<compile_context>
chip_gen: v6e
topology: v6e:2x2x1
jax: 0.10.0
libtpu: 0.0.40
codegen_flags: <defaults>
</compile_context>

<pallas_src>
import functools
import math

import jax
import jax.numpy as jnp
from jax.experimental import pallas as pl
from jax.experimental.pallas import tpu as pltpu


# ----------------------------------------------------------------------------
# Fused decoder-block kernel (one grid step == one tile of batch elements)
# ----------------------------------------------------------------------------

def _decoder_block_kernel(
    x_ref, enc_ref, sbias_ref, tbias_ref,
    sa_wqkv_ref, sa_wo_ref, sa_bo_ref, nq_g_ref, nq_b_ref,
    ca_wq_ref, ca_wkv_ref, ca_wo_ref, ca_bo_ref,
    n1_g_ref, n1_b_ref, n2_g_ref, n2_b_ref,
    w1_ref, b1_ref, w2_ref, b2_ref,
    o_ref, *, num_heads, eps):
    f32 = jnp.float32
    bf16 = jnp.bfloat16

    B, L, D = x_ref.shape
    Lk = enc_ref.shape[1]
    dk = D // num_heads

    x2 = x_ref[...].reshape(B * L, D)        # (rows, D) f32 (residual path)
    enc2 = enc_ref[...].reshape(B * Lk, D)
    tbias = tbias_ref[...]                   # (B, L, L)  additive 0 / -1e30
    sbias = sbias_ref[...]                   # (B, L, Lk)

    def layer_norm(y, g_ref, b_ref):
        mean = jnp.mean(y, axis=-1, keepdims=True)
        c = y - mean
        var = jnp.mean(c * c, axis=-1, keepdims=True)
        return c * jax.lax.rsqrt(var + eps) * g_ref[...] + b_ref[...]

    def mha(qm, q_off, km, k_off, vm, v_off, lq, lkv, bias):
        """Per-head attention; heads via static lane slices, batch via 3-D
        single-batch einsums. Softmax scale is pre-folded into the Q weights;
        masking is a single additive bias."""
        outs = []
        for h in range(num_heads):
            qh = qm[:, q_off + h * dk:q_off + (h + 1) * dk]
            kh = km[:, k_off + h * dk:k_off + (h + 1) * dk]
            vh = vm[:, v_off + h * dk:v_off + (h + 1) * dk]
            qh = qh.astype(bf16).reshape(B, lq, dk)
            kh = kh.astype(bf16).reshape(B, lkv, dk)
            vh = vh.astype(bf16).reshape(B, lkv, dk)
            s = jnp.einsum('bqd,bkd->bqk', qh, kh,
                           preferred_element_type=f32)
            s = s + bias                                     # mask as add
            s = s - jnp.max(s, axis=-1, keepdims=True)
            p = jnp.exp(s)
            p = p * pl.reciprocal(jnp.sum(p, axis=-1, keepdims=True),
                                  approx=True)
            outs.append(jnp.einsum('bqk,bkd->bqd', p.astype(bf16), vh,
                                   preferred_element_type=f32))
        return jnp.concatenate(outs, axis=-1).reshape(B * lq, D)

    # ---- masked self-attention (scale folded into Q columns of sa_wqkv) ----
    qkv = jnp.dot(x2.astype(bf16), sa_wqkv_ref[...],
                  preferred_element_type=f32)                 # (rows, 3D)
    ctx = mha(qkv, 0, qkv, D, qkv, 2 * D, L, L, tbias)
    ctx = jnp.dot(ctx.astype(bf16), sa_wo_ref[...],
                  preferred_element_type=f32) + sa_bo_ref[...]
    query = layer_norm(ctx + x2, nq_g_ref, nq_b_ref)

    # ---- cross-attention (encoder block) ----
    q_lin = jnp.dot(query.astype(bf16), ca_wq_ref[...],
                    preferred_element_type=f32)               # (rows, D)
    kv = jnp.dot(enc2.astype(bf16), ca_wkv_ref[...],
                 preferred_element_type=f32)                  # (rowsK, 2D)
    ctx = mha(q_lin, 0, kv, 0, kv, D, L, Lk, sbias)
    ctx = jnp.dot(ctx.astype(bf16), ca_wo_ref[...],
                  preferred_element_type=f32) + ca_bo_ref[...]
    x1 = layer_norm(ctx + query, n1_g_ref, n1_b_ref)

    # ---- FFN ----
    h1 = jnp.dot(x1.astype(bf16), w1_ref[...],
                 preferred_element_type=f32) + b1_ref[...]
    h1 = jnp.maximum(h1, 0.0)
    f = jnp.dot(h1.astype(bf16), w2_ref[...],
                preferred_element_type=f32) + b2_ref[...]
    out = layer_norm(x1 + f, n2_g_ref, n2_b_ref)

    o_ref[...] = out.reshape(B, L, D).astype(o_ref.dtype)


def _pick_batch_tile(n, rows_per_elem, target_rows=256, max_rows=1024):
    """Largest divisor of n whose row count stays <= max_rows, stopping as soon
    as the MXU-friendly target row count is reached."""
    best = 1
    for bt in range(1, n + 1):
        if n % bt:
            continue
        if bt * rows_per_elem > max_rows:
            break
        best = bt
        if bt * rows_per_elem >= target_rows:
            break
    return best


def decoder_block_pallas(x, enc, src_bias, tgt_bias, lp, num_heads):
    """x: (N, L, D) f32, enc: (N, Lk, D) f32, biases: (N, L, L*) f32."""
    N, L, D = x.shape
    Lk = enc.shape[1]
    bt = _pick_batch_tile(N, L)

    def act_spec(length):
        return pl.BlockSpec((bt, length, D), lambda n: (n, 0, 0))

    def bias_spec(lq, lk):
        return pl.BlockSpec((bt, lq, lk), lambda n: (n, 0, 0))

    def w_spec(a):
        # constant block index across the batch grid -> fetched once.
        # NOTE(v7x): at large d_model add pipeline_mode=pl.Buffered(1) here to
        # single-buffer the resident weights within the 64 MiB VMEM budget.
        return pl.BlockSpec(a.shape, lambda n: (0, 0))

    kernel = functools.partial(_decoder_block_kernel,
                               num_heads=num_heads, eps=1e-5)

    return pl.pallas_call(
        kernel,
        out_shape=jax.ShapeDtypeStruct((N, L, D), jnp.float32),
        grid=(N // bt,),
        in_specs=[
            act_spec(L),                       # x
            act_spec(Lk),                      # enc
            bias_spec(L, Lk),                  # src additive bias
            bias_spec(L, L),                   # tgt additive bias
            w_spec(lp["sa_wqkv"]),             # fused QKV (scale folded, bf16)
            w_spec(lp["sa_wo"]), w_spec(lp["sa_bo"]),
            w_spec(lp["nq_g"]), w_spec(lp["nq_b"]),
            w_spec(lp["ca_wq"]), w_spec(lp["ca_wkv"]),
            w_spec(lp["ca_wo"]), w_spec(lp["ca_bo"]),
            w_spec(lp["n1_g"]), w_spec(lp["n1_b"]),
            w_spec(lp["n2_g"]), w_spec(lp["n2_b"]),
            w_spec(lp["w1"]), w_spec(lp["b1"]),
            w_spec(lp["w2"]), w_spec(lp["b2"]),
        ],
        out_specs=act_spec(L),
        compiler_params=pltpu.CompilerParams(
            dimension_semantics=("parallel",),
            vmem_limit_bytes=48 * 1024 * 1024),
    )(x, enc, src_bias, tgt_bias,
      lp["sa_wqkv"], lp["sa_wo"], lp["sa_bo"], lp["nq_g"], lp["nq_b"],
      lp["ca_wq"], lp["ca_wkv"], lp["ca_wo"], lp["ca_bo"],
      lp["n1_g"], lp["n1_b"], lp["n2_g"], lp["n2_b"],
      lp["w1"], lp["b1"], lp["w2"], lp["b2"])


# ----------------------------------------------------------------------------
# Final vocabulary projection: tiled over 128-row blocks, lane-dense padded N
# ----------------------------------------------------------------------------

def _linear_kernel(x_ref, w_ref, b_ref, o_ref):
    o_ref[...] = (jnp.dot(x_ref[...].astype(w_ref.dtype), w_ref[...],
                          preferred_element_type=jnp.float32)
                  + b_ref[...]).astype(o_ref.dtype)


def final_linear(x2d, w_pad, b_pad):
    M, K = x2d.shape
    Np = w_pad.shape[1]
    TM = 128
    M_pad = pl.cdiv(M, TM) * TM
    if M_pad != M:
        x2d = jnp.pad(x2d, ((0, M_pad - M), (0, 0)))
    out = pl.pallas_call(
        _linear_kernel,
        out_shape=jax.ShapeDtypeStruct((M_pad, Np), jnp.float32),
        grid=(M_pad // TM,),
        in_specs=[pl.BlockSpec((TM, K), lambda i: (i, 0)),
                  pl.BlockSpec((K, Np), lambda i: (0, 0)),
                  pl.BlockSpec((1, Np), lambda i: (0, 0))],
        out_specs=pl.BlockSpec((TM, Np), lambda i: (i, 0)),
        compiler_params=pltpu.CompilerParams(
            dimension_semantics=("parallel",)),
    )(x2d, w_pad, b_pad)
    return out[:M]


# ----------------------------------------------------------------------------
# Forward pass (embedding gather is JAX glue; everything heavy is Pallas)
# ----------------------------------------------------------------------------

def _mask_to_bias(mask, n, lq, lk):
    # heads share the mask (head dim of size 1), as in the reference usage.
    bias = jnp.where(mask == 0, -1e30, 0.0).astype(jnp.float32)
    return jnp.broadcast_to(bias, (n, 1, lq, lk))[:, 0]


def decoder_forward(packed, ids, enc_outputs, src_mask, tgt_mask,
                    num_heads, out_dim):
    N, L = ids.shape
    Lk = enc_outputs.shape[1]
    d_model = packed["emb"].shape[1]

    # word embedding gather * sqrt(d_model) + zero positional buffer (matches
    # the reference PositionEncoding init). Dropout = identity at inference.
    x = packed["emb"][ids] * math.sqrt(d_model) + packed["pe"][:L][None]

    # masks -> additive f32 biases, computed once (no in-kernel compare/select)
    tgt_bias = _mask_to_bias(tgt_mask, N, L, L)
    src_bias = _mask_to_bias(src_mask, N, L, Lk)

    # TODO(synk): for many layers, stack per-layer weights and run a single
    # pallas_call with a leading "layer" grid axis (activation resident in
    # VMEM) instead of this per-layer Python loop.
    for lp in packed["layers"]:
        x = decoder_block_pallas(x, enc_outputs, src_bias, tgt_bias,
                                 lp, num_heads)

    out = final_linear(x.reshape(-1, d_model), packed["W_w"], packed["W_b"])
    return out[:, :out_dim].reshape(N, L, out_dim)


# ----------------------------------------------------------------------------
# Parameter construction (PyTorch-structured) and one-time packing
# ----------------------------------------------------------------------------

def init_params(key, input_dim, d_model, d_ff, num_layers, num_heads,
                max_len=500):
    d_k = d_model // num_heads
    vocab = input_dim * 200

    def nrm(k, shape, scale=0.05):
        return (scale * jax.random.normal(k, shape)).astype(jnp.float32)

    keys = iter(jax.random.split(key, 128))

    def attn_params():
        return {
            "wq": nrm(next(keys), (d_k, d_k)),
            "wk": nrm(next(keys), (d_k, d_k)),
            "wv": nrm(next(keys), (d_k, d_k)),
            "wo": nrm(next(keys), (d_model, d_model)),
            "bo": nrm(next(keys), (d_model,)),
        }

    layers = []
    for _ in range(num_layers):
        layers.append({
            "self_attn": attn_params(),
            "norm_g": jnp.ones((d_model,), jnp.float32),
            "norm_b": jnp.zeros((d_model,), jnp.float32),
            "block": {
                "attn": attn_params(),
                "norm1_g": jnp.ones((d_model,), jnp.float32),
                "norm1_b": jnp.zeros((d_model,), jnp.float32),
                "norm2_g": jnp.ones((d_model,), jnp.float32),
                "norm2_b": jnp.zeros((d_model,), jnp.float32),
                "ffn_w1": nrm(next(keys), (d_model, d_ff)),
                "ffn_b1": nrm(next(keys), (d_ff,)),
                "ffn_w2": nrm(next(keys), (d_ff, d_model)),
                "ffn_b2": nrm(next(keys), (d_model,)),
            },
        })

    return {
        "emb": nrm(next(keys), (vocab, d_model), scale=1.0),
        "pe": jnp.zeros((max_len, d_model), jnp.float32),  # stays zero (ref)
        "layers": layers,
        "W_w": nrm(next(keys), (d_model, input_dim)),
        "W_b": nrm(next(keys), (input_dim,)),
    }


def pack_params(params, num_heads):
    """One-time host-side packing: block-diagonal per-head weights, fused QKV,
    softmax scale folded into Q, bf16 matmul weights, row-shaped f32
    biases / LN params, lane-dense padded final projection."""
    d_model = params["emb"].shape[1]
    d_k = d_model // num_heads
    q_scale = 1.0 / math.sqrt(d_k)
    eye_h = jnp.eye(num_heads, dtype=jnp.float32)

    # NOTE: since the per-head weight is shared across heads, at large H the
    # kron(I_H, w) block-diagonal multiplies weight bytes / FLOPs by H; kept
    # here because D is tiny and it keeps every matmul lane-dense.
    def blk(w):
        return jnp.kron(eye_h, w.astype(jnp.float32))

    def row(v):
        return v.reshape(1, -1).astype(jnp.float32)

    def wcast(w):
        return w.astype(jnp.bfloat16)

    layers = []
    for lp in params["layers"]:
        sa = lp["self_attn"]
        bp = lp["block"]
        ca = bp["attn"]
        sa_wqkv = jnp.concatenate(
            [blk(sa["wq"]) * q_scale, blk(sa["wk"]), blk(sa["wv"])], axis=1)
        ca_wkv = jnp.concatenate([blk(ca["wk"]), blk(ca["wv"])], axis=1)
        layers.append({
            "sa_wqkv": wcast(sa_wqkv),
            "sa_wo": wcast(sa["wo"]), "sa_bo": row(sa["bo"]),
            "nq_g": row(lp["norm_g"]), "nq_b": row(lp["norm_b"]),
            "ca_wq": wcast(blk(ca["wq"]) * q_scale),
            "ca_wkv": wcast(ca_wkv),
            "ca_wo": wcast(ca["wo"]), "ca_bo": row(ca["bo"]),
            "n1_g": row(bp["norm1_g"]), "n1_b": row(bp["norm1_b"]),
            "n2_g": row(bp["norm2_g"]), "n2_b": row(bp["norm2_b"]),
            "w1": wcast(bp["ffn_w1"]), "b1": row(bp["ffn_b1"]),
            "w2": wcast(bp["ffn_w2"]), "b2": row(bp["ffn_b2"]),
        })

    # final projection padded to a lane-dense multiple of 128 output columns
    n_out = params["W_w"].shape[1]
    n_pad = max(128, ((n_out + 127) // 128) * 128)
    W_w = jnp.zeros((d_model, n_pad), jnp.float32).at[:, :n_out].set(
        params["W_w"].astype(jnp.float32))
    W_b = jnp.zeros((1, n_pad), jnp.float32).at[:, :n_out].set(
        params["W_b"].reshape(1, -1).astype(jnp.float32))

    return {
        "emb": params["emb"].astype(jnp.float32),
        "pe": params["pe"].astype(jnp.float32),
        "layers": layers,
        "W_w": W_w.astype(jnp.bfloat16),
        "W_b": W_b,
    }


# ----------------------------------------------------------------------------
if __name__ == "__main__":
    # TODO(synk): nn.Dropout is stochastic in training mode; inference
    # (identity) is what is implemented here.
    input_dim = 10
    d_model = 128          # lane-dense (multiple of 128)
    d_ff = 256
    num_heads = 4
    num_layers = 2
    batch = 8
    seq = 16               # batch*seq = 128 rows per grid step / linear tile

    key = jax.random.PRNGKey(0)
    k_ids, k_enc, k_params = jax.random.split(key, 3)

    params = init_params(k_params, input_dim, d_model, d_ff,
                         num_layers, num_heads)
    packed = pack_params(params, num_heads)

    ids = jax.random.randint(k_ids, (batch, seq), 0, input_dim * 200,
                             dtype=jnp.int32)
    enc_outputs = jax.random.normal(k_enc, (batch, seq, d_model),
                                    dtype=jnp.float32)

    # masks broadcastable to (N, H, Lq, Lk); entries == 0 are masked out
    src_mask = jnp.ones((batch, 1, seq, seq), dtype=jnp.int32)
    tgt_mask = jnp.tril(jnp.ones((seq, seq), dtype=jnp.int32))[None, None]
    tgt_mask = jnp.repeat(tgt_mask, batch, axis=0)

    fwd = jax.jit(lambda p, i, e, sm, tm: decoder_forward(
        p, i, e, sm, tm, num_heads, input_dim))
    out = fwd(packed, ids, enc_outputs, src_mask, tgt_mask)
    out = jax.block_until_ready(out)

    assert out.shape == (batch, seq, input_dim), out.shape
    assert bool(jnp.all(jnp.isfinite(out)))
    print("KERNEL_OK")
</pallas_src>

<mosaic_0001>
module attributes {stable_mosaic.version = 11 : i64} {
  func.func @_decoder_block_kernel(%arg0: i32, %arg1: memref<8x16x128xf32, #tpu.memory_space<vmem>>, %arg2: memref<8x16x128xf32, #tpu.memory_space<vmem>>, %arg3: memref<8x16x16xf32, #tpu.memory_space<vmem>>, %arg4: memref<8x16x16xf32, #tpu.memory_space<vmem>>, %arg5: memref<128x384xbf16, #tpu.memory_space<vmem>>, %arg6: memref<128x128xbf16, #tpu.memory_space<vmem>>, %arg7: memref<1x128xf32, #tpu.memory_space<vmem>>, %arg8: memref<1x128xf32, #tpu.memory_space<vmem>>, %arg9: memref<1x128xf32, #tpu.memory_space<vmem>>, %arg10: memref<128x128xbf16, #tpu.memory_space<vmem>>, %arg11: memref<128x256xbf16, #tpu.memory_space<vmem>>, %arg12: memref<128x128xbf16, #tpu.memory_space<vmem>>, %arg13: memref<1x128xf32, #tpu.memory_space<vmem>>, %arg14: memref<1x128xf32, #tpu.memory_space<vmem>>, %arg15: memref<1x128xf32, #tpu.memory_space<vmem>>, %arg16: memref<1x128xf32, #tpu.memory_space<vmem>>, %arg17: memref<1x128xf32, #tpu.memory_space<vmem>>, %arg18: memref<128x256xbf16, #tpu.memory_space<vmem>>, %arg19: memref<1x256xf32, #tpu.memory_space<vmem>>, %arg20: memref<256x128xbf16, #tpu.memory_space<vmem>>, %arg21: memref<1x128xf32, #tpu.memory_space<vmem>>, %arg22: memref<8x16x128xf32, #tpu.memory_space<vmem>>) attributes {dimension_semantics = [#tpu.dimension_semantics<parallel>], iteration_bounds = array<i64: 1>, scalar_prefetch = 0 : i64, scratch_operands = 0 : i64, tpu.core_type = #tpu.core_type<tc>, window_params = [{transform_indices = @transform_0, window_bounds = array<i64: 8, 16, 128>}, {transform_indices = @transform_1, window_bounds = array<i64: 8, 16, 128>}, {transform_indices = @transform_2, window_bounds = array<i64: 8, 16, 16>}, {transform_indices = @transform_3, window_bounds = array<i64: 8, 16, 16>}, {pipeline_mode = #tpu.pipeline_mode<synchronous>, transform_indices = @transform_4, window_bounds = array<i64: 128, 384>}, {pipeline_mode = #tpu.pipeline_mode<synchronous>, transform_indices = @transform_5, window_bounds = array<i64: 128, 128>}, {pipeline_mode = #tpu.pipeline_mode<synchronous>, transform_indices = @transform_6, window_bounds = array<i64: 1, 128>}, {pipeline_mode = #tpu.pipeline_mode<synchronous>, transform_indices = @transform_7, window_bounds = array<i64: 1, 128>}, {pipeline_mode = #tpu.pipeline_mode<synchronous>, transform_indices = @transform_8, window_bounds = array<i64: 1, 128>}, {pipeline_mode = #tpu.pipeline_mode<synchronous>, transform_indices = @transform_9, window_bounds = array<i64: 128, 128>}, {pipeline_mode = #tpu.pipeline_mode<synchronous>, transform_indices = @transform_10, window_bounds = array<i64: 128, 256>}, {pipeline_mode = #tpu.pipeline_mode<synchronous>, transform_indices = @transform_11, window_bounds = array<i64: 128, 128>}, {pipeline_mode = #tpu.pipeline_mode<synchronous>, transform_indices = @transform_12, window_bounds = array<i64: 1, 128>}, {pipeline_mode = #tpu.pipeline_mode<synchronous>, transform_indices = @transform_13, window_bounds = array<i64: 1, 128>}, {pipeline_mode = #tpu.pipeline_mode<synchronous>, transform_indices = @transform_14, window_bounds = array<i64: 1, 128>}, {pipeline_mode = #tpu.pipeline_mode<synchronous>, transform_indices = @transform_15, window_bounds = array<i64: 1, 128>}, {pipeline_mode = #tpu.pipeline_mode<synchronous>, transform_indices = @transform_16, window_bounds = array<i64: 1, 128>}, {pipeline_mode = #tpu.pipeline_mode<synchronous>, transform_indices = @transform_17, window_bounds = array<i64: 128, 256>}, {pipeline_mode = #tpu.pipeline_mode<synchronous>, transform_indices = @transform_18, window_bounds = array<i64: 1, 256>}, {pipeline_mode = #tpu.pipeline_mode<synchronous>, transform_indices = @transform_19, window_bounds = array<i64: 256, 128>}, {pipeline_mode = #tpu.pipeline_mode<synchronous>, transform_indices = @transform_20, window_bounds = array<i64: 1, 128>}, {transform_indices = @transform_21, window_bounds = array<i64: 8, 16, 128>}]} {
    %c0 = arith.constant 0 : index
    %c0_0 = arith.constant 0 : index
    %c0_1 = arith.constant 0 : index
    %0 = vector.load %arg1[%c0, %c0_0, %c0_1] : memref<8x16x128xf32, #tpu.memory_space<vmem>>, vector<8x16x128xf32>
    %1 = vector.shape_cast %0 : vector<8x16x128xf32> to vector<128x128xf32>
    %c0_2 = arith.constant 0 : index
    %c0_3 = arith.constant 0 : index
    %c0_4 = arith.constant 0 : index
    %2 = vector.load %arg2[%c0_2, %c0_3, %c0_4] : memref<8x16x128xf32, #tpu.memory_space<vmem>>, vector<8x16x128xf32>
    %3 = vector.shape_cast %2 : vector<8x16x128xf32> to vector<128x128xf32>
    %c0_5 = arith.constant 0 : index
    %c0_6 = arith.constant 0 : index
    %c0_7 = arith.constant 0 : index
    %4 = vector.load %arg4[%c0_5, %c0_6, %c0_7] : memref<8x16x16xf32, #tpu.memory_space<vmem>>, vector<8x16x16xf32>
    %c0_8 = arith.constant 0 : index
    %c0_9 = arith.constant 0 : index
    %c0_10 = arith.constant 0 : index
    %5 = vector.load %arg3[%c0_8, %c0_9, %c0_10] : memref<8x16x16xf32, #tpu.memory_space<vmem>>, vector<8x16x16xf32>
    %6 = arith.truncf %1 : vector<128x128xf32> to vector<128x128xbf16>
    %c0_11 = arith.constant 0 : index
    %c0_12 = arith.constant 0 : index
    %7 = vector.load %arg5[%c0_11, %c0_12] : memref<128x384xbf16, #tpu.memory_space<vmem>>, vector<128x384xbf16>
    %cst = arith.constant dense<0.000000e+00> : vector<128x384xf32>
    %8 = tpu.matmul %6, %7, %cst {dimension_numbers = #tpu.dot_dimension_numbers<[1], [0], [0], [1], [0, 0, 1, 1], [], []>} : vector<128x128xbf16>, vector<128x384xbf16>, vector<128x384xf32> -> vector<128x384xf32>
    %9 = vector.extract_strided_slice %8 {offsets = [0, 0], sizes = [128, 32], strides = [1, 1]} : vector<128x384xf32> to vector<128x32xf32>
    %10 = vector.extract_strided_slice %8 {offsets = [0, 128], sizes = [128, 32], strides = [1, 1]} : vector<128x384xf32> to vector<128x32xf32>
    %11 = vector.extract_strided_slice %8 {offsets = [0, 256], sizes = [128, 32], strides = [1, 1]} : vector<128x384xf32> to vector<128x32xf32>
    %12 = arith.truncf %9 : vector<128x32xf32> to vector<128x32xbf16>
    %13 = vector.shape_cast %12 : vector<128x32xbf16> to vector<8x16x32xbf16>
    %14 = arith.truncf %10 : vector<128x32xf32> to vector<128x32xbf16>
    %15 = vector.shape_cast %14 : vector<128x32xbf16> to vector<8x16x32xbf16>
    %16 = arith.truncf %11 : vector<128x32xf32> to vector<128x32xbf16>
    %17 = vector.shape_cast %16 : vector<128x32xbf16> to vector<8x16x32xbf16>
    "tpu.trace_start"() <{level = 10 : i32, message = "bqd,bkd->bqk"}> : () -> ()
    %cst_13 = arith.constant dense<0.000000e+00> : vector<8x16x16xf32>
    %18 = tpu.matmul %13, %15, %cst_13 {dimension_numbers = #tpu.dot_dimension_numbers<[2], [2], [1], [1], [0, 0, 0, 1, 1, 1], [0], [0]>} : vector<8x16x32xbf16>, vector<8x16x32xbf16>, vector<8x16x16xf32> -> vector<8x16x16xf32>
    "tpu.trace_stop"() : () -> ()
    %19 = arith.addf %18, %4 : vector<8x16x16xf32>
    %cst_14 = arith.constant dense<0xFF800000> : vector<8x16xf32>
    %20 = vector.multi_reduction <maximumf>, %19, %cst_14 [2] : vector<8x16x16xf32> to vector<8x16xf32>
    %21 = vector.shape_cast %20 : vector<8x16xf32> to vector<8x16x1xf32>
    %22 = vector.broadcast %21 : vector<8x16x1xf32> to vector<8x16x16xf32>
    %23 = arith.subf %19, %22 : vector<8x16x16xf32>
    %24 = math.exp %23 : vector<8x16x16xf32>
    %cst_15 = arith.constant dense<0.000000e+00> : vector<8x16xf32>
    %25 = vector.multi_reduction <add>, %24, %cst_15 [2] : vector<8x16x16xf32> to vector<8x16xf32>
    %26 = vector.shape_cast %25 : vector<8x16xf32> to vector<8x16x1xf32>
    %27 = tpu.reciprocal %26 {approx = true} : vector<8x16x1xf32> -> vector<8x16x1xf32>
    %28 = vector.broadcast %27 : vector<8x16x1xf32> to vector<8x16x16xf32>
    %29 = arith.mulf %24, %28 : vector<8x16x16xf32>
    %30 = arith.truncf %29 : vector<8x16x16xf32> to vector<8x16x16xbf16>
    "tpu.trace_start"() <{level = 10 : i32, message = "bqk,bkd->bqd"}> : () -> ()
    %cst_16 = arith.constant dense<0.000000e+00> : vector<8x16x32xf32>
    %31 = tpu.matmul %30, %17, %cst_16 {dimension_numbers = #tpu.dot_dimension_numbers<[2], [1], [1], [2], [0, 0, 0, 1, 1, 2], [0], [0]>} : vector<8x16x16xbf16>, vector<8x16x32xbf16>, vector<8x16x32xf32> -> vector<8x16x32xf32>
    "tpu.trace_stop"() : () -> ()
    %32 = vector.extract_strided_slice %8 {offsets = [0, 32], sizes = [128, 32], strides = [1, 1]} : vector<128x384xf32> to vector<128x32xf32>
    %33 = vector.extract_strided_slice %8 {offsets = [0, 160], sizes = [128, 32], strides = [1, 1]} : vector<128x384xf32> to vector<128x32xf32>
    %34 = vector.extract_strided_slice %8 {offsets = [0, 288], sizes = [128, 32], strides = [1, 1]} : vector<128x384xf32> to vector<128x32xf32>
    %35 = arith.truncf %32 : vector<128x32xf32> to vector<128x32xbf16>
    %36 = vector.shape_cast %35 : vector<128x32xbf16> to vector<8x16x32xbf16>
    %37 = arith.truncf %33 : vector<128x32xf32> to vector<128x32xbf16>
    %38 = vector.shape_cast %37 : vector<128x32xbf16> to vector<8x16x32xbf16>
    %39 = arith.truncf %34 : vector<128x32xf32> to vector<128x32xbf16>
    %40 = vector.shape_cast %39 : vector<128x32xbf16> to vector<8x16x32xbf16>
    "tpu.trace_start"() <{level = 10 : i32, message = "bqd,bkd->bqk"}> : () -> ()
    %cst_17 = arith.constant dense<0.000000e+00> : vector<8x16x16xf32>
    %41 = tpu.matmul %36, %38, %cst_17 {dimension_numbers = #tpu.dot_dimension_numbers<[2], [2], [1], [1], [0, 0, 0, 1, 1, 1], [0], [0]>} : vector<8x16x32xbf16>, vector<8x16x32xbf16>, vector<8x16x16xf32> -> vector<8x16x16xf32>
    "tpu.trace_stop"() : () -> ()
    %42 = arith.addf %41, %4 : vector<8x16x16xf32>
    %cst_18 = arith.constant dense<0xFF800000> : vector<8x16xf32>
    %43 = vector.multi_reduction <maximumf>, %42, %cst_18 [2] : vector<8x16x16xf32> to vector<8x16xf32>
    %44 = vector.shape_cast %43 : vector<8x16xf32> to vector<8x16x1xf32>
    %45 = vector.broadcast %44 : vector<8x16x1xf32> to vector<8x16x16xf32>
    %46 = arith.subf %42, %45 : vector<8x16x16xf32>
    %47 = math.exp %46 : vector<8x16x16xf32>
    %cst_19 = arith.constant dense<0.000000e+00> : vector<8x16xf32>
    %48 = vector.multi_reduction <add>, %47, %cst_19 [2] : vector<8x16x16xf32> to vector<8x16xf32>
    %49 = vector.shape_cast %48 : vector<8x16xf32> to vector<8x16x1xf32>
    %50 = tpu.reciprocal %49 {approx = true} : vector<8x16x1xf32> -> vector<8x16x1xf32>
    %51 = vector.broadcast %50 : vector<8x16x1xf32> to vector<8x16x16xf32>
    %52 = arith.mulf %47, %51 : vector<8x16x16xf32>
    %53 = arith.truncf %52 : vector<8x16x16xf32> to vector<8x16x16xbf16>
    "tpu.trace_start"() <{level = 10 : i32, message = "bqk,bkd->bqd"}> : () -> ()
    %cst_20 = arith.constant dense<0.000000e+00> : vector<8x16x32xf32>
    %54 = tpu.matmul %53, %40, %cst_20 {dimension_numbers = #tpu.dot_dimension_numbers<[2], [1], [1], [2], [0, 0, 0, 1, 1, 2], [0], [0]>} : vector<8x16x16xbf16>, vector<8x16x32xbf16>, vector<8x16x32xf32> -> vector<8x16x32xf32>
    "tpu.trace_stop"() : () -> ()
    %55 = vector.extract_strided_slice %8 {offsets = [0, 64], sizes = [128, 32], strides = [1, 1]} : vector<128x384xf32> to vector<128x32xf32>
    %56 = vector.extract_strided_slice %8 {offsets = [0, 192], sizes = [128, 32], strides = [1, 1]} : vector<128x384xf32> to vector<128x32xf32>
    %57 = vector.extract_strided_slice %8 {offsets = [0, 320], sizes = [128, 32], strides = [1, 1]} : vector<128x384xf32> to vector<128x32xf32>
    %58 = arith.truncf %55 : vector<128x32xf32> to vector<128x32xbf16>
    %59 = vector.shape_cast %58 : vector<128x32xbf16> to vector<8x16x32xbf16>
    %60 = arith.truncf %56 : vector<128x32xf32> to vector<128x32xbf16>
    %61 = vector.shape_cast %60 : vector<128x32xbf16> to vector<8x16x32xbf16>
    %62 = arith.truncf %57 : vector<128x32xf32> to vector<128x32xbf16>
    %63 = vector.shape_cast %62 : vector<128x32xbf16> to vector<8x16x32xbf16>
    "tpu.trace_start"() <{level = 10 : i32, message = "bqd,bkd->bqk"}> : () -> ()
    %cst_21 = arith.constant dense<0.000000e+00> : vector<8x16x16xf32>
    %64 = tpu.matmul %59, %61, %cst_21 {dimension_numbers = #tpu.dot_dimension_numbers<[2], [2], [1], [1], [0, 0, 0, 1, 1, 1], [0], [0]>} : vector<8x16x32xbf16>, vector<8x16x32xbf16>, vector<8x16x16xf32> -> vector<8x16x16xf32>
    "tpu.trace_stop"() : () -> ()
    %65 = arith.addf %64, %4 : vector<8x16x16xf32>
    %cst_22 = arith.constant dense<0xFF800000> : vector<8x16xf32>
    %66 = vector.multi_reduction <maximumf>, %65, %cst_22 [2] : vector<8x16x16xf32> to vector<8x16xf32>
    %67 = vector.shape_cast %66 : vector<8x16xf32> to vector<8x16x1xf32>
    %68 = vector.broadcast %67 : vector<8x16x1xf32> to vector<8x16x16xf32>
    %69 = arith.subf %65, %68 : vector<8x16x16xf32>
    %70 = math.exp %69 : vector<8x16x16xf32>
    %cst_23 = arith.constant dense<0.000000e+00> : vector<8x16xf32>
    %71 = vector.multi_reduction <add>, %70, %cst_23 [2] : vector<8x16x16xf32> to vector<8x16xf32>
    %72 = vector.shape_cast %71 : vector<8x16xf32> to vector<8x16x1xf32>
    %73 = tpu.reciprocal %72 {approx = true} : vector<8x16x1xf32> -> vector<8x16x1xf32>
    %74 = vector.broadcast %73 : vector<8x16x1xf32> to vector<8x16x16xf32>
    %75 = arith.mulf %70, %74 : vector<8x16x16xf32>
    %76 = arith.truncf %75 : vector<8x16x16xf32> to vector<8x16x16xbf16>
    "tpu.trace_start"() <{level = 10 : i32, message = "bqk,bkd->bqd"}> : () -> ()
    %cst_24 = arith.constant dense<0.000000e+00> : vector<8x16x32xf32>
    %77 = tpu.matmul %76, %63, %cst_24 {dimension_numbers = #tpu.dot_dimension_numbers<[2], [1], [1], [2], [0, 0, 0, 1, 1, 2], [0], [0]>} : vector<8x16x16xbf16>, vector<8x16x32xbf16>, vector<8x16x32xf32> -> vector<8x16x32xf32>
    "tpu.trace_stop"() : () -> ()
    %78 = vector.extract_strided_slice %8 {offsets = [0, 96], sizes = [128, 32], strides = [1, 1]} : vector<128x384xf32> to vector<128x32xf32>
    %79 = vector.extract_strided_slice %8 {offsets = [0, 224], sizes = [128, 32], strides = [1, 1]} : vector<128x384xf32> to vector<128x32xf32>
    %80 = vector.extract_strided_slice %8 {offsets = [0, 352], sizes = [128, 32], strides = [1, 1]} : vector<128x384xf32> to vector<128x32xf32>
    %81 = arith.truncf %78 : vector<128x32xf32> to vector<128x32xbf16>
    %82 = vector.shape_cast %81 : vector<128x32xbf16> to vector<8x16x32xbf16>
    %83 = arith.truncf %79 : vector<128x32xf32> to vector<128x32xbf16>
    %84 = vector.shape_cast %83 : vector<128x32xbf16> to vector<8x16x32xbf16>
    %85 = arith.truncf %80 : vector<128x32xf32> to vector<128x32xbf16>
    %86 = vector.shape_cast %85 : vector<128x32xbf16> to vector<8x16x32xbf16>
    "tpu.trace_start"() <{level = 10 : i32, message = "bqd,bkd->bqk"}> : () -> ()
    %cst_25 = arith.constant dense<0.000000e+00> : vector<8x16x16xf32>
    %87 = tpu.matmul %82, %84, %cst_25 {dimension_numbers = #tpu.dot_dimension_numbers<[2], [2], [1], [1], [0, 0, 0, 1, 1, 1], [0], [0]>} : vector<8x16x32xbf16>, vector<8x16x32xbf16>, vector<8x16x16xf32> -> vector<8x16x16xf32>
    "tpu.trace_stop"() : () -> ()
    %88 = arith.addf %87, %4 : vector<8x16x16xf32>
    %cst_26 = arith.constant dense<0xFF800000> : vector<8x16xf32>
    %89 = vector.multi_reduction <maximumf>, %88, %cst_26 [2] : vector<8x16x16xf32> to vector<8x16xf32>
    %90 = vector.shape_cast %89 : vector<8x16xf32> to vector<8x16x1xf32>
    %91 = vector.broadcast %90 : vector<8x16x1xf32> to vector<8x16x16xf32>
    %92 = arith.subf %88, %91 : vector<8x16x16xf32>
    %93 = math.exp %92 : vector<8x16x16xf32>
    %cst_27 = arith.constant dense<0.000000e+00> : vector<8x16xf32>
    %94 = vector.multi_reduction <add>, %93, %cst_27 [2] : vector<8x16x16xf32> to vector<8x16xf32>
    %95 = vector.shape_cast %94 : vector<8x16xf32> to vector<8x16x1xf32>
    %96 = tpu.reciprocal %95 {approx = true} : vector<8x16x1xf32> -> vector<8x16x1xf32>
    %97 = vector.broadcast %96 : vector<8x16x1xf32> to vector<8x16x16xf32>
    %98 = arith.mulf %93, %97 : vector<8x16x16xf32>
    %99 = arith.truncf %98 : vector<8x16x16xf32> to vector<8x16x16xbf16>
    "tpu.trace_start"() <{level = 10 : i32, message = "bqk,bkd->bqd"}> : () -> ()
    %cst_28 = arith.constant dense<0.000000e+00> : vector<8x16x32xf32>
    %100 = tpu.matmul %99, %86, %cst_28 {dimension_numbers = #tpu.dot_dimension_numbers<[2], [1], [1], [2], [0, 0, 0, 1, 1, 2], [0], [0]>} : vector<8x16x16xbf16>, vector<8x16x32xbf16>, vector<8x16x32xf32> -> vector<8x16x32xf32>
    "tpu.trace_stop"() : () -> ()
    %101 = tpu.concatenate %31, %54, %77, %100 in 2 : vector<8x16x32xf32>, vector<8x16x32xf32>, vector<8x16x32xf32>, vector<8x16x32xf32> -> vector<8x16x128xf32>
    %102 = vector.shape_cast %101 : vector<8x16x128xf32> to vector<128x128xf32>
    %103 = arith.truncf %102 : vector<128x128xf32> to vector<128x128xbf16>
    %c0_29 = arith.constant 0 : index
    %c0_30 = arith.constant 0 : index
    %104 = vector.load %arg6[%c0_29, %c0_30] : memref<128x128xbf16, #tpu.memory_space<vmem>>, vector<128x128xbf16>
    %cst_31 = arith.constant dense<0.000000e+00> : vector<128x128xf32>
    %105 = tpu.matmul %103, %104, %cst_31 {dimension_numbers = #tpu.dot_dimension_numbers<[1], [0], [0], [1], [0, 0, 1, 1], [], []>} : vector<128x128xbf16>, vector<128x128xbf16>, vector<128x128xf32> -> vector<128x128xf32>
    %c0_32 = arith.constant 0 : index
    %c0_33 = arith.constant 0 : index
    %106 = vector.load %arg7[%c0_32, %c0_33] : memref<1x128xf32, #tpu.memory_space<vmem>>, vector<1x128xf32>
    %107 = vector.broadcast %106 : vector<1x128xf32> to vector<128x128xf32>
    %108 = arith.addf %105, %107 : vector<128x128xf32>
    %109 = arith.addf %108, %1 : vector<128x128xf32>
    %cst_34 = arith.constant dense<0.000000e+00> : vector<128xf32>
    %110 = vector.multi_reduction <add>, %109, %cst_34 [1] : vector<128x128xf32> to vector<128xf32>
    %111 = vector.shape_cast %110 : vector<128xf32> to vector<128x1xf32>
    %cst_35 = arith.constant 1.280000e+02 : f32
    %112 = vector.broadcast %cst_35 : f32 to vector<128x1xf32>
    %113 = arith.divf %111, %112 : vector<128x1xf32>
    %114 = vector.broadcast %113 : vector<128x1xf32> to vector<128x128xf32>
    %115 = arith.subf %109, %114 : vector<128x128xf32>
    %116 = arith.mulf %115, %115 : vector<128x128xf32>
    %cst_36 = arith.constant dense<0.000000e+00> : vector<128xf32>
    %117 = vector.multi_reduction <add>, %116, %cst_36 [1] : vector<128x128xf32> to vector<128xf32>
    %118 = vector.shape_cast %117 : vector<128xf32> to vector<128x1xf32>
    %cst_37 = arith.constant 1.280000e+02 : f32
    %119 = vector.broadcast %cst_37 : f32 to vector<128x1xf32>
    %120 = arith.divf %118, %119 : vector<128x1xf32>
    %cst_38 = arith.constant 9.99999974E-6 : f32
    %121 = vector.broadcast %cst_38 : f32 to vector<128x1xf32>
    %122 = arith.addf %120, %121 : vector<128x1xf32>
    %123 = math.rsqrt %122 : vector<128x1xf32>
    %124 = vector.broadcast %123 : vector<128x1xf32> to vector<128x128xf32>
    %125 = arith.mulf %115, %124 : vector<128x128xf32>
    %c0_39 = arith.constant 0 : index
    %c0_40 = arith.constant 0 : index
    %126 = vector.load %arg8[%c0_39, %c0_40] : memref<1x128xf32, #tpu.memory_space<vmem>>, vector<1x128xf32>
    %127 = vector.broadcast %126 : vector<1x128xf32> to vector<128x128xf32>
    %128 = arith.mulf %125, %127 : vector<128x128xf32>
    %c0_41 = arith.constant 0 : index
    %c0_42 = arith.constant 0 : index
    %129 = vector.load %arg9[%c0_41, %c0_42] : memref<1x128xf32, #tpu.memory_space<vmem>>, vector<1x128xf32>
    %130 = vector.broadcast %129 : vector<1x128xf32> to vector<128x128xf32>
    %131 = arith.addf %128, %130 : vector<128x128xf32>
    %132 = arith.truncf %131 : vector<128x128xf32> to vector<128x128xbf16>
    %c0_43 = arith.constant 0 : index
    %c0_44 = arith.constant 0 : index
    %133 = vector.load %arg10[%c0_43, %c0_44] : memref<128x128xbf16, #tpu.memory_space<vmem>>, vector<128x128xbf16>
    %cst_45 = arith.constant dense<0.000000e+00> : vector<128x128xf32>
    %134 = tpu.matmul %132, %133, %cst_45 {dimension_numbers = #tpu.dot_dimension_numbers<[1], [0], [0], [1], [0, 0, 1, 1], [], []>} : vector<128x128xbf16>, vector<128x128xbf16>, vector<128x128xf32> -> vector<128x128xf32>
    %135 = arith.truncf %3 : vector<128x128xf32> to vector<128x128xbf16>
    %c0_46 = arith.constant 0 : index
    %c0_47 = arith.constant 0 : index
    %136 = vector.load %arg11[%c0_46, %c0_47] : memref<128x256xbf16, #tpu.memory_space<vmem>>, vector<128x256xbf16>
    %cst_48 = arith.constant dense<0.000000e+00> : vector<128x256xf32>
    %137 = tpu.matmul %135, %136, %cst_48 {dimension_numbers = #tpu.dot_dimension_numbers<[1], [0], [0], [1], [0, 0, 1, 1], [], []>} : vector<128x128xbf16>, vector<128x256xbf16>, vector<128x256xf32> -> vector<128x256xf32>
    %138 = vector.extract_strided_slice %134 {offsets = [0, 0], sizes = [128, 32], strides = [1, 1]} : vector<128x128xf32> to vector<128x32xf32>
    %139 = vector.extract_strided_slice %137 {offsets = [0, 0], sizes = [128, 32], strides = [1, 1]} : vector<128x256xf32> to vector<128x32xf32>
    %140 = vector.extract_strided_slice %137 {offsets = [0, 128], sizes = [128, 32], strides = [1, 1]} : vector<128x256xf32> to vector<128x32xf32>
    %141 = arith.truncf %138 : vector<128x32xf32> to vector<128x32xbf16>
    %142 = vector.shape_cast %141 : vector<128x32xbf16> to vector<8x16x32xbf16>
    %143 = arith.truncf %139 : vector<128x32xf32> to vector<128x32xbf16>
    %144 = vector.shape_cast %143 : vector<128x32xbf16> to vector<8x16x32xbf16>
    %145 = arith.truncf %140 : vector<128x32xf32> to vector<128x32xbf16>
    %146 = vector.shape_cast %145 : vector<128x32xbf16> to vector<8x16x32xbf16>
    "tpu.trace_start"() <{level = 10 : i32, message = "bqd,bkd->bqk"}> : () -> ()
    %cst_49 = arith.constant dense<0.000000e+00> : vector<8x16x16xf32>
    %147 = tpu.matmul %142, %144, %cst_49 {dimension_numbers = #tpu.dot_dimension_numbers<[2], [2], [1], [1], [0, 0, 0, 1, 1, 1], [0], [0]>} : vector<8x16x32xbf16>, vector<8x16x32xbf16>, vector<8x16x16xf32> -> vector<8x16x16xf32>
    "tpu.trace_stop"() : () -> ()
    %148 = arith.addf %147, %5 : vector<8x16x16xf32>
    %cst_50 = arith.constant dense<0xFF800000> : vector<8x16xf32>
    %149 = vector.multi_reduction <maximumf>, %148, %cst_50 [2] : vector<8x16x16xf32> to vector<8x16xf32>
    %150 = vector.shape_cast %149 : vector<8x16xf32> to vector<8x16x1xf32>
    %151 = vector.broadcast %150 : vector<8x16x1xf32> to vector<8x16x16xf32>
    %152 = arith.subf %148, %151 : vector<8x16x16xf32>
    %153 = math.exp %152 : vector<8x16x16xf32>
    %cst_51 = arith.constant dense<0.000000e+00> : vector<8x16xf32>
    %154 = vector.multi_reduction <add>, %153, %cst_51 [2] : vector<8x16x16xf32> to vector<8x16xf32>
    %155 = vector.shape_cast %154 : vector<8x16xf32> to vector<8x16x1xf32>
    %156 = tpu.reciprocal %155 {approx = true} : vector<8x16x1xf32> -> vector<8x16x1xf32>
    %157 = vector.broadcast %156 : vector<8x16x1xf32> to vector<8x16x16xf32>
    %158 = arith.mulf %153, %157 : vector<8x16x16xf32>
    %159 = arith.truncf %158 : vector<8x16x16xf32> to vector<8x16x16xbf16>
    "tpu.trace_start"() <{level = 10 : i32, message = "bqk,bkd->bqd"}> : () -> ()
    %cst_52 = arith.constant dense<0.000000e+00> : vector<8x16x32xf32>
    %160 = tpu.matmul %159, %146, %cst_52 {dimension_numbers = #tpu.dot_dimension_numbers<[2], [1], [1], [2], [0, 0, 0, 1, 1, 2], [0], [0]>} : vector<8x16x16xbf16>, vector<8x16x32xbf16>, vector<8x16x32xf32> -> vector<8x16x32xf32>
    "tpu.trace_stop"() : () -> ()
    %161 = vector.extract_strided_slice %134 {offsets = [0, 32], sizes = [128, 32], strides = [1, 1]} : vector<128x128xf32> to vector<128x32xf32>
    %162 = vector.extract_strided_slice %137 {offsets = [0, 32], sizes = [128, 32], strides = [1, 1]} : vector<128x256xf32> to vector<128x32xf32>
    %163 = vector.extract_strided_slice %137 {offsets = [0, 160], sizes = [128, 32], strides = [1, 1]} : vector<128x256xf32> to vector<128x32xf32>
    %164 = arith.truncf %161 : vector<128x32xf32> to vector<128x32xbf16>
    %165 = vector.shape_cast %164 : vector<128x32xbf16> to vector<8x16x32xbf16>
    %166 = arith.truncf %162 : vector<128x32xf32> to vector<128x32xbf16>
    %167 = vector.shape_cast %166 : vector<128x32xbf16> to vector<8x16x32xbf16>
    %168 = arith.truncf %163 : vector<128x32xf32> to vector<128x32xbf16>
    %169 = vector.shape_cast %168 : vector<128x32xbf16> to vector<8x16x32xbf16>
    "tpu.trace_start"() <{level = 10 : i32, message = "bqd,bkd->bqk"}> : () -> ()
    %cst_53 = arith.constant dense<0.000000e+00> : vector<8x16x16xf32>
    %170 = tpu.matmul %165, %167, %cst_53 {dimension_numbers = #tpu.dot_dimension_numbers<[2], [2], [1], [1], [0, 0, 0, 1, 1, 1], [0], [0]>} : vector<8x16x32xbf16>, vector<8x16x32xbf16>, vector<8x16x16xf32> -> vector<8x16x16xf32>
    "tpu.trace_stop"() : () -> ()
    %171 = arith.addf %170, %5 : vector<8x16x16xf32>
    %cst_54 = arith.constant dense<0xFF800000> : vector<8x16xf32>
    %172 = vector.multi_reduction <maximumf>, %171, %cst_54 [2] : vector<8x16x16xf32> to vector<8x16xf32>
    %173 = vector.shape_cast %172 : vector<8x16xf32> to vector<8x16x1xf32>
    %174 = vector.broadcast %173 : vector<8x16x1xf32> to vector<8x16x16xf32>
    %175 = arith.subf %171, %174 : vector<8x16x16xf32>
    %176 = math.exp %175 : vector<8x16x16xf32>
    %cst_55 = arith.constant dense<0.000000e+00> : vector<8x16xf32>
    %177 = vector.multi_reduction <add>, %176, %cst_55 [2] : vector<8x16x16xf32> to vector<8x16xf32>
    %178 = vector.shape_cast %177 : vector<8x16xf32> to vector<8x16x1xf32>
    %179 = tpu.reciprocal %178 {approx = true} : vector<8x16x1xf32> -> vector<8x16x1xf32>
    %180 = vector.broadcast %179 : vector<8x16x1xf32> to vector<8x16x16xf32>
    %181 = arith.mulf %176, %180 : vector<8x16x16xf32>
    %182 = arith.truncf %181 : vector<8x16x16xf32> to vector<8x16x16xbf16>
    "tpu.trace_start"() <{level = 10 : i32, message = "bqk,bkd->bqd"}> : () -> ()
    %cst_56 = arith.constant dense<0.000000e+00> : vector<8x16x32xf32>
    %183 = tpu.matmul %182, %169, %cst_56 {dimension_numbers = #tpu.dot_dimension_numbers<[2], [1], [1], [2], [0, 0, 0, 1, 1, 2], [0], [0]>} : vector<8x16x16xbf16>, vector<8x16x32xbf16>, vector<8x16x32xf32> -> vector<8x16x32xf32>
    "tpu.trace_stop"() : () -> ()
    %184 = vector.extract_strided_slice %134 {offsets = [0, 64], sizes = [128, 32], strides = [1, 1]} : vector<128x128xf32> to vector<128x32xf32>
    %185 = vector.extract_strided_slice %137 {offsets = [0, 64], sizes = [128, 32], strides = [1, 1]} : vector<128x256xf32> to vector<128x32xf32>
    %186 = vector.extract_strided_slice %137 {offsets = [0, 192], sizes = [128, 32], strides = [1, 1]} : vector<128x256xf32> to vector<128x32xf32>
    %187 = arith.truncf %184 : vector<128x32xf32> to vector<128x32xbf16>
    %188 = vector.shape_cast %187 : vector<128x32xbf16> to vector<8x16x32xbf16>
    %189 = arith.truncf %185 : vector<128x32xf32> to vector<128x32xbf16>
    %190 = vector.shape_cast %189 : vector<128x32xbf16> to vector<8x16x32xbf16>
    %191 = arith.truncf %186 : vector<128x32xf32> to vector<128x32xbf16>
    %192 = vector.shape_cast %191 : vector<128x32xbf16> to vector<8x16x32xbf16>
    "tpu.trace_start"() <{level = 10 : i32, message = "bqd,bkd->bqk"}> : () -> ()
    %cst_57 = arith.constant dense<0.000000e+00> : vector<8x16x16xf32>
    %193 = tpu.matmul %188, %190, %cst_57 {dimension_numbers = #tpu.dot_dimension_numbers<[2], [2], [1], [1], [0, 0, 0, 1, 1, 1], [0], [0]>} : vector<8x16x32xbf16>, vector<8x16x32xbf16>, vector<8x16x16xf32> -> vector<8x16x16xf32>
    "tpu.trace_stop"() : () -> ()
    %194 = arith.addf %193, %5 : vector<8x16x16xf32>
    %cst_58 = arith.constant dense<0xFF800000> : vector<8x16xf32>
    %195 = vector.multi_reduction <maximumf>, %194, %cst_58 [2] : vector<8x16x16xf32> to vector<8x16xf32>
    %196 = vector.shape_cast %195 : vector<8x16xf32> to vector<8x16x1xf32>
    %197 = vector.broadcast %196 : vector<8x16x1xf32> to vector<8x16x16xf32>
    %198 = arith.subf %194, %197 : vector<8x16x16xf32>
    %199 = math.exp %198 : vector<8x16x16xf32>
    %cst_59 = arith.constant dense<0.000000e+00> : vector<8x16xf32>
    %200 = vector.multi_reduction <add>, %199, %cst_59 [2] : vector<8x16x16xf32> to vector<8x16xf32>
    %201 = vector.shape_cast %200 : vector<8x16xf32> to vector<8x16x1xf32>
    %202 = tpu.reciprocal %201 {approx = true} : vector<8x16x1xf32> -> vector<8x16x1xf32>
    %203 = vector.broadcast %202 : vector<8x16x1xf32> to vector<8x16x16xf32>
    %204 = arith.mulf %199, %203 : vector<8x16x16xf32>
    %205 = arith.truncf %204 : vector<8x16x16xf32> to vector<8x16x16xbf16>
    "tpu.trace_start"() <{level = 10 : i32, message = "bqk,bkd->bqd"}> : () -> ()
    %cst_60 = arith.constant dense<0.000000e+00> : vector<8x16x32xf32>
    %206 = tpu.matmul %205, %192, %cst_60 {dimension_numbers = #tpu.dot_dimension_numbers<[2], [1], [1], [2], [0, 0, 0, 1, 1, 2], [0], [0]>} : vector<8x16x16xbf16>, vector<8x16x32xbf16>, vector<8x16x32xf32> -> vector<8x16x32xf32>
    "tpu.trace_stop"() : () -> ()
    %207 = vector.extract_strided_slice %134 {offsets = [0, 96], sizes = [128, 32], strides = [1, 1]} : vector<128x128xf32> to vector<128x32xf32>
    %208 = vector.extract_strided_slice %137 {offsets = [0, 96], sizes = [128, 32], strides = [1, 1]} : vector<128x256xf32> to vector<128x32xf32>
    %209 = vector.extract_strided_slice %137 {offsets = [0, 224], sizes = [128, 32], strides = [1, 1]} : vector<128x256xf32> to vector<128x32xf32>
    %210 = arith.truncf %207 : vector<128x32xf32> to vector<128x32xbf16>
    %211 = vector.shape_cast %210 : vector<128x32xbf16> to vector<8x16x32xbf16>
    %212 = arith.truncf %208 : vector<128x32xf32> to vector<128x32xbf16>
    %213 = vector.shape_cast %212 : vector<128x32xbf16> to vector<8x16x32xbf16>
    %214 = arith.truncf %209 : vector<128x32xf32> to vector<128x32xbf16>
    %215 = vector.shape_cast %214 : vector<128x32xbf16> to vector<8x16x32xbf16>
    "tpu.trace_start"() <{level = 10 : i32, message = "bqd,bkd->bqk"}> : () -> ()
    %cst_61 = arith.constant dense<0.000000e+00> : vector<8x16x16xf32>
    %216 = tpu.matmul %211, %213, %cst_61 {dimension_numbers = #tpu.dot_dimension_numbers<[2], [2], [1], [1], [0, 0, 0, 1, 1, 1], [0], [0]>} : vector<8x16x32xbf16>, vector<8x16x32xbf16>, vector<8x16x16xf32> -> vector<8x16x16xf32>
    "tpu.trace_stop"() : () -> ()
    %217 = arith.addf %216, %5 : vector<8x16x16xf32>
    %cst_62 = arith.constant dense<0xFF800000> : vector<8x16xf32>
    %218 = vector.multi_reduction <maximumf>, %217, %cst_62 [2] : vector<8x16x16xf32> to vector<8x16xf32>
    %219 = vector.shape_cast %218 : vector<8x16xf32> to vector<8x16x1xf32>
    %220 = vector.broadcast %219 : vector<8x16x1xf32> to vector<8x16x16xf32>
    %221 = arith.subf %217, %220 : vector<8x16x16xf32>
    %222 = math.exp %221 : vector<8x16x16xf32>
    %cst_63 = arith.constant dense<0.000000e+00> : vector<8x16xf32>
    %223 = vector.multi_reduction <add>, %222, %cst_63 [2] : vector<8x16x16xf32> to vector<8x16xf32>
    %224 = vector.shape_cast %223 : vector<8x16xf32> to vector<8x16x1xf32>
    %225 = tpu.reciprocal %224 {approx = true} : vector<8x16x1xf32> -> vector<8x16x1xf32>
    %226 = vector.broadcast %225 : vector<8x16x1xf32> to vector<8x16x16xf32>
    %227 = arith.mulf %222, %226 : vector<8x16x16xf32>
    %228 = arith.truncf %227 : vector<8x16x16xf32> to vector<8x16x16xbf16>
    "tpu.trace_start"() <{level = 10 : i32, message = "bqk,bkd->bqd"}> : () -> ()
    %cst_64 = arith.constant dense<0.000000e+00> : vector<8x16x32xf32>
    %229 = tpu.matmul %228, %215, %cst_64 {dimension_numbers = #tpu.dot_dimension_numbers<[2], [1], [1], [2], [0, 0, 0, 1, 1, 2], [0], [0]>} : vector<8x16x16xbf16>, vector<8x16x32xbf16>, vector<8x16x32xf32> -> vector<8x16x32xf32>
    "tpu.trace_stop"() : () -> ()
    %230 = tpu.concatenate %160, %183, %206, %229 in 2 : vector<8x16x32xf32>, vector<8x16x32xf32>, vector<8x16x32xf32>, vector<8x16x32xf32> -> vector<8x16x128xf32>
    %231 = vector.shape_cast %230 : vector<8x16x128xf32> to vector<128x128xf32>
    %232 = arith.truncf %231 : vector<128x128xf32> to vector<128x128xbf16>
    %c0_65 = arith.constant 0 : index
    %c0_66 = arith.constant 0 : index
    %233 = vector.load %arg12[%c0_65, %c0_66] : memref<128x128xbf16, #tpu.memory_space<vmem>>, vector<128x128xbf16>
    %cst_67 = arith.constant dense<0.000000e+00> : vector<128x128xf32>
    %234 = tpu.matmul %232, %233, %cst_67 {dimension_numbers = #tpu.dot_dimension_numbers<[1], [0], [0], [1], [0, 0, 1, 1], [], []>} : vector<128x128xbf16>, vector<128x128xbf16>, vector<128x128xf32> -> vector<128x128xf32>
    %c0_68 = arith.constant 0 : index
    %c0_69 = arith.constant 0 : index
    %235 = vector.load %arg13[%c0_68, %c0_69] : memref<1x128xf32, #tpu.memory_space<vmem>>, vector<1x128xf32>
    %236 = vector.broadcast %235 : vector<1x128xf32> to vector<128x128xf32>
    %237 = arith.addf %234, %236 : vector<128x128xf32>
    %238 = arith.addf %237, %131 : vector<128x128xf32>
    %cst_70 = arith.constant dense<0.000000e+00> : vector<128xf32>
    %239 = vector.multi_reduction <add>, %238, %cst_70 [1] : vector<128x128xf32> to vector<128xf32>
    %240 = vector.shape_cast %239 : vector<128xf32> to vector<128x1xf32>
    %cst_71 = arith.constant 1.280000e+02 : f32
    %241 = vector.broadcast %cst_71 : f32 to vector<128x1xf32>
    %242 = arith.divf %240, %241 : vector<128x1xf32>
    %243 = vector.broadcast %242 : vector<128x1xf32> to vector<128x128xf32>
    %244 = arith.subf %238, %243 : vector<128x128xf32>
    %245 = arith.mulf %244, %244 : vector<128x128xf32>
    %cst_72 = arith.constant dense<0.000000e+00> : vector<128xf32>
    %246 = vector.multi_reduction <add>, %245, %cst_72 [1] : vector<128x128xf32> to vector<128xf32>
    %247 = vector.shape_cast %246 : vector<128xf32> to vector<128x1xf32>
    %cst_73 = arith.constant 1.280000e+02 : f32
    %248 = vector.broadcast %cst_73 : f32 to vector<128x1xf32>
    %249 = arith.divf %247, %248 : vector<128x1xf32>
    %cst_74 = arith.constant 9.99999974E-6 : f32
    %250 = vector.broadcast %cst_74 : f32 to vector<128x1xf32>
    %251 = arith.addf %249, %250 : vector<128x1xf32>
    %252 = math.rsqrt %251 : vector<128x1xf32>
    %253 = vector.broadcast %252 : vector<128x1xf32> to vector<128x128xf32>
    %254 = arith.mulf %244, %253 : vector<128x128xf32>
    %c0_75 = arith.constant 0 : index
    %c0_76 = arith.constant 0 : index
    %255 = vector.load %arg14[%c0_75, %c0_76] : memref<1x128xf32, #tpu.memory_space<vmem>>, vector<1x128xf32>
    %256 = vector.broadcast %255 : vector<1x128xf32> to vector<128x128xf32>
    %257 = arith.mulf %254, %256 : vector<128x128xf32>
    %c0_77 = arith.constant 0 : index
    %c0_78 = arith.constant 0 : index
    %258 = vector.load %arg15[%c0_77, %c0_78] : memref<1x128xf32, #tpu.memory_space<vmem>>, vector<1x128xf32>
    %259 = vector.broadcast %258 : vector<1x128xf32> to vector<128x128xf32>
    %260 = arith.addf %257, %259 : vector<128x128xf32>
    %261 = arith.truncf %260 : vector<128x128xf32> to vector<128x128xbf16>
    %c0_79 = arith.constant 0 : index
    %c0_80 = arith.constant 0 : index
    %262 = vector.load %arg18[%c0_79, %c0_80] : memref<128x256xbf16, #tpu.memory_space<vmem>>, vector<128x256xbf16>
    %cst_81 = arith.constant dense<0.000000e+00> : vector<128x256xf32>
    %263 = tpu.matmul %261, %262, %cst_81 {dimension_numbers = #tpu.dot_dimension_numbers<[1], [0], [0], [1], [0, 0, 1, 1], [], []>} : vector<128x128xbf16>, vector<128x256xbf16>, vector<128x256xf32> -> vector<128x256xf32>
    %c0_82 = arith.constant 0 : index
    %c0_83 = arith.constant 0 : index
    %264 = vector.load %arg19[%c0_82, %c0_83] : memref<1x256xf32, #tpu.memory_space<vmem>>, vector<1x256xf32>
    %265 = vector.broadcast %264 : vector<1x256xf32> to vector<128x256xf32>
    %266 = arith.addf %263, %265 : vector<128x256xf32>
    %cst_84 = arith.constant 0.000000e+00 : f32
    %267 = vector.broadcast %cst_84 : f32 to vector<128x256xf32>
    %268 = arith.maximumf %266, %267 : vector<128x256xf32>
    %269 = arith.truncf %268 : vector<128x256xf32> to vector<128x256xbf16>
    %c0_85 = arith.constant 0 : index
    %c0_86 = arith.constant 0 : index
    %270 = vector.load %arg20[%c0_85, %c0_86] : memref<256x128xbf16, #tpu.memory_space<vmem>>, vector<256x128xbf16>
    %cst_87 = arith.constant dense<0.000000e+00> : vector<128x128xf32>
    %271 = tpu.matmul %269, %270, %cst_87 {dimension_numbers = #tpu.dot_dimension_numbers<[1], [0], [0], [1], [0, 0, 1, 1], [], []>} : vector<128x256xbf16>, vector<256x128xbf16>, vector<128x128xf32> -> vector<128x128xf32>
    %c0_88 = arith.constant 0 : index
    %c0_89 = arith.constant 0 : index
    %272 = vector.load %arg21[%c0_88, %c0_89] : memref<1x128xf32, #tpu.memory_space<vmem>>, vector<1x128xf32>
    %273 = vector.broadcast %272 : vector<1x128xf32> to vector<128x128xf32>
    %274 = arith.addf %271, %273 : vector<128x128xf32>
    %275 = arith.addf %260, %274 : vector<128x128xf32>
    %cst_90 = arith.constant dense<0.000000e+00> : vector<128xf32>
    %276 = vector.multi_reduction <add>, %275, %cst_90 [1] : vector<128x128xf32> to vector<128xf32>
    %277 = vector.shape_cast %276 : vector<128xf32> to vector<128x1xf32>
    %cst_91 = arith.constant 1.280000e+02 : f32
    %278 = vector.broadcast %cst_91 : f32 to vector<128x1xf32>
    %279 = arith.divf %277, %278 : vector<128x1xf32>
    %280 = vector.broadcast %279 : vector<128x1xf32> to vector<128x128xf32>
    %281 = arith.subf %275, %280 : vector<128x128xf32>
    %282 = arith.mulf %281, %281 : vector<128x128xf32>
    %cst_92 = arith.constant dense<0.000000e+00> : vector<128xf32>
    %283 = vector.multi_reduction <add>, %282, %cst_92 [1] : vector<128x128xf32> to vector<128xf32>
    %284 = vector.shape_cast %283 : vector<128xf32> to vector<128x1xf32>
    %cst_93 = arith.constant 1.280000e+02 : f32
    %285 = vector.broadcast %cst_93 : f32 to vector<128x1xf32>
    %286 = arith.divf %284, %285 : vector<128x1xf32>
    %cst_94 = arith.constant 9.99999974E-6 : f32
    %287 = vector.broadcast %cst_94 : f32 to vector<128x1xf32>
    %288 = arith.addf %286, %287 : vector<128x1xf32>
    %289 = math.rsqrt %288 : vector<128x1xf32>
    %290 = vector.broadcast %289 : vector<128x1xf32> to vector<128x128xf32>
    %291 = arith.mulf %281, %290 : vector<128x128xf32>
    %c0_95 = arith.constant 0 : index
    %c0_96 = arith.constant 0 : index
    %292 = vector.load %arg16[%c0_95, %c0_96] : memref<1x128xf32, #tpu.memory_space<vmem>>, vector<1x128xf32>
    %293 = vector.broadcast %292 : vector<1x128xf32> to vector<128x128xf32>
    %294 = arith.mulf %291, %293 : vector<128x128xf32>
    %c0_97 = arith.constant 0 : index
    %c0_98 = arith.constant 0 : index
    %295 = vector.load %arg17[%c0_97, %c0_98] : memref<1x128xf32, #tpu.memory_space<vmem>>, vector<1x128xf32>
    %296 = vector.broadcast %295 : vector<1x128xf32> to vector<128x128xf32>
    %297 = arith.addf %294, %296 : vector<128x128xf32>
    %298 = vector.shape_cast %297 : vector<128x128xf32> to vector<8x16x128xf32>
    %c0_99 = arith.constant 0 : index
    %c0_100 = arith.constant 0 : index
    %c0_101 = arith.constant 0 : index
    %299 = vector.load %arg22[%c0_99, %c0_100, %c0_101] : memref<8x16x128xf32, #tpu.memory_space<vmem>>, vector<8x16x128xf32>
    tpu.vector_store %arg22[%c0_99, %c0_100, %c0_101], %298 {strides = array<i32>} : memref<8x16x128xf32, #tpu.memory_space<vmem>>, vector<8x16x128xf32>,
    return
  }
  func.func @transform_0(%arg0: i32) -> (i32, i32, i32) {
    %c0_i32 = arith.constant 0 : i32
    %c0_i32_0 = arith.constant 0 : i32
    %c0_i32_1 = arith.constant 0 : i32
    return %arg0, %c0_i32, %c0_i32_0 : i32, i32, i32
  }
  func.func @transform_1(%arg0: i32) -> (i32, i32, i32) {
    %c0_i32 = arith.constant 0 : i32
    %c0_i32_0 = arith.constant 0 : i32
    %c0_i32_1 = arith.constant 0 : i32
    return %arg0, %c0_i32, %c0_i32_0 : i32, i32, i32
  }
  func.func @transform_2(%arg0: i32) -> (i32, i32, i32) {
    %c0_i32 = arith.constant 0 : i32
    %c0_i32_0 = arith.constant 0 : i32
    %c0_i32_1 = arith.constant 0 : i32
    return %arg0, %c0_i32, %c0_i32_0 : i32, i32, i32
  }
  func.func @transform_3(%arg0: i32) -> (i32, i32, i32) {
    %c0_i32 = arith.constant 0 : i32
    %c0_i32_0 = arith.constant 0 : i32
    %c0_i32_1 = arith.constant 0 : i32
    return %arg0, %c0_i32, %c0_i32_0 : i32, i32, i32
  }
  func.func @transform_4(%arg0: i32) -> (i32, i32) {
    %c0_i32 = arith.constant 0 : i32
    %c0_i32_0 = arith.constant 0 : i32
    %c0_i32_1 = arith.constant 0 : i32
    return %c0_i32, %c0_i32_0 : i32, i32
  }
  func.func @transform_5(%arg0: i32) -> (i32, i32) {
    %c0_i32 = arith.constant 0 : i32
    %c0_i32_0 = arith.constant 0 : i32
    %c0_i32_1 = arith.constant 0 : i32
    return %c0_i32, %c0_i32_0 : i32, i32
  }
  func.func @transform_6(%arg0: i32) -> (i32, i32) {
    %c0_i32 = arith.constant 0 : i32
    %c0_i32_0 = arith.constant 0 : i32
    %c0_i32_1 = arith.constant 0 : i32
    return %c0_i32, %c0_i32_0 : i32, i32
  }
  func.func @transform_7(%arg0: i32) -> (i32, i32) {
    %c0_i32 = arith.constant 0 : i32
    %c0_i32_0 = arith.constant 0 : i32
    %c0_i32_1 = arith.constant 0 : i32
    return %c0_i32, %c0_i32_0 : i32, i32
  }
  func.func @transform_8(%arg0: i32) -> (i32, i32) {
    %c0_i32 = arith.constant 0 : i32
    %c0_i32_0 = arith.constant 0 : i32
    %c0_i32_1 = arith.constant 0 : i32
    return %c0_i32, %c0_i32_0 : i32, i32
  }
  func.func @transform_9(%arg0: i32) -> (i32, i32) {
    %c0_i32 = arith.constant 0 : i32
    %c0_i32_0 = arith.constant 0 : i32
    %c0_i32_1 = arith.constant 0 : i32
    return %c0_i32, %c0_i32_0 : i32, i32
  }
  func.func @transform_10(%arg0: i32) -> (i32, i32) {
    %c0_i32 = arith.constant 0 : i32
    %c0_i32_0 = arith.constant 0 : i32
    %c0_i32_1 = arith.constant 0 : i32
    return %c0_i32, %c0_i32_0 : i32, i32
  }
  func.func @transform_11(%arg0: i32) -> (i32, i32) {
    %c0_i32 = arith.constant 0 : i32
    %c0_i32_0 = arith.constant 0 : i32
    %c0_i32_1 = arith.constant 0 : i32
    return %c0_i32, %c0_i32_0 : i32, i32
  }
  func.func @transform_12(%arg0: i32) -> (i32, i32) {
    %c0_i32 = arith.constant 0 : i32
    %c0_i32_0 = arith.constant 0 : i32
    %c0_i32_1 = arith.constant 0 : i32
    return %c0_i32, %c0_i32_0 : i32, i32
  }
  func.func @transform_13(%arg0: i32) -> (i32, i32) {
    %c0_i32 = arith.constant 0 : i32
    %c0_i32_0 = arith.constant 0 : i32
    %c0_i32_1 = arith.constant 0 : i32
    return %c0_i32, %c0_i32_0 : i32, i32
  }
  func.func @transform_14(%arg0: i32) -> (i32, i32) {
    %c0_i32 = arith.constant 0 : i32
    %c0_i32_0 = arith.constant 0 : i32
    %c0_i32_1 = arith.constant 0 : i32
    return %c0_i32, %c0_i32_0 : i32, i32
  }
  func.func @transform_15(%arg0: i32) -> (i32, i32) {
    %c0_i32 = arith.constant 0 : i32
    %c0_i32_0 = arith.constant 0 : i32
    %c0_i32_1 = arith.constant 0 : i32
    return %c0_i32, %c0_i32_0 : i32, i32
  }
  func.func @transform_16(%arg0: i32) -> (i32, i32) {
    %c0_i32 = arith.constant 0 : i32
    %c0_i32_0 = arith.constant 0 : i32
    %c0_i32_1 = arith.constant 0 : i32
    return %c0_i32, %c0_i32_0 : i32, i32
  }
  func.func @transform_17(%arg0: i32) -> (i32, i32) {
    %c0_i32 = arith.constant 0 : i32
    %c0_i32_0 = arith.constant 0 : i32
    %c0_i32_1 = arith.constant 0 : i32
    return %c0_i32, %c0_i32_0 : i32, i32
  }
  func.func @transform_18(%arg0: i32) -> (i32, i32) {
    %c0_i32 = arith.constant 0 : i32
    %c0_i32_0 = arith.constant 0 : i32
    %c0_i32_1 = arith.constant 0 : i32
    return %c0_i32, %c0_i32_0 : i32, i32
  }
  func.func @transform_19(%arg0: i32) -> (i32, i32) {
    %c0_i32 = arith.constant 0 : i32
    %c0_i32_0 = arith.constant 0 : i32
    %c0_i32_1 = arith.constant 0 : i32
    return %c0_i32, %c0_i32_0 : i32, i32
  }
  func.func @transform_20(%arg0: i32) -> (i32, i32) {
    %c0_i32 = arith.constant 0 : i32
    %c0_i32_0 = arith.constant 0 : i32
    %c0_i32_1 = arith.constant 0 : i32
    return %c0_i32, %c0_i32_0 : i32, i32
  }
  func.func @transform_21(%arg0: i32) -> (i32, i32, i32) {
    %c0_i32 = arith.constant 0 : i32
    %c0_i32_0 = arith.constant 0 : i32
    %c0_i32_1 = arith.constant 0 : i32
    return %arg0, %c0_i32, %c0_i32_0 : i32, i32, i32
  }
}

module attributes {stable_mosaic.version = 11 : i64} {
  func.func @_linear_kernel(%arg0: i32, %arg1: memref<128x128xf32, #tpu.memory_space<vmem>>, %arg2: memref<128x128xbf16, #tpu.memory_space<vmem>>, %arg3: memref<1x128xf32, #tpu.memory_space<vmem>>, %arg4: memref<128x128xf32, #tpu.memory_space<vmem>>) attributes {dimension_semantics = [#tpu.dimension_semantics<parallel>], iteration_bounds = array<i64: 1>, scalar_prefetch = 0 : i64, scratch_operands = 0 : i64, tpu.core_type = #tpu.core_type<tc>, window_params = [{transform_indices = @transform_0, window_bounds = array<i64: 128, 128>}, {pipeline_mode = #tpu.pipeline_mode<synchronous>, transform_indices = @transform_1, window_bounds = array<i64: 128, 128>}, {pipeline_mode = #tpu.pipeline_mode<synchronous>, transform_indices = @transform_2, window_bounds = array<i64: 1, 128>}, {transform_indices = @transform_3, window_bounds = array<i64: 128, 128>}]} {
    %c0 = arith.constant 0 : index
    %c0_0 = arith.constant 0 : index
    %0 = vector.load %arg1[%c0, %c0_0] : memref<128x128xf32, #tpu.memory_space<vmem>>, vector<128x128xf32>
    %1 = arith.truncf %0 : vector<128x128xf32> to vector<128x128xbf16>
    %c0_1 = arith.constant 0 : index
    %c0_2 = arith.constant 0 : index
    %2 = vector.load %arg2[%c0_1, %c0_2] : memref<128x128xbf16, #tpu.memory_space<vmem>>, vector<128x128xbf16>
    %cst = arith.constant dense<0.000000e+00> : vector<128x128xf32>
    %3 = tpu.matmul %1, %2, %cst {dimension_numbers = #tpu.dot_dimension_numbers<[1], [0], [0], [1], [0, 0, 1, 1], [], []>} : vector<128x128xbf16>, vector<128x128xbf16>, vector<128x128xf32> -> vector<128x128xf32>
    %c0_3 = arith.constant 0 : index
    %c0_4 = arith.constant 0 : index
    %4 = vector.load %arg3[%c0_3, %c0_4] : memref<1x128xf32, #tpu.memory_space<vmem>>, vector<1x128xf32>
    %5 = vector.broadcast %4 : vector<1x128xf32> to vector<128x128xf32>
    %6 = arith.addf %3, %5 : vector<128x128xf32>
    %c0_5 = arith.constant 0 : index
    %c0_6 = arith.constant 0 : index
    %7 = vector.load %arg4[%c0_5, %c0_6] : memref<128x128xf32, #tpu.memory_space<vmem>>, vector<128x128xf32>
    tpu.vector_store %arg4[%c0_5, %c0_6], %6 {strides = array<i32>} : memref<128x128xf32, #tpu.memory_space<vmem>>, vector<128x128xf32>,
    return
  }
  func.func @transform_0(%arg0: i32) -> (i32, i32) {
    %c0_i32 = arith.constant 0 : i32
    %c0_i32_0 = arith.constant 0 : i32
    return %arg0, %c0_i32 : i32, i32
  }
  func.func @transform_1(%arg0: i32) -> (i32, i32) {
    %c0_i32 = arith.constant 0 : i32
    %c0_i32_0 = arith.constant 0 : i32
    %c0_i32_1 = arith.constant 0 : i32
    return %c0_i32, %c0_i32_0 : i32, i32
  }
  func.func @transform_2(%arg0: i32) -> (i32, i32) {
    %c0_i32 = arith.constant 0 : i32
    %c0_i32_0 = arith.constant 0 : i32
    %c0_i32_1 = arith.constant 0 : i32
    return %c0_i32, %c0_i32_0 : i32, i32
  }
  func.func @transform_3(%arg0: i32) -> (i32, i32) {
    %c0_i32 = arith.constant 0 : i32
    %c0_i32_0 = arith.constant 0 : i32
    return %arg0, %c0_i32 : i32, i32
  }
}

</mosaic_0001>

<llo_original>
// kernel: _lambda_.5
$region0: #{_lambda_.5}
  #allocation0 [shape = 'u32[]', space=smem, size = 0x4, offset = 0x4, fixed_abs, tag = 'smem constant byte address 0x4 - core index']
  #allocation1 [shape = 'u32[144,128]{1,0:T(1,128)}', space=vmem, size = 0x12000, scoped, tag = 'internal scratch']
  %s0 = inlined_call_operand.vmem [shape: f32[128,128], index: 0, kind: input, shape index: {}]
  %s1 = inlined_call_operand.vmem [shape: bf16[128,128], index: 1, kind: input, shape index: {}]
  %s2 = inlined_call_operand.vmem [shape: f32[1,128], index: 2, kind: input, shape index: {}]
  %s3 = inlined_call_operand.vmem [shape: f32[128,128], index: 3, kind: output, shape index: {}]
  %s4 = sld [smem:[#allocation0]]
  $region22: #{_lambda_.5} parent=0
    _
  %s6 = ssub.s32 1, %s4
  %s7 = scalar_select 0, %s6, %s4
  // Predicated region
  $region2: #{_lambda_.5} parent=0 // pred_check
    _
  $region3: #{_lambda_.5} parent=0 // pred_check_branch
    %9 = sbr.rel (0) target = $region5
  $region4: #{_lambda_.5} parent=0 // pred_region
    _
  $region5: #{_lambda_.5} parent=0 // pred_fallthru
    _
  // Predicated region
  $region6: #{_lambda_.5} parent=0 // pred_check
    _
  $region7: #{_lambda_.5} parent=0 // pred_check_branch
    %11 = sbr.rel (0) target = $region9
  $region8: #{_lambda_.5} parent=0 // pred_region
    _
  $region9: #{_lambda_.5} parent=0 // pred_fallthru
    _
  // Predicated region
  $region10: #{_lambda_.5} parent=0 // pred_check
    _
  $region11: #{_lambda_.5} parent=0 // pred_check_branch
    %13 = sbr.rel (0) target = $region13
  $region12: #{_lambda_.5} parent=0 // pred_region
    _
  $region13: #{_lambda_.5} parent=0 // pred_fallthru
    _
  %v15 = vld [vmem:[%s0] sm:$0xff]
  %v16 = vld [vmem:[%s0 + $0x8] sm:$0xff]
  %v17 = vld [vmem:[%s0 + $0x10] sm:$0xff]
  %v18 = vld [vmem:[%s0 + $0x18] sm:$0xff]
  %v19 = vld [vmem:[%s0 + $0x20] sm:$0xff]
  %v20 = vld [vmem:[%s0 + $0x28] sm:$0xff]
  %v21 = vld [vmem:[%s0 + $0x30] sm:$0xff]
  %v22 = vld [vmem:[%s0 + $0x38] sm:$0xff]
  %v23 = vld [vmem:[%s0 + $0x40] sm:$0xff]
  %v24 = vld [vmem:[%s0 + $0x48] sm:$0xff]
  %v25 = vld [vmem:[%s0 + $0x50] sm:$0xff]
  %v26 = vld [vmem:[%s0 + $0x58] sm:$0xff]
  %v27 = vld [vmem:[%s0 + $0x60] sm:$0xff]
  %v28 = vld [vmem:[%s0 + $0x68] sm:$0xff]
  %v29 = vld [vmem:[%s0 + $0x70] sm:$0xff]
  %v30 = vld [vmem:[%s0 + $0x78] sm:$0xff]
  %v31 = vpack.c.bf16 %v16, %v15
  %v32 = vpack.c.bf16 %v18, %v17
  %v33 = vpack.c.bf16 %v20, %v19
  %v34 = vpack.c.bf16 %v22, %v21
  %v35 = vpack.c.bf16 %v24, %v23
  %v36 = vpack.c.bf16 %v26, %v25
  %v37 = vpack.c.bf16 %v28, %v27
  %v38 = vpack.c.bf16 %v30, %v29
  %v39 = vld [vmem:[%s1] sm:$0xf]
  %v40 = vld [vmem:[%s1 + $0x4] sm:$0xf]
  %v41 = vld [vmem:[%s1 + $0x8] sm:$0xf]
  %v42 = vld [vmem:[%s1 + $0xc] sm:$0xf]
  %v43 = vld [vmem:[%s1 + $0x10] sm:$0xf]
  %v44 = vld [vmem:[%s1 + $0x14] sm:$0xf]
  %v45 = vld [vmem:[%s1 + $0x18] sm:$0xf]
  %v46 = vld [vmem:[%s1 + $0x1c] sm:$0xf]
  %v47 = vld [vmem:[%s1 + $0x20] sm:$0xf]
  %v48 = vld [vmem:[%s1 + $0x24] sm:$0xf]
  %v49 = vld [vmem:[%s1 + $0x28] sm:$0xf]
  %v50 = vld [vmem:[%s1 + $0x2c] sm:$0xf]
  %v51 = vld [vmem:[%s1 + $0x30] sm:$0xf]
  %v52 = vld [vmem:[%s1 + $0x34] sm:$0xf]
  %v53 = vld [vmem:[%s1 + $0x38] sm:$0xf]
  %v54 = vld [vmem:[%s1 + $0x3c] sm:$0xf]
  %v55 = vld [vmem:[%s2] sm:$0x1]
  %v57 = vlaneseq
  %v58 = vshrl.u32 %v57, 7
  %v59 = vsub.s32 0, %v58
  %v60 = vrot.slane %v55, %v59
  %v78 = vunpack.c.l.b16 %v39
  %v79 = vunpack.c.l.b16 %v40
  %v80 = vunpack.c.l.b16 %v41
  %v81 = vunpack.c.l.b16 %v42
  %v82 = vunpack.c.l.b16 %v43
  %v83 = vunpack.c.l.b16 %v44
  %v84 = vunpack.c.l.b16 %v45
  %v85 = vunpack.c.l.b16 %v46
  %v86 = vunpack.c.l.b16 %v47
  %v87 = vunpack.c.l.b16 %v48
  %v88 = vunpack.c.l.b16 %v49
  %v89 = vunpack.c.l.b16 %v50
  %v90 = vunpack.c.l.b16 %v51
  %v91 = vunpack.c.l.b16 %v52
  %v92 = vunpack.c.l.b16 %v53
  %v93 = vunpack.c.l.b16 %v54
  %v94 = vpack.c.b16 %v79, %v78
  %v95 = vpack.c.b16 %v81, %v80
  %v96 = vpack.c.b16 %v83, %v82
  %v97 = vpack.c.b16 %v85, %v84
  %v98 = vpack.c.b16 %v87, %v86
  %v99 = vpack.c.b16 %v89, %v88
  %v100 = vpack.c.b16 %v91, %v90
  %v101 = vpack.c.b16 %v93, %v92
  %110 = vmatprep.subr.bf16.mxu0 0
  %111 = vmatpush1.bf16.msra.mxu0 %v101
  %112 = vmatprep.subr.bf16.mxu0 0
  %113 = vmatpush1.bf16.msra.mxu0 %v100
  %114 = vmatprep.subr.bf16.mxu0 0
  %115 = vmatpush1.bf16.msra.mxu0 %v99
  %116 = vmatprep.subr.bf16.mxu0 0
  %117 = vmatpush1.bf16.msra.mxu0 %v98
  %118 = vmatprep.subr.bf16.mxu0 0
  %119 = vmatpush1.bf16.msra.mxu0 %v97
  %120 = vmatprep.subr.bf16.mxu0 0
  %121 = vmatpush1.bf16.msra.mxu0 %v96
  %122 = vmatprep.subr.bf16.mxu0 0
  %123 = vmatpush1.bf16.msra.mxu0 %v95
  %124 = vmatprep.subr.bf16.mxu0 0
  %125 = vmatpush1.bf16.msra.mxu0 %v94
  %126 = vmatprep.subr.bf16.mxu0 0
  %127 = vmatpush2.bf16.msra.mxu0 0
  %128 = vmatprep.subr.bf16.mxu0 0
  %129 = vmatpush2.bf16.msra.mxu0 0
  %130 = vmatprep.subr.bf16.mxu0 0
  %131 = vmatpush2.bf16.msra.mxu0 0
  %132 = vmatprep.subr.bf16.mxu0 0
  %133 = vmatpush2.bf16.msra.mxu0 0
  %134 = vmatprep.subr.bf16.mxu0 0
  %135 = vmatpush2.bf16.msra.mxu0 0
  %136 = vmatprep.subr.bf16.mxu0 0
  %137 = vmatpush2.bf16.msra.mxu0 0
  %138 = vmatprep.subr.bf16.mxu0 0
  %139 = vmatpush2.bf16.msra.mxu0 0
  %140 = vmatprep.subr.bf16.mxu0 0
  %141 = vmatpush2.bf16.msra.mxu0 0
  %142 = vmatprep.mubr.bf16.mxu0 0
  %143 = vmatmul.mubr.bf16.gmra.mxu0 %v31
  %v144 = vpop.f32.mrf.mxu0
  %v145 = vadd.f32 %v60, %v144
  %v146 = vpop.f32.mrf.mxu0
  %v147 = vpop.f32.mrf.mxu0
  %v148 = vadd.f32 %v60, %v147
  %v149 = vpop.f32.mrf.mxu0
  %150 = vmatprep.mubr.bf16.mxu0 0
  %151 = vmatmul.mubr.bf16.gmra.mxu0 %v32
  %v152 = vpop.f32.mrf.mxu0
  %v153 = vadd.f32 %v60, %v152
  %v154 = vpop.f32.mrf.mxu0
  %v155 = vpop.f32.mrf.mxu0
  %v156 = vadd.f32 %v60, %v155
  %v157 = vpop.f32.mrf.mxu0
  %158 = vmatprep.mubr.bf16.mxu0 0
  %159 = vmatmul.mubr.bf16.gmra.mxu0 %v33
  %v160 = vpop.f32.mrf.mxu0
  %v161 = vadd.f32 %v60, %v160
  %v162 = vpop.f32.mrf.mxu0
  %v163 = vpop.f32.mrf.mxu0
  %v164 = vadd.f32 %v60, %v163
  %v165 = vpop.f32.mrf.mxu0
  %166 = vmatprep.mubr.bf16.mxu0 0
  %167 = vmatmul.mubr.bf16.gmra.mxu0 %v34
  %v168 = vpop.f32.mrf.mxu0
  %v169 = vadd.f32 %v60, %v168
  %v170 = vpop.f32.mrf.mxu0
  %v171 = vpop.f32.mrf.mxu0
  %v172 = vadd.f32 %v60, %v171
  %v173 = vpop.f32.mrf.mxu0
  %174 = vmatprep.mubr.bf16.mxu0 0
  %175 = vmatmul.mubr.bf16.gmra.mxu0 %v35
  %v176 = vpop.f32.mrf.mxu0
  %v177 = vadd.f32 %v60, %v176
  %v178 = vpop.f32.mrf.mxu0
  %v179 = vpop.f32.mrf.mxu0
  %v180 = vadd.f32 %v60, %v179
  %v181 = vpop.f32.mrf.mxu0
  %182 = vmatprep.mubr.bf16.mxu0 0
  %183 = vmatmul.mubr.bf16.gmra.mxu0 %v36
  %v184 = vpop.f32.mrf.mxu0
  %v185 = vadd.f32 %v60, %v184
  %v186 = vpop.f32.mrf.mxu0
  %v187 = vpop.f32.mrf.mxu0
  %v188 = vadd.f32 %v60, %v187
  %v189 = vpop.f32.mrf.mxu0
  %190 = vmatprep.mubr.bf16.mxu0 0
  %191 = vmatmul.mubr.bf16.gmra.mxu0 %v37
  %v192 = vpop.f32.mrf.mxu0
  %v193 = vadd.f32 %v60, %v192
  %v194 = vpop.f32.mrf.mxu0
  %v195 = vpop.f32.mrf.mxu0
  %v196 = vadd.f32 %v60, %v195
  %v197 = vpop.f32.mrf.mxu0
  %198 = vmatprep.mubr.bf16.mxu0 0
  %199 = vmatmul.mubr.bf16.gmra.mxu0 %v38
  %v200 = vpop.f32.mrf.mxu0
  %v201 = vadd.f32 %v60, %v200
  %v202 = vpop.f32.mrf.mxu0
  %v203 = vpop.f32.mrf.mxu0
  %v204 = vadd.f32 %v60, %v203
  %v205 = vpop.f32.mrf.mxu0
  %206 = vdwg.mxu0
  %207 = vst [vmem:[%s3] sm:$0xff] %v145
  %208 = vst [vmem:[%s3 + $0x8] sm:$0xff] %v148
  %209 = vst [vmem:[%s3 + $0x10] sm:$0xff] %v153
  %210 = vst [vmem:[%s3 + $0x18] sm:$0xff] %v156
  %211 = vst [vmem:[%s3 + $0x20] sm:$0xff] %v161
  %212 = vst [vmem:[%s3 + $0x28] sm:$0xff] %v164
  %213 = vst [vmem:[%s3 + $0x30] sm:$0xff] %v169
  %214 = vst [vmem:[%s3 + $0x38] sm:$0xff] %v172
  %215 = vst [vmem:[%s3 + $0x40] sm:$0xff] %v177
  %216 = vst [vmem:[%s3 + $0x48] sm:$0xff] %v180
  %217 = vst [vmem:[%s3 + $0x50] sm:$0xff] %v185
  %218 = vst [vmem:[%s3 + $0x58] sm:$0xff] %v188
  %219 = vst [vmem:[%s3 + $0x60] sm:$0xff] %v193
  %220 = vst [vmem:[%s3 + $0x68] sm:$0xff] %v196
  %221 = vst [vmem:[%s3 + $0x70] sm:$0xff] %v201
  %222 = vst [vmem:[%s3 + $0x78] sm:$0xff] %v204
  // Predicated region
  $region14: #{_lambda_.5} parent=0 // pred_check
    _
  $region15: #{_lambda_.5} parent=0 // pred_check_branch
    %224 = sbr.rel (0) target = $region17
  $region16: #{_lambda_.5} parent=0 // pred_region
    _
  $region17: #{_lambda_.5} parent=0 // pred_fallthru
    _
  // Predicated region
  $region18: #{_lambda_.5} parent=0 // pred_check
    _
  $region19: #{_lambda_.5} parent=0 // pred_check_branch
    %226 = sbr.rel (0) target = $region21
  $region20: #{_lambda_.5} parent=0 // pred_region
    _
  $region21: #{_lambda_.5} parent=0 // pred_fallthru
    _

// kernel: _lambda_.3
$region0: #{_lambda_.3}
  #allocation0 [shape = 'u32[]', space=smem, size = 0x4, offset = 0x4, fixed_abs, tag = 'smem constant byte address 0x4 - core index']
  #allocation1 [shape = 'u32[144,128]{1,0:T(1,128)}', space=vmem, size = 0x12000, scoped, tag = 'internal scratch']
  %s0 = inlined_call_operand.vmem [shape: f32[8,16,128], index: 0, kind: input, shape index: {}]
  %s1 = inlined_call_operand.vmem [shape: f32[8,16,128], index: 1, kind: input, shape index: {}]
  %s2 = inlined_call_operand.vmem [shape: f32[8,16,16], index: 2, kind: input, shape index: {}]
  %s3 = inlined_call_operand.vmem [shape: f32[8,16,16], index: 3, kind: input, shape index: {}]
  %s4 = inlined_call_operand.vmem [shape: bf16[128,384], index: 4, kind: input, shape index: {}]
  %s5 = inlined_call_operand.vmem [shape: bf16[128,128], index: 5, kind: input, shape index: {}]
  %s6 = inlined_call_operand.vmem [shape: f32[1,128], index: 6, kind: input, shape index: {}]
  %s7 = inlined_call_operand.vmem [shape: f32[1,128], index: 7, kind: input, shape index: {}]
  %s8 = inlined_call_operand.vmem [shape: f32[1,128], index: 8, kind: input, shape index: {}]
  %s9 = inlined_call_operand.vmem [shape: bf16[128,128], index: 9, kind: input, shape index: {}]
  %s10 = inlined_call_operand.vmem [shape: bf16[128,256], index: 10, kind: input, shape index: {}]
  %s11 = inlined_call_operand.vmem [shape: bf16[128,128], index: 11, kind: input, shape index: {}]
  %s12 = inlined_call_operand.vmem [shape: f32[1,128], index: 12, kind: input, shape index: {}]
  %s13 = inlined_call_operand.vmem [shape: f32[1,128], index: 13, kind: input, shape index: {}]
  %s14 = inlined_call_operand.vmem [shape: f32[1,128], index: 14, kind: input, shape index: {}]
  %s15 = inlined_call_operand.vmem [shape: f32[1,128], index: 15, kind: input, shape index: {}]
  %s16 = inlined_call_operand.vmem [shape: f32[1,128], index: 16, kind: input, shape index: {}]
  %s17 = inlined_call_operand.vmem [shape: bf16[128,256], index: 17, kind: input, shape index: {}]
  %s18 = inlined_call_operand.vmem [shape: f32[1,256], index: 18, kind: input, shape index: {}]
  %s19 = inlined_call_operand.vmem [shape: bf16[256,128], index: 19, kind: input, shape index: {}]
  %s20 = inlined_call_operand.vmem [shape: f32[1,128], index: 20, kind: input, shape index: {}]
  %s21 = inlined_call_operand.vmem [shape: f32[8,16,128], index: 21, kind: output, shape index: {}]
  %s22 = sld [smem:[#allocation0]]
  $region94: #{_lambda_.3} parent=0
    _
  %s24 = ssub.s32 1, %s22
  %s25 = scalar_select 0, %s24, %s22
  // Predicated region
  $region2: #{_lambda_.3} parent=0 // pred_check
    _
  $region3: #{_lambda_.3} parent=0 // pred_check_branch
    %27 = sbr.rel (0) target = $region5
  $region4: #{_lambda_.3} parent=0 // pred_region
    _
  $region5: #{_lambda_.3} parent=0 // pred_fallthru
    _
  // Predicated region
  $region6: #{_lambda_.3} parent=0 // pred_check
    _
  $region7: #{_lambda_.3} parent=0 // pred_check_branch
    %29 = sbr.rel (0) target = $region9
  $region8: #{_lambda_.3} parent=0 // pred_region
    _
  $region9: #{_lambda_.3} parent=0 // pred_fallthru
    _
  // Predicated region
  $region10: #{_lambda_.3} parent=0 // pred_check
    _
  $region11: #{_lambda_.3} parent=0 // pred_check_branch
    %31 = sbr.rel (0) target = $region13
  $region12: #{_lambda_.3} parent=0 // pred_region
    _
  $region13: #{_lambda_.3} parent=0 // pred_fallthru
    _
  // Predicated region
  $region14: #{_lambda_.3} parent=0 // pred_check
    _
  $region15: #{_lambda_.3} parent=0 // pred_check_branch
    %33 = sbr.rel (0) target = $region17
  $region16: #{_lambda_.3} parent=0 // pred_region
    _
  $region17: #{_lambda_.3} parent=0 // pred_fallthru
    _
  // Predicated region
  $region18: #{_lambda_.3} parent=0 // pred_check
    _
  $region19: #{_lambda_.3} parent=0 // pred_check_branch
    %35 = sbr.rel (0) target = $region21
  $region20: #{_lambda_.3} parent=0 // pred_region
    _
  $region21: #{_lambda_.3} parent=0 // pred_fallthru
    _
  // Predicated region
  $region22: #{_lambda_.3} parent=0 // pred_check
    _
  $region23: #{_lambda_.3} parent=0 // pred_check_branch
    %37 = sbr.rel (0) target = $region25
  $region24: #{_lambda_.3} parent=0 // pred_region
    _
  $region25: #{_lambda_.3} parent=0 // pred_fallthru
    _
  // Predicated region
  $region26: #{_lambda_.3} parent=0 // pred_check
    _
  $region27: #{_lambda_.3} parent=0 // pred_check_branch
    %39 = sbr.rel (0) target = $region29
  $region28: #{_lambda_.3} parent=0 // pred_region
    _
  $region29: #{_lambda_.3} parent=0 // pred_fallthru
    _
  // Predicated region
  $region30: #{_lambda_.3} parent=0 // pred_check
    _
  $region31: #{_lambda_.3} parent=0 // pred_check_branch
    %41 = sbr.rel (0) target = $region33
  $region32: #{_lambda_.3} parent=0 // pred_region
    _
  $region33: #{_lambda_.3} parent=0 // pred_fallthru
    _
  // Predicated region
  $region34: #{_lambda_.3} parent=0 // pred_check
    _
  $region35: #{_lambda_.3} parent=0 // pred_check_branch
    %43 = sbr.rel (0) target = $region37
  $region36: #{_lambda_.3} parent=0 // pred_region
    _
  $region37: #{_lambda_.3} parent=0 // pred_fallthru
    _
  // Predicated region
  $region38: #{_lambda_.3} parent=0 // pred_check
    _
  $region39: #{_lambda_.3} parent=0 // pred_check_branch
    %45 = sbr.rel (0) target = $region41
  $region40: #{_lambda_.3} parent=0 // pred_region
    _
  $region41: #{_lambda_.3} parent=0 // pred_fallthru
    _
  // Predicated region
  $region42: #{_lambda_.3} parent=0 // pred_check
    _
  $region43: #{_lambda_.3} parent=0 // pred_check_branch
    %47 = sbr.rel (0) target = $region45
  $region44: #{_lambda_.3} parent=0 // pred_region
    _
  $region45: #{_lambda_.3} parent=0 // pred_fallthru
    _
  // Predicated region
  $region46: #{_lambda_.3} parent=0 // pred_check
    _
  $region47: #{_lambda_.3} parent=0 // pred_check_branch
    %49 = sbr.rel (0) target = $region49
  $region48: #{_lambda_.3} parent=0 // pred_region
    _
  $region49: #{_lambda_.3} parent=0 // pred_fallthru
    _
  // Predicated region
  $region50: #{_lambda_.3} parent=0 // pred_check
    _
  $region51: #{_lambda_.3} parent=0 // pred_check_branch
    %51 = sbr.rel (0) target = $region53
  $region52: #{_lambda_.3} parent=0 // pred_region
    _
  $region53: #{_lambda_.3} parent=0 // pred_fallthru
    _
  // Predicated region
  $region54: #{_lambda_.3} parent=0 // pred_check
    _
  $region55: #{_lambda_.3} parent=0 // pred_check_branch
    %53 = sbr.rel (0) target = $region57
  $region56: #{_lambda_.3} parent=0 // pred_region
    _
  $region57: #{_lambda_.3} parent=0 // pred_fallthru
    _
  // Predicated region
  $region58: #{_lambda_.3} parent=0 // pred_check
    _
  $region59: #{_lambda_.3} parent=0 // pred_check_branch
    %55 = sbr.rel (0) target = $region61
  $region60: #{_lambda_.3} parent=0 // pred_region
    _
  $region61: #{_lambda_.3} parent=0 // pred_fallthru
    _
  // Predicated region
  $region62: #{_lambda_.3} parent=0 // pred_check
    _
  $region63: #{_lambda_.3} parent=0 // pred_check_branch
    %57 = sbr.rel (0) target = $region65
  $region64: #{_lambda_.3} parent=0 // pred_region
    _
  $region65: #{_lambda_.3} parent=0 // pred_fallthru
    _
  // Predicated region
  $region66: #{_lambda_.3} parent=0 // pred_check
    _
  $region67: #{_lambda_.3} parent=0 // pred_check_branch
    %59 = sbr.rel (0) target = $region69
  $region68: #{_lambda_.3} parent=0 // pred_region
    _
  $region69: #{_lambda_.3} parent=0 // pred_fallthru
    _
  // Predicated region
  $region70: #{_lambda_.3} parent=0 // pred_check
    _
  $region71: #{_lambda_.3} parent=0 // pred_check_branch
    %61 = sbr.rel (0) target = $region73
  $region72: #{_lambda_.3} parent=0 // pred_region
    _
  $region73: #{_lambda_.3} parent=0 // pred_fallthru
    _
  // Predicated region
  $region74: #{_lambda_.3} parent=0 // pred_check
    _
  $region75: #{_lambda_.3} parent=0 // pred_check_branch
    %63 = sbr.rel (0) target = $region77
  $region76: #{_lambda_.3} parent=0 // pred_region
    _
  $region77: #{_lambda_.3} parent=0 // pred_fallthru
    _
  // Predicated region
  $region78: #{_lambda_.3} parent=0 // pred_check
    _
  $region79: #{_lambda_.3} parent=0 // pred_check_branch
    %65 = sbr.rel (0) target = $region81
  $region80: #{_lambda_.3} parent=0 // pred_region
    _
  $region81: #{_lambda_.3} parent=0 // pred_fallthru
    _
  // Predicated region
  $region82: #{_lambda_.3} parent=0 // pred_check
    _
  $region83: #{_lambda_.3} parent=0 // pred_check_branch
    %67 = sbr.rel (0) target = $region85
  $region84: #{_lambda_.3} parent=0 // pred_region
    _
  $region85: #{_lambda_.3} parent=0 // pred_fallthru
    _
  %v69 = vld [vmem:[%s0] sm:$0xff]
  %v70 = vld [vmem:[%s0 + $0x8] sm:$0xff]
  %v71 = vld [vmem:[%s0 + $0x10] sm:$0xff]
  %v72 = vld [vmem:[%s0 + $0x18] sm:$0xff]
  %v73 = vld [vmem:[%s0 + $0x20] sm:$0xff]
  %v74 = vld [vmem:[%s0 + $0x28] sm:$0xff]
  %v75 = vld [vmem:[%s0 + $0x30] sm:$0xff]
  %v76 = vld [vmem:[%s0 + $0x38] sm:$0xff]
  %v77 = vld [vmem:[%s0 + $0x40] sm:$0xff]
  %v78 = vld [vmem:[%s0 + $0x48] sm:$0xff]
  %v79 = vld [vmem:[%s0 + $0x50] sm:$0xff]
  %v80 = vld [vmem:[%s0 + $0x58] sm:$0xff]
  %v81 = vld [vmem:[%s0 + $0x60] sm:$0xff]
  %v82 = vld [vmem:[%s0 + $0x68] sm:$0xff]
  %v83 = vld [vmem:[%s0 + $0x70] sm:$0xff]
  %v84 = vld [vmem:[%s0 + $0x78] sm:$0xff]
  %v85 = vld [vmem:[%s1] sm:$0xff]
  %v86 = vld [vmem:[%s1 + $0x8] sm:$0xff]
  %v87 = vld [vmem:[%s1 + $0x10] sm:$0xff]
  %v88 = vld [vmem:[%s1 + $0x18] sm:$0xff]
  %v89 = vld [vmem:[%s1 + $0x20] sm:$0xff]
  %v90 = vld [vmem:[%s1 + $0x28] sm:$0xff]
  %v91 = vld [vmem:[%s1 + $0x30] sm:$0xff]
  %v92 = vld [vmem:[%s1 + $0x38] sm:$0xff]
  %v93 = vld [vmem:[%s1 + $0x40] sm:$0xff]
  %v94 = vld [vmem:[%s1 + $0x48] sm:$0xff]
  %v95 = vld [vmem:[%s1 + $0x50] sm:$0xff]
  %v96 = vld [vmem:[%s1 + $0x58] sm:$0xff]
  %v97 = vld [vmem:[%s1 + $0x60] sm:$0xff]
  %v98 = vld [vmem:[%s1 + $0x68] sm:$0xff]
  %v99 = vld [vmem:[%s1 + $0x70] sm:$0xff]
  %v100 = vld [vmem:[%s1 + $0x78] sm:$0xff]
  %v101 = vld [vmem:[%s3] sm:$0xff]
  %v102 = vld [vmem:[%s3 + $0x8] sm:$0xff]
  %v103 = vld [vmem:[%s3 + $0x10] sm:$0xff]
  %v104 = vld [vmem:[%s3 + $0x18] sm:$0xff]
  %v105 = vld [vmem:[%s3 + $0x20] sm:$0xff]
  %v106 = vld [vmem:[%s3 + $0x28] sm:$0xff]
  %v107 = vld [vmem:[%s3 + $0x30] sm:$0xff]
  %v108 = vld [vmem:[%s3 + $0x38] sm:$0xff]
  %v109 = vld [vmem:[%s3 + $0x40] sm:$0xff]
  %v110 = vld [vmem:[%s3 + $0x48] sm:$0xff]
  %v111 = vld [vmem:[%s3 + $0x50] sm:$0xff]
  %v112 = vld [vmem:[%s3 + $0x58] sm:$0xff]
  %v113 = vld [vmem:[%s3 + $0x60] sm:$0xff]
  %v114 = vld [vmem:[%s3 + $0x68] sm:$0xff]
  %v115 = vld [vmem:[%s3 + $0x70] sm:$0xff]
  %v116 = vld [vmem:[%s3 + $0x78] sm:$0xff]
  %v117 = vld [vmem:[%s2] sm:$0xff]
  %v118 = vld [vmem:[%s2 + $0x8] sm:$0xff]
  %v119 = vld [vmem:[%s2 + $0x10] sm:$0xff]
  %v120 = vld [vmem:[%s2 + $0x18] sm:$0xff]
  %v121 = vld [vmem:[%s2 + $0x20] sm:$0xff]
  %v122 = vld [vmem:[%s2 + $0x28] sm:$0xff]
  %v123 = vld [vmem:[%s2 + $0x30] sm:$0xff]
  %v124 = vld [vmem:[%s2 + $0x38] sm:$0xff]
  %v125 = vld [vmem:[%s2 + $0x40] sm:$0xff]
  %v126 = vld [vmem:[%s2 + $0x48] sm:$0xff]
  %v127 = vld [vmem:[%s2 + $0x50] sm:$0xff]
  %v128 = vld [vmem:[%s2 + $0x58] sm:$0xff]
  %v129 = vld [vmem:[%s2 + $0x60] sm:$0xff]
  %v130 = vld [vmem:[%s2 + $0x68] sm:$0xff]
  %v131 = vld [vmem:[%s2 + $0x70] sm:$0xff]
  %v132 = vld [vmem:[%s2 + $0x78] sm:$0xff]
  %v133 = vpack.c.bf16 %v70, %v69
  %v134 = vpack.c.bf16 %v72, %v71
  %v135 = vpack.c.bf16 %v74, %v73
  %v136 = vpack.c.bf16 %v76, %v75
  %v137 = vpack.c.bf16 %v78, %v77
  %v138 = vpack.c.bf16 %v80, %v79
  %v139 = vpack.c.bf16 %v82, %v81
  %v140 = vpack.c.bf16 %v84, %v83
  %v141 = vld [vmem:[%s4] sm:$0xff]
  %v142 = vld [vmem:[%s4 + $0x8] sm:$0xf]
  %v143 = vld [vmem:[%s4 + $0xc] sm:$0xff]
  %v144 = vld [vmem:[%s4 + $0x14] sm:$0xf]
  %v145 = vld [vmem:[%s4 + $0x18] sm:$0xff]
  %v146 = vld [vmem:[%s4 + $0x20] sm:$0xf]
  %v147 = vld [vmem:[%s4 + $0x24] sm:$0xff]
  %v148 = vld [vmem:[%s4 + $0x2c] sm:$0xf]
  %v149 = vld [vmem:[%s4 + $0x30] sm:$0xff]
  %v150 = vld [vmem:[%s4 + $0x38] sm:$0xf]
  %v151 = vld [vmem:[%s4 + $0x3c] sm:$0xff]
  %v152 = vld [vmem:[%s4 + $0x44] sm:$0xf]
  %v153 = vld [vmem:[%s4 + $0x48] sm:$0xff]
  %v154 = vld [vmem:[%s4 + $0x50] sm:$0xf]
  %v155 = vld [vmem:[%s4 + $0x54] sm:$0xff]
  %v156 = vld [vmem:[%s4 + $0x5c] sm:$0xf]
  %v157 = vld [vmem:[%s4 + $0x60] sm:$0xff]
  %v158 = vld [vmem:[%s4 + $0x68] sm:$0xf]
  %v159 = vld [vmem:[%s4 + $0x6c] sm:$0xff]
  %v160 = vld [vmem:[%s4 + $0x74] sm:$0xf]
  %v161 = vld [vmem:[%s4 + $0x78] sm:$0xff]
  %v162 = vld [vmem:[%s4 + $0x80] sm:$0xf]
  %v163 = vld [vmem:[%s4 + $0x84] sm:$0xff]
  %v164 = vld [vmem:[%s4 + $0x8c] sm:$0xf]
  %v165 = vld [vmem:[%s4 + $0x90] sm:$0xff]
  %v166 = vld [vmem:[%s4 + $0x98] sm:$0xf]
  %v167 = vld [vmem:[%s4 + $0x9c] sm:$0xff]
  %v168 = vld [vmem:[%s4 + $0xa4] sm:$0xf]
  %v169 = vld [vmem:[%s4 + $0xa8] sm:$0xff]
  %v170 = vld [vmem:[%s4 + $0xb0] sm:$0xf]
  %v171 = vld [vmem:[%s4 + $0xb4] sm:$0xff]
  %v172 = vld [vmem:[%s4 + $0xbc] sm:$0xf]
  %v205 = vunpack.c.l.b16 %v141
  %v206 = vunpack.c.h.b16 %v141
  %v207 = vunpack.c.l.b16 %v142
  %v208 = vunpack.c.l.b16 %v143
  %v209 = vunpack.c.h.b16 %v143
  %v210 = vunpack.c.l.b16 %v144
  %v211 = vunpack.c.l.b16 %v145
  %v212 = vunpack.c.h.b16 %v145
  %v213 = vunpack.c.l.b16 %v146
  %v214 = vunpack.c.l.b16 %v147
  %v215 = vunpack.c.h.b16 %v147
  %v216 = vunpack.c.l.b16 %v148
  %v217 = vunpack.c.l.b16 %v149
  %v218 = vunpack.c.h.b16 %v149
  %v219 = vunpack.c.l.b16 %v150
  %v220 = vunpack.c.l.b16 %v151
  %v221 = vunpack.c.h.b16 %v151
  %v222 = vunpack.c.l.b16 %v152
  %v223 = vunpack.c.l.b16 %v153
  %v224 = vunpack.c.h.b16 %v153
  %v225 = vunpack.c.l.b16 %v154
  %v226 = vunpack.c.l.b16 %v155
  %v227 = vunpack.c.h.b16 %v155
  %v228 = vunpack.c.l.b16 %v156
  %v229 = vunpack.c.l.b16 %v157
  %v230 = vunpack.c.h.b16 %v157
  %v231 = vunpack.c.l.b16 %v158
  %v232 = vunpack.c.l.b16 %v159
  %v233 = vunpack.c.h.b16 %v159
  %v234 = vunpack.c.l.b16 %v160
  %v235 = vunpack.c.l.b16 %v161
  %v236 = vunpack.c.h.b16 %v161
  %v237 = vunpack.c.l.b16 %v162
  %v238 = vunpack.c.l.b16 %v163
  %v239 = vunpack.c.h.b16 %v163
  %v240 = vunpack.c.l.b16 %v164
  %v241 = vunpack.c.l.b16 %v165
  %v242 = vunpack.c.h.b16 %v165
  %v243 = vunpack.c.l.b16 %v166
  %v244 = vunpack.c.l.b16 %v167
  %v245 = vunpack.c.h.b16 %v167
  %v246 = vunpack.c.l.b16 %v168
  %v247 = vunpack.c.l.b16 %v169
  %v248 = vunpack.c.h.b16 %v169
  %v249 = vunpack.c.l.b16 %v170
  %v250 = vunpack.c.l.b16 %v171
  %v251 = vunpack.c.h.b16 %v171
  %v252 = vunpack.c.l.b16 %v172
  %v253 = vpack.c.b16 %v208, %v205
  %v254 = vpack.c.b16 %v209, %v206
  %v255 = vpack.c.b16 %v210, %v207
  %v256 = vpack.c.b16 %v214, %v211
  %v257 = vpack.c.b16 %v215, %v212
  %v258 = vpack.c.b16 %v216, %v213
  %v259 = vpack.c.b16 %v220, %v217
  %v260 = vpack.c.b16 %v221, %v218
  %v261 = vpack.c.b16 %v222, %v219
  %v262 = vpack.c.b16 %v226, %v223
  %v263 = vpack.c.b16 %v227, %v224
  %v264 = vpack.c.b16 %v228, %v225
  %v265 = vpack.c.b16 %v232, %v229
  %v266 = vpack.c.b16 %v233, %v230
  %v267 = vpack.c.b16 %v234, %v231
  %v268 = vpack.c.b16 %v238, %v235
  %v269 = vpack.c.b16 %v239, %v236
  %v270 = vpack.c.b16 %v240, %v237
  %v271 = vpack.c.b16 %v244, %v241
  %v272 = vpack.c.b16 %v245, %v242
  %v273 = vpack.c.b16 %v246, %v243
  %v274 = vpack.c.b16 %v250, %v247
  %v275 = vpack.c.b16 %v251, %v248
  %v276 = vpack.c.b16 %v252, %v249
  %301 = vmatprep.subr.bf16.mxu0 %v275
  %302 = vmatpush1.bf16.msra.mxu0 %v274
  %303 = vmatprep.subr.bf16.mxu0 %v272
  %304 = vmatpush1.bf16.msra.mxu0 %v271
  %305 = vmatprep.subr.bf16.mxu0 %v269
  %306 = vmatpush1.bf16.msra.mxu0 %v268
  %307 = vmatprep.subr.bf16.mxu0 %v266
  %308 = vmatpush1.bf16.msra.mxu0 %v265
  %309 = vmatprep.subr.bf16.mxu0 %v263
  %310 = vmatpush1.bf16.msra.mxu0 %v262
  %311 = vmatprep.subr.bf16.mxu0 %v260
  %312 = vmatpush1.bf16.msra.mxu0 %v259
  %313 = vmatprep.subr.bf16.mxu0 %v257
  %314 = vmatpush1.bf16.msra.mxu0 %v256
  %315 = vmatprep.subr.bf16.mxu0 %v254
  %316 = vmatpush1.bf16.msra.mxu0 %v253
  %317 = vmatprep.subr.bf16.mxu0 0
  %318 = vmatpush2.bf16.msra.mxu0 0
  %319 = vmatprep.subr.bf16.mxu0 0
  %320 = vmatpush2.bf16.msra.mxu0 0
  %321 = vmatprep.subr.bf16.mxu0 0
  %322 = vmatpush2.bf16.msra.mxu0 0
  %323 = vmatprep.subr.bf16.mxu0 0
  %324 = vmatpush2.bf16.msra.mxu0 0
  %325 = vmatprep.subr.bf16.mxu0 0
  %326 = vmatpush2.bf16.msra.mxu0 0
  %327 = vmatprep.subr.bf16.mxu0 0
  %328 = vmatpush2.bf16.msra.mxu0 0
  %329 = vmatprep.subr.bf16.mxu0 0
  %330 = vmatpush2.bf16.msra.mxu0 0
  %331 = vmatprep.subr.bf16.mxu0 0
  %332 = vmatpush2.bf16.msra.mxu0 0
  %333 = vmatprep.mubr.bf16.mxu0 0
  %334 = vmatmul.mubr.bf16.gmra.mxu0 %v133
  %v335 = vpop.f32.mrf.mxu0
  %v336 = vadd.f32 0.0, %v335
  %v337 = vpop.f32.mrf.mxu0
  %v338 = vadd.f32 0.0, %v337
  %v339 = vpop.f32.mrf.mxu0
  %v340 = vadd.f32 0.0, %v339
  %v341 = vpop.f32.mrf.mxu0
  %v342 = vadd.f32 0.0, %v341
  %343 = vmatprep.mubr.bf16.mxu0 0
  %344 = vmatmul.mubr.bf16.gmra.mxu0 %v134
  %v345 = vpop.f32.mrf.mxu0
  %v346 = vadd.f32 0.0, %v345
  %v347 = vpop.f32.mrf.mxu0
  %v348 = vadd.f32 0.0, %v347
  %v349 = vpop.f32.mrf.mxu0
  %v350 = vadd.f32 0.0, %v349
  %v351 = vpop.f32.mrf.mxu0
  %v352 = vadd.f32 0.0, %v351
  %353 = vmatprep.mubr.bf16.mxu0 0
  %354 = vmatmul.mubr.bf16.gmra.mxu0 %v135
  %v355 = vpop.f32.mrf.mxu0
  %v356 = vadd.f32 0.0, %v355
  %v357 = vpop.f32.mrf.mxu0
  %v358 = vadd.f32 0.0, %v357
  %v359 = vpop.f32.mrf.mxu0
  %v360 = vadd.f32 0.0, %v359
  %v361 = vpop.f32.mrf.mxu0
  %v362 = vadd.f32 0.0, %v361
  %363 = vmatprep.mubr.bf16.mxu0 0
  %364 = vmatmul.mubr.bf16.gmra.mxu0 %v136
  %v365 = vpop.f32.mrf.mxu0
  %v366 = vadd.f32 0.0, %v365
  %v367 = vpop.f32.mrf.mxu0
  %v368 = vadd.f32 0.0, %v367
  %v369 = vpop.f32.mrf.mxu0
  %v370 = vadd.f32 0.0, %v369
  %v371 = vpop.f32.mrf.mxu0
  %v372 = vadd.f32 0.0, %v371
  %373 = vmatprep.mubr.bf16.mxu0 0
  %374 = vmatmul.mubr.bf16.gmra.mxu0 %v137
  %v375 = vpop.f32.mrf.mxu0
  %v376 = vadd.f32 0.0, %v375
  %v377 = vpop.f32.mrf.mxu0
  %v378 = vadd.f32 0.0, %v377
  %v379 = vpop.f32.mrf.mxu0
  %v380 = vadd.f32 0.0, %v379
  %v381 = vpop.f32.mrf.mxu0
  %v382 = vadd.f32 0.0, %v381
  %383 = vmatprep.mubr.bf16.mxu0 0
  %384 = vmatmul.mubr.bf16.gmra.mxu0 %v138
  %v385 = vpop.f32.mrf.mxu0
  %v386 = vadd.f32 0.0, %v385
  %v387 = vpop.f32.mrf.mxu0
  %v388 = vadd.f32 0.0, %v387
  %v389 = vpop.f32.mrf.mxu0
  %v390 = vadd.f32 0.0, %v389
  %v391 = vpop.f32.mrf.mxu0
  %v392 = vadd.f32 0.0, %v391
  %393 = vmatprep.mubr.bf16.mxu0 0
  %394 = vmatmul.mubr.bf16.gmra.mxu0 %v139
  %v395 = vpop.f32.mrf.mxu0
  %v396 = vadd.f32 0.0, %v395
  %v397 = vpop.f32.mrf.mxu0
  %v398 = vadd.f32 0.0, %v397
  %v399 = vpop.f32.mrf.mxu0
  %v400 = vadd.f32 0.0, %v399
  %v401 = vpop.f32.mrf.mxu0
  %v402 = vadd.f32 0.0, %v401
  %403 = vmatprep.mubr.bf16.mxu0 0
  %404 = vmatmul.mubr.bf16.gmra.mxu0 %v140
  %v405 = vpop.f32.mrf.mxu0
  %v406 = vadd.f32 0.0, %v405
  %v407 = vpop.f32.mrf.mxu0
  %v408 = vadd.f32 0.0, %v407
  %v409 = vpop.f32.mrf.mxu0
  %v410 = vadd.f32 0.0, %v409
  %v411 = vpop.f32.mrf.mxu0
  %v412 = vadd.f32 0.0, %v411
  %413 = vdwg.mxu0
  %414 = vmatprep.subr.bf16.mxu0 0
  %415 = vmatpush1.bf16.msra.mxu0 %v276
  %416 = vmatprep.subr.bf16.mxu0 0
  %417 = vmatpush1.bf16.msra.mxu0 %v273
  %418 = vmatprep.subr.bf16.mxu0 0
  %419 = vmatpush1.bf16.msra.mxu0 %v270
  %420 = vmatprep.subr.bf16.mxu0 0
  %421 = vmatpush1.bf16.msra.mxu0 %v267
  %422 = vmatprep.subr.bf16.mxu0 0
  %423 = vmatpush1.bf16.msra.mxu0 %v264
  %424 = vmatprep.subr.bf16.mxu0 0
  %425 = vmatpush1.bf16.msra.mxu0 %v261
  %426 = vmatprep.subr.bf16.mxu0 0
  %427 = vmatpush1.bf16.msra.mxu0 %v258
  %428 = vmatprep.subr.bf16.mxu0 0
  %429 = vmatpush1.bf16.msra.mxu0 %v255
  %430 = vmatprep.subr.bf16.mxu0 0
  %431 = vmatpush2.bf16.msra.mxu0 0
  %432 = vmatprep.subr.bf16.mxu0 0
  %433 = vmatpush2.bf16.msra.mxu0 0
  %434 = vmatprep.subr.bf16.mxu0 0
  %435 = vmatpush2.bf16.msra.mxu0 0
  %436 = vmatprep.subr.bf16.mxu0 0
  %437 = vmatpush2.bf16.msra.mxu0 0
  %438 = vmatprep.subr.bf16.mxu0 0
  %439 = vmatpush2.bf16.msra.mxu0 0
  %440 = vmatprep.subr.bf16.mxu0 0
  %441 = vmatpush2.bf16.msra.mxu0 0
  %442 = vmatprep.subr.bf16.mxu0 0
  %443 = vmatpush2.bf16.msra.mxu0 0
  %444 = vmatprep.subr.bf16.mxu0 0
  %445 = vmatpush2.bf16.msra.mxu0 0
  %446 = vmatprep.mubr.bf16.mxu0 0
  %447 = vmatmul.mubr.bf16.gmra.mxu0 %v133
  %v448 = vpop.f32.mrf.mxu0
  %v449 = vadd.f32 0.0, %v448
  %v450 = vpop.f32.mrf.mxu0
  %v451 = vpop.f32.mrf.mxu0
  %v452 = vadd.f32 0.0, %v451
  %v453 = vpop.f32.mrf.mxu0
  %454 = vmatprep.mubr.bf16.mxu0 0
  %455 = vmatmul.mubr.bf16.gmra.mxu0 %v134
  %v456 = vpop.f32.mrf.mxu0
  %v457 = vadd.f32 0.0, %v456
  %v458 = vpop.f32.mrf.mxu0
  %v459 = vpop.f32.mrf.mxu0
  %v460 = vadd.f32 0.0, %v459
  %v461 = vpop.f32.mrf.mxu0
  %462 = vmatprep.mubr.bf16.mxu0 0
  %463 = vmatmul.mubr.bf16.gmra.mxu0 %v135
  %v464 = vpop.f32.mrf.mxu0
  %v465 = vadd.f32 0.0, %v464
  %v466 = vpop.f32.mrf.mxu0
  %v467 = vpop.f32.mrf.mxu0
  %v468 = vadd.f32 0.0, %v467
  %v469 = vpop.f32.mrf.mxu0
  %470 = vmatprep.mubr.bf16.mxu0 0
  %471 = vmatmul.mubr.bf16.gmra.mxu0 %v136
  %v472 = vpop.f32.mrf.mxu0
  %v473 = vadd.f32 0.0, %v472
  %v474 = vpop.f32.mrf.mxu0
  %v475 = vpop.f32.mrf.mxu0
  %v476 = vadd.f32 0.0, %v475
  %v477 = vpop.f32.mrf.mxu0
  %478 = vmatprep.mubr.bf16.mxu0 0
  %479 = vmatmul.mubr.bf16.gmra.mxu0 %v137
  %v480 = vpop.f32.mrf.mxu0
  %v481 = vadd.f32 0.0, %v480
  %v482 = vpop.f32.mrf.mxu0
  %v483 = vpop.f32.mrf.mxu0
  %v484 = vadd.f32 0.0, %v483
  %v485 = vpop.f32.mrf.mxu0
  %486 = vmatprep.mubr.bf16.mxu0 0
  %487 = vmatmul.mubr.bf16.gmra.mxu0 %v138
  %v488 = vpop.f32.mrf.mxu0
  %v489 = vadd.f32 0.0, %v488
  %v490 = vpop.f32.mrf.mxu0
  %v491 = vpop.f32.mrf.mxu0
  %v492 = vadd.f32 0.0, %v491
  %v493 = vpop.f32.mrf.mxu0
  %494 = vmatprep.mubr.bf16.mxu0 0
  %495 = vmatmul.mubr.bf16.gmra.mxu0 %v139
  %v496 = vpop.f32.mrf.mxu0
  %v497 = vadd.f32 0.0, %v496
  %v498 = vpop.f32.mrf.mxu0
  %v499 = vpop.f32.mrf.mxu0
  %v500 = vadd.f32 0.0, %v499
  %v501 = vpop.f32.mrf.mxu0
  %502 = vmatprep.mubr.bf16.mxu0 0
  %503 = vmatmul.mubr.bf16.gmra.mxu0 %v140
  %v504 = vpop.f32.mrf.mxu0
  %v505 = vadd.f32 0.0, %v504
  %v506 = vpop.f32.mrf.mxu0
  %v507 = vpop.f32.mrf.mxu0
  %v508 = vadd.f32 0.0, %v507
  %v509 = vpop.f32.mrf.mxu0
  %510 = vdwg.mxu0
  %v511 = vpack.c.bf16 %v340, %v336
  %v512 = vpack.c.bf16 %v350, %v346
  %v513 = vpack.c.bf16 %v360, %v356
  %v514 = vpack.c.bf16 %v370, %v366
  %v515 = vpack.c.bf16 %v380, %v376
  %v516 = vpack.c.bf16 %v390, %v386
  %v517 = vpack.c.bf16 %v400, %v396
  %v518 = vpack.c.bf16 %v410, %v406
  %v519 = vpack.c.bf16 %v342, %v338
  %v520 = vpack.c.bf16 %v352, %v348
  %v521 = vpack.c.bf16 %v362, %v358
  %v522 = vpack.c.bf16 %v372, %v368
  %v523 = vpack.c.bf16 %v382, %v378
  %v524 = vpack.c.bf16 %v392, %v388
  %v525 = vpack.c.bf16 %v402, %v398
  %v526 = vpack.c.bf16 %v412, %v408
  %v527 = vpack.c.bf16 %v452, %v449
  %v528 = vpack.c.bf16 %v460, %v457
  %v529 = vpack.c.bf16 %v468, %v465
  %v530 = vpack.c.bf16 %v476, %v473
  %v531 = vpack.c.bf16 %v484, %v481
  %v532 = vpack.c.bf16 %v492, %v489
  %v533 = vpack.c.bf16 %v500, %v497
  %v534 = vpack.c.bf16 %v508, %v505
  %vm535 = vcmask 261120
  %v537 = vsel %vm535, %v511, 0
  %v540 = vsel %vm535, %v519, 0
  %542 = vmatprep.subr.bf16.mxu0 0
  %543 = vmatpush1.bf16.xpose.msra.mxu0 0
  %544 = vmatprep.subr.bf16.mxu0 0
  %545 = vmatpush1.bf16.xpose.msra.mxu0 0
  %546 = vmatprep.subr.bf16.mxu0 0
  %547 = vmatpush1.bf16.xpose.msra.mxu0 0
  %548 = vmatprep.subr.bf16.mxu0 0
  %549 = vmatpush1.bf16.xpose.msra.mxu0 0
  %550 = vmatprep.subr.bf16.mxu0 0
  %551 = vmatpush1.bf16.xpose.msra.mxu0 0
  %552 = vmatprep.subr.bf16.mxu0 0
  %553 = vmatpush1.bf16.xpose.msra.mxu0 0
  %554 = vmatprep.subr.bf16.mxu0 0
  %555 = vmatpush1.bf16.xpose.msra.mxu0 0
  %556 = vmatprep.subr.bf16.mxu0 0
  %557 = vmatpush1.bf16.xpose.msra.mxu0 %v540
  %558 = vmatprep.subr.bf16.mxu0 0
  %559 = vmatpush2.bf16.xpose.msra.mxu0 0
  %560 = vmatprep.subr.bf16.mxu0 0
  %561 = vmatpush2.bf16.xpose.msra.mxu0 0
  %562 = vmatprep.subr.bf16.mxu0 0
  %563 = vmatpush2.bf16.xpose.msra.mxu0 0
  %564 = vmatprep.subr.bf16.mxu0 0
  %565 = vmatpush2.bf16.xpose.msra.mxu0 0
  %566 = vmatprep.subr.bf16.mxu0 0
  %567 = vmatpush2.bf16.xpose.msra.mxu0 0
  %568 = vmatprep.subr.bf16.mxu0 0
  %569 = vmatpush2.bf16.xpose.msra.mxu0 0
  %570 = vmatprep.subr.bf16.mxu0 0
  %571 = vmatpush2.bf16.xpose.msra.mxu0 0
  %572 = vmatprep.subr.bf16.mxu0 0
  %573 = vmatpush2.bf16.xpose.msra.mxu0 0
  %574 = vmatprep.mubr.bf16.mxu0 0
  %575 = vmatmul.mubr.bf16.gmra.mxu0 %v537
  %v576 = vpop.f32.mrf.mxu0
  %v577 = vadd.f32 %v101, %v576
  %v578 = vpop.f32.mrf.mxu0
  %v579 = vpop.f32.mrf.mxu0
  %v580 = vadd.f32 %v102, %v579
  %v581 = vpop.f32.mrf.mxu0
  %582 = vdwg.mxu0
  %v584 = vsel %vm535, %v512, 0
  %v587 = vsel %vm535, %v520, 0
  %589 = vmatprep.subr.bf16.mxu0 0
  %590 = vmatpush1.bf16.xpose.msra.mxu0 0
  %591 = vmatprep.subr.bf16.mxu0 0
  %592 = vmatpush1.bf16.xpose.msra.mxu0 0
  %593 = vmatprep.subr.bf16.mxu0 0
  %594 = vmatpush1.bf16.xpose.msra.mxu0 0
  %595 = vmatprep.subr.bf16.mxu0 0
  %596 = vmatpush1.bf16.xpose.msra.mxu0 0
  %597 = vmatprep.subr.bf16.mxu0 0
  %598 = vmatpush1.bf16.xpose.msra.mxu0 0
  %599 = vmatprep.subr.bf16.mxu0 0
  %600 = vmatpush1.bf16.xpose.msra.mxu0 0
  %601 = vmatprep.subr.bf16.mxu0 0
  %602 = vmatpush1.bf16.xpose.msra.mxu0 0
  %603 = vmatprep.subr.bf16.mxu0 0
  %604 = vmatpush1.bf16.xpose.msra.mxu0 %v587
  %605 = vmatprep.subr.bf16.mxu0 0
  %606 = vmatpush2.bf16.xpose.msra.mxu0 0
  %607 = vmatprep.subr.bf16.mxu0 0
  %608 = vmatpush2.bf16.xpose.msra.mxu0 0
  %609 = vmatprep.subr.bf16.mxu0 0
  %610 = vmatpush2.bf16.xpose.msra.mxu0 0
  %611 = vmatprep.subr.bf16.mxu0 0
  %612 = vmatpush2.bf16.xpose.msra.mxu0 0
  %613 = vmatprep.subr.bf16.mxu0 0
  %614 = vmatpush2.bf16.xpose.msra.mxu0 0
  %615 = vmatprep.subr.bf16.mxu0 0
  %616 = vmatpush2.bf16.xpose.msra.mxu0 0
  %617 = vmatprep.subr.bf16.mxu0 0
  %618 = vmatpush2.bf16.xpose.msra.mxu0 0
  %619 = vmatprep.subr.bf16.mxu0 0
  %620 = vmatpush2.bf16.xpose.msra.mxu0 0
  %621 = vmatprep.mubr.bf16.mxu0 0
  %622 = vmatmul.mubr.bf16.gmra.mxu0 %v584
  %v623 = vpop.f32.mrf.mxu0
  %v624 = vadd.f32 %v103, %v623
  %v625 = vpop.f32.mrf.mxu0
  %v626 = vpop.f32.mrf.mxu0
  %v627 = vadd.f32 %v104, %v626
  %v628 = vpop.f32.mrf.mxu0
  %629 = vdwg.mxu0
  %v631 = vsel %vm535, %v513, 0
  %v634 = vsel %vm535, %v521, 0
  %636 = vmatprep.subr.bf16.mxu0 0
  %637 = vmatpush1.bf16.xpose.msra.mxu0 0
  %638 = vmatprep.subr.bf16.mxu0 0
  %639 = vmatpush1.bf16.xpose.msra.mxu0 0
  %640 = vmatprep.subr.bf16.mxu0 0
  %641 = vmatpush1.bf16.xpose.msra.mxu0 0
  %642 = vmatprep.subr.bf16.mxu0 0
  %643 = vmatpush1.bf16.xpose.msra.mxu0 0
  %644 = vmatprep.subr.bf16.mxu0 0
  %645 = vmatpush1.bf16.xpose.msra.mxu0 0
  %646 = vmatprep.subr.bf16.mxu0 0
  %647 = vmatpush1.bf16.xpose.msra.mxu0 0
  %648 = vmatprep.subr.bf16.mxu0 0
  %649 = vmatpush1.bf16.xpose.msra.mxu0 0
  %650 = vmatprep.subr.bf16.mxu0 0
  %651 = vmatpush1.bf16.xpose.msra.mxu0 %v634
  %652 = vmatprep.subr.bf16.mxu0 0
  %653 = vmatpush2.bf16.xpose.msra.mxu0 0
  %654 = vmatprep.subr.bf16.mxu0 0
  %655 = vmatpush2.bf16.xpose.msra.mxu0 0
  %656 = vmatprep.subr.bf16.mxu0 0
  %657 = vmatpush2.bf16.xpose.msra.mxu0 0
  %658 = vmatprep.subr.bf16.mxu0 0
  %659 = vmatpush2.bf16.xpose.msra.mxu0 0
  %660 = vmatprep.subr.bf16.mxu0 0
  %661 = vmatpush2.bf16.xpose.msra.mxu0 0
  %662 = vmatprep.subr.bf16.mxu0 0
  %663 = vmatpush2.bf16.xpose.msra.mxu0 0
  %664 = vmatprep.subr.bf16.mxu0 0
  %665 = vmatpush2.bf16.xpose.msra.mxu0 0
  %666 = vmatprep.subr.bf16.mxu0 0
  %667 = vmatpush2.bf16.xpose.msra.mxu0 0
  %668 = vmatprep.mubr.bf16.mxu0 0
  %669 = vmatmul.mubr.bf16.gmra.mxu0 %v631
  %v670 = vpop.f32.mrf.mxu0
  %v671 = vadd.f32 %v105, %v670
  %v672 = vpop.f32.mrf.mxu0
  %v673 = vpop.f32.mrf.mxu0
  %v674 = vadd.f32 %v106, %v673
  %v675 = vpop.f32.mrf.mxu0
  %676 = vdwg.mxu0
  %v678 = vsel %vm535, %v514, 0
  %v681 = vsel %vm535, %v522, 0
  %683 = vmatprep.subr.bf16.mxu0 0
  %684 = vmatpush1.bf16.xpose.msra.mxu0 0
  %685 = vmatprep.subr.bf16.mxu0 0
  %686 = vmatpush1.bf16.xpose.msra.mxu0 0
  %687 = vmatprep.subr.bf16.mxu0 0
  %688 = vmatpush1.bf16.xpose.msra.mxu0 0
  %689 = vmatprep.subr.bf16.mxu0 0
  %690 = vmatpush1.bf16.xpose.msra.mxu0 0
  %691 = vmatprep.subr.bf16.mxu0 0
  %692 = vmatpush1.bf16.xpose.msra.mxu0 0
  %693 = vmatprep.subr.bf16.mxu0 0
  %694 = vmatpush1.bf16.xpose.msra.mxu0 0
  %695 = vmatprep.subr.bf16.mxu0 0
  %696 = vmatpush1.bf16.xpose.msra.mxu0 0
  %697 = vmatprep.subr.bf16.mxu0 0
  %698 = vmatpush1.bf16.xpose.msra.mxu0 %v681
  %699 = vmatprep.subr.bf16.mxu0 0
  %700 = vmatpush2.bf16.xpose.msra.mxu0 0
  %701 = vmatprep.subr.bf16.mxu0 0
  %702 = vmatpush2.bf16.xpose.msra.mxu0 0
  %703 = vmatprep.subr.bf16.mxu0 0
  %704 = vmatpush2.bf16.xpose.msra.mxu0 0
  %705 = vmatprep.subr.bf16.mxu0 0
  %706 = vmatpush2.bf16.xpose.msra.mxu0 0
  %707 = vmatprep.subr.bf16.mxu0 0
  %708 = vmatpush2.bf16.xpose.msra.mxu0 0
  %709 = vmatprep.subr.bf16.mxu0 0
  %710 = vmatpush2.bf16.xpose.msra.mxu0 0
  %711 = vmatprep.subr.bf16.mxu0 0
  %712 = vmatpush2.bf16.xpose.msra.mxu0 0
  %713 = vmatprep.subr.bf16.mxu0 0
  %714 = vmatpush2.bf16.xpose.msra.mxu0 0
  %715 = vmatprep.mubr.bf16.mxu0 0
  %716 = vmatmul.mubr.bf16.gmra.mxu0 %v678
  %v717 = vpop.f32.mrf.mxu0
  %v718 = vadd.f32 %v107, %v717
  %v719 = vpop.f32.mrf.mxu0
  %v720 = vpop.f32.mrf.mxu0
  %v721 = vadd.f32 %v108, %v720
  %v722 = vpop.f32.mrf.mxu0
  %723 = vdwg.mxu0
  %v725 = vsel %vm535, %v515, 0
  %v728 = vsel %vm535, %v523, 0
  %730 = vmatprep.subr.bf16.mxu0 0
  %731 = vmatpush1.bf16.xpose.msra.mxu0 0
  %732 = vmatprep.subr.bf16.mxu0 0
  %733 = vmatpush1.bf16.xpose.msra.mxu0 0
  %734 = vmatprep.subr.bf16.mxu0 0
  %735 = vmatpush1.bf16.xpose.msra.mxu0 0
  %736 = vmatprep.subr.bf16.mxu0 0
  %737 = vmatpush1.bf16.xpose.msra.mxu0 0
  %738 = vmatprep.subr.bf16.mxu0 0
  %739 = vmatpush1.bf16.xpose.msra.mxu0 0
  %740 = vmatprep.subr.bf16.mxu0 0
  %741 = vmatpush1.bf16.xpose.msra.mxu0 0
  %742 = vmatprep.subr.bf16.mxu0 0
  %743 = vmatpush1.bf16.xpose.msra.mxu0 0
  %744 = vmatprep.subr.bf16.mxu0 0
  %745 = vmatpush1.bf16.xpose.msra.mxu0 %v728
  %746 = vmatprep.subr.bf16.mxu0 0
  %747 = vmatpush2.bf16.xpose.msra.mxu0 0
  %748 = vmatprep.subr.bf16.mxu0 0
  %749 = vmatpush2.bf16.xpose.msra.mxu0 0
  %750 = vmatprep.subr.bf16.mxu0 0
  %751 = vmatpush2.bf16.xpose.msra.mxu0 0
  %752 = vmatprep.subr.bf16.mxu0 0
  %753 = vmatpush2.bf16.xpose.msra.mxu0 0
  %754 = vmatprep.subr.bf16.mxu0 0
  %755 = vmatpush2.bf16.xpose.msra.mxu0 0
  %756 = vmatprep.subr.bf16.mxu0 0
  %757 = vmatpush2.bf16.xpose.msra.mxu0 0
  %758 = vmatprep.subr.bf16.mxu0 0
  %759 = vmatpush2.bf16.xpose.msra.mxu0 0
  %760 = vmatprep.subr.bf16.mxu0 0
  %761 = vmatpush2.bf16.xpose.msra.mxu0 0
  %762 = vmatprep.mubr.bf16.mxu0 0
  %763 = vmatmul.mubr.bf16.gmra.mxu0 %v725
  %v764 = vpop.f32.mrf.mxu0
  %v765 = vadd.f32 %v109, %v764
  %v766 = vpop.f32.mrf.mxu0
  %v767 = vpop.f32.mrf.mxu0
  %v768 = vadd.f32 %v110, %v767
  %v769 = vpop.f32.mrf.mxu0
  %770 = vdwg.mxu0
  %v772 = vsel %vm535, %v516, 0
  %v775 = vsel %vm535, %v524, 0
  %777 = vmatprep.subr.bf16.mxu0 0
  %778 = vmatpush1.bf16.xpose.msra.mxu0 0
  %779 = vmatprep.subr.bf16.mxu0 0
  %780 = vmatpush1.bf16.xpose.msra.mxu0 0
  %781 = vmatprep.subr.bf16.mxu0 0
  %782 = vmatpush1.bf16.xpose.msra.mxu0 0
  %783 = vmatprep.subr.bf16.mxu0 0
  %784 = vmatpush1.bf16.xpose.msra.mxu0 0
  %785 = vmatprep.subr.bf16.mxu0 0
  %786 = vmatpush1.bf16.xpose.msra.mxu0 0
  %787 = vmatprep.subr.bf16.mxu0 0
  %788 = vmatpush1.bf16.xpose.msra.mxu0 0
  %789 = vmatprep.subr.bf16.mxu0 0
  %790 = vmatpush1.bf16.xpose.msra.mxu0 0
  %791 = vmatprep.subr.bf16.mxu0 0
  %792 = vmatpush1.bf16.xpose.msra.mxu0 %v775
  %793 = vmatprep.subr.bf16.mxu0 0
  %794 = vmatpush2.bf16.xpose.msra.mxu0 0
  %795 = vmatprep.subr.bf16.mxu0 0
  %796 = vmatpush2.bf16.xpose.msra.mxu0 0
  %797 = vmatprep.subr.bf16.mxu0 0
  %798 = vmatpush2.bf16.xpose.msra.mxu0 0
  %799 = vmatprep.subr.bf16.mxu0 0
  %800 = vmatpush2.bf16.xpose.msra.mxu0 0
  %801 = vmatprep.subr.bf16.mxu0 0
  %802 = vmatpush2.bf16.xpose.msra.mxu0 0
  %803 = vmatprep.subr.bf16.mxu0 0
  %804 = vmatpush2.bf16.xpose.msra.mxu0 0
  %805 = vmatprep.subr.bf16.mxu0 0
  %806 = vmatpush2.bf16.xpose.msra.mxu0 0
  %807 = vmatprep.subr.bf16.mxu0 0
  %808 = vmatpush2.bf16.xpose.msra.mxu0 0
  %809 = vmatprep.mubr.bf16.mxu0 0
  %810 = vmatmul.mubr.bf16.gmra.mxu0 %v772
  %v811 = vpop.f32.mrf.mxu0
  %v812 = vadd.f32 %v111, %v811
  %v813 = vpop.f32.mrf.mxu0
  %v814 = vpop.f32.mrf.mxu0
  %v815 = vadd.f32 %v112, %v814
  %v816 = vpop.f32.mrf.mxu0
  %817 = vdwg.mxu0
  %v819 = vsel %vm535, %v517, 0
  %v822 = vsel %vm535, %v525, 0
  %824 = vmatprep.subr.bf16.mxu0 0
  %825 = vmatpush1.bf16.xpose.msra.mxu0 0
  %826 = vmatprep.subr.bf16.mxu0 0
  %827 = vmatpush1.bf16.xpose.msra.mxu0 0
  %828 = vmatprep.subr.bf16.mxu0 0
  %829 = vmatpush1.bf16.xpose.msra.mxu0 0
  %830 = vmatprep.subr.bf16.mxu0 0
  %831 = vmatpush1.bf16.xpose.msra.mxu0 0
  %832 = vmatprep.subr.bf16.mxu0 0
  %833 = vmatpush1.bf16.xpose.msra.mxu0 0
  %834 = vmatprep.subr.bf16.mxu0 0
  %835 = vmatpush1.bf16.xpose.msra.mxu0 0
  %836 = vmatprep.subr.bf16.mxu0 0
  %837 = vmatpush1.bf16.xpose.msra.mxu0 0
  %838 = vmatprep.subr.bf16.mxu0 0
  %839 = vmatpush1.bf16.xpose.msra.mxu0 %v822
  %840 = vmatprep.subr.bf16.mxu0 0
  %841 = vmatpush2.bf16.xpose.msra.mxu0 0
  %842 = vmatprep.subr.bf16.mxu0 0
  %843 = vmatpush2.bf16.xpose.msra.mxu0 0
  %844 = vmatprep.subr.bf16.mxu0 0
  %845 = vmatpush2.bf16.xpose.msra.mxu0 0
  %846 = vmatprep.subr.bf16.mxu0 0
  %847 = vmatpush2.bf16.xpose.msra.mxu0 0
  %848 = vmatprep.subr.bf16.mxu0 0
  %849 = vmatpush2.bf16.xpose.msra.mxu0 0
  %850 = vmatprep.subr.bf16.mxu0 0
  %851 = vmatpush2.bf16.xpose.msra.mxu0 0
  %852 = vmatprep.subr.bf16.mxu0 0
  %853 = vmatpush2.bf16.xpose.msra.mxu0 0
  %854 = vmatprep.subr.bf16.mxu0 0
  %855 = vmatpush2.bf16.xpose.msra.mxu0 0
  %856 = vmatprep.mubr.bf16.mxu0 0
  %857 = vmatmul.mubr.bf16.gmra.mxu0 %v819
  %v858 = vpop.f32.mrf.mxu0
  %v859 = vadd.f32 %v113, %v858
  %v860 = vpop.f32.mrf.mxu0
  %v861 = vpop.f32.mrf.mxu0
  %v862 = vadd.f32 %v114, %v861
  %v863 = vpop.f32.mrf.mxu0
  %864 = vdwg.mxu0
  %v866 = vsel %vm535, %v518, 0
  %v869 = vsel %vm535, %v526, 0
  %871 = vmatprep.subr.bf16.mxu0 0
  %872 = vmatpush1.bf16.xpose.msra.mxu0 0
  %873 = vmatprep.subr.bf16.mxu0 0
  %874 = vmatpush1.bf16.xpose.msra.mxu0 0
  %875 = vmatprep.subr.bf16.mxu0 0
  %876 = vmatpush1.bf16.xpose.msra.mxu0 0
  %877 = vmatprep.subr.bf16.mxu0 0
  %878 = vmatpush1.bf16.xpose.msra.mxu0 0
  %879 = vmatprep.subr.bf16.mxu0 0
  %880 = vmatpush1.bf16.xpose.msra.mxu0 0
  %881 = vmatprep.subr.bf16.mxu0 0
  %882 = vmatpush1.bf16.xpose.msra.mxu0 0
  %883 = vmatprep.subr.bf16.mxu0 0
  %884 = vmatpush1.bf16.xpose.msra.mxu0 0
  %885 = vmatprep.subr.bf16.mxu0 0
  %886 = vmatpush1.bf16.xpose.msra.mxu0 %v869
  %887 = vmatprep.subr.bf16.mxu0 0
  %888 = vmatpush2.bf16.xpose.msra.mxu0 0
  %889 = vmatprep.subr.bf16.mxu0 0
  %890 = vmatpush2.bf16.xpose.msra.mxu0 0
  %891 = vmatprep.subr.bf16.mxu0 0
  %892 = vmatpush2.bf16.xpose.msra.mxu0 0
  %893 = vmatprep.subr.bf16.mxu0 0
  %894 = vmatpush2.bf16.xpose.msra.mxu0 0
  %895 = vmatprep.subr.bf16.mxu0 0
  %896 = vmatpush2.bf16.xpose.msra.mxu0 0
  %897 = vmatprep.subr.bf16.mxu0 0
  %898 = vmatpush2.bf16.xpose.msra.mxu0 0
  %899 = vmatprep.subr.bf16.mxu0 0
  %900 = vmatpush2.bf16.xpose.msra.mxu0 0
  %901 = vmatprep.subr.bf16.mxu0 0
  %902 = vmatpush2.bf16.xpose.msra.mxu0 0
  %903 = vmatprep.mubr.bf16.mxu0 0
  %904 = vmatmul.mubr.bf16.gmra.mxu0 %v866
  %v905 = vpop.f32.mrf.mxu0
  %v906 = vadd.f32 %v115, %v905
  %v907 = vpop.f32.mrf.mxu0
  %v908 = vpop.f32.mrf.mxu0
  %v909 = vadd.f32 %v116, %v908
  %v910 = vpop.f32.mrf.mxu0
  %911 = vdwg.mxu0
  %vm912 = vcmask 130048
  %v913 = vsel %vm912, %v577, -inf
  %914 = vmax.xlane.f32.xlu0 %v913
  %v915 = vpop.xlane.xlu0 %914
  %v916 = vsel %vm912, %v580, -inf
  %917 = vmax.xlane.f32.xlu0 %v916
  %v918 = vpop.xlane.xlu0 %917
  %v919 = vsel %vm912, %v624, -inf
  %920 = vmax.xlane.f32.xlu0 %v919
  %v921 = vpop.xlane.xlu0 %920
  %v922 = vsel %vm912, %v627, -inf
  %923 = vmax.xlane.f32.xlu0 %v922
  %v924 = vpop.xlane.xlu0 %923
  %v925 = vsel %vm912, %v671, -inf
  %926 = vmax.xlane.f32.xlu0 %v925
  %v927 = vpop.xlane.xlu0 %926
  %v928 = vsel %vm912, %v674, -inf
  %929 = vmax.xlane.f32.xlu0 %v928
  %v930 = vpop.xlane.xlu0 %929
  %v931 = vsel %vm912, %v718, -inf
  %932 = vmax.xlane.f32.xlu0 %v931
  %v933 = vpop.xlane.xlu0 %932
  %v934 = vsel %vm912, %v721, -inf
  %935 = vmax.xlane.f32.xlu0 %v934
  %v936 = vpop.xlane.xlu0 %935
  %v937 = vsel %vm912, %v765, -inf
  %938 = vmax.xlane.f32.xlu0 %v937
  %v939 = vpop.xlane.xlu0 %938
  %v940 = vsel %vm912, %v768, -inf
  %941 = vmax.xlane.f32.xlu0 %v940
  %v942 = vpop.xlane.xlu0 %941
  %v943 = vsel %vm912, %v812, -inf
  %944 = vmax.xlane.f32.xlu0 %v943
  %v945 = vpop.xlane.xlu0 %944
  %v946 = vsel %vm912, %v815, -inf
  %947 = vmax.xlane.f32.xlu0 %v946
  %v948 = vpop.xlane.xlu0 %947
  %v949 = vsel %vm912, %v859, -inf
  %950 = vmax.xlane.f32.xlu0 %v949
  %v951 = vpop.xlane.xlu0 %950
  %v952 = vsel %vm912, %v862, -inf
  %953 = vmax.xlane.f32.xlu0 %v952
  %v954 = vpop.xlane.xlu0 %953
  %v955 = vsel %vm912, %v906, -inf
  %956 = vmax.xlane.f32.xlu0 %v955
  %v957 = vpop.xlane.xlu0 %956
  %v958 = vsel %vm912, %v909, -inf
  %959 = vmax.xlane.f32.xlu0 %v958
  %v960 = vpop.xlane.xlu0 %959
  %v961 = vsub.f32 %v577, %v915
  %v962 = vsub.f32 %v580, %v918
  %v963 = vsub.f32 %v624, %v921
  %v964 = vsub.f32 %v627, %v924
  %v965 = vsub.f32 %v671, %v927
  %v966 = vsub.f32 %v674, %v930
  %v967 = vsub.f32 %v718, %v933
  %v968 = vsub.f32 %v721, %v936
  %v969 = vsub.f32 %v765, %v939
  %v970 = vsub.f32 %v768, %v942
  %v971 = vsub.f32 %v812, %v945
  %v972 = vsub.f32 %v815, %v948
  %v973 = vsub.f32 %v859, %v951
  %v974 = vsub.f32 %v862, %v954
  %v975 = vsub.f32 %v906, %v957
  %v976 = vsub.f32 %v909, %v960
  %v977 = vmul.f32 %v961, 1.442695
  %v978 = vpow.pop %v977
  %v979 = vmul.f32 %v962, 1.442695
  %v980 = vpow.pop %v979
  %v981 = vmul.f32 %v963, 1.442695
  %v982 = vpow.pop %v981
  %v983 = vmul.f32 %v964, 1.442695
  %v984 = vpow.pop %v983
  %v985 = vmul.f32 %v965, 1.442695
  %v986 = vpow.pop %v985
  %v987 = vmul.f32 %v966, 1.442695
  %v988 = vpow.pop %v987
  %v989 = vmul.f32 %v967, 1.442695
  %v990 = vpow.pop %v989
  %v991 = vmul.f32 %v968, 1.442695
  %v992 = vpow.pop %v991
  %v993 = vmul.f32 %v969, 1.442695
  %v994 = vpow.pop %v993
  %v995 = vmul.f32 %v970, 1.442695
  %v996 = vpow.pop %v995
  %v997 = vmul.f32 %v971, 1.442695
  %v998 = vpow.pop %v997
  %v999 = vmul.f32 %v972, 1.442695
  %v1000 = vpow.pop %v999
  %v1001 = vmul.f32 %v973, 1.442695
  %v1002 = vpow.pop %v1001
  %v1003 = vmul.f32 %v974, 1.442695
  %v1004 = vpow.pop %v1003
  %v1005 = vmul.f32 %v975, 1.442695
  %v1006 = vpow.pop %v1005
  %v1007 = vmul.f32 %v976, 1.442695
  %v1008 = vpow.pop %v1007
  %v1009 = vsel %vm912, %v978, 0.0
  %1010 = vadd.xlane.f32.xlu0 %v1009
  %v1011 = vpop.xlane.xlu0 %1010
  %v1012 = vsel %vm912, %v980, 0.0
  %1013 = vadd.xlane.f32.xlu0 %v1012
  %v1014 = vpop.xlane.xlu0 %1013
  %v1015 = vsel %vm912, %v982, 0.0
  %1016 = vadd.xlane.f32.xlu0 %v1015
  %v1017 = vpop.xlane.xlu0 %1016
  %v1018 = vsel %vm912, %v984, 0.0
  %1019 = vadd.xlane.f32.xlu0 %v1018
  %v1020 = vpop.xlane.xlu0 %1019
  %v1021 = vsel %vm912, %v986, 0.0
  %1022 = vadd.xlane.f32.xlu0 %v1021
  %v1023 = vpop.xlane.xlu0 %1022
  %v1024 = vsel %vm912, %v988, 0.0
  %1025 = vadd.xlane.f32.xlu0 %v1024
  %v1026 = vpop.xlane.xlu0 %1025
  %v1027 = vsel %vm912, %v990, 0.0
  %1028 = vadd.xlane.f32.xlu0 %v1027
  %v1029 = vpop.xlane.xlu0 %1028
  %v1030 = vsel %vm912, %v992, 0.0
  %1031 = vadd.xlane.f32.xlu0 %v1030
  %v1032 = vpop.xlane.xlu0 %1031
  %v1033 = vsel %vm912, %v994, 0.0
  %1034 = vadd.xlane.f32.xlu0 %v1033
  %v1035 = vpop.xlane.xlu0 %1034
  %v1036 = vsel %vm912, %v996, 0.0
  %1037 = vadd.xlane.f32.xlu0 %v1036
  %v1038 = vpop.xlane.xlu0 %1037
  %v1039 = vsel %vm912, %v998, 0.0
  %1040 = vadd.xlane.f32.xlu0 %v1039
  %v1041 = vpop.xlane.xlu0 %1040
  %v1042 = vsel %vm912, %v1000, 0.0
  %1043 = vadd.xlane.f32.xlu0 %v1042
  %v1044 = vpop.xlane.xlu0 %1043
  %v1045 = vsel %vm912, %v1002, 0.0
  %1046 = vadd.xlane.f32.xlu0 %v1045
  %v1047 = vpop.xlane.xlu0 %1046
  %v1048 = vsel %vm912, %v1004, 0.0
  %1049 = vadd.xlane.f32.xlu0 %v1048
  %v1050 = vpop.xlane.xlu0 %1049
  %v1051 = vsel %vm912, %v1006, 0.0
  %1052 = vadd.xlane.f32.xlu0 %v1051
  %v1053 = vpop.xlane.xlu0 %1052
  %v1054 = vsel %vm912, %v1008, 0.0
  %1055 = vadd.xlane.f32.xlu0 %v1054
  %v1056 = vpop.xlane.xlu0 %1055
  %v1057 = vrcp.pop %v1011
  %v1058 = vrcp.pop %v1014
  %v1059 = vrcp.pop %v1017
  %v1060 = vrcp.pop %v1020
  %v1061 = vrcp.pop %v1023
  %v1062 = vrcp.pop %v1026
  %v1063 = vrcp.pop %v1029
  %v1064 = vrcp.pop %v1032
  %v1065 = vrcp.pop %v1035
  %v1066 = vrcp.pop %v1038
  %v1067 = vrcp.pop %v1041
  %v1068 = vrcp.pop %v1044
  %v1069 = vrcp.pop %v1047
  %v1070 = vrcp.pop %v1050
  %v1071 = vrcp.pop %v1053
  %v1072 = vrcp.pop %v1056
  %v1073 = vmul.f32 %v978, %v1057
  %v1074 = vmul.f32 %v980, %v1058
  %v1075 = vmul.f32 %v982, %v1059
  %v1076 = vmul.f32 %v984, %v1060
  %v1077 = vmul.f32 %v986, %v1061
  %v1078 = vmul.f32 %v988, %v1062
  %v1079 = vmul.f32 %v990, %v1063
  %v1080 = vmul.f32 %v992, %v1064
  %v1081 = vmul.f32 %v994, %v1065
  %v1082 = vmul.f32 %v996, %v1066
  %v1083 = vmul.f32 %v998, %v1067
  %v1084 = vmul.f32 %v1000, %v1068
  %v1085 = vmul.f32 %v1002, %v1069
  %v1086 = vmul.f32 %v1004, %v1070
  %v1087 = vmul.f32 %v1006, %v1071
  %v1088 = vmul.f32 %v1008, %v1072
  %v1089 = vpack.c.bf16 %v1074, %v1073
  %v1090 = vpack.c.bf16 %v1076, %v1075
  %v1091 = vpack.c.bf16 %v1078, %v1077
  %v1092 = vpack.c.bf16 %v1080, %v1079
  %v1093 = vpack.c.bf16 %v1082, %v1081
  %v1094 = vpack.c.bf16 %v1084, %v1083
  %v1095 = vpack.c.bf16 %v1086, %v1085
  %v1096 = vpack.c.bf16 %v1088, %v1087
  %v1098 = vsel %vm912, %v1089, 0
  %1100 = vmatprep.subr.bf16.mxu0 0
  %1101 = vmatpush1.bf16.msra.mxu0 0
  %1102 = vmatprep.subr.bf16.mxu0 0
  %1103 = vmatpush1.bf16.msra.mxu0 0
  %1104 = vmatprep.subr.bf16.mxu0 0
  %1105 = vmatpush1.bf16.msra.mxu0 0
  %1106 = vmatprep.subr.bf16.mxu0 0
  %1107 = vmatpush1.bf16.msra.mxu0 0
  %1108 = vmatprep.subr.bf16.mxu0 0
  %1109 = vmatpush1.bf16.msra.mxu0 0
  %1110 = vmatprep.subr.bf16.mxu0 0
  %1111 = vmatpush1.bf16.msra.mxu0 0
  %1112 = vmatprep.subr.bf16.mxu0 0
  %1113 = vmatpush1.bf16.msra.mxu0 0
  %1114 = vmatprep.subr.bf16.mxu0 0
  %1115 = vmatpush1.bf16.msra.mxu0 %v527
  %1116 = vmatprep.subr.bf16.mxu0 0
  %1117 = vmatpush2.bf16.msra.mxu0 0
  %1118 = vmatprep.subr.bf16.mxu0 0
  %1119 = vmatpush2.bf16.msra.mxu0 0
  %1120 = vmatprep.subr.bf16.mxu0 0
  %1121 = vmatpush2.bf16.msra.mxu0 0
  %1122 = vmatprep.subr.bf16.mxu0 0
  %1123 = vmatpush2.bf16.msra.mxu0 0
  %1124 = vmatprep.subr.bf16.mxu0 0
  %1125 = vmatpush2.bf16.msra.mxu0 0
  %1126 = vmatprep.subr.bf16.mxu0 0
  %1127 = vmatpush2.bf16.msra.mxu0 0
  %1128 = vmatprep.subr.bf16.mxu0 0
  %1129 = vmatpush2.bf16.msra.mxu0 0
  %1130 = vmatprep.subr.bf16.mxu0 0
  %1131 = vmatpush2.bf16.msra.mxu0 0
  %1132 = vmatprep.mubr.bf16.mxu0 0
  %1133 = vmatmul.mubr.bf16.gmra.mxu0 %v1098
  %v1134 = vpop.f32.mrf.mxu0
  %v1135 = vadd.f32 0.0, %v1134
  %v1136 = vpop.f32.mrf.mxu0
  %v1137 = vpop.f32.mrf.mxu0
  %v1138 = vadd.f32 0.0, %v1137
  %v1139 = vpop.f32.mrf.mxu0
  %1140 = vdwg.mxu0
  %v1142 = vsel %vm912, %v1090, 0
  %1144 = vmatprep.subr.bf16.mxu0 0
  %1145 = vmatpush1.bf16.msra.mxu0 0
  %1146 = vmatprep.subr.bf16.mxu0 0
  %1147 = vmatpush1.bf16.msra.mxu0 0
  %1148 = vmatprep.subr.bf16.mxu0 0
  %1149 = vmatpush1.bf16.msra.mxu0 0
  %1150 = vmatprep.subr.bf16.mxu0 0
  %1151 = vmatpush1.bf16.msra.mxu0 0
  %1152 = vmatprep.subr.bf16.mxu0 0
  %1153 = vmatpush1.bf16.msra.mxu0 0
  %1154 = vmatprep.subr.bf16.mxu0 0
  %1155 = vmatpush1.bf16.msra.mxu0 0
  %1156 = vmatprep.subr.bf16.mxu0 0
  %1157 = vmatpush1.bf16.msra.mxu0 0
  %1158 = vmatprep.subr.bf16.mxu0 0
  %1159 = vmatpush1.bf16.msra.mxu0 %v528
  %1160 = vmatprep.subr.bf16.mxu0 0
  %1161 = vmatpush2.bf16.msra.mxu0 0
  %1162 = vmatprep.subr.bf16.mxu0 0
  %1163 = vmatpush2.bf16.msra.mxu0 0
  %1164 = vmatprep.subr.bf16.mxu0 0
  %1165 = vmatpush2.bf16.msra.mxu0 0
  %1166 = vmatprep.subr.bf16.mxu0 0
  %1167 = vmatpush2.bf16.msra.mxu0 0
  %1168 = vmatprep.subr.bf16.mxu0 0
  %1169 = vmatpush2.bf16.msra.mxu0 0
  %1170 = vmatprep.subr.bf16.mxu0 0
  %1171 = vmatpush2.bf16.msra.mxu0 0
  %1172 = vmatprep.subr.bf16.mxu0 0
  %1173 = vmatpush2.bf16.msra.mxu0 0
  %1174 = vmatprep.subr.bf16.mxu0 0
  %1175 = vmatpush2.bf16.msra.mxu0 0
  %1176 = vmatprep.mubr.bf16.mxu0 0
  %1177 = vmatmul.mubr.bf16.gmra.mxu0 %v1142
  %v1178 = vpop.f32.mrf.mxu0
  %v1179 = vadd.f32 0.0, %v1178
  %v1180 = vpop.f32.mrf.mxu0
  %v1181 = vpop.f32.mrf.mxu0
  %v1182 = vadd.f32 0.0, %v1181
  %v1183 = vpop.f32.mrf.mxu0
  %1184 = vdwg.mxu0
  %v1186 = vsel %vm912, %v1091, 0
  %1188 = vmatprep.subr.bf16.mxu0 0
  %1189 = vmatpush1.bf16.msra.mxu0 0
  %1190 = vmatprep.subr.bf16.mxu0 0
  %1191 = vmatpush1.bf16.msra.mxu0 0
  %1192 = vmatprep.subr.bf16.mxu0 0
  %1193 = vmatpush1.bf16.msra.mxu0 0
  %1194 = vmatprep.subr.bf16.mxu0 0
  %1195 = vmatpush1.bf16.msra.mxu0 0
  %1196 = vmatprep.subr.bf16.mxu0 0
  %1197 = vmatpush1.bf16.msra.mxu0 0
  %1198 = vmatprep.subr.bf16.mxu0 0
  %1199 = vmatpush1.bf16.msra.mxu0 0
  %1200 = vmatprep.subr.bf16.mxu0 0
  %1201 = vmatpush1.bf16.msra.mxu0 0
  %1202 = vmatprep.subr.bf16.mxu0 0
  %1203 = vmatpush1.bf16.msra.mxu0 %v529
  %1204 = vmatprep.subr.bf16.mxu0 0
  %1205 = vmatpush2.bf16.msra.mxu0 0
  %1206 = vmatprep.subr.bf16.mxu0 0
  %1207 = vmatpush2.bf16.msra.mxu0 0
  %1208 = vmatprep.subr.bf16.mxu0 0
  %1209 = vmatpush2.bf16.msra.mxu0 0
  %1210 = vmatprep.subr.bf16.mxu0 0
  %1211 = vmatpush2.bf16.msra.mxu0 0
  %1212 = vmatprep.subr.bf16.mxu0 0
  %1213 = vmatpush2.bf16.msra.mxu0 0
  %1214 = vmatprep.subr.bf16.mxu0 0
  %1215 = vmatpush2.bf16.msra.mxu0 0
  %1216 = vmatprep.subr.bf16.mxu0 0
  %1217 = vmatpush2.bf16.msra.mxu0 0
  %1218 = vmatprep.subr.bf16.mxu0 0
  %1219 = vmatpush2.bf16.msra.mxu0 0
  %1220 = vmatprep.mubr.bf16.mxu0 0
  %1221 = vmatmul.mubr.bf16.gmra.mxu0 %v1186
  %v1222 = vpop.f32.mrf.mxu0
  %v1223 = vadd.f32 0.0, %v1222
  %v1224 = vpop.f32.mrf.mxu0
  %v1225 = vpop.f32.mrf.mxu0
  %v1226 = vadd.f32 0.0, %v1225
  %v1227 = vpop.f32.mrf.mxu0
  %1228 = vdwg.mxu0
  %v1230 = vsel %vm912, %v1092, 0
  %1232 = vmatprep.subr.bf16.mxu0 0
  %1233 = vmatpush1.bf16.msra.mxu0 0
  %1234 = vmatprep.subr.bf16.mxu0 0
  %1235 = vmatpush1.bf16.msra.mxu0 0
  %1236 = vmatprep.subr.bf16.mxu0 0
  %1237 = vmatpush1.bf16.msra.mxu0 0
  %1238 = vmatprep.subr.bf16.mxu0 0
  %1239 = vmatpush1.bf16.msra.mxu0 0
  %1240 = vmatprep.subr.bf16.mxu0 0
  %1241 = vmatpush1.bf16.msra.mxu0 0
  %1242 = vmatprep.subr.bf16.mxu0 0
  %1243 = vmatpush1.bf16.msra.mxu0 0
  %1244 = vmatprep.subr.bf16.mxu0 0
  %1245 = vmatpush1.bf16.msra.mxu0 0
  %1246 = vmatprep.subr.bf16.mxu0 0
  %1247 = vmatpush1.bf16.msra.mxu0 %v530
  %1248 = vmatprep.subr.bf16.mxu0 0
  %1249 = vmatpush2.bf16.msra.mxu0 0
  %1250 = vmatprep.subr.bf16.mxu0 0
  %1251 = vmatpush2.bf16.msra.mxu0 0
  %1252 = vmatprep.subr.bf16.mxu0 0
  %1253 = vmatpush2.bf16.msra.mxu0 0
  %1254 = vmatprep.subr.bf16.mxu0 0
  %1255 = vmatpush2.bf16.msra.mxu0 0
  %1256 = vmatprep.subr.bf16.mxu0 0
  %1257 = vmatpush2.bf16.msra.mxu0 0
  %1258 = vmatprep.subr.bf16.mxu0 0
  %1259 = vmatpush2.bf16.msra.mxu0 0
  %1260 = vmatprep.subr.bf16.mxu0 0
  %1261 = vmatpush2.bf16.msra.mxu0 0
  %1262 = vmatprep.subr.bf16.mxu0 0
  %1263 = vmatpush2.bf16.msra.mxu0 0
  %1264 = vmatprep.mubr.bf16.mxu0 0
  %1265 = vmatmul.mubr.bf16.gmra.mxu0 %v1230
  %v1266 = vpop.f32.mrf.mxu0
  %v1267 = vadd.f32 0.0, %v1266
  %v1268 = vpop.f32.mrf.mxu0
  %v1269 = vpop.f32.mrf.mxu0
  %v1270 = vadd.f32 0.0, %v1269
  %v1271 = vpop.f32.mrf.mxu0
  %1272 = vdwg.mxu0
  %v1274 = vsel %vm912, %v1093, 0
  %1276 = vmatprep.subr.bf16.mxu0 0
  %1277 = vmatpush1.bf16.msra.mxu0 0
  %1278 = vmatprep.subr.bf16.mxu0 0
  %1279 = vmatpush1.bf16.msra.mxu0 0
  %1280 = vmatprep.subr.bf16.mxu0 0
  %1281 = vmatpush1.bf16.msra.mxu0 0
  %1282 = vmatprep.subr.bf16.mxu0 0
  %1283 = vmatpush1.bf16.msra.mxu0 0
  %1284 = vmatprep.subr.bf16.mxu0 0
  %1285 = vmatpush1.bf16.msra.mxu0 0
  %1286 = vmatprep.subr.bf16.mxu0 0
  %1287 = vmatpush1.bf16.msra.mxu0 0
  %1288 = vmatprep.subr.bf16.mxu0 0
  %1289 = vmatpush1.bf16.msra.mxu0 0
  %1290 = vmatprep.subr.bf16.mxu0 0
  %1291 = vmatpush1.bf16.msra.mxu0 %v531
  %1292 = vmatprep.subr.bf16.mxu0 0
  %1293 = vmatpush2.bf16.msra.mxu0 0
  %1294 = vmatprep.subr.bf16.mxu0 0
  %1295 = vmatpush2.bf16.msra.mxu0 0
  %1296 = vmatprep.subr.bf16.mxu0 0
  %1297 = vmatpush2.bf16.msra.mxu0 0
  %1298 = vmatprep.subr.bf16.mxu0 0
  %1299 = vmatpush2.bf16.msra.mxu0 0
  %1300 = vmatprep.subr.bf16.mxu0 0
  %1301 = vmatpush2.bf16.msra.mxu0 0
  %1302 = vmatprep.subr.bf16.mxu0 0
  %1303 = vmatpush2.bf16.msra.mxu0 0
  %1304 = vmatprep.subr.bf16.mxu0 0
  %1305 = vmatpush2.bf16.msra.mxu0 0
  %1306 = vmatprep.subr.bf16.mxu0 0
  %1307 = vmatpush2.bf16.msra.mxu0 0
  %1308 = vmatprep.mubr.bf16.mxu0 0
  %1309 = vmatmul.mubr.bf16.gmra.mxu0 %v1274
  %v1310 = vpop.f32.mrf.mxu0
  %v1311 = vadd.f32 0.0, %v1310
  %v1312 = vpop.f32.mrf.mxu0
  %v1313 = vpop.f32.mrf.mxu0
  %v1314 = vadd.f32 0.0, %v1313
  %v1315 = vpop.f32.mrf.mxu0
  %1316 = vdwg.mxu0
  %v1318 = vsel %vm912, %v1094, 0
  %1320 = vmatprep.subr.bf16.mxu0 0
  %1321 = vmatpush1.bf16.msra.mxu0 0
  %1322 = vmatprep.subr.bf16.mxu0 0
  %1323 = vmatpush1.bf16.msra.mxu0 0
  %1324 = vmatprep.subr.bf16.mxu0 0
  %1325 = vmatpush1.bf16.msra.mxu0 0
  %1326 = vmatprep.subr.bf16.mxu0 0
  %1327 = vmatpush1.bf16.msra.mxu0 0
  %1328 = vmatprep.subr.bf16.mxu0 0
  %1329 = vmatpush1.bf16.msra.mxu0 0
  %1330 = vmatprep.subr.bf16.mxu0 0
  %1331 = vmatpush1.bf16.msra.mxu0 0
  %1332 = vmatprep.subr.bf16.mxu0 0
  %1333 = vmatpush1.bf16.msra.mxu0 0
  %1334 = vmatprep.subr.bf16.mxu0 0
  %1335 = vmatpush1.bf16.msra.mxu0 %v532
  %1336 = vmatprep.subr.bf16.mxu0 0
  %1337 = vmatpush2.bf16.msra.mxu0 0
  %1338 = vmatprep.subr.bf16.mxu0 0
  %1339 = vmatpush2.bf16.msra.mxu0 0
  %1340 = vmatprep.subr.bf16.mxu0 0
  %1341 = vmatpush2.bf16.msra.mxu0 0
  %1342 = vmatprep.subr.bf16.mxu0 0
  %1343 = vmatpush2.bf16.msra.mxu0 0
  %1344 = vmatprep.subr.bf16.mxu0 0
  %1345 = vmatpush2.bf16.msra.mxu0 0
  %1346 = vmatprep.subr.bf16.mxu0 0
  %1347 = vmatpush2.bf16.msra.mxu0 0
  %1348 = vmatprep.subr.bf16.mxu0 0
  %1349 = vmatpush2.bf16.msra.mxu0 0
  %1350 = vmatprep.subr.bf16.mxu0 0
  %1351 = vmatpush2.bf16.msra.mxu0 0
  %1352 = vmatprep.mubr.bf16.mxu0 0
  %1353 = vmatmul.mubr.bf16.gmra.mxu0 %v1318
  %v1354 = vpop.f32.mrf.mxu0
  %v1355 = vadd.f32 0.0, %v1354
  %v1356 = vpop.f32.mrf.mxu0
  %v1357 = vpop.f32.mrf.mxu0
  %v1358 = vadd.f32 0.0, %v1357
  %v1359 = vpop.f32.mrf.mxu0
  %1360 = vdwg.mxu0
  %v1362 = vsel %vm912, %v1095, 0
  %1364 = vmatprep.subr.bf16.mxu0 0
  %1365 = vmatpush1.bf16.msra.mxu0 0
  %1366 = vmatprep.subr.bf16.mxu0 0
  %1367 = vmatpush1.bf16.msra.mxu0 0
  %1368 = vmatprep.subr.bf16.mxu0 0
  %1369 = vmatpush1.bf16.msra.mxu0 0
  %1370 = vmatprep.subr.bf16.mxu0 0
  %1371 = vmatpush1.bf16.msra.mxu0 0
  %1372 = vmatprep.subr.bf16.mxu0 0
  %1373 = vmatpush1.bf16.msra.mxu0 0
  %1374 = vmatprep.subr.bf16.mxu0 0
  %1375 = vmatpush1.bf16.msra.mxu0 0
  %1376 = vmatprep.subr.bf16.mxu0 0
  %1377 = vmatpush1.bf16.msra.mxu0 0
  %1378 = vmatprep.subr.bf16.mxu0 0
  %1379 = vmatpush1.bf16.msra.mxu0 %v533
  %1380 = vmatprep.subr.bf16.mxu0 0
  %1381 = vmatpush2.bf16.msra.mxu0 0
  %1382 = vmatprep.subr.bf16.mxu0 0
  %1383 = vmatpush2.bf16.msra.mxu0 0
  %1384 = vmatprep.subr.bf16.mxu0 0
  %1385 = vmatpush2.bf16.msra.mxu0 0
  %1386 = vmatprep.subr.bf16.mxu0 0
  %1387 = vmatpush2.bf16.msra.mxu0 0
  %1388 = vmatprep.subr.bf16.mxu0 0
  %1389 = vmatpush2.bf16.msra.mxu0 0
  %1390 = vmatprep.subr.bf16.mxu0 0
  %1391 = vmatpush2.bf16.msra.mxu0 0
  %1392 = vmatprep.subr.bf16.mxu0 0
  %1393 = vmatpush2.bf16.msra.mxu0 0
  %1394 = vmatprep.subr.bf16.mxu0 0
  %1395 = vmatpush2.bf16.msra.mxu0 0
  %1396 = vmatprep.mubr.bf16.mxu0 0
  %1397 = vmatmul.mubr.bf16.gmra.mxu0 %v1362
  %v1398 = vpop.f32.mrf.mxu0
  %v1399 = vadd.f32 0.0, %v1398
  %v1400 = vpop.f32.mrf.mxu0
  %v1401 = vpop.f32.mrf.mxu0
  %v1402 = vadd.f32 0.0, %v1401
  %v1403 = vpop.f32.mrf.mxu0
  %1404 = vdwg.mxu0
  %v1406 = vsel %vm912, %v1096, 0
  %1408 = vmatprep.subr.bf16.mxu0 0
  %1409 = vmatpush1.bf16.msra.mxu0 0
  %1410 = vmatprep.subr.bf16.mxu0 0
  %1411 = vmatpush1.bf16.msra.mxu0 0
  %1412 = vmatprep.subr.bf16.mxu0 0
  %1413 = vmatpush1.bf16.msra.mxu0 0
  %1414 = vmatprep.subr.bf16.mxu0 0
  %1415 = vmatpush1.bf16.msra.mxu0 0
  %1416 = vmatprep.subr.bf16.mxu0 0
  %1417 = vmatpush1.bf16.msra.mxu0 0
  %1418 = vmatprep.subr.bf16.mxu0 0
  %1419 = vmatpush1.bf16.msra.mxu0 0
  %1420 = vmatprep.subr.bf16.mxu0 0
  %1421 = vmatpush1.bf16.msra.mxu0 0
  %1422 = vmatprep.subr.bf16.mxu0 0
  %1423 = vmatpush1.bf16.msra.mxu0 %v534
  %1424 = vmatprep.subr.bf16.mxu0 0
  %1425 = vmatpush2.bf16.msra.mxu0 0
  %1426 = vmatprep.subr.bf16.mxu0 0
  %1427 = vmatpush2.bf16.msra.mxu0 0
  %1428 = vmatprep.subr.bf16.mxu0 0
  %1429 = vmatpush2.bf16.msra.mxu0 0
  %1430 = vmatprep.subr.bf16.mxu0 0
  %1431 = vmatpush2.bf16.msra.mxu0 0
  %1432 = vmatprep.subr.bf16.mxu0 0
  %1433 = vmatpush2.bf16.msra.mxu0 0
  %1434 = vmatprep.subr.bf16.mxu0 0
  %1435 = vmatpush2.bf16.msra.mxu0 0
  %1436 = vmatprep.subr.bf16.mxu0 0
  %1437 = vmatpush2.bf16.msra.mxu0 0
  %1438 = vmatprep.subr.bf16.mxu0 0
  %1439 = vmatpush2.bf16.msra.mxu0 0
  %1440 = vmatprep.mubr.bf16.mxu0 0
  %1441 = vmatmul.mubr.bf16.gmra.mxu0 %v1406
  %v1442 = vpop.f32.mrf.mxu0
  %v1443 = vadd.f32 0.0, %v1442
  %v1444 = vpop.f32.mrf.mxu0
  %v1445 = vpop.f32.mrf.mxu0
  %v1446 = vadd.f32 0.0, %v1445
  %v1447 = vpop.f32.mrf.mxu0
  %1448 = vdwg.mxu0
  %1450 = vrot.lane.b32.xlu0 %v511, 96
  %v1451 = vpop.permute.xlu0 %1450
  %1453 = vrot.lane.b32.xlu0 %v519, 96
  %v1454 = vpop.permute.xlu0 %1453
  %v1456 = vsel %vm535, %v1451, 0
  %v1459 = vsel %vm535, %v1454, 0
  %1461 = vmatprep.subr.bf16.mxu0 0
  %1462 = vmatpush1.bf16.xpose.msra.mxu0 0
  %1463 = vmatprep.subr.bf16.mxu0 0
  %1464 = vmatpush1.bf16.xpose.msra.mxu0 0
  %1465 = vmatprep.subr.bf16.mxu0 0
  %1466 = vmatpush1.bf16.xpose.msra.mxu0 0
  %1467 = vmatprep.subr.bf16.mxu0 0
  %1468 = vmatpush1.bf16.xpose.msra.mxu0 0
  %1469 = vmatprep.subr.bf16.mxu0 0
  %1470 = vmatpush1.bf16.xpose.msra.mxu0 0
  %1471 = vmatprep.subr.bf16.mxu0 0
  %1472 = vmatpush1.bf16.xpose.msra.mxu0 0
  %1473 = vmatprep.subr.bf16.mxu0 0
  %1474 = vmatpush1.bf16.xpose.msra.mxu0 0
  %1475 = vmatprep.subr.bf16.mxu0 0
  %1476 = vmatpush1.bf16.xpose.msra.mxu0 %v1459
  %1477 = vmatprep.subr.bf16.mxu0 0
  %1478 = vmatpush2.bf16.xpose.msra.mxu0 0
  %1479 = vmatprep.subr.bf16.mxu0 0
  %1480 = vmatpush2.bf16.xpose.msra.mxu0 0
  %1481 = vmatprep.subr.bf16.mxu0 0
  %1482 = vmatpush2.bf16.xpose.msra.mxu0 0
  %1483 = vmatprep.subr.bf16.mxu0 0
  %1484 = vmatpush2.bf16.xpose.msra.mxu0 0
  %1485 = vmatprep.subr.bf16.mxu0 0
  %1486 = vmatpush2.bf16.xpose.msra.mxu0 0
  %1487 = vmatprep.subr.bf16.mxu0 0
  %1488 = vmatpush2.bf16.xpose.msra.mxu0 0
  %1489 = vmatprep.subr.bf16.mxu0 0
  %1490 = vmatpush2.bf16.xpose.msra.mxu0 0
  %1491 = vmatprep.subr.bf16.mxu0 0
  %1492 = vmatpush2.bf16.xpose.msra.mxu0 0
  %1493 = vmatprep.mubr.bf16.mxu0 0
  %1494 = vmatmul.mubr.bf16.gmra.mxu0 %v1456
  %v1495 = vpop.f32.mrf.mxu0
  %v1496 = vadd.f32 %v101, %v1495
  %v1497 = vpop.f32.mrf.mxu0
  %v1498 = vpop.f32.mrf.mxu0
  %v1499 = vadd.f32 %v102, %v1498
  %v1500 = vpop.f32.mrf.mxu0
  %1501 = vdwg.mxu0
  %1503 = vrot.lane.b32.xlu0 %v512, 96
  %v1504 = vpop.permute.xlu0 %1503
  %1506 = vrot.lane.b32.xlu0 %v520, 96
  %v1507 = vpop.permute.xlu0 %1506
  %v1509 = vsel %vm535, %v1504, 0
  %v1512 = vsel %vm535, %v1507, 0
  %1514 = vmatprep.subr.bf16.mxu0 0
  %1515 = vmatpush1.bf16.xpose.msra.mxu0 0
  %1516 = vmatprep.subr.bf16.mxu0 0
  %1517 = vmatpush1.bf16.xpose.msra.mxu0 0
  %1518 = vmatprep.subr.bf16.mxu0 0
  %1519 = vmatpush1.bf16.xpose.msra.mxu0 0
  %1520 = vmatprep.subr.bf16.mxu0 0
  %1521 = vmatpush1.bf16.xpose.msra.mxu0 0
  %1522 = vmatprep.subr.bf16.mxu0 0
  %1523 = vmatpush1.bf16.xpose.msra.mxu0 0
  %1524 = vmatprep.subr.bf16.mxu0 0
  %1525 = vmatpush1.bf16.xpose.msra.mxu0 0
  %1526 = vmatprep.subr.bf16.mxu0 0
  %1527 = vmatpush1.bf16.xpose.msra.mxu0 0
  %1528 = vmatprep.subr.bf16.mxu0 0
  %1529 = vmatpush1.bf16.xpose.msra.mxu0 %v1512
  %1530 = vmatprep.subr.bf16.mxu0 0
  %1531 = vmatpush2.bf16.xpose.msra.mxu0 0
  %1532 = vmatprep.subr.bf16.mxu0 0
  %1533 = vmatpush2.bf16.xpose.msra.mxu0 0
  %1534 = vmatprep.subr.bf16.mxu0 0
  %1535 = vmatpush2.bf16.xpose.msra.mxu0 0
  %1536 = vmatprep.subr.bf16.mxu0 0
  %1537 = vmatpush2.bf16.xpose.msra.mxu0 0
  %1538 = vmatprep.subr.bf16.mxu0 0
  %1539 = vmatpush2.bf16.xpose.msra.mxu0 0
  %1540 = vmatprep.subr.bf16.mxu0 0
  %1541 = vmatpush2.bf16.xpose.msra.mxu0 0
  %1542 = vmatprep.subr.bf16.mxu0 0
  %1543 = vmatpush2.bf16.xpose.msra.mxu0 0
  %1544 = vmatprep.subr.bf16.mxu0 0
  %1545 = vmatpush2.bf16.xpose.msra.mxu0 0
  %1546 = vmatprep.mubr.bf16.mxu0 0
  %1547 = vmatmul.mubr.bf16.gmra.mxu0 %v1509
  %v1548 = vpop.f32.mrf.mxu0
  %v1549 = vadd.f32 %v103, %v1548
  %v1550 = vpop.f32.mrf.mxu0
  %v1551 = vpop.f32.mrf.mxu0
  %v1552 = vadd.f32 %v104, %v1551
  %v1553 = vpop.f32.mrf.mxu0
  %1554 = vdwg.mxu0
  %1556 = vrot.lane.b32.xlu0 %v513, 96
  %v1557 = vpop.permute.xlu0 %1556
  %1559 = vrot.lane.b32.xlu0 %v521, 96
  %v1560 = vpop.permute.xlu0 %1559
  %v1562 = vsel %vm535, %v1557, 0
  %v1565 = vsel %vm535, %v1560, 0
  %1567 = vmatprep.subr.bf16.mxu0 0
  %1568 = vmatpush1.bf16.xpose.msra.mxu0 0
  %1569 = vmatprep.subr.bf16.mxu0 0
  %1570 = vmatpush1.bf16.xpose.msra.mxu0 0
  %1571 = vmatprep.subr.bf16.mxu0 0
  %1572 = vmatpush1.bf16.xpose.msra.mxu0 0
  %1573 = vmatprep.subr.bf16.mxu0 0
  %1574 = vmatpush1.bf16.xpose.msra.mxu0 0
  %1575 = vmatprep.subr.bf16.mxu0 0
  %1576 = vmatpush1.bf16.xpose.msra.mxu0 0
  %1577 = vmatprep.subr.bf16.mxu0 0
  %1578 = vmatpush1.bf16.xpose.msra.mxu0 0
  %1579 = vmatprep.subr.bf16.mxu0 0
  %1580 = vmatpush1.bf16.xpose.msra.mxu0 0
  %1581 = vmatprep.subr.bf16.mxu0 0
  %1582 = vmatpush1.bf16.xpose.msra.mxu0 %v1565
  %1583 = vmatprep.subr.bf16.mxu0 0
  %1584 = vmatpush2.bf16.xpose.msra.mxu0 0
  %1585 = vmatprep.subr.bf16.mxu0 0
  %1586 = vmatpush2.bf16.xpose.msra.mxu0 0
  %1587 = vmatprep.subr.bf16.mxu0 0
  %1588 = vmatpush2.bf16.xpose.msra.mxu0 0
  %1589 = vmatprep.subr.bf16.mxu0 0
  %1590 = vmatpush2.bf16.xpose.msra.mxu0 0
  %1591 = vmatprep.subr.bf16.mxu0 0
  %1592 = vmatpush2.bf16.xpose.msra.mxu0 0
  %1593 = vmatprep.subr.bf16.mxu0 0
  %1594 = vmatpush2.bf16.xpose.msra.mxu0 0
  %1595 = vmatprep.subr.bf16.mxu0 0
  %1596 = vmatpush2.bf16.xpose.msra.mxu0 0
  %1597 = vmatprep.subr.bf16.mxu0 0
  %1598 = vmatpush2.bf16.xpose.msra.mxu0 0
  %1599 = vmatprep.mubr.bf16.mxu0 0
  %1600 = vmatmul.mubr.bf16.gmra.mxu0 %v1562
  %v1601 = vpop.f32.mrf.mxu0
  %v1602 = vadd.f32 %v105, %v1601
  %v1603 = vpop.f32.mrf.mxu0
  %v1604 = vpop.f32.mrf.mxu0
  %v1605 = vadd.f32 %v106, %v1604
  %v1606 = vpop.f32.mrf.mxu0
  %1607 = vdwg.mxu0
  %1609 = vrot.lane.b32.xlu0 %v514, 96
  %v1610 = vpop.permute.xlu0 %1609
  %1612 = vrot.lane.b32.xlu0 %v522, 96
  %v1613 = vpop.permute.xlu0 %1612
  %v1615 = vsel %vm535, %v1610, 0
  %v1618 = vsel %vm535, %v1613, 0
  %1620 = vmatprep.subr.bf16.mxu0 0
  %1621 = vmatpush1.bf16.xpose.msra.mxu0 0
  %1622 = vmatprep.subr.bf16.mxu0 0
  %1623 = vmatpush1.bf16.xpose.msra.mxu0 0
  %1624 = vmatprep.subr.bf16.mxu0 0
  %1625 = vmatpush1.bf16.xpose.msra.mxu0 0
  %1626 = vmatprep.subr.bf16.mxu0 0
  %1627 = vmatpush1.bf16.xpose.msra.mxu0 0
  %1628 = vmatprep.subr.bf16.mxu0 0
  %1629 = vmatpush1.bf16.xpose.msra.mxu0 0
  %1630 = vmatprep.subr.bf16.mxu0 0
  %1631 = vmatpush1.bf16.xpose.msra.mxu0 0
  %1632 = vmatprep.subr.bf16.mxu0 0
  %1633 = vmatpush1.bf16.xpose.msra.mxu0 0
  %1634 = vmatprep.subr.bf16.mxu0 0
  %1635 = vmatpush1.bf16.xpose.msra.mxu0 %v1618
  %1636 = vmatprep.subr.bf16.mxu0 0
  %1637 = vmatpush2.bf16.xpose.msra.mxu0 0
  %1638 = vmatprep.subr.bf16.mxu0 0
  %1639 = vmatpush2.bf16.xpose.msra.mxu0 0
  %1640 = vmatprep.subr.bf16.mxu0 0
  %1641 = vmatpush2.bf16.xpose.msra.mxu0 0
  %1642 = vmatprep.subr.bf16.mxu0 0
  %1643 = vmatpush2.bf16.xpose.msra.mxu0 0
  %1644 = vmatprep.subr.bf16.mxu0 0
  %1645 = vmatpush2.bf16.xpose.msra.mxu0 0
  %1646 = vmatprep.subr.bf16.mxu0 0
  %1647 = vmatpush2.bf16.xpose.msra.mxu0 0
  %1648 = vmatprep.subr.bf16.mxu0 0
  %1649 = vmatpush2.bf16.xpose.msra.mxu0 0
  %1650 = vmatprep.subr.bf16.mxu0 0
  %1651 = vmatpush2.bf16.xpose.msra.mxu0 0
  %1652 = vmatprep.mubr.bf16.mxu0 0
  %1653 = vmatmul.mubr.bf16.gmra.mxu0 %v1615
  %v1654 = vpop.f32.mrf.mxu0
  %v1655 = vadd.f32 %v107, %v1654
  %v1656 = vpop.f32.mrf.mxu0
  %v1657 = vpop.f32.mrf.mxu0
  %v1658 = vadd.f32 %v108, %v1657
  %v1659 = vpop.f32.mrf.mxu0
  %1660 = vdwg.mxu0
  %1662 = vrot.lane.b32.xlu0 %v515, 96
  %v1663 = vpop.permute.xlu0 %1662
  %1665 = vrot.lane.b32.xlu0 %v523, 96
  %v1666 = vpop.permute.xlu0 %1665
  %v1668 = vsel %vm535, %v1663, 0
  %v1671 = vsel %vm535, %v1666, 0
  %1673 = vmatprep.subr.bf16.mxu0 0
  %1674 = vmatpush1.bf16.xpose.msra.mxu0 0
  %1675 = vmatprep.subr.bf16.mxu0 0
  %1676 = vmatpush1.bf16.xpose.msra.mxu0 0
  %1677 = vmatprep.subr.bf16.mxu0 0
  %1678 = vmatpush1.bf16.xpose.msra.mxu0 0
  %1679 = vmatprep.subr.bf16.mxu0 0
  %1680 = vmatpush1.bf16.xpose.msra.mxu0 0
  %1681 = vmatprep.subr.bf16.mxu0 0
  %1682 = vmatpush1.bf16.xpose.msra.mxu0 0
  %1683 = vmatprep.subr.bf16.mxu0 0
  %1684 = vmatpush1.bf16.xpose.msra.mxu0 0
  %1685 = vmatprep.subr.bf16.mxu0 0
  %1686 = vmatpush1.bf16.xpose.msra.mxu0 0
  %1687 = vmatprep.subr.bf16.mxu0 0
  %1688 = vmatpush1.bf16.xpose.msra.mxu0 %v1671
  %1689 = vmatprep.subr.bf16.mxu0 0
  %1690 = vmatpush2.bf16.xpose.msra.mxu0 0
  %1691 = vmatprep.subr.bf16.mxu0 0
  %1692 = vmatpush2.bf16.xpose.msra.mxu0 0
  %1693 = vmatprep.subr.bf16.mxu0 0
  %1694 = vmatpush2.bf16.xpose.msra.mxu0 0
  %1695 = vmatprep.subr.bf16.mxu0 0
  %1696 = vmatpush2.bf16.xpose.msra.mxu0 0
  %1697 = vmatprep.subr.bf16.mxu0 0
  %1698 = vmatpush2.bf16.xpose.msra.mxu0 0
  %1699 = vmatprep.subr.bf16.mxu0 0
  %1700 = vmatpush2.bf16.xpose.msra.mxu0 0
  %1701 = vmatprep.subr.bf16.mxu0 0
  %1702 = vmatpush2.bf16.xpose.msra.mxu0 0
  %1703 = vmatprep.subr.bf16.mxu0 0
  %1704 = vmatpush2.bf16.xpose.msra.mxu0 0
  %1705 = vmatprep.mubr.bf16.mxu0 0
  %1706 = vmatmul.mubr.bf16.gmra.mxu0 %v1668
  %v1707 = vpop.f32.mrf.mxu0
  %v1708 = vadd.f32 %v109, %v1707
  %v1709 = vpop.f32.mrf.mxu0
  %v1710 = vpop.f32.mrf.mxu0
  %v1711 = vadd.f32 %v110, %v1710
  %v1712 = vpop.f32.mrf.mxu0
  %1713 = vdwg.mxu0
  %1715 = vrot.lane.b32.xlu0 %v516, 96
  %v1716 = vpop.permute.xlu0 %1715
  %1718 = vrot.lane.b32.xlu0 %v524, 96
  %v1719 = vpop.permute.xlu0 %1718
  %v1721 = vsel %vm535, %v1716, 0
  %v1724 = vsel %vm535, %v1719, 0
  %1726 = vmatprep.subr.bf16.mxu0 0
  %1727 = vmatpush1.bf16.xpose.msra.mxu0 0
  %1728 = vmatprep.subr.bf16.mxu0 0
  %1729 = vmatpush1.bf16.xpose.msra.mxu0 0
  %1730 = vmatprep.subr.bf16.mxu0 0
  %1731 = vmatpush1.bf16.xpose.msra.mxu0 0
  %1732 = vmatprep.subr.bf16.mxu0 0
  %1733 = vmatpush1.bf16.xpose.msra.mxu0 0
  %1734 = vmatprep.subr.bf16.mxu0 0
  %1735 = vmatpush1.bf16.xpose.msra.mxu0 0
  %1736 = vmatprep.subr.bf16.mxu0 0
  %1737 = vmatpush1.bf16.xpose.msra.mxu0 0
  %1738 = vmatprep.subr.bf16.mxu0 0
  %1739 = vmatpush1.bf16.xpose.msra.mxu0 0
  %1740 = vmatprep.subr.bf16.mxu0 0
  %1741 = vmatpush1.bf16.xpose.msra.mxu0 %v1724
  %1742 = vmatprep.subr.bf16.mxu0 0
  %1743 = vmatpush2.bf16.xpose.msra.mxu0 0
  %1744 = vmatprep.subr.bf16.mxu0 0
  %1745 = vmatpush2.bf16.xpose.msra.mxu0 0
  %1746 = vmatprep.subr.bf16.mxu0 0
  %1747 = vmatpush2.bf16.xpose.msra.mxu0 0
  %1748 = vmatprep.subr.bf16.mxu0 0
  %1749 = vmatpush2.bf16.xpose.msra.mxu0 0
  %1750 = vmatprep.subr.bf16.mxu0 0
  %1751 = vmatpush2.bf16.xpose.msra.mxu0 0
  %1752 = vmatprep.subr.bf16.mxu0 0
  %1753 = vmatpush2.bf16.xpose.msra.mxu0 0
  %1754 = vmatprep.subr.bf16.mxu0 0
  %1755 = vmatpush2.bf16.xpose.msra.mxu0 0
  %1756 = vmatprep.subr.bf16.mxu0 0
  %1757 = vmatpush2.bf16.xpose.msra.mxu0 0
  %1758 = vmatprep.mubr.bf16.mxu0 0
  %1759 = vmatmul.mubr.bf16.gmra.mxu0 %v1721
  %v1760 = vpop.f32.mrf.mxu0
  %v1761 = vadd.f32 %v111, %v1760
  %v1762 = vpop.f32.mrf.mxu0
  %v1763 = vpop.f32.mrf.mxu0
  %v1764 = vadd.f32 %v112, %v1763
  %v1765 = vpop.f32.mrf.mxu0
  %1766 = vdwg.mxu0
  %1768 = vrot.lane.b32.xlu0 %v517, 96
  %v1769 = vpop.permute.xlu0 %1768
  %1771 = vrot.lane.b32.xlu0 %v525, 96
  %v1772 = vpop.permute.xlu0 %1771
  %v1774 = vsel %vm535, %v1769, 0
  %v1777 = vsel %vm535, %v1772, 0
  %1779 = vmatprep.subr.bf16.mxu0 0
  %1780 = vmatpush1.bf16.xpose.msra.mxu0 0
  %1781 = vmatprep.subr.bf16.mxu0 0
  %1782 = vmatpush1.bf16.xpose.msra.mxu0 0
  %1783 = vmatprep.subr.bf16.mxu0 0
  %1784 = vmatpush1.bf16.xpose.msra.mxu0 0
  %1785 = vmatprep.subr.bf16.mxu0 0
  %1786 = vmatpush1.bf16.xpose.msra.mxu0 0
  %1787 = vmatprep.subr.bf16.mxu0 0
  %1788 = vmatpush1.bf16.xpose.msra.mxu0 0
  %1789 = vmatprep.subr.bf16.mxu0 0
  %1790 = vmatpush1.bf16.xpose.msra.mxu0 0
  %1791 = vmatprep.subr.bf16.mxu0 0
  %1792 = vmatpush1.bf16.xpose.msra.mxu0 0
  %1793 = vmatprep.subr.bf16.mxu0 0
  %1794 = vmatpush1.bf16.xpose.msra.mxu0 %v1777
  %1795 = vmatprep.subr.bf16.mxu0 0
  %1796 = vmatpush2.bf16.xpose.msra.mxu0 0
  %1797 = vmatprep.subr.bf16.mxu0 0
  %1798 = vmatpush2.bf16.xpose.msra.mxu0 0
  %1799 = vmatprep.subr.bf16.mxu0 0
  %1800 = vmatpush2.bf16.xpose.msra.mxu0 0
  %1801 = vmatprep.subr.bf16.mxu0 0
  %1802 = vmatpush2.bf16.xpose.msra.mxu0 0
  %1803 = vmatprep.subr.bf16.mxu0 0
  %1804 = vmatpush2.bf16.xpose.msra.mxu0 0
  %1805 = vmatprep.subr.bf16.mxu0 0
  %1806 = vmatpush2.bf16.xpose.msra.mxu0 0
  %1807 = vmatprep.subr.bf16.mxu0 0
  %1808 = vmatpush2.bf16.xpose.msra.mxu0 0
  %1809 = vmatprep.subr.bf16.mxu0 0
  %1810 = vmatpush2.bf16.xpose.msra.mxu0 0
  %1811 = vmatprep.mubr.bf16.mxu0 0
  %1812 = vmatmul.mubr.bf16.gmra.mxu0 %v1774
  %v1813 = vpop.f32.mrf.mxu0
  %v1814 = vadd.f32 %v113, %v1813
  %v1815 = vpop.f32.mrf.mxu0
  %v1816 = vpop.f32.mrf.mxu0
  %v1817 = vadd.f32 %v114, %v1816
  %v1818 = vpop.f32.mrf.mxu0
  %1819 = vdwg.mxu0
  %1821 = vrot.lane.b32.xlu0 %v518, 96
  %v1822 = vpop.permute.xlu0 %1821
  %1824 = vrot.lane.b32.xlu0 %v526, 96
  %v1825 = vpop.permute.xlu0 %1824
  %v1827 = vsel %vm535, %v1822, 0
  %v1830 = vsel %vm535, %v1825, 0
  %1832 = vmatprep.subr.bf16.mxu0 0
  %1833 = vmatpush1.bf16.xpose.msra.mxu0 0
  %1834 = vmatprep.subr.bf16.mxu0 0
  %1835 = vmatpush1.bf16.xpose.msra.mxu0 0
  %1836 = vmatprep.subr.bf16.mxu0 0
  %1837 = vmatpush1.bf16.xpose.msra.mxu0 0
  %1838 = vmatprep.subr.bf16.mxu0 0
  %1839 = vmatpush1.bf16.xpose.msra.mxu0 0
  %1840 = vmatprep.subr.bf16.mxu0 0
  %1841 = vmatpush1.bf16.xpose.msra.mxu0 0
  %1842 = vmatprep.subr.bf16.mxu0 0
  %1843 = vmatpush1.bf16.xpose.msra.mxu0 0
  %1844 = vmatprep.subr.bf16.mxu0 0
  %1845 = vmatpush1.bf16.xpose.msra.mxu0 0
  %1846 = vmatprep.subr.bf16.mxu0 0
  %1847 = vmatpush1.bf16.xpose.msra.mxu0 %v1830
  %1848 = vmatprep.subr.bf16.mxu0 0
  %1849 = vmatpush2.bf16.xpose.msra.mxu0 0
  %1850 = vmatprep.subr.bf16.mxu0 0
  %1851 = vmatpush2.bf16.xpose.msra.mxu0 0
  %1852 = vmatprep.subr.bf16.mxu0 0
  %1853 = vmatpush2.bf16.xpose.msra.mxu0 0
  %1854 = vmatprep.subr.bf16.mxu0 0
  %1855 = vmatpush2.bf16.xpose.msra.mxu0 0
  %1856 = vmatprep.subr.bf16.mxu0 0
  %1857 = vmatpush2.bf16.xpose.msra.mxu0 0
  %1858 = vmatprep.subr.bf16.mxu0 0
  %1859 = vmatpush2.bf16.xpose.msra.mxu0 0
  %1860 = vmatprep.subr.bf16.mxu0 0
  %1861 = vmatpush2.bf16.xpose.msra.mxu0 0
  %1862 = vmatprep.subr.bf16.mxu0 0
  %1863 = vmatpush2.bf16.xpose.msra.mxu0 0
  %1864 = vmatprep.mubr.bf16.mxu0 0
  %1865 = vmatmul.mubr.bf16.gmra.mxu0 %v1827
  %v1866 = vpop.f32.mrf.mxu0
  %v1867 = vadd.f32 %v115, %v1866
  %v1868 = vpop.f32.mrf.mxu0
  %v1869 = vpop.f32.mrf.mxu0
  %v1870 = vadd.f32 %v116, %v1869
  %v1871 = vpop.f32.mrf.mxu0
  %1872 = vdwg.mxu0
  %v1873 = vsel %vm912, %v1496, -inf
  %1874 = vmax.xlane.f32.xlu0 %v1873
  %v1875 = vpop.xlane.xlu0 %1874
  %v1876 = vsel %vm912, %v1499, -inf
  %1877 = vmax.xlane.f32.xlu0 %v1876
  %v1878 = vpop.xlane.xlu0 %1877
  %v1879 = vsel %vm912, %v1549, -inf
  %1880 = vmax.xlane.f32.xlu0 %v1879
  %v1881 = vpop.xlane.xlu0 %1880
  %v1882 = vsel %vm912, %v1552, -inf
  %1883 = vmax.xlane.f32.xlu0 %v1882
  %v1884 = vpop.xlane.xlu0 %1883
  %v1885 = vsel %vm912, %v1602, -inf
  %1886 = vmax.xlane.f32.xlu0 %v1885
  %v1887 = vpop.xlane.xlu0 %1886
  %v1888 = vsel %vm912, %v1605, -inf
  %1889 = vmax.xlane.f32.xlu0 %v1888
  %v1890 = vpop.xlane.xlu0 %1889
  %v1891 = vsel %vm912, %v1655, -inf
  %1892 = vmax.xlane.f32.xlu0 %v1891
  %v1893 = vpop.xlane.xlu0 %1892
  %v1894 = vsel %vm912, %v1658, -inf
  %1895 = vmax.xlane.f32.xlu0 %v1894
  %v1896 = vpop.xlane.xlu0 %1895
  %v1897 = vsel %vm912, %v1708, -inf
  %1898 = vmax.xlane.f32.xlu0 %v1897
  %v1899 = vpop.xlane.xlu0 %1898
  %v1900 = vsel %vm912, %v1711, -inf
  %1901 = vmax.xlane.f32.xlu0 %v1900
  %v1902 = vpop.xlane.xlu0 %1901
  %v1903 = vsel %vm912, %v1761, -inf
  %1904 = vmax.xlane.f32.xlu0 %v1903
  %v1905 = vpop.xlane.xlu0 %1904
  %v1906 = vsel %vm912, %v1764, -inf
  %1907 = vmax.xlane.f32.xlu0 %v1906
  %v1908 = vpop.xlane.xlu0 %1907
  %v1909 = vsel %vm912, %v1814, -inf
  %1910 = vmax.xlane.f32.xlu0 %v1909
  %v1911 = vpop.xlane.xlu0 %1910
  %v1912 = vsel %vm912, %v1817, -inf
  %1913 = vmax.xlane.f32.xlu0 %v1912
  %v1914 = vpop.xlane.xlu0 %1913
  %v1915 = vsel %vm912, %v1867, -inf
  %1916 = vmax.xlane.f32.xlu0 %v1915
  %v1917 = vpop.xlane.xlu0 %1916
  %v1918 = vsel %vm912, %v1870, -inf
  %1919 = vmax.xlane.f32.xlu0 %v1918
  %v1920 = vpop.xlane.xlu0 %1919
  %v1921 = vsub.f32 %v1496, %v1875
  %v1922 = vsub.f32 %v1499, %v1878
  %v1923 = vsub.f32 %v1549, %v1881
  %v1924 = vsub.f32 %v1552, %v1884
  %v1925 = vsub.f32 %v1602, %v1887
  %v1926 = vsub.f32 %v1605, %v1890
  %v1927 = vsub.f32 %v1655, %v1893
  %v1928 = vsub.f32 %v1658, %v1896
  %v1929 = vsub.f32 %v1708, %v1899
  %v1930 = vsub.f32 %v1711, %v1902
  %v1931 = vsub.f32 %v1761, %v1905
  %v1932 = vsub.f32 %v1764, %v1908
  %v1933 = vsub.f32 %v1814, %v1911
  %v1934 = vsub.f32 %v1817, %v1914
  %v1935 = vsub.f32 %v1867, %v1917
  %v1936 = vsub.f32 %v1870, %v1920
  %v1937 = vmul.f32 %v1921, 1.442695
  %v1938 = vpow.pop %v1937
  %v1939 = vmul.f32 %v1922, 1.442695
  %v1940 = vpow.pop %v1939
  %v1941 = vmul.f32 %v1923, 1.442695
  %v1942 = vpow.pop %v1941
  %v1943 = vmul.f32 %v1924, 1.442695
  %v1944 = vpow.pop %v1943
  %v1945 = vmul.f32 %v1925, 1.442695
  %v1946 = vpow.pop %v1945
  %v1947 = vmul.f32 %v1926, 1.442695
  %v1948 = vpow.pop %v1947
  %v1949 = vmul.f32 %v1927, 1.442695
  %v1950 = vpow.pop %v1949
  %v1951 = vmul.f32 %v1928, 1.442695
  %v1952 = vpow.pop %v1951
  %v1953 = vmul.f32 %v1929, 1.442695
  %v1954 = vpow.pop %v1953
  %v1955 = vmul.f32 %v1930, 1.442695
  %v1956 = vpow.pop %v1955
  %v1957 = vmul.f32 %v1931, 1.442695
  %v1958 = vpow.pop %v1957
  %v1959 = vmul.f32 %v1932, 1.442695
  %v1960 = vpow.pop %v1959
  %v1961 = vmul.f32 %v1933, 1.442695
  %v1962 = vpow.pop %v1961
  %v1963 = vmul.f32 %v1934, 1.442695
  %v1964 = vpow.pop %v1963
  %v1965 = vmul.f32 %v1935, 1.442695
  %v1966 = vpow.pop %v1965
  %v1967 = vmul.f32 %v1936, 1.442695
  %v1968 = vpow.pop %v1967
  %v1969 = vsel %vm912, %v1938, 0.0
  %1970 = vadd.xlane.f32.xlu0 %v1969
  %v1971 = vpop.xlane.xlu0 %1970
  %v1972 = vsel %vm912, %v1940, 0.0
  %1973 = vadd.xlane.f32.xlu0 %v1972
  %v1974 = vpop.xlane.xlu0 %1973
  %v1975 = vsel %vm912, %v1942, 0.0
  %1976 = vadd.xlane.f32.xlu0 %v1975
  %v1977 = vpop.xlane.xlu0 %1976
  %v1978 = vsel %vm912, %v1944, 0.0
  %1979 = vadd.xlane.f32.xlu0 %v1978
  %v1980 = vpop.xlane.xlu0 %1979
  %v1981 = vsel %vm912, %v1946, 0.0
  %1982 = vadd.xlane.f32.xlu0 %v1981
  %v1983 = vpop.xlane.xlu0 %1982
  %v1984 = vsel %vm912, %v1948, 0.0
  %1985 = vadd.xlane.f32.xlu0 %v1984
  %v1986 = vpop.xlane.xlu0 %1985
  %v1987 = vsel %vm912, %v1950, 0.0
  %1988 = vadd.xlane.f32.xlu0 %v1987
  %v1989 = vpop.xlane.xlu0 %1988
  %v1990 = vsel %vm912, %v1952, 0.0
  %1991 = vadd.xlane.f32.xlu0 %v1990
  %v1992 = vpop.xlane.xlu0 %1991
  %v1993 = vsel %vm912, %v1954, 0.0
  %1994 = vadd.xlane.f32.xlu0 %v1993
  %v1995 = vpop.xlane.xlu0 %1994
  %v1996 = vsel %vm912, %v1956, 0.0
  %1997 = vadd.xlane.f32.xlu0 %v1996
  %v1998 = vpop.xlane.xlu0 %1997
  %v1999 = vsel %vm912, %v1958, 0.0
  %2000 = vadd.xlane.f32.xlu0 %v1999
  %v2001 = vpop.xlane.xlu0 %2000
  %v2002 = vsel %vm912, %v1960, 0.0
  %2003 = vadd.xlane.f32.xlu0 %v2002
  %v2004 = vpop.xlane.xlu0 %2003
  %v2005 = vsel %vm912, %v1962, 0.0
  %2006 = vadd.xlane.f32.xlu0 %v2005
  %v2007 = vpop.xlane.xlu0 %2006
  %v2008 = vsel %vm912, %v1964, 0.0
  %2009 = vadd.xlane.f32.xlu0 %v2008
  %v2010 = vpop.xlane.xlu0 %2009
  %v2011 = vsel %vm912, %v1966, 0.0
  %2012 = vadd.xlane.f32.xlu0 %v2011
  %v2013 = vpop.xlane.xlu0 %2012
  %v2014 = vsel %vm912, %v1968, 0.0
  %2015 = vadd.xlane.f32.xlu0 %v2014
  %v2016 = vpop.xlane.xlu0 %2015
  %v2017 = vrcp.pop %v1971
  %v2018 = vrcp.pop %v1974
  %v2019 = vrcp.pop %v1977
  %v2020 = vrcp.pop %v1980
  %v2021 = vrcp.pop %v1983
  %v2022 = vrcp.pop %v1986
  %v2023 = vrcp.pop %v1989
  %v2024 = vrcp.pop %v1992
  %v2025 = vrcp.pop %v1995
  %v2026 = vrcp.pop %v1998
  %v2027 = vrcp.pop %v2001
  %v2028 = vrcp.pop %v2004
  %v2029 = vrcp.pop %v2007
  %v2030 = vrcp.pop %v2010
  %v2031 = vrcp.pop %v2013
  %v2032 = vrcp.pop %v2016
  %v2033 = vmul.f32 %v1938, %v2017
  %v2034 = vmul.f32 %v1940, %v2018
  %v2035 = vmul.f32 %v1942, %v2019
  %v2036 = vmul.f32 %v1944, %v2020
  %v2037 = vmul.f32 %v1946, %v2021
  %v2038 = vmul.f32 %v1948, %v2022
  %v2039 = vmul.f32 %v1950, %v2023
  %v2040 = vmul.f32 %v1952, %v2024
  %v2041 = vmul.f32 %v1954, %v2025
  %v2042 = vmul.f32 %v1956, %v2026
  %v2043 = vmul.f32 %v1958, %v2027
  %v2044 = vmul.f32 %v1960, %v2028
  %v2045 = vmul.f32 %v1962, %v2029
  %v2046 = vmul.f32 %v1964, %v2030
  %v2047 = vmul.f32 %v1966, %v2031
  %v2048 = vmul.f32 %v1968, %v2032
  %v2049 = vpack.c.bf16 %v2034, %v2033
  %v2050 = vpack.c.bf16 %v2036, %v2035
  %v2051 = vpack.c.bf16 %v2038, %v2037
  %v2052 = vpack.c.bf16 %v2040, %v2039
  %v2053 = vpack.c.bf16 %v2042, %v2041
  %v2054 = vpack.c.bf16 %v2044, %v2043
  %v2055 = vpack.c.bf16 %v2046, %v2045
  %v2056 = vpack.c.bf16 %v2048, %v2047
  %2058 = vrot.lane.b32.xlu0 %v527, 96
  %v2059 = vpop.permute.xlu0 %2058
  %v2062 = vsel %vm912, %v2049, 0
  %2064 = vmatprep.subr.bf16.mxu0 0
  %2065 = vmatpush1.bf16.msra.mxu0 0
  %2066 = vmatprep.subr.bf16.mxu0 0
  %2067 = vmatpush1.bf16.msra.mxu0 0
  %2068 = vmatprep.subr.bf16.mxu0 0
  %2069 = vmatpush1.bf16.msra.mxu0 0
  %2070 = vmatprep.subr.bf16.mxu0 0
  %2071 = vmatpush1.bf16.msra.mxu0 0
  %2072 = vmatprep.subr.bf16.mxu0 0
  %2073 = vmatpush1.bf16.msra.mxu0 0
  %2074 = vmatprep.subr.bf16.mxu0 0
  %2075 = vmatpush1.bf16.msra.mxu0 0
  %2076 = vmatprep.subr.bf16.mxu0 0
  %2077 = vmatpush1.bf16.msra.mxu0 0
  %2078 = vmatprep.subr.bf16.mxu0 0
  %2079 = vmatpush1.bf16.msra.mxu0 %v2059
  %2080 = vmatprep.subr.bf16.mxu0 0
  %2081 = vmatpush2.bf16.msra.mxu0 0
  %2082 = vmatprep.subr.bf16.mxu0 0
  %2083 = vmatpush2.bf16.msra.mxu0 0
  %2084 = vmatprep.subr.bf16.mxu0 0
  %2085 = vmatpush2.bf16.msra.mxu0 0
  %2086 = vmatprep.subr.bf16.mxu0 0
  %2087 = vmatpush2.bf16.msra.mxu0 0
  %2088 = vmatprep.subr.bf16.mxu0 0
  %2089 = vmatpush2.bf16.msra.mxu0 0
  %2090 = vmatprep.subr.bf16.mxu0 0
  %2091 = vmatpush2.bf16.msra.mxu0 0
  %2092 = vmatprep.subr.bf16.mxu0 0
  %2093 = vmatpush2.bf16.msra.mxu0 0
  %2094 = vmatprep.subr.bf16.mxu0 0
  %2095 = vmatpush2.bf16.msra.mxu0 0
  %2096 = vmatprep.mubr.bf16.mxu0 0
  %2097 = vmatmul.mubr.bf16.gmra.mxu0 %v2062
  %v2098 = vpop.f32.mrf.mxu0
  %v2099 = vadd.f32 0.0, %v2098
  %v2100 = vpop.f32.mrf.mxu0
  %v2101 = vpop.f32.mrf.mxu0
  %v2102 = vadd.f32 0.0, %v2101
  %v2103 = vpop.f32.mrf.mxu0
  %2104 = vdwg.mxu0
  %2106 = vrot.lane.b32.xlu0 %v528, 96
  %v2107 = vpop.permute.xlu0 %2106
  %v2110 = vsel %vm912, %v2050, 0
  %2112 = vmatprep.subr.bf16.mxu0 0
  %2113 = vmatpush1.bf16.msra.mxu0 0
  %2114 = vmatprep.subr.bf16.mxu0 0
  %2115 = vmatpush1.bf16.msra.mxu0 0
  %2116 = vmatprep.subr.bf16.mxu0 0
  %2117 = vmatpush1.bf16.msra.mxu0 0
  %2118 = vmatprep.subr.bf16.mxu0 0
  %2119 = vmatpush1.bf16.msra.mxu0 0
  %2120 = vmatprep.subr.bf16.mxu0 0
  %2121 = vmatpush1.bf16.msra.mxu0 0
  %2122 = vmatprep.subr.bf16.mxu0 0
  %2123 = vmatpush1.bf16.msra.mxu0 0
  %2124 = vmatprep.subr.bf16.mxu0 0
  %2125 = vmatpush1.bf16.msra.mxu0 0
  %2126 = vmatprep.subr.bf16.mxu0 0
  %2127 = vmatpush1.bf16.msra.mxu0 %v2107
  %2128 = vmatprep.subr.bf16.mxu0 0
  %2129 = vmatpush2.bf16.msra.mxu0 0
  %2130 = vmatprep.subr.bf16.mxu0 0
  %2131 = vmatpush2.bf16.msra.mxu0 0
  %2132 = vmatprep.subr.bf16.mxu0 0
  %2133 = vmatpush2.bf16.msra.mxu0 0
  %2134 = vmatprep.subr.bf16.mxu0 0
  %2135 = vmatpush2.bf16.msra.mxu0 0
  %2136 = vmatprep.subr.bf16.mxu0 0
  %2137 = vmatpush2.bf16.msra.mxu0 0
  %2138 = vmatprep.subr.bf16.mxu0 0
  %2139 = vmatpush2.bf16.msra.mxu0 0
  %2140 = vmatprep.subr.bf16.mxu0 0
  %2141 = vmatpush2.bf16.msra.mxu0 0
  %2142 = vmatprep.subr.bf16.mxu0 0
  %2143 = vmatpush2.bf16.msra.mxu0 0
  %2144 = vmatprep.mubr.bf16.mxu0 0
  %2145 = vmatmul.mubr.bf16.gmra.mxu0 %v2110
  %v2146 = vpop.f32.mrf.mxu0
  %v2147 = vadd.f32 0.0, %v2146
  %v2148 = vpop.f32.mrf.mxu0
  %v2149 = vpop.f32.mrf.mxu0
  %v2150 = vadd.f32 0.0, %v2149
  %v2151 = vpop.f32.mrf.mxu0
  %2152 = vdwg.mxu0
  %2154 = vrot.lane.b32.xlu0 %v529, 96
  %v2155 = vpop.permute.xlu0 %2154
  %v2158 = vsel %vm912, %v2051, 0
  %2160 = vmatprep.subr.bf16.mxu0 0
  %2161 = vmatpush1.bf16.msra.mxu0 0
  %2162 = vmatprep.subr.bf16.mxu0 0
  %2163 = vmatpush1.bf16.msra.mxu0 0
  %2164 = vmatprep.subr.bf16.mxu0 0
  %2165 = vmatpush1.bf16.msra.mxu0 0
  %2166 = vmatprep.subr.bf16.mxu0 0
  %2167 = vmatpush1.bf16.msra.mxu0 0
  %2168 = vmatprep.subr.bf16.mxu0 0
  %2169 = vmatpush1.bf16.msra.mxu0 0
  %2170 = vmatprep.subr.bf16.mxu0 0
  %2171 = vmatpush1.bf16.msra.mxu0 0
  %2172 = vmatprep.subr.bf16.mxu0 0
  %2173 = vmatpush1.bf16.msra.mxu0 0
  %2174 = vmatprep.subr.bf16.mxu0 0
  %2175 = vmatpush1.bf16.msra.mxu0 %v2155
  %2176 = vmatprep.subr.bf16.mxu0 0
  %2177 = vmatpush2.bf16.msra.mxu0 0
  %2178 = vmatprep.subr.bf16.mxu0 0
  %2179 = vmatpush2.bf16.msra.mxu0 0
  %2180 = vmatprep.subr.bf16.mxu0 0
  %2181 = vmatpush2.bf16.msra.mxu0 0
  %2182 = vmatprep.subr.bf16.mxu0 0
  %2183 = vmatpush2.bf16.msra.mxu0 0
  %2184 = vmatprep.subr.bf16.mxu0 0
  %2185 = vmatpush2.bf16.msra.mxu0 0
  %2186 = vmatprep.subr.bf16.mxu0 0
  %2187 = vmatpush2.bf16.msra.mxu0 0
  %2188 = vmatprep.subr.bf16.mxu0 0
  %2189 = vmatpush2.bf16.msra.mxu0 0
  %2190 = vmatprep.subr.bf16.mxu0 0
  %2191 = vmatpush2.bf16.msra.mxu0 0
  %2192 = vmatprep.mubr.bf16.mxu0 0
  %2193 = vmatmul.mubr.bf16.gmra.mxu0 %v2158
  %v2194 = vpop.f32.mrf.mxu0
  %v2195 = vadd.f32 0.0, %v2194
  %v2196 = vpop.f32.mrf.mxu0
  %v2197 = vpop.f32.mrf.mxu0
  %v2198 = vadd.f32 0.0, %v2197
  %v2199 = vpop.f32.mrf.mxu0
  %2200 = vdwg.mxu0
  %2202 = vrot.lane.b32.xlu0 %v530, 96
  %v2203 = vpop.permute.xlu0 %2202
  %v2206 = vsel %vm912, %v2052, 0
  %2208 = vmatprep.subr.bf16.mxu0 0
  %2209 = vmatpush1.bf16.msra.mxu0 0
  %2210 = vmatprep.subr.bf16.mxu0 0
  %2211 = vmatpush1.bf16.msra.mxu0 0
  %2212 = vmatprep.subr.bf16.mxu0 0
  %2213 = vmatpush1.bf16.msra.mxu0 0
  %2214 = vmatprep.subr.bf16.mxu0 0
  %2215 = vmatpush1.bf16.msra.mxu0 0
  %2216 = vmatprep.subr.bf16.mxu0 0
  %2217 = vmatpush1.bf16.msra.mxu0 0
  %2218 = vmatprep.subr.bf16.mxu0 0
  %2219 = vmatpush1.bf16.msra.mxu0 0
  %2220 = vmatprep.subr.bf16.mxu0 0
  %2221 = vmatpush1.bf16.msra.mxu0 0
  %2222 = vmatprep.subr.bf16.mxu0 0
  %2223 = vmatpush1.bf16.msra.mxu0 %v2203
  %2224 = vmatprep.subr.bf16.mxu0 0
  %2225 = vmatpush2.bf16.msra.mxu0 0
  %2226 = vmatprep.subr.bf16.mxu0 0
  %2227 = vmatpush2.bf16.msra.mxu0 0
  %2228 = vmatprep.subr.bf16.mxu0 0
  %2229 = vmatpush2.bf16.msra.mxu0 0
  %2230 = vmatprep.subr.bf16.mxu0 0
  %2231 = vmatpush2.bf16.msra.mxu0 0
  %2232 = vmatprep.subr.bf16.mxu0 0
  %2233 = vmatpush2.bf16.msra.mxu0 0
  %2234 = vmatprep.subr.bf16.mxu0 0
  %2235 = vmatpush2.bf16.msra.mxu0 0
  %2236 = vmatprep.subr.bf16.mxu0 0
  %2237 = vmatpush2.bf16.msra.mxu0 0
  %2238 = vmatprep.subr.bf16.mxu0 0
  %2239 = vmatpush2.bf16.msra.mxu0 0
  %2240 = vmatprep.mubr.bf16.mxu0 0
  %2241 = vmatmul.mubr.bf16.gmra.mxu0 %v2206
  %v2242 = vpop.f32.mrf.mxu0
  %v2243 = vadd.f32 0.0, %v2242
  %v2244 = vpop.f32.mrf.mxu0
  %v2245 = vpop.f32.mrf.mxu0
  %v2246 = vadd.f32 0.0, %v2245
  %v2247 = vpop.f32.mrf.mxu0
  %2248 = vdwg.mxu0
  %2250 = vrot.lane.b32.xlu0 %v531, 96
  %v2251 = vpop.permute.xlu0 %2250
  %v2254 = vsel %vm912, %v2053, 0
  %2256 = vmatprep.subr.bf16.mxu0 0
  %2257 = vmatpush1.bf16.msra.mxu0 0
  %2258 = vmatprep.subr.bf16.mxu0 0
  %2259 = vmatpush1.bf16.msra.mxu0 0
  %2260 = vmatprep.subr.bf16.mxu0 0
  %2261 = vmatpush1.bf16.msra.mxu0 0
  %2262 = vmatprep.subr.bf16.mxu0 0
  %2263 = vmatpush1.bf16.msra.mxu0 0
  %2264 = vmatprep.subr.bf16.mxu0 0
  %2265 = vmatpush1.bf16.msra.mxu0 0
  %2266 = vmatprep.subr.bf16.mxu0 0
  %2267 = vmatpush1.bf16.msra.mxu0 0
  %2268 = vmatprep.subr.bf16.mxu0 0
  %2269 = vmatpush1.bf16.msra.mxu0 0
  %2270 = vmatprep.subr.bf16.mxu0 0
  %2271 = vmatpush1.bf16.msra.mxu0 %v2251
  %2272 = vmatprep.subr.bf16.mxu0 0
  %2273 = vmatpush2.bf16.msra.mxu0 0
  %2274 = vmatprep.subr.bf16.mxu0 0
  %2275 = vmatpush2.bf16.msra.mxu0 0
  %2276 = vmatprep.subr.bf16.mxu0 0
  %2277 = vmatpush2.bf16.msra.mxu0 0
  %2278 = vmatprep.subr.bf16.mxu0 0
  %2279 = vmatpush2.bf16.msra.mxu0 0
  %2280 = vmatprep.subr.bf16.mxu0 0
  %2281 = vmatpush2.bf16.msra.mxu0 0
  %2282 = vmatprep.subr.bf16.mxu0 0
  %2283 = vmatpush2.bf16.msra.mxu0 0
  %2284 = vmatprep.subr.bf16.mxu0 0
  %2285 = vmatpush2.bf16.msra.mxu0 0
  %2286 = vmatprep.subr.bf16.mxu0 0
  %2287 = vmatpush2.bf16.msra.mxu0 0
  %2288 = vmatprep.mubr.bf16.mxu0 0
  %2289 = vmatmul.mubr.bf16.gmra.mxu0 %v2254
  %v2290 = vpop.f32.mrf.mxu0
  %v2291 = vadd.f32 0.0, %v2290
  %v2292 = vpop.f32.mrf.mxu0
  %v2293 = vpop.f32.mrf.mxu0
  %v2294 = vadd.f32 0.0, %v2293
  %v2295 = vpop.f32.mrf.mxu0
  %2296 = vdwg.mxu0
  %2298 = vrot.lane.b32.xlu0 %v532, 96
  %v2299 = vpop.permute.xlu0 %2298
  %v2302 = vsel %vm912, %v2054, 0
  %2304 = vmatprep.subr.bf16.mxu0 0
  %2305 = vmatpush1.bf16.msra.mxu0 0
  %2306 = vmatprep.subr.bf16.mxu0 0
  %2307 = vmatpush1.bf16.msra.mxu0 0
  %2308 = vmatprep.subr.bf16.mxu0 0
  %2309 = vmatpush1.bf16.msra.mxu0 0
  %2310 = vmatprep.subr.bf16.mxu0 0
  %2311 = vmatpush1.bf16.msra.mxu0 0
  %2312 = vmatprep.subr.bf16.mxu0 0
  %2313 = vmatpush1.bf16.msra.mxu0 0
  %2314 = vmatprep.subr.bf16.mxu0 0
  %2315 = vmatpush1.bf16.msra.mxu0 0
  %2316 = vmatprep.subr.bf16.mxu0 0
  %2317 = vmatpush1.bf16.msra.mxu0 0
  %2318 = vmatprep.subr.bf16.mxu0 0
  %2319 = vmatpush1.bf16.msra.mxu0 %v2299
  %2320 = vmatprep.subr.bf16.mxu0 0
  %2321 = vmatpush2.bf16.msra.mxu0 0
  %2322 = vmatprep.subr.bf16.mxu0 0
  %2323 = vmatpush2.bf16.msra.mxu0 0
  %2324 = vmatprep.subr.bf16.mxu0 0
  %2325 = vmatpush2.bf16.msra.mxu0 0
  %2326 = vmatprep.subr.bf16.mxu0 0
  %2327 = vmatpush2.bf16.msra.mxu0 0
  %2328 = vmatprep.subr.bf16.mxu0 0
  %2329 = vmatpush2.bf16.msra.mxu0 0
  %2330 = vmatprep.subr.bf16.mxu0 0
  %2331 = vmatpush2.bf16.msra.mxu0 0
  %2332 = vmatprep.subr.bf16.mxu0 0
  %2333 = vmatpush2.bf16.msra.mxu0 0
  %2334 = vmatprep.subr.bf16.mxu0 0
  %2335 = vmatpush2.bf16.msra.mxu0 0
  %2336 = vmatprep.mubr.bf16.mxu0 0
  %2337 = vmatmul.mubr.bf16.gmra.mxu0 %v2302
  %v2338 = vpop.f32.mrf.mxu0
  %v2339 = vadd.f32 0.0, %v2338
  %v2340 = vpop.f32.mrf.mxu0
  %v2341 = vpop.f32.mrf.mxu0
  %v2342 = vadd.f32 0.0, %v2341
  %v2343 = vpop.f32.mrf.mxu0
  %2344 = vdwg.mxu0
  %2346 = vrot.lane.b32.xlu0 %v533, 96
  %v2347 = vpop.permute.xlu0 %2346
  %v2350 = vsel %vm912, %v2055, 0
  %2352 = vmatprep.subr.bf16.mxu0 0
  %2353 = vmatpush1.bf16.msra.mxu0 0
  %2354 = vmatprep.subr.bf16.mxu0 0
  %2355 = vmatpush1.bf16.msra.mxu0 0
  %2356 = vmatprep.subr.bf16.mxu0 0
  %2357 = vmatpush1.bf16.msra.mxu0 0
  %2358 = vmatprep.subr.bf16.mxu0 0
  %2359 = vmatpush1.bf16.msra.mxu0 0
  %2360 = vmatprep.subr.bf16.mxu0 0
  %2361 = vmatpush1.bf16.msra.mxu0 0
  %2362 = vmatprep.subr.bf16.mxu0 0
  %2363 = vmatpush1.bf16.msra.mxu0 0
  %2364 = vmatprep.subr.bf16.mxu0 0
  %2365 = vmatpush1.bf16.msra.mxu0 0
  %2366 = vmatprep.subr.bf16.mxu0 0
  %2367 = vmatpush1.bf16.msra.mxu0 %v2347
  %2368 = vmatprep.subr.bf16.mxu0 0
  %2369 = vmatpush2.bf16.msra.mxu0 0
  %2370 = vmatprep.subr.bf16.mxu0 0
  %2371 = vmatpush2.bf16.msra.mxu0 0
  %2372 = vmatprep.subr.bf16.mxu0 0
  %2373 = vmatpush2.bf16.msra.mxu0 0
  %2374 = vmatprep.subr.bf16.mxu0 0
  %2375 = vmatpush2.bf16.msra.mxu0 0
  %2376 = vmatprep.subr.bf16.mxu0 0
  %2377 = vmatpush2.bf16.msra.mxu0 0
  %2378 = vmatprep.subr.bf16.mxu0 0
  %2379 = vmatpush2.bf16.msra.mxu0 0
  %2380 = vmatprep.subr.bf16.mxu0 0
  %2381 = vmatpush2.bf16.msra.mxu0 0
  %2382 = vmatprep.subr.bf16.mxu0 0
  %2383 = vmatpush2.bf16.msra.mxu0 0
  %2384 = vmatprep.mubr.bf16.mxu0 0
  %2385 = vmatmul.mubr.bf16.gmra.mxu0 %v2350
  %v2386 = vpop.f32.mrf.mxu0
  %v2387 = vadd.f32 0.0, %v2386
  %v2388 = vpop.f32.mrf.mxu0
  %v2389 = vpop.f32.mrf.mxu0
  %v2390 = vadd.f32 0.0, %v2389
  %v2391 = vpop.f32.mrf.mxu0
  %2392 = vdwg.mxu0
  %2394 = vrot.lane.b32.xlu0 %v534, 96
  %v2395 = vpop.permute.xlu0 %2394
  %v2398 = vsel %vm912, %v2056, 0
  %2400 = vmatprep.subr.bf16.mxu0 0
  %2401 = vmatpush1.bf16.msra.mxu0 0
  %2402 = vmatprep.subr.bf16.mxu0 0
  %2403 = vmatpush1.bf16.msra.mxu0 0
  %2404 = vmatprep.subr.bf16.mxu0 0
  %2405 = vmatpush1.bf16.msra.mxu0 0
  %2406 = vmatprep.subr.bf16.mxu0 0
  %2407 = vmatpush1.bf16.msra.mxu0 0
  %2408 = vmatprep.subr.bf16.mxu0 0
  %2409 = vmatpush1.bf16.msra.mxu0 0
  %2410 = vmatprep.subr.bf16.mxu0 0
  %2411 = vmatpush1.bf16.msra.mxu0 0
  %2412 = vmatprep.subr.bf16.mxu0 0
  %2413 = vmatpush1.bf16.msra.mxu0 0
  %2414 = vmatprep.subr.bf16.mxu0 0
  %2415 = vmatpush1.bf16.msra.mxu0 %v2395
  %2416 = vmatprep.subr.bf16.mxu0 0
  %2417 = vmatpush2.bf16.msra.mxu0 0
  %2418 = vmatprep.subr.bf16.mxu0 0
  %2419 = vmatpush2.bf16.msra.mxu0 0
  %2420 = vmatprep.subr.bf16.mxu0 0
  %2421 = vmatpush2.bf16.msra.mxu0 0
  %2422 = vmatprep.subr.bf16.mxu0 0
  %2423 = vmatpush2.bf16.msra.mxu0 0
  %2424 = vmatprep.subr.bf16.mxu0 0
  %2425 = vmatpush2.bf16.msra.mxu0 0
  %2426 = vmatprep.subr.bf16.mxu0 0
  %2427 = vmatpush2.bf16.msra.mxu0 0
  %2428 = vmatprep.subr.bf16.mxu0 0
  %2429 = vmatpush2.bf16.msra.mxu0 0
  %2430 = vmatprep.subr.bf16.mxu0 0
  %2431 = vmatpush2.bf16.msra.mxu0 0
  %2432 = vmatprep.mubr.bf16.mxu0 0
  %2433 = vmatmul.mubr.bf16.gmra.mxu0 %v2398
  %v2434 = vpop.f32.mrf.mxu0
  %v2435 = vadd.f32 0.0, %v2434
  %v2436 = vpop.f32.mrf.mxu0
  %v2437 = vpop.f32.mrf.mxu0
  %v2438 = vadd.f32 0.0, %v2437
  %v2439 = vpop.f32.mrf.mxu0
  %2440 = vdwg.mxu0
  %2441 = vrot.lane.b32.xlu0 %v511, 64
  %v2442 = vpop.permute.xlu0 %2441
  %2443 = vrot.lane.b32.xlu0 %v519, 64
  %v2444 = vpop.permute.xlu0 %2443
  %v2446 = vsel %vm535, %v2442, 0
  %v2449 = vsel %vm535, %v2444, 0
  %2451 = vmatprep.subr.bf16.mxu0 0
  %2452 = vmatpush1.bf16.xpose.msra.mxu0 0
  %2453 = vmatprep.subr.bf16.mxu0 0
  %2454 = vmatpush1.bf16.xpose.msra.mxu0 0
  %2455 = vmatprep.subr.bf16.mxu0 0
  %2456 = vmatpush1.bf16.xpose.msra.mxu0 0
  %2457 = vmatprep.subr.bf16.mxu0 0
  %2458 = vmatpush1.bf16.xpose.msra.mxu0 0
  %2459 = vmatprep.subr.bf16.mxu0 0
  %2460 = vmatpush1.bf16.xpose.msra.mxu0 0
  %2461 = vmatprep.subr.bf16.mxu0 0
  %2462 = vmatpush1.bf16.xpose.msra.mxu0 0
  %2463 = vmatprep.subr.bf16.mxu0 0
  %2464 = vmatpush1.bf16.xpose.msra.mxu0 0
  %2465 = vmatprep.subr.bf16.mxu0 0
  %2466 = vmatpush1.bf16.xpose.msra.mxu0 %v2449
  %2467 = vmatprep.subr.bf16.mxu0 0
  %2468 = vmatpush2.bf16.xpose.msra.mxu0 0
  %2469 = vmatprep.subr.bf16.mxu0 0
  %2470 = vmatpush2.bf16.xpose.msra.mxu0 0
  %2471 = vmatprep.subr.bf16.mxu0 0
  %2472 = vmatpush2.bf16.xpose.msra.mxu0 0
  %2473 = vmatprep.subr.bf16.mxu0 0
  %2474 = vmatpush2.bf16.xpose.msra.mxu0 0
  %2475 = vmatprep.subr.bf16.mxu0 0
  %2476 = vmatpush2.bf16.xpose.msra.mxu0 0
  %2477 = vmatprep.subr.bf16.mxu0 0
  %2478 = vmatpush2.bf16.xpose.msra.mxu0 0
  %2479 = vmatprep.subr.bf16.mxu0 0
  %2480 = vmatpush2.bf16.xpose.msra.mxu0 0
  %2481 = vmatprep.subr.bf16.mxu0 0
  %2482 = vmatpush2.bf16.xpose.msra.mxu0 0
  %2483 = vmatprep.mubr.bf16.mxu0 0
  %2484 = vmatmul.mubr.bf16.gmra.mxu0 %v2446
  %v2485 = vpop.f32.mrf.mxu0
  %v2486 = vadd.f32 %v101, %v2485
  %v2487 = vpop.f32.mrf.mxu0
  %v2488 = vpop.f32.mrf.mxu0
  %v2489 = vadd.f32 %v102, %v2488
  %v2490 = vpop.f32.mrf.mxu0
  %2491 = vdwg.mxu0
  %2492 = vrot.lane.b32.xlu0 %v512, 64
  %v2493 = vpop.permute.xlu0 %2492
  %2494 = vrot.lane.b32.xlu0 %v520, 64
  %v2495 = vpop.permute.xlu0 %2494
  %v2497 = vsel %vm535, %v2493, 0
  %v2500 = vsel %vm535, %v2495, 0
  %2502 = vmatprep.subr.bf16.mxu0 0
  %2503 = vmatpush1.bf16.xpose.msra.mxu0 0
  %2504 = vmatprep.subr.bf16.mxu0 0
  %2505 = vmatpush1.bf16.xpose.msra.mxu0 0
  %2506 = vmatprep.subr.bf16.mxu0 0
  %2507 = vmatpush1.bf16.xpose.msra.mxu0 0
  %2508 = vmatprep.subr.bf16.mxu0 0
  %2509 = vmatpush1.bf16.xpose.msra.mxu0 0
  %2510 = vmatprep.subr.bf16.mxu0 0
  %2511 = vmatpush1.bf16.xpose.msra.mxu0 0
  %2512 = vmatprep.subr.bf16.mxu0 0
  %2513 = vmatpush1.bf16.xpose.msra.mxu0 0
  %2514 = vmatprep.subr.bf16.mxu0 0
  %2515 = vmatpush1.bf16.xpose.msra.mxu0 0
  %2516 = vmatprep.subr.bf16.mxu0 0
  %2517 = vmatpush1.bf16.xpose.msra.mxu0 %v2500
  %2518 = vmatprep.subr.bf16.mxu0 0
  %2519 = vmatpush2.bf16.xpose.msra.mxu0 0
  %2520 = vmatprep.subr.bf16.mxu0 0
  %2521 = vmatpush2.bf16.xpose.msra.mxu0 0
  %2522 = vmatprep.subr.bf16.mxu0 0
  %2523 = vmatpush2.bf16.xpose.msra.mxu0 0
  %2524 = vmatprep.subr.bf16.mxu0 0
  %2525 = vmatpush2.bf16.xpose.msra.mxu0 0
  %2526 = vmatprep.subr.bf16.mxu0 0
  %2527 = vmatpush2.bf16.xpose.msra.mxu0 0
  %2528 = vmatprep.subr.bf16.mxu0 0
  %2529 = vmatpush2.bf16.xpose.msra.mxu0 0
  %2530 = vmatprep.subr.bf16.mxu0 0
  %2531 = vmatpush2.bf16.xpose.msra.mxu0 0
  %2532 = vmatprep.subr.bf16.mxu0 0
  %2533 = vmatpush2.bf16.xpose.msra.mxu0 0
  %2534 = vmatprep.mubr.bf16.mxu0 0
  %2535 = vmatmul.mubr.bf16.gmra.mxu0 %v2497
  %v2536 = vpop.f32.mrf.mxu0
  %v2537 = vadd.f32 %v103, %v2536
  %v2538 = vpop.f32.mrf.mxu0
  %v2539 = vpop.f32.mrf.mxu0
  %v2540 = vadd.f32 %v104, %v2539
  %v2541 = vpop.f32.mrf.mxu0
  %2542 = vdwg.mxu0
  %2543 = vrot.lane.b32.xlu0 %v513, 64
  %v2544 = vpop.permute.xlu0 %2543
  %2545 = vrot.lane.b32.xlu0 %v521, 64
  %v2546 = vpop.permute.xlu0 %2545
  %v2548 = vsel %vm535, %v2544, 0
  %v2551 = vsel %vm535, %v2546, 0
  %2553 = vmatprep.subr.bf16.mxu0 0
  %2554 = vmatpush1.bf16.xpose.msra.mxu0 0
  %2555 = vmatprep.subr.bf16.mxu0 0
  %2556 = vmatpush1.bf16.xpose.msra.mxu0 0
  %2557 = vmatprep.subr.bf16.mxu0 0
  %2558 = vmatpush1.bf16.xpose.msra.mxu0 0
  %2559 = vmatprep.subr.bf16.mxu0 0
  %2560 = vmatpush1.bf16.xpose.msra.mxu0 0
  %2561 = vmatprep.subr.bf16.mxu0 0
  %2562 = vmatpush1.bf16.xpose.msra.mxu0 0
  %2563 = vmatprep.subr.bf16.mxu0 0
  %2564 = vmatpush1.bf16.xpose.msra.mxu0 0
  %2565 = vmatprep.subr.bf16.mxu0 0
  %2566 = vmatpush1.bf16.xpose.msra.mxu0 0
  %2567 = vmatprep.subr.bf16.mxu0 0
  %2568 = vmatpush1.bf16.xpose.msra.mxu0 %v2551
  %2569 = vmatprep.subr.bf16.mxu0 0
  %2570 = vmatpush2.bf16.xpose.msra.mxu0 0
  %2571 = vmatprep.subr.bf16.mxu0 0
  %2572 = vmatpush2.bf16.xpose.msra.mxu0 0
  %2573 = vmatprep.subr.bf16.mxu0 0
  %2574 = vmatpush2.bf16.xpose.msra.mxu0 0
  %2575 = vmatprep.subr.bf16.mxu0 0
  %2576 = vmatpush2.bf16.xpose.msra.mxu0 0
  %2577 = vmatprep.subr.bf16.mxu0 0
  %2578 = vmatpush2.bf16.xpose.msra.mxu0 0
  %2579 = vmatprep.subr.bf16.mxu0 0
  %2580 = vmatpush2.bf16.xpose.msra.mxu0 0
  %2581 = vmatprep.subr.bf16.mxu0 0
  %2582 = vmatpush2.bf16.xpose.msra.mxu0 0
  %2583 = vmatprep.subr.bf16.mxu0 0
  %2584 = vmatpush2.bf16.xpose.msra.mxu0 0
  %2585 = vmatprep.mubr.bf16.mxu0 0
  %2586 = vmatmul.mubr.bf16.gmra.mxu0 %v2548
  %v2587 = vpop.f32.mrf.mxu0
  %v2588 = vadd.f32 %v105, %v2587
  %v2589 = vpop.f32.mrf.mxu0
  %v2590 = vpop.f32.mrf.mxu0
  %v2591 = vadd.f32 %v106, %v2590
  %v2592 = vpop.f32.mrf.mxu0
  %2593 = vdwg.mxu0
  %2594 = vrot.lane.b32.xlu0 %v514, 64
  %v2595 = vpop.permute.xlu0 %2594
  %2596 = vrot.lane.b32.xlu0 %v522, 64
  %v2597 = vpop.permute.xlu0 %2596
  %v2599 = vsel %vm535, %v2595, 0
  %v2602 = vsel %vm535, %v2597, 0
  %2604 = vmatprep.subr.bf16.mxu0 0
  %2605 = vmatpush1.bf16.xpose.msra.mxu0 0
  %2606 = vmatprep.subr.bf16.mxu0 0
  %2607 = vmatpush1.bf16.xpose.msra.mxu0 0
  %2608 = vmatprep.subr.bf16.mxu0 0
  %2609 = vmatpush1.bf16.xpose.msra.mxu0 0
  %2610 = vmatprep.subr.bf16.mxu0 0
  %2611 = vmatpush1.bf16.xpose.msra.mxu0 0
  %2612 = vmatprep.subr.bf16.mxu0 0
  %2613 = vmatpush1.bf16.xpose.msra.mxu0 0
  %2614 = vmatprep.subr.bf16.mxu0 0
  %2615 = vmatpush1.bf16.xpose.msra.mxu0 0
  %2616 = vmatprep.subr.bf16.mxu0 0
  %2617 = vmatpush1.bf16.xpose.msra.mxu0 0
  %2618 = vmatprep.subr.bf16.mxu0 0
  %2619 = vmatpush1.bf16.xpose.msra.mxu0 %v2602
  %2620 = vmatprep.subr.bf16.mxu0 0
  %2621 = vmatpush2.bf16.xpose.msra.mxu0 0
  %2622 = vmatprep.subr.bf16.mxu0 0
  %2623 = vmatpush2.bf16.xpose.msra.mxu0 0
  %2624 = vmatprep.subr.bf16.mxu0 0
  %2625 = vmatpush2.bf16.xpose.msra.mxu0 0
  %2626 = vmatprep.subr.bf16.mxu0 0
  %2627 = vmatpush2.bf16.xpose.msra.mxu0 0
  %2628 = vmatprep.subr.bf16.mxu0 0
  %2629 = vmatpush2.bf16.xpose.msra.mxu0 0
  %2630 = vmatprep.subr.bf16.mxu0 0
  %2631 = vmatpush2.bf16.xpose.msra.mxu0 0
  %2632 = vmatprep.subr.bf16.mxu0 0
  %2633 = vmatpush2.bf16.xpose.msra.mxu0 0
  %2634 = vmatprep.subr.bf16.mxu0 0
  %2635 = vmatpush2.bf16.xpose.msra.mxu0 0
  %2636 = vmatprep.mubr.bf16.mxu0 0
  %2637 = vmatmul.mubr.bf16.gmra.mxu0 %v2599
  %v2638 = vpop.f32.mrf.mxu0
  %v2639 = vadd.f32 %v107, %v2638
  %v2640 = vpop.f32.mrf.mxu0
  %v2641 = vpop.f32.mrf.mxu0
  %v2642 = vadd.f32 %v108, %v2641
  %v2643 = vpop.f32.mrf.mxu0
  %2644 = vdwg.mxu0
  %2645 = vrot.lane.b32.xlu0 %v515, 64
  %v2646 = vpop.permute.xlu0 %2645
  %2647 = vrot.lane.b32.xlu0 %v523, 64
  %v2648 = vpop.permute.xlu0 %2647
  %v2650 = vsel %vm535, %v2646, 0
  %v2653 = vsel %vm535, %v2648, 0
  %2655 = vmatprep.subr.bf16.mxu0 0
  %2656 = vmatpush1.bf16.xpose.msra.mxu0 0
  %2657 = vmatprep.subr.bf16.mxu0 0
  %2658 = vmatpush1.bf16.xpose.msra.mxu0 0
  %2659 = vmatprep.subr.bf16.mxu0 0
  %2660 = vmatpush1.bf16.xpose.msra.mxu0 0
  %2661 = vmatprep.subr.bf16.mxu0 0
  %2662 = vmatpush1.bf16.xpose.msra.mxu0 0
  %2663 = vmatprep.subr.bf16.mxu0 0
  %2664 = vmatpush1.bf16.xpose.msra.mxu0 0
  %2665 = vmatprep.subr.bf16.mxu0 0
  %2666 = vmatpush1.bf16.xpose.msra.mxu0 0
  %2667 = vmatprep.subr.bf16.mxu0 0
  %2668 = vmatpush1.bf16.xpose.msra.mxu0 0
  %2669 = vmatprep.subr.bf16.mxu0 0
  %2670 = vmatpush1.bf16.xpose.msra.mxu0 %v2653
  %2671 = vmatprep.subr.bf16.mxu0 0
  %2672 = vmatpush2.bf16.xpose.msra.mxu0 0
  %2673 = vmatprep.subr.bf16.mxu0 0
  %2674 = vmatpush2.bf16.xpose.msra.mxu0 0
  %2675 = vmatprep.subr.bf16.mxu0 0
  %2676 = vmatpush2.bf16.xpose.msra.mxu0 0
  %2677 = vmatprep.subr.bf16.mxu0 0
  %2678 = vmatpush2.bf16.xpose.msra.mxu0 0
  %2679 = vmatprep.subr.bf16.mxu0 0
  %2680 = vmatpush2.bf16.xpose.msra.mxu0 0
  %2681 = vmatprep.subr.bf16.mxu0 0
  %2682 = vmatpush2.bf16.xpose.msra.mxu0 0
  %2683 = vmatprep.subr.bf16.mxu0 0
  %2684 = vmatpush2.bf16.xpose.msra.mxu0 0
  %2685 = vmatprep.subr.bf16.mxu0 0
  %2686 = vmatpush2.bf16.xpose.msra.mxu0 0
  %2687 = vmatprep.mubr.bf16.mxu0 0
  %2688 = vmatmul.mubr.bf16.gmra.mxu0 %v2650
  %v2689 = vpop.f32.mrf.mxu0
  %v2690 = vadd.f32 %v109, %v2689
  %v2691 = vpop.f32.mrf.mxu0
  %v2692 = vpop.f32.mrf.mxu0
  %v2693 = vadd.f32 %v110, %v2692
  %v2694 = vpop.f32.mrf.mxu0
  %2695 = vdwg.mxu0
  %2696 = vrot.lane.b32.xlu0 %v516, 64
  %v2697 = vpop.permute.xlu0 %2696
  %2698 = vrot.lane.b32.xlu0 %v524, 64
  %v2699 = vpop.permute.xlu0 %2698
  %v2701 = vsel %vm535, %v2697, 0
  %v2704 = vsel %vm535, %v2699, 0
  %2706 = vmatprep.subr.bf16.mxu0 0
  %2707 = vmatpush1.bf16.xpose.msra.mxu0 0
  %2708 = vmatprep.subr.bf16.mxu0 0
  %2709 = vmatpush1.bf16.xpose.msra.mxu0 0
  %2710 = vmatprep.subr.bf16.mxu0 0
  %2711 = vmatpush1.bf16.xpose.msra.mxu0 0
  %2712 = vmatprep.subr.bf16.mxu0 0
  %2713 = vmatpush1.bf16.xpose.msra.mxu0 0
  %2714 = vmatprep.subr.bf16.mxu0 0
  %2715 = vmatpush1.bf16.xpose.msra.mxu0 0
  %2716 = vmatprep.subr.bf16.mxu0 0
  %2717 = vmatpush1.bf16.xpose.msra.mxu0 0
  %2718 = vmatprep.subr.bf16.mxu0 0
  %2719 = vmatpush1.bf16.xpose.msra.mxu0 0
  %2720 = vmatprep.subr.bf16.mxu0 0
  %2721 = vmatpush1.bf16.xpose.msra.mxu0 %v2704
  %2722 = vmatprep.subr.bf16.mxu0 0
  %2723 = vmatpush2.bf16.xpose.msra.mxu0 0
  %2724 = vmatprep.subr.bf16.mxu0 0
  %2725 = vmatpush2.bf16.xpose.msra.mxu0 0
  %2726 = vmatprep.subr.bf16.mxu0 0
  %2727 = vmatpush2.bf16.xpose.msra.mxu0 0
  %2728 = vmatprep.subr.bf16.mxu0 0
  %2729 = vmatpush2.bf16.xpose.msra.mxu0 0
  %2730 = vmatprep.subr.bf16.mxu0 0
  %2731 = vmatpush2.bf16.xpose.msra.mxu0 0
  %2732 = vmatprep.subr.bf16.mxu0 0
  %2733 = vmatpush2.bf16.xpose.msra.mxu0 0
  %2734 = vmatprep.subr.bf16.mxu0 0
  %2735 = vmatpush2.bf16.xpose.msra.mxu0 0
  %2736 = vmatprep.subr.bf16.mxu0 0
  %2737 = vmatpush2.bf16.xpose.msra.mxu0 0
  %2738 = vmatprep.mubr.bf16.mxu0 0
  %2739 = vmatmul.mubr.bf16.gmra.mxu0 %v2701
  %v2740 = vpop.f32.mrf.mxu0
  %v2741 = vadd.f32 %v111, %v2740
  %v2742 = vpop.f32.mrf.mxu0
  %v2743 = vpop.f32.mrf.mxu0
  %v2744 = vadd.f32 %v112, %v2743
  %v2745 = vpop.f32.mrf.mxu0
  %2746 = vdwg.mxu0
  %2747 = vrot.lane.b32.xlu0 %v517, 64
  %v2748 = vpop.permute.xlu0 %2747
  %2749 = vrot.lane.b32.xlu0 %v525, 64
  %v2750 = vpop.permute.xlu0 %2749
  %v2752 = vsel %vm535, %v2748, 0
  %v2755 = vsel %vm535, %v2750, 0
  %2757 = vmatprep.subr.bf16.mxu0 0
  %2758 = vmatpush1.bf16.xpose.msra.mxu0 0
  %2759 = vmatprep.subr.bf16.mxu0 0
  %2760 = vmatpush1.bf16.xpose.msra.mxu0 0
  %2761 = vmatprep.subr.bf16.mxu0 0
  %2762 = vmatpush1.bf16.xpose.msra.mxu0 0
  %2763 = vmatprep.subr.bf16.mxu0 0
  %2764 = vmatpush1.bf16.xpose.msra.mxu0 0
  %2765 = vmatprep.subr.bf16.mxu0 0
  %2766 = vmatpush1.bf16.xpose.msra.mxu0 0
  %2767 = vmatprep.subr.bf16.mxu0 0
  %2768 = vmatpush1.bf16.xpose.msra.mxu0 0
  %2769 = vmatprep.subr.bf16.mxu0 0
  %2770 = vmatpush1.bf16.xpose.msra.mxu0 0
  %2771 = vmatprep.subr.bf16.mxu0 0
  %2772 = vmatpush1.bf16.xpose.msra.mxu0 %v2755
  %2773 = vmatprep.subr.bf16.mxu0 0
  %2774 = vmatpush2.bf16.xpose.msra.mxu0 0
  %2775 = vmatprep.subr.bf16.mxu0 0
  %2776 = vmatpush2.bf16.xpose.msra.mxu0 0
  %2777 = vmatprep.subr.bf16.mxu0 0
  %2778 = vmatpush2.bf16.xpose.msra.mxu0 0
  %2779 = vmatprep.subr.bf16.mxu0 0
  %2780 = vmatpush2.bf16.xpose.msra.mxu0 0
  %2781 = vmatprep.subr.bf16.mxu0 0
  %2782 = vmatpush2.bf16.xpose.msra.mxu0 0
  %2783 = vmatprep.subr.bf16.mxu0 0
  %2784 = vmatpush2.bf16.xpose.msra.mxu0 0
  %2785 = vmatprep.subr.bf16.mxu0 0
  %2786 = vmatpush2.bf16.xpose.msra.mxu0 0
  %2787 = vmatprep.subr.bf16.mxu0 0
  %2788 = vmatpush2.bf16.xpose.msra.mxu0 0
  %2789 = vmatprep.mubr.bf16.mxu0 0
  %2790 = vmatmul.mubr.bf16.gmra.mxu0 %v2752
  %v2791 = vpop.f32.mrf.mxu0
  %v2792 = vadd.f32 %v113, %v2791
  %v2793 = vpop.f32.mrf.mxu0
  %v2794 = vpop.f32.mrf.mxu0
  %v2795 = vadd.f32 %v114, %v2794
  %v2796 = vpop.f32.mrf.mxu0
  %2797 = vdwg.mxu0
  %2798 = vrot.lane.b32.xlu0 %v518, 64
  %v2799 = vpop.permute.xlu0 %2798
  %2800 = vrot.lane.b32.xlu0 %v526, 64
  %v2801 = vpop.permute.xlu0 %2800
  %v2803 = vsel %vm535, %v2799, 0
  %v2806 = vsel %vm535, %v2801, 0
  %2808 = vmatprep.subr.bf16.mxu0 0
  %2809 = vmatpush1.bf16.xpose.msra.mxu0 0
  %2810 = vmatprep.subr.bf16.mxu0 0
  %2811 = vmatpush1.bf16.xpose.msra.mxu0 0
  %2812 = vmatprep.subr.bf16.mxu0 0
  %2813 = vmatpush1.bf16.xpose.msra.mxu0 0
  %2814 = vmatprep.subr.bf16.mxu0 0
  %2815 = vmatpush1.bf16.xpose.msra.mxu0 0
  %2816 = vmatprep.subr.bf16.mxu0 0
  %2817 = vmatpush1.bf16.xpose.msra.mxu0 0
  %2818 = vmatprep.subr.bf16.mxu0 0
  %2819 = vmatpush1.bf16.xpose.msra.mxu0 0
  %2820 = vmatprep.subr.bf16.mxu0 0
  %2821 = vmatpush1.bf16.xpose.msra.mxu0 0
  %2822 = vmatprep.subr.bf16.mxu0 0
  %2823 = vmatpush1.bf16.xpose.msra.mxu0 %v2806
  %2824 = vmatprep.subr.bf16.mxu0 0
  %2825 = vmatpush2.bf16.xpose.msra.mxu0 0
  %2826 = vmatprep.subr.bf16.mxu0 0
  %2827 = vmatpush2.bf16.xpose.msra.mxu0 0
  %2828 = vmatprep.subr.bf16.mxu0 0
  %2829 = vmatpush2.bf16.xpose.msra.mxu0 0
  %2830 = vmatprep.subr.bf16.mxu0 0
  %2831 = vmatpush2.bf16.xpose.msra.mxu0 0
  %2832 = vmatprep.subr.bf16.mxu0 0
  %2833 = vmatpush2.bf16.xpose.msra.mxu0 0
  %2834 = vmatprep.subr.bf16.mxu0 0
  %2835 = vmatpush2.bf16.xpose.msra.mxu0 0
  %2836 = vmatprep.subr.bf16.mxu0 0
  %2837 = vmatpush2.bf16.xpose.msra.mxu0 0
  %2838 = vmatprep.subr.bf16.mxu0 0
  %2839 = vmatpush2.bf16.xpose.msra.mxu0 0
  %2840 = vmatprep.mubr.bf16.mxu0 0
  %2841 = vmatmul.mubr.bf16.gmra.mxu0 %v2803
  %v2842 = vpop.f32.mrf.mxu0
  %v2843 = vadd.f32 %v115, %v2842
  %v2844 = vpop.f32.mrf.mxu0
  %v2845 = vpop.f32.mrf.mxu0
  %v2846 = vadd.f32 %v116, %v2845
  %v2847 = vpop.f32.mrf.mxu0
  %2848 = vdwg.mxu0
  %v2849 = vsel %vm912, %v2486, -inf
  %2850 = vmax.xlane.f32.xlu0 %v2849
  %v2851 = vpop.xlane.xlu0 %2850
  %v2852 = vsel %vm912, %v2489, -inf
  %2853 = vmax.xlane.f32.xlu0 %v2852
  %v2854 = vpop.xlane.xlu0 %2853
  %v2855 = vsel %vm912, %v2537, -inf
  %2856 = vmax.xlane.f32.xlu0 %v2855
  %v2857 = vpop.xlane.xlu0 %2856
  %v2858 = vsel %vm912, %v2540, -inf
  %2859 = vmax.xlane.f32.xlu0 %v2858
  %v2860 = vpop.xlane.xlu0 %2859
  %v2861 = vsel %vm912, %v2588, -inf
  %2862 = vmax.xlane.f32.xlu0 %v2861
  %v2863 = vpop.xlane.xlu0 %2862
  %v2864 = vsel %vm912, %v2591, -inf
  %2865 = vmax.xlane.f32.xlu0 %v2864
  %v2866 = vpop.xlane.xlu0 %2865
  %v2867 = vsel %vm912, %v2639, -inf
  %2868 = vmax.xlane.f32.xlu0 %v2867
  %v2869 = vpop.xlane.xlu0 %2868
  %v2870 = vsel %vm912, %v2642, -inf
  %2871 = vmax.xlane.f32.xlu0 %v2870
  %v2872 = vpop.xlane.xlu0 %2871
  %v2873 = vsel %vm912, %v2690, -inf
  %2874 = vmax.xlane.f32.xlu0 %v2873
  %v2875 = vpop.xlane.xlu0 %2874
  %v2876 = vsel %vm912, %v2693, -inf
  %2877 = vmax.xlane.f32.xlu0 %v2876
  %v2878 = vpop.xlane.xlu0 %2877
  %v2879 = vsel %vm912, %v2741, -inf
  %2880 = vmax.xlane.f32.xlu0 %v2879
  %v2881 = vpop.xlane.xlu0 %2880
  %v2882 = vsel %vm912, %v2744, -inf
  %2883 = vmax.xlane.f32.xlu0 %v2882
  %v2884 = vpop.xlane.xlu0 %2883
  %v2885 = vsel %vm912, %v2792, -inf
  %2886 = vmax.xlane.f32.xlu0 %v2885
  %v2887 = vpop.xlane.xlu0 %2886
  %v2888 = vsel %vm912, %v2795, -inf
  %2889 = vmax.xlane.f32.xlu0 %v2888
  %v2890 = vpop.xlane.xlu0 %2889
  %v2891 = vsel %vm912, %v2843, -inf
  %2892 = vmax.xlane.f32.xlu0 %v2891
  %v2893 = vpop.xlane.xlu0 %2892
  %v2894 = vsel %vm912, %v2846, -inf
  %2895 = vmax.xlane.f32.xlu0 %v2894
  %v2896 = vpop.xlane.xlu0 %2895
  %v2897 = vsub.f32 %v2486, %v2851
  %v2898 = vsub.f32 %v2489, %v2854
  %v2899 = vsub.f32 %v2537, %v2857
  %v2900 = vsub.f32 %v2540, %v2860
  %v2901 = vsub.f32 %v2588, %v2863
  %v2902 = vsub.f32 %v2591, %v2866
  %v2903 = vsub.f32 %v2639, %v2869
  %v2904 = vsub.f32 %v2642, %v2872
  %v2905 = vsub.f32 %v2690, %v2875
  %v2906 = vsub.f32 %v2693, %v2878
  %v2907 = vsub.f32 %v2741, %v2881
  %v2908 = vsub.f32 %v2744, %v2884
  %v2909 = vsub.f32 %v2792, %v2887
  %v2910 = vsub.f32 %v2795, %v2890
  %v2911 = vsub.f32 %v2843, %v2893
  %v2912 = vsub.f32 %v2846, %v2896
  %v2913 = vmul.f32 %v2897, 1.442695
  %v2914 = vpow.pop %v2913
  %v2915 = vmul.f32 %v2898, 1.442695
  %v2916 = vpow.pop %v2915
  %v2917 = vmul.f32 %v2899, 1.442695
  %v2918 = vpow.pop %v2917
  %v2919 = vmul.f32 %v2900, 1.442695
  %v2920 = vpow.pop %v2919
  %v2921 = vmul.f32 %v2901, 1.442695
  %v2922 = vpow.pop %v2921
  %v2923 = vmul.f32 %v2902, 1.442695
  %v2924 = vpow.pop %v2923
  %v2925 = vmul.f32 %v2903, 1.442695
  %v2926 = vpow.pop %v2925
  %v2927 = vmul.f32 %v2904, 1.442695
  %v2928 = vpow.pop %v2927
  %v2929 = vmul.f32 %v2905, 1.442695
  %v2930 = vpow.pop %v2929
  %v2931 = vmul.f32 %v2906, 1.442695
  %v2932 = vpow.pop %v2931
  %v2933 = vmul.f32 %v2907, 1.442695
  %v2934 = vpow.pop %v2933
  %v2935 = vmul.f32 %v2908, 1.442695
  %v2936 = vpow.pop %v2935
  %v2937 = vmul.f32 %v2909, 1.442695
  %v2938 = vpow.pop %v2937
  %v2939 = vmul.f32 %v2910, 1.442695
  %v2940 = vpow.pop %v2939
  %v2941 = vmul.f32 %v2911, 1.442695
  %v2942 = vpow.pop %v2941
  %v2943 = vmul.f32 %v2912, 1.442695
  %v2944 = vpow.pop %v2943
  %v2945 = vsel %vm912, %v2914, 0.0
  %2946 = vadd.xlane.f32.xlu0 %v2945
  %v2947 = vpop.xlane.xlu0 %2946
  %v2948 = vsel %vm912, %v2916, 0.0
  %2949 = vadd.xlane.f32.xlu0 %v2948
  %v2950 = vpop.xlane.xlu0 %2949
  %v2951 = vsel %vm912, %v2918, 0.0
  %2952 = vadd.xlane.f32.xlu0 %v2951
  %v2953 = vpop.xlane.xlu0 %2952
  %v2954 = vsel %vm912, %v2920, 0.0
  %2955 = vadd.xlane.f32.xlu0 %v2954
  %v2956 = vpop.xlane.xlu0 %2955
  %v2957 = vsel %vm912, %v2922, 0.0
  %2958 = vadd.xlane.f32.xlu0 %v2957
  %v2959 = vpop.xlane.xlu0 %2958
  %v2960 = vsel %vm912, %v2924, 0.0
  %2961 = vadd.xlane.f32.xlu0 %v2960
  %v2962 = vpop.xlane.xlu0 %2961
  %v2963 = vsel %vm912, %v2926, 0.0
  %2964 = vadd.xlane.f32.xlu0 %v2963
  %v2965 = vpop.xlane.xlu0 %2964
  %v2966 = vsel %vm912, %v2928, 0.0
  %2967 = vadd.xlane.f32.xlu0 %v2966
  %v2968 = vpop.xlane.xlu0 %2967
  %v2969 = vsel %vm912, %v2930, 0.0
  %2970 = vadd.xlane.f32.xlu0 %v2969
  %v2971 = vpop.xlane.xlu0 %2970
  %v2972 = vsel %vm912, %v2932, 0.0
  %2973 = vadd.xlane.f32.xlu0 %v2972
  %v2974 = vpop.xlane.xlu0 %2973
  %v2975 = vsel %vm912, %v2934, 0.0
  %2976 = vadd.xlane.f32.xlu0 %v2975
  %v2977 = vpop.xlane.xlu0 %2976
  %v2978 = vsel %vm912, %v2936, 0.0
  %2979 = vadd.xlane.f32.xlu0 %v2978
  %v2980 = vpop.xlane.xlu0 %2979
  %v2981 = vsel %vm912, %v2938, 0.0
  %2982 = vadd.xlane.f32.xlu0 %v2981
  %v2983 = vpop.xlane.xlu0 %2982
  %v2984 = vsel %vm912, %v2940, 0.0
  %2985 = vadd.xlane.f32.xlu0 %v2984
  %v2986 = vpop.xlane.xlu0 %2985
  %v2987 = vsel %vm912, %v2942, 0.0
  %2988 = vadd.xlane.f32.xlu0 %v2987
  %v2989 = vpop.xlane.xlu0 %2988
  %v2990 = vsel %vm912, %v2944, 0.0
  %2991 = vadd.xlane.f32.xlu0 %v2990
  %v2992 = vpop.xlane.xlu0 %2991
  %v2993 = vrcp.pop %v2947
  %v2994 = vrcp.pop %v2950
  %v2995 = vrcp.pop %v2953
  %v2996 = vrcp.pop %v2956
  %v2997 = vrcp.pop %v2959
  %v2998 = vrcp.pop %v2962
  %v2999 = vrcp.pop %v2965
  %v3000 = vrcp.pop %v2968
  %v3001 = vrcp.pop %v2971
  %v3002 = vrcp.pop %v2974
  %v3003 = vrcp.pop %v2977
  %v3004 = vrcp.pop %v2980
  %v3005 = vrcp.pop %v2983
  %v3006 = vrcp.pop %v2986
  %v3007 = vrcp.pop %v2989
  %v3008 = vrcp.pop %v2992
  %v3009 = vmul.f32 %v2914, %v2993
  %v3010 = vmul.f32 %v2916, %v2994
  %v3011 = vmul.f32 %v2918, %v2995
  %v3012 = vmul.f32 %v2920, %v2996
  %v3013 = vmul.f32 %v2922, %v2997
  %v3014 = vmul.f32 %v2924, %v2998
  %v3015 = vmul.f32 %v2926, %v2999
  %v3016 = vmul.f32 %v2928, %v3000
  %v3017 = vmul.f32 %v2930, %v3001
  %v3018 = vmul.f32 %v2932, %v3002
  %v3019 = vmul.f32 %v2934, %v3003
  %v3020 = vmul.f32 %v2936, %v3004
  %v3021 = vmul.f32 %v2938, %v3005
  %v3022 = vmul.f32 %v2940, %v3006
  %v3023 = vmul.f32 %v2942, %v3007
  %v3024 = vmul.f32 %v2944, %v3008
  %v3025 = vpack.c.bf16 %v3010, %v3009
  %v3026 = vpack.c.bf16 %v3012, %v3011
  %v3027 = vpack.c.bf16 %v3014, %v3013
  %v3028 = vpack.c.bf16 %v3016, %v3015
  %v3029 = vpack.c.bf16 %v3018, %v3017
  %v3030 = vpack.c.bf16 %v3020, %v3019
  %v3031 = vpack.c.bf16 %v3022, %v3021
  %v3032 = vpack.c.bf16 %v3024, %v3023
  %3033 = vrot.lane.b32.xlu0 %v527, 64
  %v3034 = vpop.permute.xlu0 %3033
  %v3037 = vsel %vm912, %v3025, 0
  %3039 = vmatprep.subr.bf16.mxu0 0
  %3040 = vmatpush1.bf16.msra.mxu0 0
  %3041 = vmatprep.subr.bf16.mxu0 0
  %3042 = vmatpush1.bf16.msra.mxu0 0
  %3043 = vmatprep.subr.bf16.mxu0 0
  %3044 = vmatpush1.bf16.msra.mxu0 0
  %3045 = vmatprep.subr.bf16.mxu0 0
  %3046 = vmatpush1.bf16.msra.mxu0 0
  %3047 = vmatprep.subr.bf16.mxu0 0
  %3048 = vmatpush1.bf16.msra.mxu0 0
  %3049 = vmatprep.subr.bf16.mxu0 0
  %3050 = vmatpush1.bf16.msra.mxu0 0
  %3051 = vmatprep.subr.bf16.mxu0 0
  %3052 = vmatpush1.bf16.msra.mxu0 0
  %3053 = vmatprep.subr.bf16.mxu0 0
  %3054 = vmatpush1.bf16.msra.mxu0 %v3034
  %3055 = vmatprep.subr.bf16.mxu0 0
  %3056 = vmatpush2.bf16.msra.mxu0 0
  %3057 = vmatprep.subr.bf16.mxu0 0
  %3058 = vmatpush2.bf16.msra.mxu0 0
  %3059 = vmatprep.subr.bf16.mxu0 0
  %3060 = vmatpush2.bf16.msra.mxu0 0
  %3061 = vmatprep.subr.bf16.mxu0 0
  %3062 = vmatpush2.bf16.msra.mxu0 0
  %3063 = vmatprep.subr.bf16.mxu0 0
  %3064 = vmatpush2.bf16.msra.mxu0 0
  %3065 = vmatprep.subr.bf16.mxu0 0
  %3066 = vmatpush2.bf16.msra.mxu0 0
  %3067 = vmatprep.subr.bf16.mxu0 0
  %3068 = vmatpush2.bf16.msra.mxu0 0
  %3069 = vmatprep.subr.bf16.mxu0 0
  %3070 = vmatpush2.bf16.msra.mxu0 0
  %3071 = vmatprep.mubr.bf16.mxu0 0
  %3072 = vmatmul.mubr.bf16.gmra.mxu0 %v3037
  %v3073 = vpop.f32.mrf.mxu0
  %v3074 = vadd.f32 0.0, %v3073
  %v3075 = vpop.f32.mrf.mxu0
  %v3076 = vpop.f32.mrf.mxu0
  %v3077 = vadd.f32 0.0, %v3076
  %v3078 = vpop.f32.mrf.mxu0
  %3079 = vdwg.mxu0
  %3080 = vrot.lane.b32.xlu0 %v528, 64
  %v3081 = vpop.permute.xlu0 %3080
  %v3084 = vsel %vm912, %v3026, 0
  %3086 = vmatprep.subr.bf16.mxu0 0
  %3087 = vmatpush1.bf16.msra.mxu0 0
  %3088 = vmatprep.subr.bf16.mxu0 0
  %3089 = vmatpush1.bf16.msra.mxu0 0
  %3090 = vmatprep.subr.bf16.mxu0 0
  %3091 = vmatpush1.bf16.msra.mxu0 0
  %3092 = vmatprep.subr.bf16.mxu0 0
  %3093 = vmatpush1.bf16.msra.mxu0 0
  %3094 = vmatprep.subr.bf16.mxu0 0
  %3095 = vmatpush1.bf16.msra.mxu0 0
  %3096 = vmatprep.subr.bf16.mxu0 0
  %3097 = vmatpush1.bf16.msra.mxu0 0
  %3098 = vmatprep.subr.bf16.mxu0 0
  %3099 = vmatpush1.bf16.msra.mxu0 0
  %3100 = vmatprep.subr.bf16.mxu0 0
  %3101 = vmatpush1.bf16.msra.mxu0 %v3081
  %3102 = vmatprep.subr.bf16.mxu0 0
  %3103 = vmatpush2.bf16.msra.mxu0 0
  %3104 = vmatprep.subr.bf16.mxu0 0
  %3105 = vmatpush2.bf16.msra.mxu0 0
  %3106 = vmatprep.subr.bf16.mxu0 0
  %3107 = vmatpush2.bf16.msra.mxu0 0
  %3108 = vmatprep.subr.bf16.mxu0 0
  %3109 = vmatpush2.bf16.msra.mxu0 0
  %3110 = vmatprep.subr.bf16.mxu0 0
  %3111 = vmatpush2.bf16.msra.mxu0 0
  %3112 = vmatprep.subr.bf16.mxu0 0
  %3113 = vmatpush2.bf16.msra.mxu0 0
  %3114 = vmatprep.subr.bf16.mxu0 0
  %3115 = vmatpush2.bf16.msra.mxu0 0
  %3116 = vmatprep.subr.bf16.mxu0 0
  %3117 = vmatpush2.bf16.msra.mxu0 0
  %3118 = vmatprep.mubr.bf16.mxu0 0
  %3119 = vmatmul.mubr.bf16.gmra.mxu0 %v3084
  %v3120 = vpop.f32.mrf.mxu0
  %v3121 = vadd.f32 0.0, %v3120
  %v3122 = vpop.f32.mrf.mxu0
  %v3123 = vpop.f32.mrf.mxu0
  %v3124 = vadd.f32 0.0, %v3123
  %v3125 = vpop.f32.mrf.mxu0
  %3126 = vdwg.mxu0
  %3127 = vrot.lane.b32.xlu0 %v529, 64
  %v3128 = vpop.permute.xlu0 %3127
  %v3131 = vsel %vm912, %v3027, 0
  %3133 = vmatprep.subr.bf16.mxu0 0
  %3134 = vmatpush1.bf16.msra.mxu0 0
  %3135 = vmatprep.subr.bf16.mxu0 0
  %3136 = vmatpush1.bf16.msra.mxu0 0
  %3137 = vmatprep.subr.bf16.mxu0 0
  %3138 = vmatpush1.bf16.msra.mxu0 0
  %3139 = vmatprep.subr.bf16.mxu0 0
  %3140 = vmatpush1.bf16.msra.mxu0 0
  %3141 = vmatprep.subr.bf16.mxu0 0
  %3142 = vmatpush1.bf16.msra.mxu0 0
  %3143 = vmatprep.subr.bf16.mxu0 0
  %3144 = vmatpush1.bf16.msra.mxu0 0
  %3145 = vmatprep.subr.bf16.mxu0 0
  %3146 = vmatpush1.bf16.msra.mxu0 0
  %3147 = vmatprep.subr.bf16.mxu0 0
  %3148 = vmatpush1.bf16.msra.mxu0 %v3128
  %3149 = vmatprep.subr.bf16.mxu0 0
  %3150 = vmatpush2.bf16.msra.mxu0 0
  %3151 = vmatprep.subr.bf16.mxu0 0
  %3152 = vmatpush2.bf16.msra.mxu0 0
  %3153 = vmatprep.subr.bf16.mxu0 0
  %3154 = vmatpush2.bf16.msra.mxu0 0
  %3155 = vmatprep.subr.bf16.mxu0 0
  %3156 = vmatpush2.bf16.msra.mxu0 0
  %3157 = vmatprep.subr.bf16.mxu0 0
  %3158 = vmatpush2.bf16.msra.mxu0 0
  %3159 = vmatprep.subr.bf16.mxu0 0
  %3160 = vmatpush2.bf16.msra.mxu0 0
  %3161 = vmatprep.subr.bf16.mxu0 0
  %3162 = vmatpush2.bf16.msra.mxu0 0
  %3163 = vmatprep.subr.bf16.mxu0 0
  %3164 = vmatpush2.bf16.msra.mxu0 0
  %3165 = vmatprep.mubr.bf16.mxu0 0
  %3166 = vmatmul.mubr.bf16.gmra.mxu0 %v3131
  %v3167 = vpop.f32.mrf.mxu0
  %v3168 = vadd.f32 0.0, %v3167
  %v3169 = vpop.f32.mrf.mxu0
  %v3170 = vpop.f32.mrf.mxu0
  %v3171 = vadd.f32 0.0, %v3170
  %v3172 = vpop.f32.mrf.mxu0
  %3173 = vdwg.mxu0
  %3174 = vrot.lane.b32.xlu0 %v530, 64
  %v3175 = vpop.permute.xlu0 %3174
  %v3178 = vsel %vm912, %v3028, 0
  %3180 = vmatprep.subr.bf16.mxu0 0
  %3181 = vmatpush1.bf16.msra.mxu0 0
  %3182 = vmatprep.subr.bf16.mxu0 0
  %3183 = vmatpush1.bf16.msra.mxu0 0
  %3184 = vmatprep.subr.bf16.mxu0 0
  %3185 = vmatpush1.bf16.msra.mxu0 0
  %3186 = vmatprep.subr.bf16.mxu0 0
  %3187 = vmatpush1.bf16.msra.mxu0 0
  %3188 = vmatprep.subr.bf16.mxu0 0
  %3189 = vmatpush1.bf16.msra.mxu0 0
  %3190 = vmatprep.subr.bf16.mxu0 0
  %3191 = vmatpush1.bf16.msra.mxu0 0
  %3192 = vmatprep.subr.bf16.mxu0 0
  %3193 = vmatpush1.bf16.msra.mxu0 0
  %3194 = vmatprep.subr.bf16.mxu0 0
  %3195 = vmatpush1.bf16.msra.mxu0 %v3175
  %3196 = vmatprep.subr.bf16.mxu0 0
  %3197 = vmatpush2.bf16.msra.mxu0 0
  %3198 = vmatprep.subr.bf16.mxu0 0
  %3199 = vmatpush2.bf16.msra.mxu0 0
  %3200 = vmatprep.subr.bf16.mxu0 0
  %3201 = vmatpush2.bf16.msra.mxu0 0
  %3202 = vmatprep.subr.bf16.mxu0 0
  %3203 = vmatpush2.bf16.msra.mxu0 0
  %3204 = vmatprep.subr.bf16.mxu0 0
  %3205 = vmatpush2.bf16.msra.mxu0 0
  %3206 = vmatprep.subr.bf16.mxu0 0
  %3207 = vmatpush2.bf16.msra.mxu0 0
  %3208 = vmatprep.subr.bf16.mxu0 0
  %3209 = vmatpush2.bf16.msra.mxu0 0
  %3210 = vmatprep.subr.bf16.mxu0 0
  %3211 = vmatpush2.bf16.msra.mxu0 0
  %3212 = vmatprep.mubr.bf16.mxu0 0
  %3213 = vmatmul.mubr.bf16.gmra.mxu0 %v3178
  %v3214 = vpop.f32.mrf.mxu0
  %v3215 = vadd.f32 0.0, %v3214
  %v3216 = vpop.f32.mrf.mxu0
  %v3217 = vpop.f32.mrf.mxu0
  %v3218 = vadd.f32 0.0, %v3217
  %v3219 = vpop.f32.mrf.mxu0
  %3220 = vdwg.mxu0
  %3221 = vrot.lane.b32.xlu0 %v531, 64
  %v3222 = vpop.permute.xlu0 %3221
  %v3225 = vsel %vm912, %v3029, 0
  %3227 = vmatprep.subr.bf16.mxu0 0
  %3228 = vmatpush1.bf16.msra.mxu0 0
  %3229 = vmatprep.subr.bf16.mxu0 0
  %3230 = vmatpush1.bf16.msra.mxu0 0
  %3231 = vmatprep.subr.bf16.mxu0 0
  %3232 = vmatpush1.bf16.msra.mxu0 0
  %3233 = vmatprep.subr.bf16.mxu0 0
  %3234 = vmatpush1.bf16.msra.mxu0 0
  %3235 = vmatprep.subr.bf16.mxu0 0
  %3236 = vmatpush1.bf16.msra.mxu0 0
  %3237 = vmatprep.subr.bf16.mxu0 0
  %3238 = vmatpush1.bf16.msra.mxu0 0
  %3239 = vmatprep.subr.bf16.mxu0 0
  %3240 = vmatpush1.bf16.msra.mxu0 0
  %3241 = vmatprep.subr.bf16.mxu0 0
  %3242 = vmatpush1.bf16.msra.mxu0 %v3222
  %3243 = vmatprep.subr.bf16.mxu0 0
  %3244 = vmatpush2.bf16.msra.mxu0 0
  %3245 = vmatprep.subr.bf16.mxu0 0
  %3246 = vmatpush2.bf16.msra.mxu0 0
  %3247 = vmatprep.subr.bf16.mxu0 0
  %3248 = vmatpush2.bf16.msra.mxu0 0
  %3249 = vmatprep.subr.bf16.mxu0 0
  %3250 = vmatpush2.bf16.msra.mxu0 0
  %3251 = vmatprep.subr.bf16.mxu0 0
  %3252 = vmatpush2.bf16.msra.mxu0 0
  %3253 = vmatprep.subr.bf16.mxu0 0
  %3254 = vmatpush2.bf16.msra.mxu0 0
  %3255 = vmatprep.subr.bf16.mxu0 0
  %3256 = vmatpush2.bf16.msra.mxu0 0
  %3257 = vmatprep.subr.bf16.mxu0 0
  %3258 = vmatpush2.bf16.msra.mxu0 0
  %3259 = vmatprep.mubr.bf16.mxu0 0
  %3260 = vmatmul.mubr.bf16.gmra.mxu0 %v3225
  %v3261 = vpop.f32.mrf.mxu0
  %v3262 = vadd.f32 0.0, %v3261
  %v3263 = vpop.f32.mrf.mxu0
  %v3264 = vpop.f32.mrf.mxu0
  %v3265 = vadd.f32 0.0, %v3264
  %v3266 = vpop.f32.mrf.mxu0
  %3267 = vdwg.mxu0
  %3268 = vrot.lane.b32.xlu0 %v532, 64
  %v3269 = vpop.permute.xlu0 %3268
  %v3272 = vsel %vm912, %v3030, 0
  %3274 = vmatprep.subr.bf16.mxu0 0
  %3275 = vmatpush1.bf16.msra.mxu0 0
  %3276 = vmatprep.subr.bf16.mxu0 0
  %3277 = vmatpush1.bf16.msra.mxu0 0
  %3278 = vmatprep.subr.bf16.mxu0 0
  %3279 = vmatpush1.bf16.msra.mxu0 0
  %3280 = vmatprep.subr.bf16.mxu0 0
  %3281 = vmatpush1.bf16.msra.mxu0 0
  %3282 = vmatprep.subr.bf16.mxu0 0
  %3283 = vmatpush1.bf16.msra.mxu0 0
  %3284 = vmatprep.subr.bf16.mxu0 0
  %3285 = vmatpush1.bf16.msra.mxu0 0
  %3286 = vmatprep.subr.bf16.mxu0 0
  %3287 = vmatpush1.bf16.msra.mxu0 0
  %3288 = vmatprep.subr.bf16.mxu0 0
  %3289 = vmatpush1.bf16.msra.mxu0 %v3269
  %3290 = vmatprep.subr.bf16.mxu0 0
  %3291 = vmatpush2.bf16.msra.mxu0 0
  %3292 = vmatprep.subr.bf16.mxu0 0
  %3293 = vmatpush2.bf16.msra.mxu0 0
  %3294 = vmatprep.subr.bf16.mxu0 0
  %3295 = vmatpush2.bf16.msra.mxu0 0
  %3296 = vmatprep.subr.bf16.mxu0 0
  %3297 = vmatpush2.bf16.msra.mxu0 0
  %3298 = vmatprep.subr.bf16.mxu0 0
  %3299 = vmatpush2.bf16.msra.mxu0 0
  %3300 = vmatprep.subr.bf16.mxu0 0
  %3301 = vmatpush2.bf16.msra.mxu0 0
  %3302 = vmatprep.subr.bf16.mxu0 0
  %3303 = vmatpush2.bf16.msra.mxu0 0
  %3304 = vmatprep.subr.bf16.mxu0 0
  %3305 = vmatpush2.bf16.msra.mxu0 0
  %3306 = vmatprep.mubr.bf16.mxu0 0
  %3307 = vmatmul.mubr.bf16.gmra.mxu0 %v3272
  %v3308 = vpop.f32.mrf.mxu0
  %v3309 = vadd.f32 0.0, %v3308
  %v3310 = vpop.f32.mrf.mxu0
  %v3311 = vpop.f32.mrf.mxu0
  %v3312 = vadd.f32 0.0, %v3311
  %v3313 = vpop.f32.mrf.mxu0
  %3314 = vdwg.mxu0
  %3315 = vrot.lane.b32.xlu0 %v533, 64
  %v3316 = vpop.permute.xlu0 %3315
  %v3319 = vsel %vm912, %v3031, 0
  %3321 = vmatprep.subr.bf16.mxu0 0
  %3322 = vmatpush1.bf16.msra.mxu0 0
  %3323 = vmatprep.subr.bf16.mxu0 0
  %3324 = vmatpush1.bf16.msra.mxu0 0
  %3325 = vmatprep.subr.bf16.mxu0 0
  %3326 = vmatpush1.bf16.msra.mxu0 0
  %3327 = vmatprep.subr.bf16.mxu0 0
  %3328 = vmatpush1.bf16.msra.mxu0 0
  %3329 = vmatprep.subr.bf16.mxu0 0
  %3330 = vmatpush1.bf16.msra.mxu0 0
  %3331 = vmatprep.subr.bf16.mxu0 0
  %3332 = vmatpush1.bf16.msra.mxu0 0
  %3333 = vmatprep.subr.bf16.mxu0 0
  %3334 = vmatpush1.bf16.msra.mxu0 0
  %3335 = vmatprep.subr.bf16.mxu0 0
  %3336 = vmatpush1.bf16.msra.mxu0 %v3316
  %3337 = vmatprep.subr.bf16.mxu0 0
  %3338 = vmatpush2.bf16.msra.mxu0 0
  %3339 = vmatprep.subr.bf16.mxu0 0
  %3340 = vmatpush2.bf16.msra.mxu0 0
  %3341 = vmatprep.subr.bf16.mxu0 0
  %3342 = vmatpush2.bf16.msra.mxu0 0
  %3343 = vmatprep.subr.bf16.mxu0 0
  %3344 = vmatpush2.bf16.msra.mxu0 0
  %3345 = vmatprep.subr.bf16.mxu0 0
  %3346 = vmatpush2.bf16.msra.mxu0 0
  %3347 = vmatprep.subr.bf16.mxu0 0
  %3348 = vmatpush2.bf16.msra.mxu0 0
  %3349 = vmatprep.subr.bf16.mxu0 0
  %3350 = vmatpush2.bf16.msra.mxu0 0
  %3351 = vmatprep.subr.bf16.mxu0 0
  %3352 = vmatpush2.bf16.msra.mxu0 0
  %3353 = vmatprep.mubr.bf16.mxu0 0
  %3354 = vmatmul.mubr.bf16.gmra.mxu0 %v3319
  %v3355 = vpop.f32.mrf.mxu0
  %v3356 = vadd.f32 0.0, %v3355
  %v3357 = vpop.f32.mrf.mxu0
  %v3358 = vpop.f32.mrf.mxu0
  %v3359 = vadd.f32 0.0, %v3358
  %v3360 = vpop.f32.mrf.mxu0
  %3361 = vdwg.mxu0
  %3362 = vrot.lane.b32.xlu0 %v534, 64
  %v3363 = vpop.permute.xlu0 %3362
  %v3366 = vsel %vm912, %v3032, 0
  %3368 = vmatprep.subr.bf16.mxu0 0
  %3369 = vmatpush1.bf16.msra.mxu0 0
  %3370 = vmatprep.subr.bf16.mxu0 0
  %3371 = vmatpush1.bf16.msra.mxu0 0
  %3372 = vmatprep.subr.bf16.mxu0 0
  %3373 = vmatpush1.bf16.msra.mxu0 0
  %3374 = vmatprep.subr.bf16.mxu0 0
  %3375 = vmatpush1.bf16.msra.mxu0 0
  %3376 = vmatprep.subr.bf16.mxu0 0
  %3377 = vmatpush1.bf16.msra.mxu0 0
  %3378 = vmatprep.subr.bf16.mxu0 0
  %3379 = vmatpush1.bf16.msra.mxu0 0
  %3380 = vmatprep.subr.bf16.mxu0 0
  %3381 = vmatpush1.bf16.msra.mxu0 0
  %3382 = vmatprep.subr.bf16.mxu0 0
  %3383 = vmatpush1.bf16.msra.mxu0 %v3363
  %3384 = vmatprep.subr.bf16.mxu0 0
  %3385 = vmatpush2.bf16.msra.mxu0 0
  %3386 = vmatprep.subr.bf16.mxu0 0
  %3387 = vmatpush2.bf16.msra.mxu0 0
  %3388 = vmatprep.subr.bf16.mxu0 0
  %3389 = vmatpush2.bf16.msra.mxu0 0
  %3390 = vmatprep.subr.bf16.mxu0 0
  %3391 = vmatpush2.bf16.msra.mxu0 0
  %3392 = vmatprep.subr.bf16.mxu0 0
  %3393 = vmatpush2.bf16.msra.mxu0 0
  %3394 = vmatprep.subr.bf16.mxu0 0
  %3395 = vmatpush2.bf16.msra.mxu0 0
  %3396 = vmatprep.subr.bf16.mxu0 0
  %3397 = vmatpush2.bf16.msra.mxu0 0
  %3398 = vmatprep.subr.bf16.mxu0 0
  %3399 = vmatpush2.bf16.msra.mxu0 0
  %3400 = vmatprep.mubr.bf16.mxu0 0
  %3401 = vmatmul.mubr.bf16.gmra.mxu0 %v3366
  %v3402 = vpop.f32.mrf.mxu0
  %v3403 = vadd.f32 0.0, %v3402
  %v3404 = vpop.f32.mrf.mxu0
  %v3405 = vpop.f32.mrf.mxu0
  %v3406 = vadd.f32 0.0, %v3405
  %v3407 = vpop.f32.mrf.mxu0
  %3408 = vdwg.mxu0
  %3409 = vrot.lane.b32.xlu0 %v511, 32
  %v3410 = vpop.permute.xlu0 %3409
  %3411 = vrot.lane.b32.xlu0 %v519, 32
  %v3412 = vpop.permute.xlu0 %3411
  %v3414 = vsel %vm535, %v3410, 0
  %v3417 = vsel %vm535, %v3412, 0
  %3419 = vmatprep.subr.bf16.mxu0 0
  %3420 = vmatpush1.bf16.xpose.msra.mxu0 0
  %3421 = vmatprep.subr.bf16.mxu0 0
  %3422 = vmatpush1.bf16.xpose.msra.mxu0 0
  %3423 = vmatprep.subr.bf16.mxu0 0
  %3424 = vmatpush1.bf16.xpose.msra.mxu0 0
  %3425 = vmatprep.subr.bf16.mxu0 0
  %3426 = vmatpush1.bf16.xpose.msra.mxu0 0
  %3427 = vmatprep.subr.bf16.mxu0 0
  %3428 = vmatpush1.bf16.xpose.msra.mxu0 0
  %3429 = vmatprep.subr.bf16.mxu0 0
  %3430 = vmatpush1.bf16.xpose.msra.mxu0 0
  %3431 = vmatprep.subr.bf16.mxu0 0
  %3432 = vmatpush1.bf16.xpose.msra.mxu0 0
  %3433 = vmatprep.subr.bf16.mxu0 0
  %3434 = vmatpush1.bf16.xpose.msra.mxu0 %v3417
  %3435 = vmatprep.subr.bf16.mxu0 0
  %3436 = vmatpush2.bf16.xpose.msra.mxu0 0
  %3437 = vmatprep.subr.bf16.mxu0 0
  %3438 = vmatpush2.bf16.xpose.msra.mxu0 0
  %3439 = vmatprep.subr.bf16.mxu0 0
  %3440 = vmatpush2.bf16.xpose.msra.mxu0 0
  %3441 = vmatprep.subr.bf16.mxu0 0
  %3442 = vmatpush2.bf16.xpose.msra.mxu0 0
  %3443 = vmatprep.subr.bf16.mxu0 0
  %3444 = vmatpush2.bf16.xpose.msra.mxu0 0
  %3445 = vmatprep.subr.bf16.mxu0 0
  %3446 = vmatpush2.bf16.xpose.msra.mxu0 0
  %3447 = vmatprep.subr.bf16.mxu0 0
  %3448 = vmatpush2.bf16.xpose.msra.mxu0 0
  %3449 = vmatprep.subr.bf16.mxu0 0
  %3450 = vmatpush2.bf16.xpose.msra.mxu0 0
  %3451 = vmatprep.mubr.bf16.mxu0 0
  %3452 = vmatmul.mubr.bf16.gmra.mxu0 %v3414
  %v3453 = vpop.f32.mrf.mxu0
  %v3454 = vadd.f32 %v101, %v3453
  %v3455 = vpop.f32.mrf.mxu0
  %v3456 = vpop.f32.mrf.mxu0
  %v3457 = vadd.f32 %v102, %v3456
  %v3458 = vpop.f32.mrf.mxu0
  %3459 = vdwg.mxu0
  %3460 = vrot.lane.b32.xlu0 %v512, 32
  %v3461 = vpop.permute.xlu0 %3460
  %3462 = vrot.lane.b32.xlu0 %v520, 32
  %v3463 = vpop.permute.xlu0 %3462
  %v3465 = vsel %vm535, %v3461, 0
  %v3468 = vsel %vm535, %v3463, 0
  %3470 = vmatprep.subr.bf16.mxu0 0
  %3471 = vmatpush1.bf16.xpose.msra.mxu0 0
  %3472 = vmatprep.subr.bf16.mxu0 0
  %3473 = vmatpush1.bf16.xpose.msra.mxu0 0
  %3474 = vmatprep.subr.bf16.mxu0 0
  %3475 = vmatpush1.bf16.xpose.msra.mxu0 0
  %3476 = vmatprep.subr.bf16.mxu0 0
  %3477 = vmatpush1.bf16.xpose.msra.mxu0 0
  %3478 = vmatprep.subr.bf16.mxu0 0
  %3479 = vmatpush1.bf16.xpose.msra.mxu0 0
  %3480 = vmatprep.subr.bf16.mxu0 0
  %3481 = vmatpush1.bf16.xpose.msra.mxu0 0
  %3482 = vmatprep.subr.bf16.mxu0 0
  %3483 = vmatpush1.bf16.xpose.msra.mxu0 0
  %3484 = vmatprep.subr.bf16.mxu0 0
  %3485 = vmatpush1.bf16.xpose.msra.mxu0 %v3468
  %3486 = vmatprep.subr.bf16.mxu0 0
  %3487 = vmatpush2.bf16.xpose.msra.mxu0 0
  %3488 = vmatprep.subr.bf16.mxu0 0
  %3489 = vmatpush2.bf16.xpose.msra.mxu0 0
  %3490 = vmatprep.subr.bf16.mxu0 0
  %3491 = vmatpush2.bf16.xpose.msra.mxu0 0
  %3492 = vmatprep.subr.bf16.mxu0 0
  %3493 = vmatpush2.bf16.xpose.msra.mxu0 0
  %3494 = vmatprep.subr.bf16.mxu0 0
  %3495 = vmatpush2.bf16.xpose.msra.mxu0 0
  %3496 = vmatprep.subr.bf16.mxu0 0
  %3497 = vmatpush2.bf16.xpose.msra.mxu0 0
  %3498 = vmatprep.subr.bf16.mxu0 0
  %3499 = vmatpush2.bf16.xpose.msra.mxu0 0
  %3500 = vmatprep.subr.bf16.mxu0 0
  %3501 = vmatpush2.bf16.xpose.msra.mxu0 0
  %3502 = vmatprep.mubr.bf16.mxu0 0
  %3503 = vmatmul.mubr.bf16.gmra.mxu0 %v3465
  %v3504 = vpop.f32.mrf.mxu0
  %v3505 = vadd.f32 %v103, %v3504
  %v3506 = vpop.f32.mrf.mxu0
  %v3507 = vpop.f32.mrf.mxu0
  %v3508 = vadd.f32 %v104, %v3507
  %v3509 = vpop.f32.mrf.mxu0
  %3510 = vdwg.mxu0
  %3511 = vrot.lane.b32.xlu0 %v513, 32
  %v3512 = vpop.permute.xlu0 %3511
  %3513 = vrot.lane.b32.xlu0 %v521, 32
  %v3514 = vpop.permute.xlu0 %3513
  %v3516 = vsel %vm535, %v3512, 0
  %v3519 = vsel %vm535, %v3514, 0
  %3521 = vmatprep.subr.bf16.mxu0 0
  %3522 = vmatpush1.bf16.xpose.msra.mxu0 0
  %3523 = vmatprep.subr.bf16.mxu0 0
  %3524 = vmatpush1.bf16.xpose.msra.mxu0 0
  %3525 = vmatprep.subr.bf16.mxu0 0
  %3526 = vmatpush1.bf16.xpose.msra.mxu0 0
  %3527 = vmatprep.subr.bf16.mxu0 0
  %3528 = vmatpush1.bf16.xpose.msra.mxu0 0
  %3529 = vmatprep.subr.bf16.mxu0 0
  %3530 = vmatpush1.bf16.xpose.msra.mxu0 0
  %3531 = vmatprep.subr.bf16.mxu0 0
  %3532 = vmatpush1.bf16.xpose.msra.mxu0 0
  %3533 = vmatprep.subr.bf16.mxu0 0
  %3534 = vmatpush1.bf16.xpose.msra.mxu0 0
  %3535 = vmatprep.subr.bf16.mxu0 0
  %3536 = vmatpush1.bf16.xpose.msra.mxu0 %v3519
  %3537 = vmatprep.subr.bf16.mxu0 0
  %3538 = vmatpush2.bf16.xpose.msra.mxu0 0
  %3539 = vmatprep.subr.bf16.mxu0 0
  %3540 = vmatpush2.bf16.xpose.msra.mxu0 0
  %3541 = vmatprep.subr.bf16.mxu0 0
  %3542 = vmatpush2.bf16.xpose.msra.mxu0 0
  %3543 = vmatprep.subr.bf16.mxu0 0
  %3544 = vmatpush2.bf16.xpose.msra.mxu0 0
  %3545 = vmatprep.subr.bf16.mxu0 0
  %3546 = vmatpush2.bf16.xpose.msra.mxu0 0
  %3547 = vmatprep.subr.bf16.mxu0 0
  %3548 = vmatpush2.bf16.xpose.msra.mxu0 0
  %3549 = vmatprep.subr.bf16.mxu0 0
  %3550 = vmatpush2.bf16.xpose.msra.mxu0 0
  %3551 = vmatprep.subr.bf16.mxu0 0
  %3552 = vmatpush2.bf16.xpose.msra.mxu0 0
  %3553 = vmatprep.mubr.bf16.mxu0 0
  %3554 = vmatmul.mubr.bf16.gmra.mxu0 %v3516
  %v3555 = vpop.f32.mrf.mxu0
  %v3556 = vadd.f32 %v105, %v3555
  %v3557 = vpop.f32.mrf.mxu0
  %v3558 = vpop.f32.mrf.mxu0
  %v3559 = vadd.f32 %v106, %v3558
  %v3560 = vpop.f32.mrf.mxu0
  %3561 = vdwg.mxu0
  %3562 = vrot.lane.b32.xlu0 %v514, 32
  %v3563 = vpop.permute.xlu0 %3562
  %3564 = vrot.lane.b32.xlu0 %v522, 32
  %v3565 = vpop.permute.xlu0 %3564
  %v3567 = vsel %vm535, %v3563, 0
  %v3570 = vsel %vm535, %v3565, 0
  %3572 = vmatprep.subr.bf16.mxu0 0
  %3573 = vmatpush1.bf16.xpose.msra.mxu0 0
  %3574 = vmatprep.subr.bf16.mxu0 0
  %3575 = vmatpush1.bf16.xpose.msra.mxu0 0
  %3576 = vmatprep.subr.bf16.mxu0 0
  %3577 = vmatpush1.bf16.xpose.msra.mxu0 0
  %3578 = vmatprep.subr.bf16.mxu0 0
  %3579 = vmatpush1.bf16.xpose.msra.mxu0 0
  %3580 = vmatprep.subr.bf16.mxu0 0
  %3581 = vmatpush1.bf16.xpose.msra.mxu0 0
  %3582 = vmatprep.subr.bf16.mxu0 0
  %3583 = vmatpush1.bf16.xpose.msra.mxu0 0
  %3584 = vmatprep.subr.bf16.mxu0 0
  %3585 = vmatpush1.bf16.xpose.msra.mxu0 0
  %3586 = vmatprep.subr.bf16.mxu0 0
  %3587 = vmatpush1.bf16.xpose.msra.mxu0 %v3570
  %3588 = vmatprep.subr.bf16.mxu0 0
  %3589 = vmatpush2.bf16.xpose.msra.mxu0 0
  %3590 = vmatprep.subr.bf16.mxu0 0
  %3591 = vmatpush2.bf16.xpose.msra.mxu0 0
  %3592 = vmatprep.subr.bf16.mxu0 0
  %3593 = vmatpush2.bf16.xpose.msra.mxu0 0
  %3594 = vmatprep.subr.bf16.mxu0 0
  %3595 = vmatpush2.bf16.xpose.msra.mxu0 0
  %3596 = vmatprep.subr.bf16.mxu0 0
  %3597 = vmatpush2.bf16.xpose.msra.mxu0 0
  %3598 = vmatprep.subr.bf16.mxu0 0
  %3599 = vmatpush2.bf16.xpose.msra.mxu0 0
  %3600 = vmatprep.subr.bf16.mxu0 0
  %3601 = vmatpush2.bf16.xpose.msra.mxu0 0
  %3602 = vmatprep.subr.bf16.mxu0 0
  %3603 = vmatpush2.bf16.xpose.msra.mxu0 0
  %3604 = vmatprep.mubr.bf16.mxu0 0
  %3605 = vmatmul.mubr.bf16.gmra.mxu0 %v3567
  %v3606 = vpop.f32.mrf.mxu0
  %v3607 = vadd.f32 %v107, %v3606
  %v3608 = vpop.f32.mrf.mxu0
  %v3609 = vpop.f32.mrf.mxu0
  %v3610 = vadd.f32 %v108, %v3609
  %v3611 = vpop.f32.mrf.mxu0
  %3612 = vdwg.mxu0
  %3613 = vrot.lane.b32.xlu0 %v515, 32
  %v3614 = vpop.permute.xlu0 %3613
  %3615 = vrot.lane.b32.xlu0 %v523, 32
  %v3616 = vpop.permute.xlu0 %3615
  %v3618 = vsel %vm535, %v3614, 0
  %v3621 = vsel %vm535, %v3616, 0
  %3623 = vmatprep.subr.bf16.mxu0 0
  %3624 = vmatpush1.bf16.xpose.msra.mxu0 0
  %3625 = vmatprep.subr.bf16.mxu0 0
  %3626 = vmatpush1.bf16.xpose.msra.mxu0 0
  %3627 = vmatprep.subr.bf16.mxu0 0
  %3628 = vmatpush1.bf16.xpose.msra.mxu0 0
  %3629 = vmatprep.subr.bf16.mxu0 0
  %3630 = vmatpush1.bf16.xpose.msra.mxu0 0
  %3631 = vmatprep.subr.bf16.mxu0 0
  %3632 = vmatpush1.bf16.xpose.msra.mxu0 0
  %3633 = vmatprep.subr.bf16.mxu0 0
  %3634 = vmatpush1.bf16.xpose.msra.mxu0 0
  %3635 = vmatprep.subr.bf16.mxu0 0
  %3636 = vmatpush1.bf16.xpose.msra.mxu0 0
  %3637 = vmatprep.subr.bf16.mxu0 0
  %3638 = vmatpush1.bf16.xpose.msra.mxu0 %v3621
  %3639 = vmatprep.subr.bf16.mxu0 0
  %3640 = vmatpush2.bf16.xpose.msra.mxu0 0
  %3641 = vmatprep.subr.bf16.mxu0 0
  %3642 = vmatpush2.bf16.xpose.msra.mxu0 0
  %3643 = vmatprep.subr.bf16.mxu0 0
  %3644 = vmatpush2.bf16.xpose.msra.mxu0 0
  %3645 = vmatprep.subr.bf16.mxu0 0
  %3646 = vmatpush2.bf16.xpose.msra.mxu0 0
  %3647 = vmatprep.subr.bf16.mxu0 0
  %3648 = vmatpush2.bf16.xpose.msra.mxu0 0
  %3649 = vmatprep.subr.bf16.mxu0 0
  %3650 = vmatpush2.bf16.xpose.msra.mxu0 0
  %3651 = vmatprep.subr.bf16.mxu0 0
  %3652 = vmatpush2.bf16.xpose.msra.mxu0 0
  %3653 = vmatprep.subr.bf16.mxu0 0
  %3654 = vmatpush2.bf16.xpose.msra.mxu0 0
  %3655 = vmatprep.mubr.bf16.mxu0 0
  %3656 = vmatmul.mubr.bf16.gmra.mxu0 %v3618
  %v3657 = vpop.f32.mrf.mxu0
  %v3658 = vadd.f32 %v109, %v3657
  %v3659 = vpop.f32.mrf.mxu0
  %v3660 = vpop.f32.mrf.mxu0
  %v3661 = vadd.f32 %v110, %v3660
  %v3662 = vpop.f32.mrf.mxu0
  %3663 = vdwg.mxu0
  %3664 = vrot.lane.b32.xlu0 %v516, 32
  %v3665 = vpop.permute.xlu0 %3664
  %3666 = vrot.lane.b32.xlu0 %v524, 32
  %v3667 = vpop.permute.xlu0 %3666
  %v3669 = vsel %vm535, %v3665, 0
  %v3672 = vsel %vm535, %v3667, 0
  %3674 = vmatprep.subr.bf16.mxu0 0
  %3675 = vmatpush1.bf16.xpose.msra.mxu0 0
  %3676 = vmatprep.subr.bf16.mxu0 0
  %3677 = vmatpush1.bf16.xpose.msra.mxu0 0
  %3678 = vmatprep.subr.bf16.mxu0 0
  %3679 = vmatpush1.bf16.xpose.msra.mxu0 0
  %3680 = vmatprep.subr.bf16.mxu0 0
  %3681 = vmatpush1.bf16.xpose.msra.mxu0 0
  %3682 = vmatprep.subr.bf16.mxu0 0
  %3683 = vmatpush1.bf16.xpose.msra.mxu0 0
  %3684 = vmatprep.subr.bf16.mxu0 0
  %3685 = vmatpush1.bf16.xpose.msra.mxu0 0
  %3686 = vmatprep.subr.bf16.mxu0 0
  %3687 = vmatpush1.bf16.xpose.msra.mxu0 0
  %3688 = vmatprep.subr.bf16.mxu0 0
  %3689 = vmatpush1.bf16.xpose.msra.mxu0 %v3672
  %3690 = vmatprep.subr.bf16.mxu0 0
  %3691 = vmatpush2.bf16.xpose.msra.mxu0 0
  %3692 = vmatprep.subr.bf16.mxu0 0
  %3693 = vmatpush2.bf16.xpose.msra.mxu0 0
  %3694 = vmatprep.subr.bf16.mxu0 0
  %3695 = vmatpush2.bf16.xpose.msra.mxu0 0
  %3696 = vmatprep.subr.bf16.mxu0 0
  %3697 = vmatpush2.bf16.xpose.msra.mxu0 0
  %3698 = vmatprep.subr.bf16.mxu0 0
  %3699 = vmatpush2.bf16.xpose.msra.mxu0 0
  %3700 = vmatprep.subr.bf16.mxu0 0
  %3701 = vmatpush2.bf16.xpose.msra.mxu0 0
  %3702 = vmatprep.subr.bf16.mxu0 0
  %3703 = vmatpush2.bf16.xpose.msra.mxu0 0
  %3704 = vmatprep.subr.bf16.mxu0 0
  %3705 = vmatpush2.bf16.xpose.msra.mxu0 0
  %3706 = vmatprep.mubr.bf16.mxu0 0
  %3707 = vmatmul.mubr.bf16.gmra.mxu0 %v3669
  %v3708 = vpop.f32.mrf.mxu0
  %v3709 = vadd.f32 %v111, %v3708
  %v3710 = vpop.f32.mrf.mxu0
  %v3711 = vpop.f32.mrf.mxu0
  %v3712 = vadd.f32 %v112, %v3711
  %v3713 = vpop.f32.mrf.mxu0
  %3714 = vdwg.mxu0
  %3715 = vrot.lane.b32.xlu0 %v517, 32
  %v3716 = vpop.permute.xlu0 %3715
  %3717 = vrot.lane.b32.xlu0 %v525, 32
  %v3718 = vpop.permute.xlu0 %3717
  %v3720 = vsel %vm535, %v3716, 0
  %v3723 = vsel %vm535, %v3718, 0
  %3725 = vmatprep.subr.bf16.mxu0 0
  %3726 = vmatpush1.bf16.xpose.msra.mxu0 0
  %3727 = vmatprep.subr.bf16.mxu0 0
  %3728 = vmatpush1.bf16.xpose.msra.mxu0 0
  %3729 = vmatprep.subr.bf16.mxu0 0
  %3730 = vmatpush1.bf16.xpose.msra.mxu0 0
  %3731 = vmatprep.subr.bf16.mxu0 0
  %3732 = vmatpush1.bf16.xpose.msra.mxu0 0
  %3733 = vmatprep.subr.bf16.mxu0 0
  %3734 = vmatpush1.bf16.xpose.msra.mxu0 0
  %3735 = vmatprep.subr.bf16.mxu0 0
  %3736 = vmatpush1.bf16.xpose.msra.mxu0 0
  %3737 = vmatprep.subr.bf16.mxu0 0
  %3738 = vmatpush1.bf16.xpose.msra.mxu0 0
  %3739 = vmatprep.subr.bf16.mxu0 0
  %3740 = vmatpush1.bf16.xpose.msra.mxu0 %v3723
  %3741 = vmatprep.subr.bf16.mxu0 0
  %3742 = vmatpush2.bf16.xpose.msra.mxu0 0
  %3743 = vmatprep.subr.bf16.mxu0 0
  %3744 = vmatpush2.bf16.xpose.msra.mxu0 0
  %3745 = vmatprep.subr.bf16.mxu0 0
  %3746 = vmatpush2.bf16.xpose.msra.mxu0 0
  %3747 = vmatprep.subr.bf16.mxu0 0
  %3748 = vmatpush2.bf16.xpose.msra.mxu0 0
  %3749 = vmatprep.subr.bf16.mxu0 0
  %3750 = vmatpush2.bf16.xpose.msra.mxu0 0
  %3751 = vmatprep.subr.bf16.mxu0 0
  %3752 = vmatpush2.bf16.xpose.msra.mxu0 0
  %3753 = vmatprep.subr.bf16.mxu0 0
  %3754 = vmatpush2.bf16.xpose.msra.mxu0 0
  %3755 = vmatprep.subr.bf16.mxu0 0
  %3756 = vmatpush2.bf16.xpose.msra.mxu0 0
  %3757 = vmatprep.mubr.bf16.mxu0 0
  %3758 = vmatmul.mubr.bf16.gmra.mxu0 %v3720
  %v3759 = vpop.f32.mrf.mxu0
  %v3760 = vadd.f32 %v113, %v3759
  %v3761 = vpop.f32.mrf.mxu0
  %v3762 = vpop.f32.mrf.mxu0
  %v3763 = vadd.f32 %v114, %v3762
  %v3764 = vpop.f32.mrf.mxu0
  %3765 = vdwg.mxu0
  %3766 = vrot.lane.b32.xlu0 %v518, 32
  %v3767 = vpop.permute.xlu0 %3766
  %3768 = vrot.lane.b32.xlu0 %v526, 32
  %v3769 = vpop.permute.xlu0 %3768
  %v3771 = vsel %vm535, %v3767, 0
  %v3774 = vsel %vm535, %v3769, 0
  %3776 = vmatprep.subr.bf16.mxu0 0
  %3777 = vmatpush1.bf16.xpose.msra.mxu0 0
  %3778 = vmatprep.subr.bf16.mxu0 0
  %3779 = vmatpush1.bf16.xpose.msra.mxu0 0
  %3780 = vmatprep.subr.bf16.mxu0 0
  %3781 = vmatpush1.bf16.xpose.msra.mxu0 0
  %3782 = vmatprep.subr.bf16.mxu0 0
  %3783 = vmatpush1.bf16.xpose.msra.mxu0 0
  %3784 = vmatprep.subr.bf16.mxu0 0
  %3785 = vmatpush1.bf16.xpose.msra.mxu0 0
  %3786 = vmatprep.subr.bf16.mxu0 0
  %3787 = vmatpush1.bf16.xpose.msra.mxu0 0
  %3788 = vmatprep.subr.bf16.mxu0 0
  %3789 = vmatpush1.bf16.xpose.msra.mxu0 0
  %3790 = vmatprep.subr.bf16.mxu0 0
  %3791 = vmatpush1.bf16.xpose.msra.mxu0 %v3774
  %3792 = vmatprep.subr.bf16.mxu0 0
  %3793 = vmatpush2.bf16.xpose.msra.mxu0 0
  %3794 = vmatprep.subr.bf16.mxu0 0
  %3795 = vmatpush2.bf16.xpose.msra.mxu0 0
  %3796 = vmatprep.subr.bf16.mxu0 0
  %3797 = vmatpush2.bf16.xpose.msra.mxu0 0
  %3798 = vmatprep.subr.bf16.mxu0 0
  %3799 = vmatpush2.bf16.xpose.msra.mxu0 0
  %3800 = vmatprep.subr.bf16.mxu0 0
  %3801 = vmatpush2.bf16.xpose.msra.mxu0 0
  %3802 = vmatprep.subr.bf16.mxu0 0
  %3803 = vmatpush2.bf16.xpose.msra.mxu0 0
  %3804 = vmatprep.subr.bf16.mxu0 0
  %3805 = vmatpush2.bf16.xpose.msra.mxu0 0
  %3806 = vmatprep.subr.bf16.mxu0 0
  %3807 = vmatpush2.bf16.xpose.msra.mxu0 0
  %3808 = vmatprep.mubr.bf16.mxu0 0
  %3809 = vmatmul.mubr.bf16.gmra.mxu0 %v3771
  %v3810 = vpop.f32.mrf.mxu0
  %v3811 = vadd.f32 %v115, %v3810
  %v3812 = vpop.f32.mrf.mxu0
  %v3813 = vpop.f32.mrf.mxu0
  %v3814 = vadd.f32 %v116, %v3813
  %v3815 = vpop.f32.mrf.mxu0
  %3816 = vdwg.mxu0
  %v3817 = vsel %vm912, %v3454, -inf
  %3818 = vmax.xlane.f32.xlu0 %v3817
  %v3819 = vpop.xlane.xlu0 %3818
  %v3820 = vsel %vm912, %v3457, -inf
  %3821 = vmax.xlane.f32.xlu0 %v3820
  %v3822 = vpop.xlane.xlu0 %3821
  %v3823 = vsel %vm912, %v3505, -inf
  %3824 = vmax.xlane.f32.xlu0 %v3823
  %v3825 = vpop.xlane.xlu0 %3824
  %v3826 = vsel %vm912, %v3508, -inf
  %3827 = vmax.xlane.f32.xlu0 %v3826
  %v3828 = vpop.xlane.xlu0 %3827
  %v3829 = vsel %vm912, %v3556, -inf
  %3830 = vmax.xlane.f32.xlu0 %v3829
  %v3831 = vpop.xlane.xlu0 %3830
  %v3832 = vsel %vm912, %v3559, -inf
  %3833 = vmax.xlane.f32.xlu0 %v3832
  %v3834 = vpop.xlane.xlu0 %3833
  %v3835 = vsel %vm912, %v3607, -inf
  %3836 = vmax.xlane.f32.xlu0 %v3835
  %v3837 = vpop.xlane.xlu0 %3836
  %v3838 = vsel %vm912, %v3610, -inf
  %3839 = vmax.xlane.f32.xlu0 %v3838
  %v3840 = vpop.xlane.xlu0 %3839
  %v3841 = vsel %vm912, %v3658, -inf
  %3842 = vmax.xlane.f32.xlu0 %v3841
  %v3843 = vpop.xlane.xlu0 %3842
  %v3844 = vsel %vm912, %v3661, -inf
  %3845 = vmax.xlane.f32.xlu0 %v3844
  %v3846 = vpop.xlane.xlu0 %3845
  %v3847 = vsel %vm912, %v3709, -inf
  %3848 = vmax.xlane.f32.xlu0 %v3847
  %v3849 = vpop.xlane.xlu0 %3848
  %v3850 = vsel %vm912, %v3712, -inf
  %3851 = vmax.xlane.f32.xlu0 %v3850
  %v3852 = vpop.xlane.xlu0 %3851
  %v3853 = vsel %vm912, %v3760, -inf
  %3854 = vmax.xlane.f32.xlu0 %v3853
  %v3855 = vpop.xlane.xlu0 %3854
  %v3856 = vsel %vm912, %v3763, -inf
  %3857 = vmax.xlane.f32.xlu0 %v3856
  %v3858 = vpop.xlane.xlu0 %3857
  %v3859 = vsel %vm912, %v3811, -inf
  %3860 = vmax.xlane.f32.xlu0 %v3859
  %v3861 = vpop.xlane.xlu0 %3860
  %v3862 = vsel %vm912, %v3814, -inf
  %3863 = vmax.xlane.f32.xlu0 %v3862
  %v3864 = vpop.xlane.xlu0 %3863
  %v3865 = vsub.f32 %v3454, %v3819
  %v3866 = vsub.f32 %v3457, %v3822
  %v3867 = vsub.f32 %v3505, %v3825
  %v3868 = vsub.f32 %v3508, %v3828
  %v3869 = vsub.f32 %v3556, %v3831
  %v3870 = vsub.f32 %v3559, %v3834
  %v3871 = vsub.f32 %v3607, %v3837
  %v3872 = vsub.f32 %v3610, %v3840
  %v3873 = vsub.f32 %v3658, %v3843
  %v3874 = vsub.f32 %v3661, %v3846
  %v3875 = vsub.f32 %v3709, %v3849
  %v3876 = vsub.f32 %v3712, %v3852
  %v3877 = vsub.f32 %v3760, %v3855
  %v3878 = vsub.f32 %v3763, %v3858
  %v3879 = vsub.f32 %v3811, %v3861
  %v3880 = vsub.f32 %v3814, %v3864
  %v3881 = vmul.f32 %v3865, 1.442695
  %v3882 = vpow.pop %v3881
  %v3883 = vmul.f32 %v3866, 1.442695
  %v3884 = vpow.pop %v3883
  %v3885 = vmul.f32 %v3867, 1.442695
  %v3886 = vpow.pop %v3885
  %v3887 = vmul.f32 %v3868, 1.442695
  %v3888 = vpow.pop %v3887
  %v3889 = vmul.f32 %v3869, 1.442695
  %v3890 = vpow.pop %v3889
  %v3891 = vmul.f32 %v3870, 1.442695
  %v3892 = vpow.pop %v3891
  %v3893 = vmul.f32 %v3871, 1.442695
  %v3894 = vpow.pop %v3893
  %v3895 = vmul.f32 %v3872, 1.442695
  %v3896 = vpow.pop %v3895
  %v3897 = vmul.f32 %v3873, 1.442695
  %v3898 = vpow.pop %v3897
  %v3899 = vmul.f32 %v3874, 1.442695
  %v3900 = vpow.pop %v3899
  %v3901 = vmul.f32 %v3875, 1.442695
  %v3902 = vpow.pop %v3901
  %v3903 = vmul.f32 %v3876, 1.442695
  %v3904 = vpow.pop %v3903
  %v3905 = vmul.f32 %v3877, 1.442695
  %v3906 = vpow.pop %v3905
  %v3907 = vmul.f32 %v3878, 1.442695
  %v3908 = vpow.pop %v3907
  %v3909 = vmul.f32 %v3879, 1.442695
  %v3910 = vpow.pop %v3909
  %v3911 = vmul.f32 %v3880, 1.442695
  %v3912 = vpow.pop %v3911
  %v3913 = vsel %vm912, %v3882, 0.0
  %3914 = vadd.xlane.f32.xlu0 %v3913
  %v3915 = vpop.xlane.xlu0 %3914
  %v3916 = vsel %vm912, %v3884, 0.0
  %3917 = vadd.xlane.f32.xlu0 %v3916
  %v3918 = vpop.xlane.xlu0 %3917
  %v3919 = vsel %vm912, %v3886, 0.0
  %3920 = vadd.xlane.f32.xlu0 %v3919
  %v3921 = vpop.xlane.xlu0 %3920
  %v3922 = vsel %vm912, %v3888, 0.0
  %3923 = vadd.xlane.f32.xlu0 %v3922
  %v3924 = vpop.xlane.xlu0 %3923
  %v3925 = vsel %vm912, %v3890, 0.0
  %3926 = vadd.xlane.f32.xlu0 %v3925
  %v3927 = vpop.xlane.xlu0 %3926
  %v3928 = vsel %vm912, %v3892, 0.0
  %3929 = vadd.xlane.f32.xlu0 %v3928
  %v3930 = vpop.xlane.xlu0 %3929
  %v3931 = vsel %vm912, %v3894, 0.0
  %3932 = vadd.xlane.f32.xlu0 %v3931
  %v3933 = vpop.xlane.xlu0 %3932
  %v3934 = vsel %vm912, %v3896, 0.0
  %3935 = vadd.xlane.f32.xlu0 %v3934
  %v3936 = vpop.xlane.xlu0 %3935
  %v3937 = vsel %vm912, %v3898, 0.0
  %3938 = vadd.xlane.f32.xlu0 %v3937
  %v3939 = vpop.xlane.xlu0 %3938
  %v3940 = vsel %vm912, %v3900, 0.0
  %3941 = vadd.xlane.f32.xlu0 %v3940
  %v3942 = vpop.xlane.xlu0 %3941
  %v3943 = vsel %vm912, %v3902, 0.0
  %3944 = vadd.xlane.f32.xlu0 %v3943
  %v3945 = vpop.xlane.xlu0 %3944
  %v3946 = vsel %vm912, %v3904, 0.0
  %3947 = vadd.xlane.f32.xlu0 %v3946
  %v3948 = vpop.xlane.xlu0 %3947
  %v3949 = vsel %vm912, %v3906, 0.0
  %3950 = vadd.xlane.f32.xlu0 %v3949
  %v3951 = vpop.xlane.xlu0 %3950
  %v3952 = vsel %vm912, %v3908, 0.0
  %3953 = vadd.xlane.f32.xlu0 %v3952
  %v3954 = vpop.xlane.xlu0 %3953
  %v3955 = vsel %vm912, %v3910, 0.0
  %3956 = vadd.xlane.f32.xlu0 %v3955
  %v3957 = vpop.xlane.xlu0 %3956
  %v3958 = vsel %vm912, %v3912, 0.0
  %3959 = vadd.xlane.f32.xlu0 %v3958
  %v3960 = vpop.xlane.xlu0 %3959
  %v3961 = vrcp.pop %v3915
  %v3962 = vrcp.pop %v3918
  %v3963 = vrcp.pop %v3921
  %v3964 = vrcp.pop %v3924
  %v3965 = vrcp.pop %v3927
  %v3966 = vrcp.pop %v3930
  %v3967 = vrcp.pop %v3933
  %v3968 = vrcp.pop %v3936
  %v3969 = vrcp.pop %v3939
  %v3970 = vrcp.pop %v3942
  %v3971 = vrcp.pop %v3945
  %v3972 = vrcp.pop %v3948
  %v3973 = vrcp.pop %v3951
  %v3974 = vrcp.pop %v3954
  %v3975 = vrcp.pop %v3957
  %v3976 = vrcp.pop %v3960
  %v3977 = vmul.f32 %v3882, %v3961
  %v3978 = vmul.f32 %v3884, %v3962
  %v3979 = vmul.f32 %v3886, %v3963
  %v3980 = vmul.f32 %v3888, %v3964
  %v3981 = vmul.f32 %v3890, %v3965
  %v3982 = vmul.f32 %v3892, %v3966
  %v3983 = vmul.f32 %v3894, %v3967
  %v3984 = vmul.f32 %v3896, %v3968
  %v3985 = vmul.f32 %v3898, %v3969
  %v3986 = vmul.f32 %v3900, %v3970
  %v3987 = vmul.f32 %v3902, %v3971
  %v3988 = vmul.f32 %v3904, %v3972
  %v3989 = vmul.f32 %v3906, %v3973
  %v3990 = vmul.f32 %v3908, %v3974
  %v3991 = vmul.f32 %v3910, %v3975
  %v3992 = vmul.f32 %v3912, %v3976
  %v3993 = vpack.c.bf16 %v3978, %v3977
  %v3994 = vpack.c.bf16 %v3980, %v3979
  %v3995 = vpack.c.bf16 %v3982, %v3981
  %v3996 = vpack.c.bf16 %v3984, %v3983
  %v3997 = vpack.c.bf16 %v3986, %v3985
  %v3998 = vpack.c.bf16 %v3988, %v3987
  %v3999 = vpack.c.bf16 %v3990, %v3989
  %v4000 = vpack.c.bf16 %v3992, %v3991
  %4001 = vrot.lane.b32.xlu0 %v527, 32
  %v4002 = vpop.permute.xlu0 %4001
  %v4005 = vsel %vm912, %v3993, 0
  %4007 = vmatprep.subr.bf16.mxu0 0
  %4008 = vmatpush1.bf16.msra.mxu0 0
  %4009 = vmatprep.subr.bf16.mxu0 0
  %4010 = vmatpush1.bf16.msra.mxu0 0
  %4011 = vmatprep.subr.bf16.mxu0 0
  %4012 = vmatpush1.bf16.msra.mxu0 0
  %4013 = vmatprep.subr.bf16.mxu0 0
  %4014 = vmatpush1.bf16.msra.mxu0 0
  %4015 = vmatprep.subr.bf16.mxu0 0
  %4016 = vmatpush1.bf16.msra.mxu0 0
  %4017 = vmatprep.subr.bf16.mxu0 0
  %4018 = vmatpush1.bf16.msra.mxu0 0
  %4019 = vmatprep.subr.bf16.mxu0 0
  %4020 = vmatpush1.bf16.msra.mxu0 0
  %4021 = vmatprep.subr.bf16.mxu0 0
  %4022 = vmatpush1.bf16.msra.mxu0 %v4002
  %4023 = vmatprep.subr.bf16.mxu0 0
  %4024 = vmatpush2.bf16.msra.mxu0 0
  %4025 = vmatprep.subr.bf16.mxu0 0
  %4026 = vmatpush2.bf16.msra.mxu0 0
  %4027 = vmatprep.subr.bf16.mxu0 0
  %4028 = vmatpush2.bf16.msra.mxu0 0
  %4029 = vmatprep.subr.bf16.mxu0 0
  %4030 = vmatpush2.bf16.msra.mxu0 0
  %4031 = vmatprep.subr.bf16.mxu0 0
  %4032 = vmatpush2.bf16.msra.mxu0 0
  %4033 = vmatprep.subr.bf16.mxu0 0
  %4034 = vmatpush2.bf16.msra.mxu0 0
  %4035 = vmatprep.subr.bf16.mxu0 0
  %4036 = vmatpush2.bf16.msra.mxu0 0
  %4037 = vmatprep.subr.bf16.mxu0 0
  %4038 = vmatpush2.bf16.msra.mxu0 0
  %4039 = vmatprep.mubr.bf16.mxu0 0
  %4040 = vmatmul.mubr.bf16.gmra.mxu0 %v4005
  %v4041 = vpop.f32.mrf.mxu0
  %v4042 = vadd.f32 0.0, %v4041
  %v4043 = vpop.f32.mrf.mxu0
  %v4044 = vpop.f32.mrf.mxu0
  %v4045 = vadd.f32 0.0, %v4044
  %v4046 = vpop.f32.mrf.mxu0
  %4047 = vdwg.mxu0
  %4048 = vrot.lane.b32.xlu0 %v528, 32
  %v4049 = vpop.permute.xlu0 %4048
  %v4052 = vsel %vm912, %v3994, 0
  %4054 = vmatprep.subr.bf16.mxu0 0
  %4055 = vmatpush1.bf16.msra.mxu0 0
  %4056 = vmatprep.subr.bf16.mxu0 0
  %4057 = vmatpush1.bf16.msra.mxu0 0
  %4058 = vmatprep.subr.bf16.mxu0 0
  %4059 = vmatpush1.bf16.msra.mxu0 0
  %4060 = vmatprep.subr.bf16.mxu0 0
  %4061 = vmatpush1.bf16.msra.mxu0 0
  %4062 = vmatprep.subr.bf16.mxu0 0
  %4063 = vmatpush1.bf16.msra.mxu0 0
  %4064 = vmatprep.subr.bf16.mxu0 0
  %4065 = vmatpush1.bf16.msra.mxu0 0
  %4066 = vmatprep.subr.bf16.mxu0 0
  %4067 = vmatpush1.bf16.msra.mxu0 0
  %4068 = vmatprep.subr.bf16.mxu0 0
  %4069 = vmatpush1.bf16.msra.mxu0 %v4049
  %4070 = vmatprep.subr.bf16.mxu0 0
  %4071 = vmatpush2.bf16.msra.mxu0 0
  %4072 = vmatprep.subr.bf16.mxu0 0
  %4073 = vmatpush2.bf16.msra.mxu0 0
  %4074 = vmatprep.subr.bf16.mxu0 0
  %4075 = vmatpush2.bf16.msra.mxu0 0
  %4076 = vmatprep.subr.bf16.mxu0 0
  %4077 = vmatpush2.bf16.msra.mxu0 0
  %4078 = vmatprep.subr.bf16.mxu0 0
  %4079 = vmatpush2.bf16.msra.mxu0 0
  %4080 = vmatprep.subr.bf16.mxu0 0
  %4081 = vmatpush2.bf16.msra.mxu0 0
  %4082 = vmatprep.subr.bf16.mxu0 0
  %4083 = vmatpush2.bf16.msra.mxu0 0
  %4084 = vmatprep.subr.bf16.mxu0 0
  %4085 = vmatpush2.bf16.msra.mxu0 0
  %4086 = vmatprep.mubr.bf16.mxu0 0
  %4087 = vmatmul.mubr.bf16.gmra.mxu0 %v4052
  %v4088 = vpop.f32.mrf.mxu0
  %v4089 = vadd.f32 0.0, %v4088
  %v4090 = vpop.f32.mrf.mxu0
  %v4091 = vpop.f32.mrf.mxu0
  %v4092 = vadd.f32 0.0, %v4091
  %v4093 = vpop.f32.mrf.mxu0
  %4094 = vdwg.mxu0
  %4095 = vrot.lane.b32.xlu0 %v529, 32
  %v4096 = vpop.permute.xlu0 %4095
  %v4099 = vsel %vm912, %v3995, 0
  %4101 = vmatprep.subr.bf16.mxu0 0
  %4102 = vmatpush1.bf16.msra.mxu0 0
  %4103 = vmatprep.subr.bf16.mxu0 0
  %4104 = vmatpush1.bf16.msra.mxu0 0
  %4105 = vmatprep.subr.bf16.mxu0 0
  %4106 = vmatpush1.bf16.msra.mxu0 0
  %4107 = vmatprep.subr.bf16.mxu0 0
  %4108 = vmatpush1.bf16.msra.mxu0 0
  %4109 = vmatprep.subr.bf16.mxu0 0
  %4110 = vmatpush1.bf16.msra.mxu0 0
  %4111 = vmatprep.subr.bf16.mxu0 0
  %4112 = vmatpush1.bf16.msra.mxu0 0
  %4113 = vmatprep.subr.bf16.mxu0 0
  %4114 = vmatpush1.bf16.msra.mxu0 0
  %4115 = vmatprep.subr.bf16.mxu0 0
  %4116 = vmatpush1.bf16.msra.mxu0 %v4096
  %4117 = vmatprep.subr.bf16.mxu0 0
  %4118 = vmatpush2.bf16.msra.mxu0 0
  %4119 = vmatprep.subr.bf16.mxu0 0
  %4120 = vmatpush2.bf16.msra.mxu0 0
  %4121 = vmatprep.subr.bf16.mxu0 0
  %4122 = vmatpush2.bf16.msra.mxu0 0
  %4123 = vmatprep.subr.bf16.mxu0 0
  %4124 = vmatpush2.bf16.msra.mxu0 0
  %4125 = vmatprep.subr.bf16.mxu0 0
  %4126 = vmatpush2.bf16.msra.mxu0 0
  %4127 = vmatprep.subr.bf16.mxu0 0
  %4128 = vmatpush2.bf16.msra.mxu0 0
  %4129 = vmatprep.subr.bf16.mxu0 0
  %4130 = vmatpush2.bf16.msra.mxu0 0
  %4131 = vmatprep.subr.bf16.mxu0 0
  %4132 = vmatpush2.bf16.msra.mxu0 0
  %4133 = vmatprep.mubr.bf16.mxu0 0
  %4134 = vmatmul.mubr.bf16.gmra.mxu0 %v4099
  %v4135 = vpop.f32.mrf.mxu0
  %v4136 = vadd.f32 0.0, %v4135
  %v4137 = vpop.f32.mrf.mxu0
  %v4138 = vpop.f32.mrf.mxu0
  %v4139 = vadd.f32 0.0, %v4138
  %v4140 = vpop.f32.mrf.mxu0
  %4141 = vdwg.mxu0
  %4142 = vrot.lane.b32.xlu0 %v530, 32
  %v4143 = vpop.permute.xlu0 %4142
  %v4146 = vsel %vm912, %v3996, 0
  %4148 = vmatprep.subr.bf16.mxu0 0
  %4149 = vmatpush1.bf16.msra.mxu0 0
  %4150 = vmatprep.subr.bf16.mxu0 0
  %4151 = vmatpush1.bf16.msra.mxu0 0
  %4152 = vmatprep.subr.bf16.mxu0 0
  %4153 = vmatpush1.bf16.msra.mxu0 0
  %4154 = vmatprep.subr.bf16.mxu0 0
  %4155 = vmatpush1.bf16.msra.mxu0 0
  %4156 = vmatprep.subr.bf16.mxu0 0
  %4157 = vmatpush1.bf16.msra.mxu0 0
  %4158 = vmatprep.subr.bf16.mxu0 0
  %4159 = vmatpush1.bf16.msra.mxu0 0
  %4160 = vmatprep.subr.bf16.mxu0 0
  %4161 = vmatpush1.bf16.msra.mxu0 0
  %4162 = vmatprep.subr.bf16.mxu0 0
  %4163 = vmatpush1.bf16.msra.mxu0 %v4143
  %4164 = vmatprep.subr.bf16.mxu0 0
  %4165 = vmatpush2.bf16.msra.mxu0 0
  %4166 = vmatprep.subr.bf16.mxu0 0
  %4167 = vmatpush2.bf16.msra.mxu0 0
  %4168 = vmatprep.subr.bf16.mxu0 0
  %4169 = vmatpush2.bf16.msra.mxu0 0
  %4170 = vmatprep.subr.bf16.mxu0 0
  %4171 = vmatpush2.bf16.msra.mxu0 0
  %4172 = vmatprep.subr.bf16.mxu0 0
  %4173 = vmatpush2.bf16.msra.mxu0 0
  %4174 = vmatprep.subr.bf16.mxu0 0
  %4175 = vmatpush2.bf16.msra.mxu0 0
  %4176 = vmatprep.subr.bf16.mxu0 0
  %4177 = vmatpush2.bf16.msra.mxu0 0
  %4178 = vmatprep.subr.bf16.mxu0 0
  %4179 = vmatpush2.bf16.msra.mxu0 0
  %4180 = vmatprep.mubr.bf16.mxu0 0
  %4181 = vmatmul.mubr.bf16.gmra.mxu0 %v4146
  %v4182 = vpop.f32.mrf.mxu0
  %v4183 = vadd.f32 0.0, %v4182
  %v4184 = vpop.f32.mrf.mxu0
  %v4185 = vpop.f32.mrf.mxu0
  %v4186 = vadd.f32 0.0, %v4185
  %v4187 = vpop.f32.mrf.mxu0
  %4188 = vdwg.mxu0
  %4189 = vrot.lane.b32.xlu0 %v531, 32
  %v4190 = vpop.permute.xlu0 %4189
  %v4193 = vsel %vm912, %v3997, 0
  %4195 = vmatprep.subr.bf16.mxu0 0
  %4196 = vmatpush1.bf16.msra.mxu0 0
  %4197 = vmatprep.subr.bf16.mxu0 0
  %4198 = vmatpush1.bf16.msra.mxu0 0
  %4199 = vmatprep.subr.bf16.mxu0 0
  %4200 = vmatpush1.bf16.msra.mxu0 0
  %4201 = vmatprep.subr.bf16.mxu0 0
  %4202 = vmatpush1.bf16.msra.mxu0 0
  %4203 = vmatprep.subr.bf16.mxu0 0
  %4204 = vmatpush1.bf16.msra.mxu0 0
  %4205 = vmatprep.subr.bf16.mxu0 0
  %4206 = vmatpush1.bf16.msra.mxu0 0
  %4207 = vmatprep.subr.bf16.mxu0 0
  %4208 = vmatpush1.bf16.msra.mxu0 0
  %4209 = vmatprep.subr.bf16.mxu0 0
  %4210 = vmatpush1.bf16.msra.mxu0 %v4190
  %4211 = vmatprep.subr.bf16.mxu0 0
  %4212 = vmatpush2.bf16.msra.mxu0 0
  %4213 = vmatprep.subr.bf16.mxu0 0
  %4214 = vmatpush2.bf16.msra.mxu0 0
  %4215 = vmatprep.subr.bf16.mxu0 0
  %4216 = vmatpush2.bf16.msra.mxu0 0
  %4217 = vmatprep.subr.bf16.mxu0 0
  %4218 = vmatpush2.bf16.msra.mxu0 0
  %4219 = vmatprep.subr.bf16.mxu0 0
  %4220 = vmatpush2.bf16.msra.mxu0 0
  %4221 = vmatprep.subr.bf16.mxu0 0
  %4222 = vmatpush2.bf16.msra.mxu0 0
  %4223 = vmatprep.subr.bf16.mxu0 0
  %4224 = vmatpush2.bf16.msra.mxu0 0
  %4225 = vmatprep.subr.bf16.mxu0 0
  %4226 = vmatpush2.bf16.msra.mxu0 0
  %4227 = vmatprep.mubr.bf16.mxu0 0
  %4228 = vmatmul.mubr.bf16.gmra.mxu0 %v4193
  %v4229 = vpop.f32.mrf.mxu0
  %v4230 = vadd.f32 0.0, %v4229
  %v4231 = vpop.f32.mrf.mxu0
  %v4232 = vpop.f32.mrf.mxu0
  %v4233 = vadd.f32 0.0, %v4232
  %v4234 = vpop.f32.mrf.mxu0
  %4235 = vdwg.mxu0
  %4236 = vrot.lane.b32.xlu0 %v532, 32
  %v4237 = vpop.permute.xlu0 %4236
  %v4240 = vsel %vm912, %v3998, 0
  %4242 = vmatprep.subr.bf16.mxu0 0
  %4243 = vmatpush1.bf16.msra.mxu0 0
  %4244 = vmatprep.subr.bf16.mxu0 0
  %4245 = vmatpush1.bf16.msra.mxu0 0
  %4246 = vmatprep.subr.bf16.mxu0 0
  %4247 = vmatpush1.bf16.msra.mxu0 0
  %4248 = vmatprep.subr.bf16.mxu0 0
  %4249 = vmatpush1.bf16.msra.mxu0 0
  %4250 = vmatprep.subr.bf16.mxu0 0
  %4251 = vmatpush1.bf16.msra.mxu0 0
  %4252 = vmatprep.subr.bf16.mxu0 0
  %4253 = vmatpush1.bf16.msra.mxu0 0
  %4254 = vmatprep.subr.bf16.mxu0 0
  %4255 = vmatpush1.bf16.msra.mxu0 0
  %4256 = vmatprep.subr.bf16.mxu0 0
  %4257 = vmatpush1.bf16.msra.mxu0 %v4237
  %4258 = vmatprep.subr.bf16.mxu0 0
  %4259 = vmatpush2.bf16.msra.mxu0 0
  %4260 = vmatprep.subr.bf16.mxu0 0
  %4261 = vmatpush2.bf16.msra.mxu0 0
  %4262 = vmatprep.subr.bf16.mxu0 0
  %4263 = vmatpush2.bf16.msra.mxu0 0
  %4264 = vmatprep.subr.bf16.mxu0 0
  %4265 = vmatpush2.bf16.msra.mxu0 0
  %4266 = vmatprep.subr.bf16.mxu0 0
  %4267 = vmatpush2.bf16.msra.mxu0 0
  %4268 = vmatprep.subr.bf16.mxu0 0
  %4269 = vmatpush2.bf16.msra.mxu0 0
  %4270 = vmatprep.subr.bf16.mxu0 0
  %4271 = vmatpush2.bf16.msra.mxu0 0
  %4272 = vmatprep.subr.bf16.mxu0 0
  %4273 = vmatpush2.bf16.msra.mxu0 0
  %4274 = vmatprep.mubr.bf16.mxu0 0
  %4275 = vmatmul.mubr.bf16.gmra.mxu0 %v4240
  %v4276 = vpop.f32.mrf.mxu0
  %v4277 = vadd.f32 0.0, %v4276
  %v4278 = vpop.f32.mrf.mxu0
  %v4279 = vpop.f32.mrf.mxu0
  %v4280 = vadd.f32 0.0, %v4279
  %v4281 = vpop.f32.mrf.mxu0
  %4282 = vdwg.mxu0
  %4283 = vrot.lane.b32.xlu0 %v533, 32
  %v4284 = vpop.permute.xlu0 %4283
  %v4287 = vsel %vm912, %v3999, 0
  %4289 = vmatprep.subr.bf16.mxu0 0
  %4290 = vmatpush1.bf16.msra.mxu0 0
  %4291 = vmatprep.subr.bf16.mxu0 0
  %4292 = vmatpush1.bf16.msra.mxu0 0
  %4293 = vmatprep.subr.bf16.mxu0 0
  %4294 = vmatpush1.bf16.msra.mxu0 0
  %4295 = vmatprep.subr.bf16.mxu0 0
  %4296 = vmatpush1.bf16.msra.mxu0 0
  %4297 = vmatprep.subr.bf16.mxu0 0
  %4298 = vmatpush1.bf16.msra.mxu0 0
  %4299 = vmatprep.subr.bf16.mxu0 0
  %4300 = vmatpush1.bf16.msra.mxu0 0
  %4301 = vmatprep.subr.bf16.mxu0 0
  %4302 = vmatpush1.bf16.msra.mxu0 0
  %4303 = vmatprep.subr.bf16.mxu0 0
  %4304 = vmatpush1.bf16.msra.mxu0 %v4284
  %4305 = vmatprep.subr.bf16.mxu0 0
  %4306 = vmatpush2.bf16.msra.mxu0 0
  %4307 = vmatprep.subr.bf16.mxu0 0
  %4308 = vmatpush2.bf16.msra.mxu0 0
  %4309 = vmatprep.subr.bf16.mxu0 0
  %4310 = vmatpush2.bf16.msra.mxu0 0
  %4311 = vmatprep.subr.bf16.mxu0 0
  %4312 = vmatpush2.bf16.msra.mxu0 0
  %4313 = vmatprep.subr.bf16.mxu0 0
  %4314 = vmatpush2.bf16.msra.mxu0 0
  %4315 = vmatprep.subr.bf16.mxu0 0
  %4316 = vmatpush2.bf16.msra.mxu0 0
  %4317 = vmatprep.subr.bf16.mxu0 0
  %4318 = vmatpush2.bf16.msra.mxu0 0
  %4319 = vmatprep.subr.bf16.mxu0 0
  %4320 = vmatpush2.bf16.msra.mxu0 0
  %4321 = vmatprep.mubr.bf16.mxu0 0
  %4322 = vmatmul.mubr.bf16.gmra.mxu0 %v4287
  %v4323 = vpop.f32.mrf.mxu0
  %v4324 = vadd.f32 0.0, %v4323
  %v4325 = vpop.f32.mrf.mxu0
  %v4326 = vpop.f32.mrf.mxu0
  %v4327 = vadd.f32 0.0, %v4326
  %v4328 = vpop.f32.mrf.mxu0
  %4329 = vdwg.mxu0
  %4330 = vrot.lane.b32.xlu0 %v534, 32
  %v4331 = vpop.permute.xlu0 %4330
  %v4334 = vsel %vm912, %v4000, 0
  %4336 = vmatprep.subr.bf16.mxu0 0
  %4337 = vmatpush1.bf16.msra.mxu0 0
  %4338 = vmatprep.subr.bf16.mxu0 0
  %4339 = vmatpush1.bf16.msra.mxu0 0
  %4340 = vmatprep.subr.bf16.mxu0 0
  %4341 = vmatpush1.bf16.msra.mxu0 0
  %4342 = vmatprep.subr.bf16.mxu0 0
  %4343 = vmatpush1.bf16.msra.mxu0 0
  %4344 = vmatprep.subr.bf16.mxu0 0
  %4345 = vmatpush1.bf16.msra.mxu0 0
  %4346 = vmatprep.subr.bf16.mxu0 0
  %4347 = vmatpush1.bf16.msra.mxu0 0
  %4348 = vmatprep.subr.bf16.mxu0 0
  %4349 = vmatpush1.bf16.msra.mxu0 0
  %4350 = vmatprep.subr.bf16.mxu0 0
  %4351 = vmatpush1.bf16.msra.mxu0 %v4331
  %4352 = vmatprep.subr.bf16.mxu0 0
  %4353 = vmatpush2.bf16.msra.mxu0 0
  %4354 = vmatprep.subr.bf16.mxu0 0
  %4355 = vmatpush2.bf16.msra.mxu0 0
  %4356 = vmatprep.subr.bf16.mxu0 0
  %4357 = vmatpush2.bf16.msra.mxu0 0
  %4358 = vmatprep.subr.bf16.mxu0 0
  %4359 = vmatpush2.bf16.msra.mxu0 0
  %4360 = vmatprep.subr.bf16.mxu0 0
  %4361 = vmatpush2.bf16.msra.mxu0 0
  %4362 = vmatprep.subr.bf16.mxu0 0
  %4363 = vmatpush2.bf16.msra.mxu0 0
  %4364 = vmatprep.subr.bf16.mxu0 0
  %4365 = vmatpush2.bf16.msra.mxu0 0
  %4366 = vmatprep.subr.bf16.mxu0 0
  %4367 = vmatpush2.bf16.msra.mxu0 0
  %4368 = vmatprep.mubr.bf16.mxu0 0
  %4369 = vmatmul.mubr.bf16.gmra.mxu0 %v4334
  %v4370 = vpop.f32.mrf.mxu0
  %v4371 = vadd.f32 0.0, %v4370
  %v4372 = vpop.f32.mrf.mxu0
  %v4373 = vpop.f32.mrf.mxu0
  %v4374 = vadd.f32 0.0, %v4373
  %v4375 = vpop.f32.mrf.mxu0
  %4376 = vdwg.mxu0
  %4393 = vrot.lane.b32.xlu0 %v2099, 32
  %v4394 = vpop.permute.xlu0 %4393
  %4395 = vrot.lane.b32.xlu0 %v2102, 32
  %v4396 = vpop.permute.xlu0 %4395
  %4397 = vrot.lane.b32.xlu0 %v2147, 32
  %v4398 = vpop.permute.xlu0 %4397
  %4399 = vrot.lane.b32.xlu0 %v2150, 32
  %v4400 = vpop.permute.xlu0 %4399
  %4401 = vrot.lane.b32.xlu0 %v2195, 32
  %v4402 = vpop.permute.xlu0 %4401
  %4403 = vrot.lane.b32.xlu0 %v2198, 32
  %v4404 = vpop.permute.xlu0 %4403
  %4405 = vrot.lane.b32.xlu0 %v2243, 32
  %v4406 = vpop.permute.xlu0 %4405
  %4407 = vrot.lane.b32.xlu0 %v2246, 32
  %v4408 = vpop.permute.xlu0 %4407
  %4409 = vrot.lane.b32.xlu0 %v2291, 32
  %v4410 = vpop.permute.xlu0 %4409
  %4411 = vrot.lane.b32.xlu0 %v2294, 32
  %v4412 = vpop.permute.xlu0 %4411
  %4413 = vrot.lane.b32.xlu0 %v2339, 32
  %v4414 = vpop.permute.xlu0 %4413
  %4415 = vrot.lane.b32.xlu0 %v2342, 32
  %v4416 = vpop.permute.xlu0 %4415
  %4417 = vrot.lane.b32.xlu0 %v2387, 32
  %v4418 = vpop.permute.xlu0 %4417
  %4419 = vrot.lane.b32.xlu0 %v2390, 32
  %v4420 = vpop.permute.xlu0 %4419
  %4421 = vrot.lane.b32.xlu0 %v2435, 32
  %v4422 = vpop.permute.xlu0 %4421
  %4423 = vrot.lane.b32.xlu0 %v2438, 32
  %v4424 = vpop.permute.xlu0 %4423
  %4457 = vrot.lane.b32.xlu0 %v3074, 64
  %v4458 = vpop.permute.xlu0 %4457
  %4459 = vrot.lane.b32.xlu0 %v3077, 64
  %v4460 = vpop.permute.xlu0 %4459
  %4461 = vrot.lane.b32.xlu0 %v3121, 64
  %v4462 = vpop.permute.xlu0 %4461
  %4463 = vrot.lane.b32.xlu0 %v3124, 64
  %v4464 = vpop.permute.xlu0 %4463
  %4465 = vrot.lane.b32.xlu0 %v3168, 64
  %v4466 = vpop.permute.xlu0 %4465
  %4467 = vrot.lane.b32.xlu0 %v3171, 64
  %v4468 = vpop.permute.xlu0 %4467
  %4469 = vrot.lane.b32.xlu0 %v3215, 64
  %v4470 = vpop.permute.xlu0 %4469
  %4471 = vrot.lane.b32.xlu0 %v3218, 64
  %v4472 = vpop.permute.xlu0 %4471
  %4473 = vrot.lane.b32.xlu0 %v3262, 64
  %v4474 = vpop.permute.xlu0 %4473
  %4475 = vrot.lane.b32.xlu0 %v3265, 64
  %v4476 = vpop.permute.xlu0 %4475
  %4477 = vrot.lane.b32.xlu0 %v3309, 64
  %v4478 = vpop.permute.xlu0 %4477
  %4479 = vrot.lane.b32.xlu0 %v3312, 64
  %v4480 = vpop.permute.xlu0 %4479
  %4481 = vrot.lane.b32.xlu0 %v3356, 64
  %v4482 = vpop.permute.xlu0 %4481
  %4483 = vrot.lane.b32.xlu0 %v3359, 64
  %v4484 = vpop.permute.xlu0 %4483
  %4485 = vrot.lane.b32.xlu0 %v3403, 64
  %v4486 = vpop.permute.xlu0 %4485
  %4487 = vrot.lane.b32.xlu0 %v3406, 64
  %v4488 = vpop.permute.xlu0 %4487
  %4521 = vrot.lane.b32.xlu0 %v4042, 96
  %v4522 = vpop.permute.xlu0 %4521
  %4523 = vrot.lane.b32.xlu0 %v4045, 96
  %v4524 = vpop.permute.xlu0 %4523
  %4525 = vrot.lane.b32.xlu0 %v4089, 96
  %v4526 = vpop.permute.xlu0 %4525
  %4527 = vrot.lane.b32.xlu0 %v4092, 96
  %v4528 = vpop.permute.xlu0 %4527
  %4529 = vrot.lane.b32.xlu0 %v4136, 96
  %v4530 = vpop.permute.xlu0 %4529
  %4531 = vrot.lane.b32.xlu0 %v4139, 96
  %v4532 = vpop.permute.xlu0 %4531
  %4533 = vrot.lane.b32.xlu0 %v4183, 96
  %v4534 = vpop.permute.xlu0 %4533
  %4535 = vrot.lane.b32.xlu0 %v4186, 96
  %v4536 = vpop.permute.xlu0 %4535
  %4537 = vrot.lane.b32.xlu0 %v4230, 96
  %v4538 = vpop.permute.xlu0 %4537
  %4539 = vrot.lane.b32.xlu0 %v4233, 96
  %v4540 = vpop.permute.xlu0 %4539
  %4541 = vrot.lane.b32.xlu0 %v4277, 96
  %v4542 = vpop.permute.xlu0 %4541
  %4543 = vrot.lane.b32.xlu0 %v4280, 96
  %v4544 = vpop.permute.xlu0 %4543
  %4545 = vrot.lane.b32.xlu0 %v4324, 96
  %v4546 = vpop.permute.xlu0 %4545
  %4547 = vrot.lane.b32.xlu0 %v4327, 96
  %v4548 = vpop.permute.xlu0 %4547
  %4549 = vrot.lane.b32.xlu0 %v4371, 96
  %v4550 = vpop.permute.xlu0 %4549
  %4551 = vrot.lane.b32.xlu0 %v4374, 96
  %v4552 = vpop.permute.xlu0 %4551
  %v4569 = vsel %vm535, %v1135, %v4394
  %v4570 = vsel %vm535, %v1138, %v4396
  %v4571 = vsel %vm535, %v1179, %v4398
  %v4572 = vsel %vm535, %v1182, %v4400
  %v4573 = vsel %vm535, %v1223, %v4402
  %v4574 = vsel %vm535, %v1226, %v4404
  %v4575 = vsel %vm535, %v1267, %v4406
  %v4576 = vsel %vm535, %v1270, %v4408
  %v4577 = vsel %vm535, %v1311, %v4410
  %v4578 = vsel %vm535, %v1314, %v4412
  %v4579 = vsel %vm535, %v1355, %v4414
  %v4580 = vsel %vm535, %v1358, %v4416
  %v4581 = vsel %vm535, %v1399, %v4418
  %v4582 = vsel %vm535, %v1402, %v4420
  %v4583 = vsel %vm535, %v1443, %v4422
  %v4584 = vsel %vm535, %v1446, %v4424
  %vm4585 = vcmask 523264
  %v4586 = vsel %vm4585, %v4569, %v4458
  %v4587 = vsel %vm4585, %v4570, %v4460
  %v4588 = vsel %vm4585, %v4571, %v4462
  %v4589 = vsel %vm4585, %v4572, %v4464
  %v4590 = vsel %vm4585, %v4573, %v4466
  %v4591 = vsel %vm4585, %v4574, %v4468
  %v4592 = vsel %vm4585, %v4575, %v4470
  %v4593 = vsel %vm4585, %v4576, %v4472
  %v4594 = vsel %vm4585, %v4577, %v4474
  %v4595 = vsel %vm4585, %v4578, %v4476
  %v4596 = vsel %vm4585, %v4579, %v4478
  %v4597 = vsel %vm4585, %v4580, %v4480
  %v4598 = vsel %vm4585, %v4581, %v4482
  %v4599 = vsel %vm4585, %v4582, %v4484
  %v4600 = vsel %vm4585, %v4583, %v4486
  %v4601 = vsel %vm4585, %v4584, %v4488
  %vm4602 = vcmask 785408
  %v4603 = vsel %vm4602, %v4586, %v4522
  %v4604 = vsel %vm4602, %v4587, %v4524
  %v4605 = vsel %vm4602, %v4588, %v4526
  %v4606 = vsel %vm4602, %v4589, %v4528
  %v4607 = vsel %vm4602, %v4590, %v4530
  %v4608 = vsel %vm4602, %v4591, %v4532
  %v4609 = vsel %vm4602, %v4592, %v4534
  %v4610 = vsel %vm4602, %v4593, %v4536
  %v4611 = vsel %vm4602, %v4594, %v4538
  %v4612 = vsel %vm4602, %v4595, %v4540
  %v4613 = vsel %vm4602, %v4596, %v4542
  %v4614 = vsel %vm4602, %v4597, %v4544
  %v4615 = vsel %vm4602, %v4598, %v4546
  %v4616 = vsel %vm4602, %v4599, %v4548
  %v4617 = vsel %vm4602, %v4600, %v4550
  %v4618 = vsel %vm4602, %v4601, %v4552
  %v4619 = vpack.c.bf16 %v4604, %v4603
  %v4620 = vpack.c.bf16 %v4606, %v4605
  %v4621 = vpack.c.bf16 %v4608, %v4607
  %v4622 = vpack.c.bf16 %v4610, %v4609
  %v4623 = vpack.c.bf16 %v4612, %v4611
  %v4624 = vpack.c.bf16 %v4614, %v4613
  %v4625 = vpack.c.bf16 %v4616, %v4615
  %v4626 = vpack.c.bf16 %v4618, %v4617
  %v4627 = vld [vmem:[%s5] sm:$0xf]
  %v4628 = vld [vmem:[%s5 + $0x4] sm:$0xf]
  %v4629 = vld [vmem:[%s5 + $0x8] sm:$0xf]
  %v4630 = vld [vmem:[%s5 + $0xc] sm:$0xf]
  %v4631 = vld [vmem:[%s5 + $0x10] sm:$0xf]
  %v4632 = vld [vmem:[%s5 + $0x14] sm:$0xf]
  %v4633 = vld [vmem:[%s5 + $0x18] sm:$0xf]
  %v4634 = vld [vmem:[%s5 + $0x1c] sm:$0xf]
  %v4635 = vld [vmem:[%s5 + $0x20] sm:$0xf]
  %v4636 = vld [vmem:[%s5 + $0x24] sm:$0xf]
  %v4637 = vld [vmem:[%s5 + $0x28] sm:$0xf]
  %v4638 = vld [vmem:[%s5 + $0x2c] sm:$0xf]
  %v4639 = vld [vmem:[%s5 + $0x30] sm:$0xf]
  %v4640 = vld [vmem:[%s5 + $0x34] sm:$0xf]
  %v4641 = vld [vmem:[%s5 + $0x38] sm:$0xf]
  %v4642 = vld [vmem:[%s5 + $0x3c] sm:$0xf]
  %v4643 = vld [vmem:[%s6] sm:$0x1]
  %v4645 = vlaneseq
  %v4646 = vshrl.u32 %v4645, 7
  %v4647 = vsub.s32 0, %v4646
  %v4648 = vrot.slane %v4643, %v4647
  %v4666 = vunpack.c.l.b16 %v4627
  %v4667 = vunpack.c.l.b16 %v4628
  %v4668 = vunpack.c.l.b16 %v4629
  %v4669 = vunpack.c.l.b16 %v4630
  %v4670 = vunpack.c.l.b16 %v4631
  %v4671 = vunpack.c.l.b16 %v4632
  %v4672 = vunpack.c.l.b16 %v4633
  %v4673 = vunpack.c.l.b16 %v4634
  %v4674 = vunpack.c.l.b16 %v4635
  %v4675 = vunpack.c.l.b16 %v4636
  %v4676 = vunpack.c.l.b16 %v4637
  %v4677 = vunpack.c.l.b16 %v4638
  %v4678 = vunpack.c.l.b16 %v4639
  %v4679 = vunpack.c.l.b16 %v4640
  %v4680 = vunpack.c.l.b16 %v4641
  %v4681 = vunpack.c.l.b16 %v4642
  %v4682 = vpack.c.b16 %v4667, %v4666
  %v4683 = vpack.c.b16 %v4669, %v4668
  %v4684 = vpack.c.b16 %v4671, %v4670
  %v4685 = vpack.c.b16 %v4673, %v4672
  %v4686 = vpack.c.b16 %v4675, %v4674
  %v4687 = vpack.c.b16 %v4677, %v4676
  %v4688 = vpack.c.b16 %v4679, %v4678
  %v4689 = vpack.c.b16 %v4681, %v4680
  %4698 = vmatprep.subr.bf16.mxu0 0
  %4699 = vmatpush1.bf16.msra.mxu0 %v4689
  %4700 = vmatprep.subr.bf16.mxu0 0
  %4701 = vmatpush1.bf16.msra.mxu0 %v4688
  %4702 = vmatprep.subr.bf16.mxu0 0
  %4703 = vmatpush1.bf16.msra.mxu0 %v4687
  %4704 = vmatprep.subr.bf16.mxu0 0
  %4705 = vmatpush1.bf16.msra.mxu0 %v4686
  %4706 = vmatprep.subr.bf16.mxu0 0
  %4707 = vmatpush1.bf16.msra.mxu0 %v4685
  %4708 = vmatprep.subr.bf16.mxu0 0
  %4709 = vmatpush1.bf16.msra.mxu0 %v4684
  %4710 = vmatprep.subr.bf16.mxu0 0
  %4711 = vmatpush1.bf16.msra.mxu0 %v4683
  %4712 = vmatprep.subr.bf16.mxu0 0
  %4713 = vmatpush1.bf16.msra.mxu0 %v4682
  %4714 = vmatprep.subr.bf16.mxu0 0
  %4715 = vmatpush2.bf16.msra.mxu0 0
  %4716 = vmatprep.subr.bf16.mxu0 0
  %4717 = vmatpush2.bf16.msra.mxu0 0
  %4718 = vmatprep.subr.bf16.mxu0 0
  %4719 = vmatpush2.bf16.msra.mxu0 0
  %4720 = vmatprep.subr.bf16.mxu0 0
  %4721 = vmatpush2.bf16.msra.mxu0 0
  %4722 = vmatprep.subr.bf16.mxu0 0
  %4723 = vmatpush2.bf16.msra.mxu0 0
  %4724 = vmatprep.subr.bf16.mxu0 0
  %4725 = vmatpush2.bf16.msra.mxu0 0
  %4726 = vmatprep.subr.bf16.mxu0 0
  %4727 = vmatpush2.bf16.msra.mxu0 0
  %4728 = vmatprep.subr.bf16.mxu0 0
  %4729 = vmatpush2.bf16.msra.mxu0 0
  %4730 = vmatprep.mubr.bf16.mxu0 0
  %4731 = vmatmul.mubr.bf16.gmra.mxu0 %v4619
  %v4732 = vpop.f32.mrf.mxu0
  %v4733 = vadd.f32 %v4648, %v4732
  %v4734 = vpop.f32.mrf.mxu0
  %v4735 = vpop.f32.mrf.mxu0
  %v4736 = vadd.f32 %v4648, %v4735
  %v4737 = vpop.f32.mrf.mxu0
  %4738 = vmatprep.mubr.bf16.mxu0 0
  %4739 = vmatmul.mubr.bf16.gmra.mxu0 %v4620
  %v4740 = vpop.f32.mrf.mxu0
  %v4741 = vadd.f32 %v4648, %v4740
  %v4742 = vpop.f32.mrf.mxu0
  %v4743 = vpop.f32.mrf.mxu0
  %v4744 = vadd.f32 %v4648, %v4743
  %v4745 = vpop.f32.mrf.mxu0
  %4746 = vmatprep.mubr.bf16.mxu0 0
  %4747 = vmatmul.mubr.bf16.gmra.mxu0 %v4621
  %v4748 = vpop.f32.mrf.mxu0
  %v4749 = vadd.f32 %v4648, %v4748
  %v4750 = vpop.f32.mrf.mxu0
  %v4751 = vpop.f32.mrf.mxu0
  %v4752 = vadd.f32 %v4648, %v4751
  %v4753 = vpop.f32.mrf.mxu0
  %4754 = vmatprep.mubr.bf16.mxu0 0
  %4755 = vmatmul.mubr.bf16.gmra.mxu0 %v4622
  %v4756 = vpop.f32.mrf.mxu0
  %v4757 = vadd.f32 %v4648, %v4756
  %v4758 = vpop.f32.mrf.mxu0
  %v4759 = vpop.f32.mrf.mxu0
  %v4760 = vadd.f32 %v4648, %v4759
  %v4761 = vpop.f32.mrf.mxu0
  %4762 = vmatprep.mubr.bf16.mxu0 0
  %4763 = vmatmul.mubr.bf16.gmra.mxu0 %v4623
  %v4764 = vpop.f32.mrf.mxu0
  %v4765 = vadd.f32 %v4648, %v4764
  %v4766 = vpop.f32.mrf.mxu0
  %v4767 = vpop.f32.mrf.mxu0
  %v4768 = vadd.f32 %v4648, %v4767
  %v4769 = vpop.f32.mrf.mxu0
  %4770 = vmatprep.mubr.bf16.mxu0 0
  %4771 = vmatmul.mubr.bf16.gmra.mxu0 %v4624
  %v4772 = vpop.f32.mrf.mxu0
  %v4773 = vadd.f32 %v4648, %v4772
  %v4774 = vpop.f32.mrf.mxu0
  %v4775 = vpop.f32.mrf.mxu0
  %v4776 = vadd.f32 %v4648, %v4775
  %v4777 = vpop.f32.mrf.mxu0
  %4778 = vmatprep.mubr.bf16.mxu0 0
  %4779 = vmatmul.mubr.bf16.gmra.mxu0 %v4625
  %v4780 = vpop.f32.mrf.mxu0
  %v4781 = vadd.f32 %v4648, %v4780
  %v4782 = vpop.f32.mrf.mxu0
  %v4783 = vpop.f32.mrf.mxu0
  %v4784 = vadd.f32 %v4648, %v4783
  %v4785 = vpop.f32.mrf.mxu0
  %4786 = vmatprep.mubr.bf16.mxu0 0
  %4787 = vmatmul.mubr.bf16.gmra.mxu0 %v4626
  %v4788 = vpop.f32.mrf.mxu0
  %v4789 = vadd.f32 %v4648, %v4788
  %v4790 = vpop.f32.mrf.mxu0
  %v4791 = vpop.f32.mrf.mxu0
  %v4792 = vadd.f32 %v4648, %v4791
  %v4793 = vpop.f32.mrf.mxu0
  %4794 = vdwg.mxu0
  %v4795 = vadd.f32 %v4733, %v69
  %v4796 = vadd.f32 %v4736, %v70
  %v4797 = vadd.f32 %v4741, %v71
  %v4798 = vadd.f32 %v4744, %v72
  %v4799 = vadd.f32 %v4749, %v73
  %v4800 = vadd.f32 %v4752, %v74
  %v4801 = vadd.f32 %v4757, %v75
  %v4802 = vadd.f32 %v4760, %v76
  %v4803 = vadd.f32 %v4765, %v77
  %v4804 = vadd.f32 %v4768, %v78
  %v4805 = vadd.f32 %v4773, %v79
  %v4806 = vadd.f32 %v4776, %v80
  %v4807 = vadd.f32 %v4781, %v81
  %v4808 = vadd.f32 %v4784, %v82
  %v4809 = vadd.f32 %v4789, %v83
  %v4810 = vadd.f32 %v4792, %v84
  %4811 = vadd.xlane.f32.xlu0 %v4795
  %v4812 = vpop.xlane.xlu0 %4811
  %4813 = vadd.xlane.f32.xlu0 %v4796
  %v4814 = vpop.xlane.xlu0 %4813
  %4815 = vadd.xlane.f32.xlu0 %v4797
  %v4816 = vpop.xlane.xlu0 %4815
  %4817 = vadd.xlane.f32.xlu0 %v4798
  %v4818 = vpop.xlane.xlu0 %4817
  %4819 = vadd.xlane.f32.xlu0 %v4799
  %v4820 = vpop.xlane.xlu0 %4819
  %4821 = vadd.xlane.f32.xlu0 %v4800
  %v4822 = vpop.xlane.xlu0 %4821
  %4823 = vadd.xlane.f32.xlu0 %v4801
  %v4824 = vpop.xlane.xlu0 %4823
  %4825 = vadd.xlane.f32.xlu0 %v4802
  %v4826 = vpop.xlane.xlu0 %4825
  %4827 = vadd.xlane.f32.xlu0 %v4803
  %v4828 = vpop.xlane.xlu0 %4827
  %4829 = vadd.xlane.f32.xlu0 %v4804
  %v4830 = vpop.xlane.xlu0 %4829
  %4831 = vadd.xlane.f32.xlu0 %v4805
  %v4832 = vpop.xlane.xlu0 %4831
  %4833 = vadd.xlane.f32.xlu0 %v4806
  %v4834 = vpop.xlane.xlu0 %4833
  %4835 = vadd.xlane.f32.xlu0 %v4807
  %v4836 = vpop.xlane.xlu0 %4835
  %4837 = vadd.xlane.f32.xlu0 %v4808
  %v4838 = vpop.xlane.xlu0 %4837
  %4839 = vadd.xlane.f32.xlu0 %v4809
  %v4840 = vpop.xlane.xlu0 %4839
  %4841 = vadd.xlane.f32.xlu0 %v4810
  %v4842 = vpop.xlane.xlu0 %4841
  %v4843 = vrcp.pop 128.0
  %v4844 = vmul.f32 %v4812, %v4843
  %v4845 = vmul.f32 %v4814, %v4843
  %v4846 = vmul.f32 %v4816, %v4843
  %v4847 = vmul.f32 %v4818, %v4843
  %v4848 = vmul.f32 %v4820, %v4843
  %v4849 = vmul.f32 %v4822, %v4843
  %v4850 = vmul.f32 %v4824, %v4843
  %v4851 = vmul.f32 %v4826, %v4843
  %v4852 = vmul.f32 %v4828, %v4843
  %v4853 = vmul.f32 %v4830, %v4843
  %v4854 = vmul.f32 %v4832, %v4843
  %v4855 = vmul.f32 %v4834, %v4843
  %v4856 = vmul.f32 %v4836, %v4843
  %v4857 = vmul.f32 %v4838, %v4843
  %v4858 = vmul.f32 %v4840, %v4843
  %v4859 = vmul.f32 %v4842, %v4843
  %v4860 = vsub.f32 %v4795, %v4844
  %v4861 = vsub.f32 %v4796, %v4845
  %v4862 = vsub.f32 %v4797, %v4846
  %v4863 = vsub.f32 %v4798, %v4847
  %v4864 = vsub.f32 %v4799, %v4848
  %v4865 = vsub.f32 %v4800, %v4849
  %v4866 = vsub.f32 %v4801, %v4850
  %v4867 = vsub.f32 %v4802, %v4851
  %v4868 = vsub.f32 %v4803, %v4852
  %v4869 = vsub.f32 %v4804, %v4853
  %v4870 = vsub.f32 %v4805, %v4854
  %v4871 = vsub.f32 %v4806, %v4855
  %v4872 = vsub.f32 %v4807, %v4856
  %v4873 = vsub.f32 %v4808, %v4857
  %v4874 = vsub.f32 %v4809, %v4858
  %v4875 = vsub.f32 %v4810, %v4859
  %v4876 = vmul.f32 %v4860, %v4860
  %v4877 = vmul.f32 %v4861, %v4861
  %v4878 = vmul.f32 %v4862, %v4862
  %v4879 = vmul.f32 %v4863, %v4863
  %v4880 = vmul.f32 %v4864, %v4864
  %v4881 = vmul.f32 %v4865, %v4865
  %v4882 = vmul.f32 %v4866, %v4866
  %v4883 = vmul.f32 %v4867, %v4867
  %v4884 = vmul.f32 %v4868, %v4868
  %v4885 = vmul.f32 %v4869, %v4869
  %v4886 = vmul.f32 %v4870, %v4870
  %v4887 = vmul.f32 %v4871, %v4871
  %v4888 = vmul.f32 %v4872, %v4872
  %v4889 = vmul.f32 %v4873, %v4873
  %v4890 = vmul.f32 %v4874, %v4874
  %v4891 = vmul.f32 %v4875, %v4875
  %4892 = vadd.xlane.f32.xlu0 %v4876
  %v4893 = vpop.xlane.xlu0 %4892
  %4894 = vadd.xlane.f32.xlu0 %v4877
  %v4895 = vpop.xlane.xlu0 %4894
  %4896 = vadd.xlane.f32.xlu0 %v4878
  %v4897 = vpop.xlane.xlu0 %4896
  %4898 = vadd.xlane.f32.xlu0 %v4879
  %v4899 = vpop.xlane.xlu0 %4898
  %4900 = vadd.xlane.f32.xlu0 %v4880
  %v4901 = vpop.xlane.xlu0 %4900
  %4902 = vadd.xlane.f32.xlu0 %v4881
  %v4903 = vpop.xlane.xlu0 %4902
  %4904 = vadd.xlane.f32.xlu0 %v4882
  %v4905 = vpop.xlane.xlu0 %4904
  %4906 = vadd.xlane.f32.xlu0 %v4883
  %v4907 = vpop.xlane.xlu0 %4906
  %4908 = vadd.xlane.f32.xlu0 %v4884
  %v4909 = vpop.xlane.xlu0 %4908
  %4910 = vadd.xlane.f32.xlu0 %v4885
  %v4911 = vpop.xlane.xlu0 %4910
  %4912 = vadd.xlane.f32.xlu0 %v4886
  %v4913 = vpop.xlane.xlu0 %4912
  %4914 = vadd.xlane.f32.xlu0 %v4887
  %v4915 = vpop.xlane.xlu0 %4914
  %4916 = vadd.xlane.f32.xlu0 %v4888
  %v4917 = vpop.xlane.xlu0 %4916
  %4918 = vadd.xlane.f32.xlu0 %v4889
  %v4919 = vpop.xlane.xlu0 %4918
  %4920 = vadd.xlane.f32.xlu0 %v4890
  %v4921 = vpop.xlane.xlu0 %4920
  %4922 = vadd.xlane.f32.xlu0 %v4891
  %v4923 = vpop.xlane.xlu0 %4922
  %v4924 = vmul.f32 %v4893, %v4843
  %v4925 = vmul.f32 %v4895, %v4843
  %v4926 = vmul.f32 %v4897, %v4843
  %v4927 = vmul.f32 %v4899, %v4843
  %v4928 = vmul.f32 %v4901, %v4843
  %v4929 = vmul.f32 %v4903, %v4843
  %v4930 = vmul.f32 %v4905, %v4843
  %v4931 = vmul.f32 %v4907, %v4843
  %v4932 = vmul.f32 %v4909, %v4843
  %v4933 = vmul.f32 %v4911, %v4843
  %v4934 = vmul.f32 %v4913, %v4843
  %v4935 = vmul.f32 %v4915, %v4843
  %v4936 = vmul.f32 %v4917, %v4843
  %v4937 = vmul.f32 %v4919, %v4843
  %v4938 = vmul.f32 %v4921, %v4843
  %v4939 = vmul.f32 %v4923, %v4843
  %v4940 = vadd.f32 %v4924, 1e-05
  %v4941 = vadd.f32 %v4925, 1e-05
  %v4942 = vadd.f32 %v4926, 1e-05
  %v4943 = vadd.f32 %v4927, 1e-05
  %v4944 = vadd.f32 %v4928, 1e-05
  %v4945 = vadd.f32 %v4929, 1e-05
  %v4946 = vadd.f32 %v4930, 1e-05
  %v4947 = vadd.f32 %v4931, 1e-05
  %v4948 = vadd.f32 %v4932, 1e-05
  %v4949 = vadd.f32 %v4933, 1e-05
  %v4950 = vadd.f32 %v4934, 1e-05
  %v4951 = vadd.f32 %v4935, 1e-05
  %v4952 = vadd.f32 %v4936, 1e-05
  %v4953 = vadd.f32 %v4937, 1e-05
  %v4954 = vadd.f32 %v4938, 1e-05
  %v4955 = vadd.f32 %v4939, 1e-05
  %v4956 = vrsqrt.pop %v4940
  %v4957 = vrsqrt.pop %v4941
  %v4958 = vrsqrt.pop %v4942
  %v4959 = vrsqrt.pop %v4943
  %v4960 = vrsqrt.pop %v4944
  %v4961 = vrsqrt.pop %v4945
  %v4962 = vrsqrt.pop %v4946
  %v4963 = vrsqrt.pop %v4947
  %v4964 = vrsqrt.pop %v4948
  %v4965 = vrsqrt.pop %v4949
  %v4966 = vrsqrt.pop %v4950
  %v4967 = vrsqrt.pop %v4951
  %v4968 = vrsqrt.pop %v4952
  %v4969 = vrsqrt.pop %v4953
  %v4970 = vrsqrt.pop %v4954
  %v4971 = vrsqrt.pop %v4955
  %v4972 = vmul.f32 %v4860, %v4956
  %v4973 = vmul.f32 %v4861, %v4957
  %v4974 = vmul.f32 %v4862, %v4958
  %v4975 = vmul.f32 %v4863, %v4959
  %v4976 = vmul.f32 %v4864, %v4960
  %v4977 = vmul.f32 %v4865, %v4961
  %v4978 = vmul.f32 %v4866, %v4962
  %v4979 = vmul.f32 %v4867, %v4963
  %v4980 = vmul.f32 %v4868, %v4964
  %v4981 = vmul.f32 %v4869, %v4965
  %v4982 = vmul.f32 %v4870, %v4966
  %v4983 = vmul.f32 %v4871, %v4967
  %v4984 = vmul.f32 %v4872, %v4968
  %v4985 = vmul.f32 %v4873, %v4969
  %v4986 = vmul.f32 %v4874, %v4970
  %v4987 = vmul.f32 %v4875, %v4971
  %v4988 = vld [vmem:[%s7] sm:$0x1]
  %v4990 = vlaneseq
  %v4991 = vshrl.u32 %v4990, 7
  %v4992 = vsub.s32 0, %v4991
  %v4993 = vrot.slane %v4988, %v4992
  %v4995 = vmul.f32 %v4972, %v4993
  %v4996 = vmul.f32 %v4973, %v4993
  %v4997 = vmul.f32 %v4974, %v4993
  %v4998 = vmul.f32 %v4975, %v4993
  %v4999 = vmul.f32 %v4976, %v4993
  %v5000 = vmul.f32 %v4977, %v4993
  %v5001 = vmul.f32 %v4978, %v4993
  %v5002 = vmul.f32 %v4979, %v4993
  %v5003 = vmul.f32 %v4980, %v4993
  %v5004 = vmul.f32 %v4981, %v4993
  %v5005 = vmul.f32 %v4982, %v4993
  %v5006 = vmul.f32 %v4983, %v4993
  %v5007 = vmul.f32 %v4984, %v4993
  %v5008 = vmul.f32 %v4985, %v4993
  %v5009 = vmul.f32 %v4986, %v4993
  %v5010 = vmul.f32 %v4987, %v4993
  %v5011 = vld [vmem:[%s8] sm:$0x1]
  %v5013 = vlaneseq
  %v5014 = vshrl.u32 %v5013, 7
  %v5015 = vsub.s32 0, %v5014
  %v5016 = vrot.slane %v5011, %v5015
  %v5018 = vadd.f32 %v4995, %v5016
  %v5019 = vadd.f32 %v4996, %v5016
  %v5020 = vadd.f32 %v4997, %v5016
  %v5021 = vadd.f32 %v4998, %v5016
  %v5022 = vadd.f32 %v4999, %v5016
  %v5023 = vadd.f32 %v5000, %v5016
  %v5024 = vadd.f32 %v5001, %v5016
  %v5025 = vadd.f32 %v5002, %v5016
  %v5026 = vadd.f32 %v5003, %v5016
  %v5027 = vadd.f32 %v5004, %v5016
  %v5028 = vadd.f32 %v5005, %v5016
  %v5029 = vadd.f32 %v5006, %v5016
  %v5030 = vadd.f32 %v5007, %v5016
  %v5031 = vadd.f32 %v5008, %v5016
  %v5032 = vadd.f32 %v5009, %v5016
  %v5033 = vadd.f32 %v5010, %v5016
  %v5034 = vpack.c.bf16 %v5019, %v5018
  %v5035 = vpack.c.bf16 %v5021, %v5020
  %v5036 = vpack.c.bf16 %v5023, %v5022
  %v5037 = vpack.c.bf16 %v5025, %v5024
  %v5038 = vpack.c.bf16 %v5027, %v5026
  %v5039 = vpack.c.bf16 %v5029, %v5028
  %v5040 = vpack.c.bf16 %v5031, %v5030
  %v5041 = vpack.c.bf16 %v5033, %v5032
  %v5042 = vld [vmem:[%s9] sm:$0xf]
  %v5043 = vld [vmem:[%s9 + $0x4] sm:$0xf]
  %v5044 = vld [vmem:[%s9 + $0x8] sm:$0xf]
  %v5045 = vld [vmem:[%s9 + $0xc] sm:$0xf]
  %v5046 = vld [vmem:[%s9 + $0x10] sm:$0xf]
  %v5047 = vld [vmem:[%s9 + $0x14] sm:$0xf]
  %v5048 = vld [vmem:[%s9 + $0x18] sm:$0xf]
  %v5049 = vld [vmem:[%s9 + $0x1c] sm:$0xf]
  %v5050 = vld [vmem:[%s9 + $0x20] sm:$0xf]
  %v5051 = vld [vmem:[%s9 + $0x24] sm:$0xf]
  %v5052 = vld [vmem:[%s9 + $0x28] sm:$0xf]
  %v5053 = vld [vmem:[%s9 + $0x2c] sm:$0xf]
  %v5054 = vld [vmem:[%s9 + $0x30] sm:$0xf]
  %v5055 = vld [vmem:[%s9 + $0x34] sm:$0xf]
  %v5056 = vld [vmem:[%s9 + $0x38] sm:$0xf]
  %v5057 = vld [vmem:[%s9 + $0x3c] sm:$0xf]
  %v5074 = vunpack.c.l.b16 %v5042
  %v5075 = vunpack.c.l.b16 %v5043
  %v5076 = vunpack.c.l.b16 %v5044
  %v5077 = vunpack.c.l.b16 %v5045
  %v5078 = vunpack.c.l.b16 %v5046
  %v5079 = vunpack.c.l.b16 %v5047
  %v5080 = vunpack.c.l.b16 %v5048
  %v5081 = vunpack.c.l.b16 %v5049
  %v5082 = vunpack.c.l.b16 %v5050
  %v5083 = vunpack.c.l.b16 %v5051
  %v5084 = vunpack.c.l.b16 %v5052
  %v5085 = vunpack.c.l.b16 %v5053
  %v5086 = vunpack.c.l.b16 %v5054
  %v5087 = vunpack.c.l.b16 %v5055
  %v5088 = vunpack.c.l.b16 %v5056
  %v5089 = vunpack.c.l.b16 %v5057
  %v5090 = vpack.c.b16 %v5075, %v5074
  %v5091 = vpack.c.b16 %v5077, %v5076
  %v5092 = vpack.c.b16 %v5079, %v5078
  %v5093 = vpack.c.b16 %v5081, %v5080
  %v5094 = vpack.c.b16 %v5083, %v5082
  %v5095 = vpack.c.b16 %v5085, %v5084
  %v5096 = vpack.c.b16 %v5087, %v5086
  %v5097 = vpack.c.b16 %v5089, %v5088
  %5106 = vmatprep.subr.bf16.mxu0 0
  %5107 = vmatpush1.bf16.msra.mxu0 %v5097
  %5108 = vmatprep.subr.bf16.mxu0 0
  %5109 = vmatpush1.bf16.msra.mxu0 %v5096
  %5110 = vmatprep.subr.bf16.mxu0 0
  %5111 = vmatpush1.bf16.msra.mxu0 %v5095
  %5112 = vmatprep.subr.bf16.mxu0 0
  %5113 = vmatpush1.bf16.msra.mxu0 %v5094
  %5114 = vmatprep.subr.bf16.mxu0 0
  %5115 = vmatpush1.bf16.msra.mxu0 %v5093
  %5116 = vmatprep.subr.bf16.mxu0 0
  %5117 = vmatpush1.bf16.msra.mxu0 %v5092
  %5118 = vmatprep.subr.bf16.mxu0 0
  %5119 = vmatpush1.bf16.msra.mxu0 %v5091
  %5120 = vmatprep.subr.bf16.mxu0 0
  %5121 = vmatpush1.bf16.msra.mxu0 %v5090
  %5122 = vmatprep.subr.bf16.mxu0 0
  %5123 = vmatpush2.bf16.msra.mxu0 0
  %5124 = vmatprep.subr.bf16.mxu0 0
  %5125 = vmatpush2.bf16.msra.mxu0 0
  %5126 = vmatprep.subr.bf16.mxu0 0
  %5127 = vmatpush2.bf16.msra.mxu0 0
  %5128 = vmatprep.subr.bf16.mxu0 0
  %5129 = vmatpush2.bf16.msra.mxu0 0
  %5130 = vmatprep.subr.bf16.mxu0 0
  %5131 = vmatpush2.bf16.msra.mxu0 0
  %5132 = vmatprep.subr.bf16.mxu0 0
  %5133 = vmatpush2.bf16.msra.mxu0 0
  %5134 = vmatprep.subr.bf16.mxu0 0
  %5135 = vmatpush2.bf16.msra.mxu0 0
  %5136 = vmatprep.subr.bf16.mxu0 0
  %5137 = vmatpush2.bf16.msra.mxu0 0
  %5138 = vmatprep.mubr.bf16.mxu0 0
  %5139 = vmatmul.mubr.bf16.gmra.mxu0 %v5034
  %v5140 = vpop.f32.mrf.mxu0
  %v5141 = vadd.f32 0.0, %v5140
  %v5142 = vpop.f32.mrf.mxu0
  %v5143 = vpop.f32.mrf.mxu0
  %v5144 = vadd.f32 0.0, %v5143
  %v5145 = vpop.f32.mrf.mxu0
  %5146 = vmatprep.mubr.bf16.mxu0 0
  %5147 = vmatmul.mubr.bf16.gmra.mxu0 %v5035
  %v5148 = vpop.f32.mrf.mxu0
  %v5149 = vadd.f32 0.0, %v5148
  %v5150 = vpop.f32.mrf.mxu0
  %v5151 = vpop.f32.mrf.mxu0
  %v5152 = vadd.f32 0.0, %v5151
  %v5153 = vpop.f32.mrf.mxu0
  %5154 = vmatprep.mubr.bf16.mxu0 0
  %5155 = vmatmul.mubr.bf16.gmra.mxu0 %v5036
  %v5156 = vpop.f32.mrf.mxu0
  %v5157 = vadd.f32 0.0, %v5156
  %v5158 = vpop.f32.mrf.mxu0
  %v5159 = vpop.f32.mrf.mxu0
  %v5160 = vadd.f32 0.0, %v5159
  %v5161 = vpop.f32.mrf.mxu0
  %5162 = vmatprep.mubr.bf16.mxu0 0
  %5163 = vmatmul.mubr.bf16.gmra.mxu0 %v5037
  %v5164 = vpop.f32.mrf.mxu0
  %v5165 = vadd.f32 0.0, %v5164
  %v5166 = vpop.f32.mrf.mxu0
  %v5167 = vpop.f32.mrf.mxu0
  %v5168 = vadd.f32 0.0, %v5167
  %v5169 = vpop.f32.mrf.mxu0
  %5170 = vmatprep.mubr.bf16.mxu0 0
  %5171 = vmatmul.mubr.bf16.gmra.mxu0 %v5038
  %v5172 = vpop.f32.mrf.mxu0
  %v5173 = vadd.f32 0.0, %v5172
  %v5174 = vpop.f32.mrf.mxu0
  %v5175 = vpop.f32.mrf.mxu0
  %v5176 = vadd.f32 0.0, %v5175
  %v5177 = vpop.f32.mrf.mxu0
  %5178 = vmatprep.mubr.bf16.mxu0 0
  %5179 = vmatmul.mubr.bf16.gmra.mxu0 %v5039
  %v5180 = vpop.f32.mrf.mxu0
  %v5181 = vadd.f32 0.0, %v5180
  %v5182 = vpop.f32.mrf.mxu0
  %v5183 = vpop.f32.mrf.mxu0
  %v5184 = vadd.f32 0.0, %v5183
  %v5185 = vpop.f32.mrf.mxu0
  %5186 = vmatprep.mubr.bf16.mxu0 0
  %5187 = vmatmul.mubr.bf16.gmra.mxu0 %v5040
  %v5188 = vpop.f32.mrf.mxu0
  %v5189 = vadd.f32 0.0, %v5188
  %v5190 = vpop.f32.mrf.mxu0
  %v5191 = vpop.f32.mrf.mxu0
  %v5192 = vadd.f32 0.0, %v5191
  %v5193 = vpop.f32.mrf.mxu0
  %5194 = vmatprep.mubr.bf16.mxu0 0
  %5195 = vmatmul.mubr.bf16.gmra.mxu0 %v5041
  %v5196 = vpop.f32.mrf.mxu0
  %v5197 = vadd.f32 0.0, %v5196
  %v5198 = vpop.f32.mrf.mxu0
  %v5199 = vpop.f32.mrf.mxu0
  %v5200 = vadd.f32 0.0, %v5199
  %v5201 = vpop.f32.mrf.mxu0
  %5202 = vdwg.mxu0
  %v5203 = vpack.c.bf16 %v86, %v85
  %v5204 = vpack.c.bf16 %v88, %v87
  %v5205 = vpack.c.bf16 %v90, %v89
  %v5206 = vpack.c.bf16 %v92, %v91
  %v5207 = vpack.c.bf16 %v94, %v93
  %v5208 = vpack.c.bf16 %v96, %v95
  %v5209 = vpack.c.bf16 %v98, %v97
  %v5210 = vpack.c.bf16 %v100, %v99
  %v5211 = vld [vmem:[%s10] sm:$0xff]
  %v5212 = vld [vmem:[%s10 + $0x8] sm:$0xff]
  %v5213 = vld [vmem:[%s10 + $0x10] sm:$0xff]
  %v5214 = vld [vmem:[%s10 + $0x18] sm:$0xff]
  %v5215 = vld [vmem:[%s10 + $0x20] sm:$0xff]
  %v5216 = vld [vmem:[%s10 + $0x28] sm:$0xff]
  %v5217 = vld [vmem:[%s10 + $0x30] sm:$0xff]
  %v5218 = vld [vmem:[%s10 + $0x38] sm:$0xff]
  %v5219 = vld [vmem:[%s10 + $0x40] sm:$0xff]
  %v5220 = vld [vmem:[%s10 + $0x48] sm:$0xff]
  %v5221 = vld [vmem:[%s10 + $0x50] sm:$0xff]
  %v5222 = vld [vmem:[%s10 + $0x58] sm:$0xff]
  %v5223 = vld [vmem:[%s10 + $0x60] sm:$0xff]
  %v5224 = vld [vmem:[%s10 + $0x68] sm:$0xff]
  %v5225 = vld [vmem:[%s10 + $0x70] sm:$0xff]
  %v5226 = vld [vmem:[%s10 + $0x78] sm:$0xff]
  %v5243 = vunpack.c.l.b16 %v5211
  %v5244 = vunpack.c.h.b16 %v5211
  %v5245 = vunpack.c.l.b16 %v5212
  %v5246 = vunpack.c.h.b16 %v5212
  %v5247 = vunpack.c.l.b16 %v5213
  %v5248 = vunpack.c.h.b16 %v5213
  %v5249 = vunpack.c.l.b16 %v5214
  %v5250 = vunpack.c.h.b16 %v5214
  %v5251 = vunpack.c.l.b16 %v5215
  %v5252 = vunpack.c.h.b16 %v5215
  %v5253 = vunpack.c.l.b16 %v5216
  %v5254 = vunpack.c.h.b16 %v5216
  %v5255 = vunpack.c.l.b16 %v5217
  %v5256 = vunpack.c.h.b16 %v5217
  %v5257 = vunpack.c.l.b16 %v5218
  %v5258 = vunpack.c.h.b16 %v5218
  %v5259 = vunpack.c.l.b16 %v5219
  %v5260 = vunpack.c.h.b16 %v5219
  %v5261 = vunpack.c.l.b16 %v5220
  %v5262 = vunpack.c.h.b16 %v5220
  %v5263 = vunpack.c.l.b16 %v5221
  %v5264 = vunpack.c.h.b16 %v5221
  %v5265 = vunpack.c.l.b16 %v5222
  %v5266 = vunpack.c.h.b16 %v5222
  %v5267 = vunpack.c.l.b16 %v5223
  %v5268 = vunpack.c.h.b16 %v5223
  %v5269 = vunpack.c.l.b16 %v5224
  %v5270 = vunpack.c.h.b16 %v5224
  %v5271 = vunpack.c.l.b16 %v5225
  %v5272 = vunpack.c.h.b16 %v5225
  %v5273 = vunpack.c.l.b16 %v5226
  %v5274 = vunpack.c.h.b16 %v5226
  %v5275 = vpack.c.b16 %v5245, %v5243
  %v5276 = vpack.c.b16 %v5246, %v5244
  %v5277 = vpack.c.b16 %v5249, %v5247
  %v5278 = vpack.c.b16 %v5250, %v5248
  %v5279 = vpack.c.b16 %v5253, %v5251
  %v5280 = vpack.c.b16 %v5254, %v5252
  %v5281 = vpack.c.b16 %v5257, %v5255
  %v5282 = vpack.c.b16 %v5258, %v5256
  %v5283 = vpack.c.b16 %v5261, %v5259
  %v5284 = vpack.c.b16 %v5262, %v5260
  %v5285 = vpack.c.b16 %v5265, %v5263
  %v5286 = vpack.c.b16 %v5266, %v5264
  %v5287 = vpack.c.b16 %v5269, %v5267
  %v5288 = vpack.c.b16 %v5270, %v5268
  %v5289 = vpack.c.b16 %v5273, %v5271
  %v5290 = vpack.c.b16 %v5274, %v5272
  %5307 = vmatprep.subr.bf16.mxu0 %v5290
  %5308 = vmatpush1.bf16.msra.mxu0 %v5289
  %5309 = vmatprep.subr.bf16.mxu0 %v5288
  %5310 = vmatpush1.bf16.msra.mxu0 %v5287
  %5311 = vmatprep.subr.bf16.mxu0 %v5286
  %5312 = vmatpush1.bf16.msra.mxu0 %v5285
  %5313 = vmatprep.subr.bf16.mxu0 %v5284
  %5314 = vmatpush1.bf16.msra.mxu0 %v5283
  %5315 = vmatprep.subr.bf16.mxu0 %v5282
  %5316 = vmatpush1.bf16.msra.mxu0 %v5281
  %5317 = vmatprep.subr.bf16.mxu0 %v5280
  %5318 = vmatpush1.bf16.msra.mxu0 %v5279
  %5319 = vmatprep.subr.bf16.mxu0 %v5278
  %5320 = vmatpush1.bf16.msra.mxu0 %v5277
  %5321 = vmatprep.subr.bf16.mxu0 %v5276
  %5322 = vmatpush1.bf16.msra.mxu0 %v5275
  %5323 = vmatprep.subr.bf16.mxu0 0
  %5324 = vmatpush2.bf16.msra.mxu0 0
  %5325 = vmatprep.subr.bf16.mxu0 0
  %5326 = vmatpush2.bf16.msra.mxu0 0
  %5327 = vmatprep.subr.bf16.mxu0 0
  %5328 = vmatpush2.bf16.msra.mxu0 0
  %5329 = vmatprep.subr.bf16.mxu0 0
  %5330 = vmatpush2.bf16.msra.mxu0 0
  %5331 = vmatprep.subr.bf16.mxu0 0
  %5332 = vmatpush2.bf16.msra.mxu0 0
  %5333 = vmatprep.subr.bf16.mxu0 0
  %5334 = vmatpush2.bf16.msra.mxu0 0
  %5335 = vmatprep.subr.bf16.mxu0 0
  %5336 = vmatpush2.bf16.msra.mxu0 0
  %5337 = vmatprep.subr.bf16.mxu0 0
  %5338 = vmatpush2.bf16.msra.mxu0 0
  %5339 = vmatprep.mubr.bf16.mxu0 0
  %5340 = vmatmul.mubr.bf16.gmra.mxu0 %v5203
  %v5341 = vpop.f32.mrf.mxu0
  %v5342 = vadd.f32 0.0, %v5341
  %v5343 = vpop.f32.mrf.mxu0
  %v5344 = vadd.f32 0.0, %v5343
  %v5345 = vpop.f32.mrf.mxu0
  %v5346 = vadd.f32 0.0, %v5345
  %v5347 = vpop.f32.mrf.mxu0
  %v5348 = vadd.f32 0.0, %v5347
  %5349 = vmatprep.mubr.bf16.mxu0 0
  %5350 = vmatmul.mubr.bf16.gmra.mxu0 %v5204
  %v5351 = vpop.f32.mrf.mxu0
  %v5352 = vadd.f32 0.0, %v5351
  %v5353 = vpop.f32.mrf.mxu0
  %v5354 = vadd.f32 0.0, %v5353
  %v5355 = vpop.f32.mrf.mxu0
  %v5356 = vadd.f32 0.0, %v5355
  %v5357 = vpop.f32.mrf.mxu0
  %v5358 = vadd.f32 0.0, %v5357
  %5359 = vmatprep.mubr.bf16.mxu0 0
  %5360 = vmatmul.mubr.bf16.gmra.mxu0 %v5205
  %v5361 = vpop.f32.mrf.mxu0
  %v5362 = vadd.f32 0.0, %v5361
  %v5363 = vpop.f32.mrf.mxu0
  %v5364 = vadd.f32 0.0, %v5363
  %v5365 = vpop.f32.mrf.mxu0
  %v5366 = vadd.f32 0.0, %v5365
  %v5367 = vpop.f32.mrf.mxu0
  %v5368 = vadd.f32 0.0, %v5367
  %5369 = vmatprep.mubr.bf16.mxu0 0
  %5370 = vmatmul.mubr.bf16.gmra.mxu0 %v5206
  %v5371 = vpop.f32.mrf.mxu0
  %v5372 = vadd.f32 0.0, %v5371
  %v5373 = vpop.f32.mrf.mxu0
  %v5374 = vadd.f32 0.0, %v5373
  %v5375 = vpop.f32.mrf.mxu0
  %v5376 = vadd.f32 0.0, %v5375
  %v5377 = vpop.f32.mrf.mxu0
  %v5378 = vadd.f32 0.0, %v5377
  %5379 = vmatprep.mubr.bf16.mxu0 0
  %5380 = vmatmul.mubr.bf16.gmra.mxu0 %v5207
  %v5381 = vpop.f32.mrf.mxu0
  %v5382 = vadd.f32 0.0, %v5381
  %v5383 = vpop.f32.mrf.mxu0
  %v5384 = vadd.f32 0.0, %v5383
  %v5385 = vpop.f32.mrf.mxu0
  %v5386 = vadd.f32 0.0, %v5385
  %v5387 = vpop.f32.mrf.mxu0
  %v5388 = vadd.f32 0.0, %v5387
  %5389 = vmatprep.mubr.bf16.mxu0 0
  %5390 = vmatmul.mubr.bf16.gmra.mxu0 %v5208
  %v5391 = vpop.f32.mrf.mxu0
  %v5392 = vadd.f32 0.0, %v5391
  %v5393 = vpop.f32.mrf.mxu0
  %v5394 = vadd.f32 0.0, %v5393
  %v5395 = vpop.f32.mrf.mxu0
  %v5396 = vadd.f32 0.0, %v5395
  %v5397 = vpop.f32.mrf.mxu0
  %v5398 = vadd.f32 0.0, %v5397
  %5399 = vmatprep.mubr.bf16.mxu0 0
  %5400 = vmatmul.mubr.bf16.gmra.mxu0 %v5209
  %v5401 = vpop.f32.mrf.mxu0
  %v5402 = vadd.f32 0.0, %v5401
  %v5403 = vpop.f32.mrf.mxu0
  %v5404 = vadd.f32 0.0, %v5403
  %v5405 = vpop.f32.mrf.mxu0
  %v5406 = vadd.f32 0.0, %v5405
  %v5407 = vpop.f32.mrf.mxu0
  %v5408 = vadd.f32 0.0, %v5407
  %5409 = vmatprep.mubr.bf16.mxu0 0
  %5410 = vmatmul.mubr.bf16.gmra.mxu0 %v5210
  %v5411 = vpop.f32.mrf.mxu0
  %v5412 = vadd.f32 0.0, %v5411
  %v5413 = vpop.f32.mrf.mxu0
  %v5414 = vadd.f32 0.0, %v5413
  %v5415 = vpop.f32.mrf.mxu0
  %v5416 = vadd.f32 0.0, %v5415
  %v5417 = vpop.f32.mrf.mxu0
  %v5418 = vadd.f32 0.0, %v5417
  %5419 = vdwg.mxu0
  %v5420 = vpack.c.bf16 %v5144, %v5141
  %v5421 = vpack.c.bf16 %v5152, %v5149
  %v5422 = vpack.c.bf16 %v5160, %v5157
  %v5423 = vpack.c.bf16 %v5168, %v5165
  %v5424 = vpack.c.bf16 %v5176, %v5173
  %v5425 = vpack.c.bf16 %v5184, %v5181
  %v5426 = vpack.c.bf16 %v5192, %v5189
  %v5427 = vpack.c.bf16 %v5200, %v5197
  %v5428 = vpack.c.bf16 %v5346, %v5342
  %v5429 = vpack.c.bf16 %v5356, %v5352
  %v5430 = vpack.c.bf16 %v5366, %v5362
  %v5431 = vpack.c.bf16 %v5376, %v5372
  %v5432 = vpack.c.bf16 %v5386, %v5382
  %v5433 = vpack.c.bf16 %v5396, %v5392
  %v5434 = vpack.c.bf16 %v5406, %v5402
  %v5435 = vpack.c.bf16 %v5416, %v5412
  %v5436 = vpack.c.bf16 %v5348, %v5344
  %v5437 = vpack.c.bf16 %v5358, %v5354
  %v5438 = vpack.c.bf16 %v5368, %v5364
  %v5439 = vpack.c.bf16 %v5378, %v5374
  %v5440 = vpack.c.bf16 %v5388, %v5384
  %v5441 = vpack.c.bf16 %v5398, %v5394
  %v5442 = vpack.c.bf16 %v5408, %v5404
  %v5443 = vpack.c.bf16 %v5418, %v5414
  %v5445 = vsel %vm535, %v5420, 0
  %v5448 = vsel %vm535, %v5428, 0
  %5450 = vmatprep.subr.bf16.mxu0 0
  %5451 = vmatpush1.bf16.xpose.msra.mxu0 0
  %5452 = vmatprep.subr.bf16.mxu0 0
  %5453 = vmatpush1.bf16.xpose.msra.mxu0 0
  %5454 = vmatprep.subr.bf16.mxu0 0
  %5455 = vmatpush1.bf16.xpose.msra.mxu0 0
  %5456 = vmatprep.subr.bf16.mxu0 0
  %5457 = vmatpush1.bf16.xpose.msra.mxu0 0
  %5458 = vmatprep.subr.bf16.mxu0 0
  %5459 = vmatpush1.bf16.xpose.msra.mxu0 0
  %5460 = vmatprep.subr.bf16.mxu0 0
  %5461 = vmatpush1.bf16.xpose.msra.mxu0 0
  %5462 = vmatprep.subr.bf16.mxu0 0
  %5463 = vmatpush1.bf16.xpose.msra.mxu0 0
  %5464 = vmatprep.subr.bf16.mxu0 0
  %5465 = vmatpush1.bf16.xpose.msra.mxu0 %v5448
  %5466 = vmatprep.subr.bf16.mxu0 0
  %5467 = vmatpush2.bf16.xpose.msra.mxu0 0
  %5468 = vmatprep.subr.bf16.mxu0 0
  %5469 = vmatpush2.bf16.xpose.msra.mxu0 0
  %5470 = vmatprep.subr.bf16.mxu0 0
  %5471 = vmatpush2.bf16.xpose.msra.mxu0 0
  %5472 = vmatprep.subr.bf16.mxu0 0
  %5473 = vmatpush2.bf16.xpose.msra.mxu0 0
  %5474 = vmatprep.subr.bf16.mxu0 0
  %5475 = vmatpush2.bf16.xpose.msra.mxu0 0
  %5476 = vmatprep.subr.bf16.mxu0 0
  %5477 = vmatpush2.bf16.xpose.msra.mxu0 0
  %5478 = vmatprep.subr.bf16.mxu0 0
  %5479 = vmatpush2.bf16.xpose.msra.mxu0 0
  %5480 = vmatprep.subr.bf16.mxu0 0
  %5481 = vmatpush2.bf16.xpose.msra.mxu0 0
  %5482 = vmatprep.mubr.bf16.mxu0 0
  %5483 = vmatmul.mubr.bf16.gmra.mxu0 %v5445
  %v5484 = vpop.f32.mrf.mxu0
  %v5485 = vadd.f32 %v117, %v5484
  %v5486 = vpop.f32.mrf.mxu0
  %v5487 = vpop.f32.mrf.mxu0
  %v5488 = vadd.f32 %v118, %v5487
  %v5489 = vpop.f32.mrf.mxu0
  %5490 = vdwg.mxu0
  %v5492 = vsel %vm535, %v5421, 0
  %v5495 = vsel %vm535, %v5429, 0
  %5497 = vmatprep.subr.bf16.mxu0 0
  %5498 = vmatpush1.bf16.xpose.msra.mxu0 0
  %5499 = vmatprep.subr.bf16.mxu0 0
  %5500 = vmatpush1.bf16.xpose.msra.mxu0 0
  %5501 = vmatprep.subr.bf16.mxu0 0
  %5502 = vmatpush1.bf16.xpose.msra.mxu0 0
  %5503 = vmatprep.subr.bf16.mxu0 0
  %5504 = vmatpush1.bf16.xpose.msra.mxu0 0
  %5505 = vmatprep.subr.bf16.mxu0 0
  %5506 = vmatpush1.bf16.xpose.msra.mxu0 0
  %5507 = vmatprep.subr.bf16.mxu0 0
  %5508 = vmatpush1.bf16.xpose.msra.mxu0 0
  %5509 = vmatprep.subr.bf16.mxu0 0
  %5510 = vmatpush1.bf16.xpose.msra.mxu0 0
  %5511 = vmatprep.subr.bf16.mxu0 0
  %5512 = vmatpush1.bf16.xpose.msra.mxu0 %v5495
  %5513 = vmatprep.subr.bf16.mxu0 0
  %5514 = vmatpush2.bf16.xpose.msra.mxu0 0
  %5515 = vmatprep.subr.bf16.mxu0 0
  %5516 = vmatpush2.bf16.xpose.msra.mxu0 0
  %5517 = vmatprep.subr.bf16.mxu0 0
  %5518 = vmatpush2.bf16.xpose.msra.mxu0 0
  %5519 = vmatprep.subr.bf16.mxu0 0
  %5520 = vmatpush2.bf16.xpose.msra.mxu0 0
  %5521 = vmatprep.subr.bf16.mxu0 0
  %5522 = vmatpush2.bf16.xpose.msra.mxu0 0
  %5523 = vmatprep.subr.bf16.mxu0 0
  %5524 = vmatpush2.bf16.xpose.msra.mxu0 0
  %5525 = vmatprep.subr.bf16.mxu0 0
  %5526 = vmatpush2.bf16.xpose.msra.mxu0 0
  %5527 = vmatprep.subr.bf16.mxu0 0
  %5528 = vmatpush2.bf16.xpose.msra.mxu0 0
  %5529 = vmatprep.mubr.bf16.mxu0 0
  %5530 = vmatmul.mubr.bf16.gmra.mxu0 %v5492
  %v5531 = vpop.f32.mrf.mxu0
  %v5532 = vadd.f32 %v119, %v5531
  %v5533 = vpop.f32.mrf.mxu0
  %v5534 = vpop.f32.mrf.mxu0
  %v5535 = vadd.f32 %v120, %v5534
  %v5536 = vpop.f32.mrf.mxu0
  %5537 = vdwg.mxu0
  %v5539 = vsel %vm535, %v5422, 0
  %v5542 = vsel %vm535, %v5430, 0
  %5544 = vmatprep.subr.bf16.mxu0 0
  %5545 = vmatpush1.bf16.xpose.msra.mxu0 0
  %5546 = vmatprep.subr.bf16.mxu0 0
  %5547 = vmatpush1.bf16.xpose.msra.mxu0 0
  %5548 = vmatprep.subr.bf16.mxu0 0
  %5549 = vmatpush1.bf16.xpose.msra.mxu0 0
  %5550 = vmatprep.subr.bf16.mxu0 0
  %5551 = vmatpush1.bf16.xpose.msra.mxu0 0
  %5552 = vmatprep.subr.bf16.mxu0 0
  %5553 = vmatpush1.bf16.xpose.msra.mxu0 0
  %5554 = vmatprep.subr.bf16.mxu0 0
  %5555 = vmatpush1.bf16.xpose.msra.mxu0 0
  %5556 = vmatprep.subr.bf16.mxu0 0
  %5557 = vmatpush1.bf16.xpose.msra.mxu0 0
  %5558 = vmatprep.subr.bf16.mxu0 0
  %5559 = vmatpush1.bf16.xpose.msra.mxu0 %v5542
  %5560 = vmatprep.subr.bf16.mxu0 0
  %5561 = vmatpush2.bf16.xpose.msra.mxu0 0
  %5562 = vmatprep.subr.bf16.mxu0 0
  %5563 = vmatpush2.bf16.xpose.msra.mxu0 0
  %5564 = vmatprep.subr.bf16.mxu0 0
  %5565 = vmatpush2.bf16.xpose.msra.mxu0 0
  %5566 = vmatprep.subr.bf16.mxu0 0
  %5567 = vmatpush2.bf16.xpose.msra.mxu0 0
  %5568 = vmatprep.subr.bf16.mxu0 0
  %5569 = vmatpush2.bf16.xpose.msra.mxu0 0
  %5570 = vmatprep.subr.bf16.mxu0 0
  %5571 = vmatpush2.bf16.xpose.msra.mxu0 0
  %5572 = vmatprep.subr.bf16.mxu0 0
  %5573 = vmatpush2.bf16.xpose.msra.mxu0 0
  %5574 = vmatprep.subr.bf16.mxu0 0
  %5575 = vmatpush2.bf16.xpose.msra.mxu0 0
  %5576 = vmatprep.mubr.bf16.mxu0 0
  %5577 = vmatmul.mubr.bf16.gmra.mxu0 %v5539
  %v5578 = vpop.f32.mrf.mxu0
  %v5579 = vadd.f32 %v121, %v5578
  %v5580 = vpop.f32.mrf.mxu0
  %v5581 = vpop.f32.mrf.mxu0
  %v5582 = vadd.f32 %v122, %v5581
  %v5583 = vpop.f32.mrf.mxu0
  %5584 = vdwg.mxu0
  %v5586 = vsel %vm535, %v5423, 0
  %v5589 = vsel %vm535, %v5431, 0
  %5591 = vmatprep.subr.bf16.mxu0 0
  %5592 = vmatpush1.bf16.xpose.msra.mxu0 0
  %5593 = vmatprep.subr.bf16.mxu0 0
  %5594 = vmatpush1.bf16.xpose.msra.mxu0 0
  %5595 = vmatprep.subr.bf16.mxu0 0
  %5596 = vmatpush1.bf16.xpose.msra.mxu0 0
  %5597 = vmatprep.subr.bf16.mxu0 0
  %5598 = vmatpush1.bf16.xpose.msra.mxu0 0
  %5599 = vmatprep.subr.bf16.mxu0 0
  %5600 = vmatpush1.bf16.xpose.msra.mxu0 0
  %5601 = vmatprep.subr.bf16.mxu0 0
  %5602 = vmatpush1.bf16.xpose.msra.mxu0 0
  %5603 = vmatprep.subr.bf16.mxu0 0
  %5604 = vmatpush1.bf16.xpose.msra.mxu0 0
  %5605 = vmatprep.subr.bf16.mxu0 0
  %5606 = vmatpush1.bf16.xpose.msra.mxu0 %v5589
  %5607 = vmatprep.subr.bf16.mxu0 0
  %5608 = vmatpush2.bf16.xpose.msra.mxu0 0
  %5609 = vmatprep.subr.bf16.mxu0 0
  %5610 = vmatpush2.bf16.xpose.msra.mxu0 0
  %5611 = vmatprep.subr.bf16.mxu0 0
  %5612 = vmatpush2.bf16.xpose.msra.mxu0 0
  %5613 = vmatprep.subr.bf16.mxu0 0
  %5614 = vmatpush2.bf16.xpose.msra.mxu0 0
  %5615 = vmatprep.subr.bf16.mxu0 0
  %5616 = vmatpush2.bf16.xpose.msra.mxu0 0
  %5617 = vmatprep.subr.bf16.mxu0 0
  %5618 = vmatpush2.bf16.xpose.msra.mxu0 0
  %5619 = vmatprep.subr.bf16.mxu0 0
  %5620 = vmatpush2.bf16.xpose.msra.mxu0 0
  %5621 = vmatprep.subr.bf16.mxu0 0
  %5622 = vmatpush2.bf16.xpose.msra.mxu0 0
  %5623 = vmatprep.mubr.bf16.mxu0 0
  %5624 = vmatmul.mubr.bf16.gmra.mxu0 %v5586
  %v5625 = vpop.f32.mrf.mxu0
  %v5626 = vadd.f32 %v123, %v5625
  %v5627 = vpop.f32.mrf.mxu0
  %v5628 = vpop.f32.mrf.mxu0
  %v5629 = vadd.f32 %v124, %v5628
  %v5630 = vpop.f32.mrf.mxu0
  %5631 = vdwg.mxu0
  %v5633 = vsel %vm535, %v5424, 0
  %v5636 = vsel %vm535, %v5432, 0
  %5638 = vmatprep.subr.bf16.mxu0 0
  %5639 = vmatpush1.bf16.xpose.msra.mxu0 0
  %5640 = vmatprep.subr.bf16.mxu0 0
  %5641 = vmatpush1.bf16.xpose.msra.mxu0 0
  %5642 = vmatprep.subr.bf16.mxu0 0
  %5643 = vmatpush1.bf16.xpose.msra.mxu0 0
  %5644 = vmatprep.subr.bf16.mxu0 0
  %5645 = vmatpush1.bf16.xpose.msra.mxu0 0
  %5646 = vmatprep.subr.bf16.mxu0 0
  %5647 = vmatpush1.bf16.xpose.msra.mxu0 0
  %5648 = vmatprep.subr.bf16.mxu0 0
  %5649 = vmatpush1.bf16.xpose.msra.mxu0 0
  %5650 = vmatprep.subr.bf16.mxu0 0
  %5651 = vmatpush1.bf16.xpose.msra.mxu0 0
  %5652 = vmatprep.subr.bf16.mxu0 0
  %5653 = vmatpush1.bf16.xpose.msra.mxu0 %v5636
  %5654 = vmatprep.subr.bf16.mxu0 0
  %5655 = vmatpush2.bf16.xpose.msra.mxu0 0
  %5656 = vmatprep.subr.bf16.mxu0 0
  %5657 = vmatpush2.bf16.xpose.msra.mxu0 0
  %5658 = vmatprep.subr.bf16.mxu0 0
  %5659 = vmatpush2.bf16.xpose.msra.mxu0 0
  %5660 = vmatprep.subr.bf16.mxu0 0
  %5661 = vmatpush2.bf16.xpose.msra.mxu0 0
  %5662 = vmatprep.subr.bf16.mxu0 0
  %5663 = vmatpush2.bf16.xpose.msra.mxu0 0
  %5664 = vmatprep.subr.bf16.mxu0 0
  %5665 = vmatpush2.bf16.xpose.msra.mxu0 0
  %5666 = vmatprep.subr.bf16.mxu0 0
  %5667 = vmatpush2.bf16.xpose.msra.mxu0 0
  %5668 = vmatprep.subr.bf16.mxu0 0
  %5669 = vmatpush2.bf16.xpose.msra.mxu0 0
  %5670 = vmatprep.mubr.bf16.mxu0 0
  %5671 = vmatmul.mubr.bf16.gmra.mxu0 %v5633
  %v5672 = vpop.f32.mrf.mxu0
  %v5673 = vadd.f32 %v125, %v5672
  %v5674 = vpop.f32.mrf.mxu0
  %v5675 = vpop.f32.mrf.mxu0
  %v5676 = vadd.f32 %v126, %v5675
  %v5677 = vpop.f32.mrf.mxu0
  %5678 = vdwg.mxu0
  %v5680 = vsel %vm535, %v5425, 0
  %v5683 = vsel %vm535, %v5433, 0
  %5685 = vmatprep.subr.bf16.mxu0 0
  %5686 = vmatpush1.bf16.xpose.msra.mxu0 0
  %5687 = vmatprep.subr.bf16.mxu0 0
  %5688 = vmatpush1.bf16.xpose.msra.mxu0 0
  %5689 = vmatprep.subr.bf16.mxu0 0
  %5690 = vmatpush1.bf16.xpose.msra.mxu0 0
  %5691 = vmatprep.subr.bf16.mxu0 0
  %5692 = vmatpush1.bf16.xpose.msra.mxu0 0
  %5693 = vmatprep.subr.bf16.mxu0 0
  %5694 = vmatpush1.bf16.xpose.msra.mxu0 0
  %5695 = vmatprep.subr.bf16.mxu0 0
  %5696 = vmatpush1.bf16.xpose.msra.mxu0 0
  %5697 = vmatprep.subr.bf16.mxu0 0
  %5698 = vmatpush1.bf16.xpose.msra.mxu0 0
  %5699 = vmatprep.subr.bf16.mxu0 0
  %5700 = vmatpush1.bf16.xpose.msra.mxu0 %v5683
  %5701 = vmatprep.subr.bf16.mxu0 0
  %5702 = vmatpush2.bf16.xpose.msra.mxu0 0
  %5703 = vmatprep.subr.bf16.mxu0 0
  %5704 = vmatpush2.bf16.xpose.msra.mxu0 0
  %5705 = vmatprep.subr.bf16.mxu0 0
  %5706 = vmatpush2.bf16.xpose.msra.mxu0 0
  %5707 = vmatprep.subr.bf16.mxu0 0
  %5708 = vmatpush2.bf16.xpose.msra.mxu0 0
  %5709 = vmatprep.subr.bf16.mxu0 0
  %5710 = vmatpush2.bf16.xpose.msra.mxu0 0
  %5711 = vmatprep.subr.bf16.mxu0 0
  %5712 = vmatpush2.bf16.xpose.msra.mxu0 0
  %5713 = vmatprep.subr.bf16.mxu0 0
  %5714 = vmatpush2.bf16.xpose.msra.mxu0 0
  %5715 = vmatprep.subr.bf16.mxu0 0
  %5716 = vmatpush2.bf16.xpose.msra.mxu0 0
  %5717 = vmatprep.mubr.bf16.mxu0 0
  %5718 = vmatmul.mubr.bf16.gmra.mxu0 %v5680
  %v5719 = vpop.f32.mrf.mxu0
  %v5720 = vadd.f32 %v127, %v5719
  %v5721 = vpop.f32.mrf.mxu0
  %v5722 = vpop.f32.mrf.mxu0
  %v5723 = vadd.f32 %v128, %v5722
  %v5724 = vpop.f32.mrf.mxu0
  %5725 = vdwg.mxu0
  %v5727 = vsel %vm535, %v5426, 0
  %v5730 = vsel %vm535, %v5434, 0
  %5732 = vmatprep.subr.bf16.mxu0 0
  %5733 = vmatpush1.bf16.xpose.msra.mxu0 0
  %5734 = vmatprep.subr.bf16.mxu0 0
  %5735 = vmatpush1.bf16.xpose.msra.mxu0 0
  %5736 = vmatprep.subr.bf16.mxu0 0
  %5737 = vmatpush1.bf16.xpose.msra.mxu0 0
  %5738 = vmatprep.subr.bf16.mxu0 0
  %5739 = vmatpush1.bf16.xpose.msra.mxu0 0
  %5740 = vmatprep.subr.bf16.mxu0 0
  %5741 = vmatpush1.bf16.xpose.msra.mxu0 0
  %5742 = vmatprep.subr.bf16.mxu0 0
  %5743 = vmatpush1.bf16.xpose.msra.mxu0 0
  %5744 = vmatprep.subr.bf16.mxu0 0
  %5745 = vmatpush1.bf16.xpose.msra.mxu0 0
  %5746 = vmatprep.subr.bf16.mxu0 0
  %5747 = vmatpush1.bf16.xpose.msra.mxu0 %v5730
  %5748 = vmatprep.subr.bf16.mxu0 0
  %5749 = vmatpush2.bf16.xpose.msra.mxu0 0
  %5750 = vmatprep.subr.bf16.mxu0 0
  %5751 = vmatpush2.bf16.xpose.msra.mxu0 0
  %5752 = vmatprep.subr.bf16.mxu0 0
  %5753 = vmatpush2.bf16.xpose.msra.mxu0 0
  %5754 = vmatprep.subr.bf16.mxu0 0
  %5755 = vmatpush2.bf16.xpose.msra.mxu0 0
  %5756 = vmatprep.subr.bf16.mxu0 0
  %5757 = vmatpush2.bf16.xpose.msra.mxu0 0
  %5758 = vmatprep.subr.bf16.mxu0 0
  %5759 = vmatpush2.bf16.xpose.msra.mxu0 0
  %5760 = vmatprep.subr.bf16.mxu0 0
  %5761 = vmatpush2.bf16.xpose.msra.mxu0 0
  %5762 = vmatprep.subr.bf16.mxu0 0
  %5763 = vmatpush2.bf16.xpose.msra.mxu0 0
  %5764 = vmatprep.mubr.bf16.mxu0 0
  %5765 = vmatmul.mubr.bf16.gmra.mxu0 %v5727
  %v5766 = vpop.f32.mrf.mxu0
  %v5767 = vadd.f32 %v129, %v5766
  %v5768 = vpop.f32.mrf.mxu0
  %v5769 = vpop.f32.mrf.mxu0
  %v5770 = vadd.f32 %v130, %v5769
  %v5771 = vpop.f32.mrf.mxu0
  %5772 = vdwg.mxu0
  %v5774 = vsel %vm535, %v5427, 0
  %v5777 = vsel %vm535, %v5435, 0
  %5779 = vmatprep.subr.bf16.mxu0 0
  %5780 = vmatpush1.bf16.xpose.msra.mxu0 0
  %5781 = vmatprep.subr.bf16.mxu0 0
  %5782 = vmatpush1.bf16.xpose.msra.mxu0 0
  %5783 = vmatprep.subr.bf16.mxu0 0
  %5784 = vmatpush1.bf16.xpose.msra.mxu0 0
  %5785 = vmatprep.subr.bf16.mxu0 0
  %5786 = vmatpush1.bf16.xpose.msra.mxu0 0
  %5787 = vmatprep.subr.bf16.mxu0 0
  %5788 = vmatpush1.bf16.xpose.msra.mxu0 0
  %5789 = vmatprep.subr.bf16.mxu0 0
  %5790 = vmatpush1.bf16.xpose.msra.mxu0 0
  %5791 = vmatprep.subr.bf16.mxu0 0
  %5792 = vmatpush1.bf16.xpose.msra.mxu0 0
  %5793 = vmatprep.subr.bf16.mxu0 0
  %5794 = vmatpush1.bf16.xpose.msra.mxu0 %v5777
  %5795 = vmatprep.subr.bf16.mxu0 0
  %5796 = vmatpush2.bf16.xpose.msra.mxu0 0
  %5797 = vmatprep.subr.bf16.mxu0 0
  %5798 = vmatpush2.bf16.xpose.msra.mxu0 0
  %5799 = vmatprep.subr.bf16.mxu0 0
  %5800 = vmatpush2.bf16.xpose.msra.mxu0 0
  %5801 = vmatprep.subr.bf16.mxu0 0
  %5802 = vmatpush2.bf16.xpose.msra.mxu0 0
  %5803 = vmatprep.subr.bf16.mxu0 0
  %5804 = vmatpush2.bf16.xpose.msra.mxu0 0
  %5805 = vmatprep.subr.bf16.mxu0 0
  %5806 = vmatpush2.bf16.xpose.msra.mxu0 0
  %5807 = vmatprep.subr.bf16.mxu0 0
  %5808 = vmatpush2.bf16.xpose.msra.mxu0 0
  %5809 = vmatprep.subr.bf16.mxu0 0
  %5810 = vmatpush2.bf16.xpose.msra.mxu0 0
  %5811 = vmatprep.mubr.bf16.mxu0 0
  %5812 = vmatmul.mubr.bf16.gmra.mxu0 %v5774
  %v5813 = vpop.f32.mrf.mxu0
  %v5814 = vadd.f32 %v131, %v5813
  %v5815 = vpop.f32.mrf.mxu0
  %v5816 = vpop.f32.mrf.mxu0
  %v5817 = vadd.f32 %v132, %v5816
  %v5818 = vpop.f32.mrf.mxu0
  %5819 = vdwg.mxu0
  %v5820 = vsel %vm912, %v5485, -inf
  %5821 = vmax.xlane.f32.xlu0 %v5820
  %v5822 = vpop.xlane.xlu0 %5821
  %v5823 = vsel %vm912, %v5488, -inf
  %5824 = vmax.xlane.f32.xlu0 %v5823
  %v5825 = vpop.xlane.xlu0 %5824
  %v5826 = vsel %vm912, %v5532, -inf
  %5827 = vmax.xlane.f32.xlu0 %v5826
  %v5828 = vpop.xlane.xlu0 %5827
  %v5829 = vsel %vm912, %v5535, -inf
  %5830 = vmax.xlane.f32.xlu0 %v5829
  %v5831 = vpop.xlane.xlu0 %5830
  %v5832 = vsel %vm912, %v5579, -inf
  %5833 = vmax.xlane.f32.xlu0 %v5832
  %v5834 = vpop.xlane.xlu0 %5833
  %v5835 = vsel %vm912, %v5582, -inf
  %5836 = vmax.xlane.f32.xlu0 %v5835
  %v5837 = vpop.xlane.xlu0 %5836
  %v5838 = vsel %vm912, %v5626, -inf
  %5839 = vmax.xlane.f32.xlu0 %v5838
  %v5840 = vpop.xlane.xlu0 %5839
  %v5841 = vsel %vm912, %v5629, -inf
  %5842 = vmax.xlane.f32.xlu0 %v5841
  %v5843 = vpop.xlane.xlu0 %5842
  %v5844 = vsel %vm912, %v5673, -inf
  %5845 = vmax.xlane.f32.xlu0 %v5844
  %v5846 = vpop.xlane.xlu0 %5845
  %v5847 = vsel %vm912, %v5676, -inf
  %5848 = vmax.xlane.f32.xlu0 %v5847
  %v5849 = vpop.xlane.xlu0 %5848
  %v5850 = vsel %vm912, %v5720, -inf
  %5851 = vmax.xlane.f32.xlu0 %v5850
  %v5852 = vpop.xlane.xlu0 %5851
  %v5853 = vsel %vm912, %v5723, -inf
  %5854 = vmax.xlane.f32.xlu0 %v5853
  %v5855 = vpop.xlane.xlu0 %5854
  %v5856 = vsel %vm912, %v5767, -inf
  %5857 = vmax.xlane.f32.xlu0 %v5856
  %v5858 = vpop.xlane.xlu0 %5857
  %v5859 = vsel %vm912, %v5770, -inf
  %5860 = vmax.xlane.f32.xlu0 %v5859
  %v5861 = vpop.xlane.xlu0 %5860
  %v5862 = vsel %vm912, %v5814, -inf
  %5863 = vmax.xlane.f32.xlu0 %v5862
  %v5864 = vpop.xlane.xlu0 %5863
  %v5865 = vsel %vm912, %v5817, -inf
  %5866 = vmax.xlane.f32.xlu0 %v5865
  %v5867 = vpop.xlane.xlu0 %5866
  %v5868 = vsub.f32 %v5485, %v5822
  %v5869 = vsub.f32 %v5488, %v5825
  %v5870 = vsub.f32 %v5532, %v5828
  %v5871 = vsub.f32 %v5535, %v5831
  %v5872 = vsub.f32 %v5579, %v5834
  %v5873 = vsub.f32 %v5582, %v5837
  %v5874 = vsub.f32 %v5626, %v5840
  %v5875 = vsub.f32 %v5629, %v5843
  %v5876 = vsub.f32 %v5673, %v5846
  %v5877 = vsub.f32 %v5676, %v5849
  %v5878 = vsub.f32 %v5720, %v5852
  %v5879 = vsub.f32 %v5723, %v5855
  %v5880 = vsub.f32 %v5767, %v5858
  %v5881 = vsub.f32 %v5770, %v5861
  %v5882 = vsub.f32 %v5814, %v5864
  %v5883 = vsub.f32 %v5817, %v5867
  %v5884 = vmul.f32 %v5868, 1.442695
  %v5885 = vpow.pop %v5884
  %v5886 = vmul.f32 %v5869, 1.442695
  %v5887 = vpow.pop %v5886
  %v5888 = vmul.f32 %v5870, 1.442695
  %v5889 = vpow.pop %v5888
  %v5890 = vmul.f32 %v5871, 1.442695
  %v5891 = vpow.pop %v5890
  %v5892 = vmul.f32 %v5872, 1.442695
  %v5893 = vpow.pop %v5892
  %v5894 = vmul.f32 %v5873, 1.442695
  %v5895 = vpow.pop %v5894
  %v5896 = vmul.f32 %v5874, 1.442695
  %v5897 = vpow.pop %v5896
  %v5898 = vmul.f32 %v5875, 1.442695
  %v5899 = vpow.pop %v5898
  %v5900 = vmul.f32 %v5876, 1.442695
  %v5901 = vpow.pop %v5900
  %v5902 = vmul.f32 %v5877, 1.442695
  %v5903 = vpow.pop %v5902
  %v5904 = vmul.f32 %v5878, 1.442695
  %v5905 = vpow.pop %v5904
  %v5906 = vmul.f32 %v5879, 1.442695
  %v5907 = vpow.pop %v5906
  %v5908 = vmul.f32 %v5880, 1.442695
  %v5909 = vpow.pop %v5908
  %v5910 = vmul.f32 %v5881, 1.442695
  %v5911 = vpow.pop %v5910
  %v5912 = vmul.f32 %v5882, 1.442695
  %v5913 = vpow.pop %v5912
  %v5914 = vmul.f32 %v5883, 1.442695
  %v5915 = vpow.pop %v5914
  %v5916 = vsel %vm912, %v5885, 0.0
  %5917 = vadd.xlane.f32.xlu0 %v5916
  %v5918 = vpop.xlane.xlu0 %5917
  %v5919 = vsel %vm912, %v5887, 0.0
  %5920 = vadd.xlane.f32.xlu0 %v5919
  %v5921 = vpop.xlane.xlu0 %5920
  %v5922 = vsel %vm912, %v5889, 0.0
  %5923 = vadd.xlane.f32.xlu0 %v5922
  %v5924 = vpop.xlane.xlu0 %5923
  %v5925 = vsel %vm912, %v5891, 0.0
  %5926 = vadd.xlane.f32.xlu0 %v5925
  %v5927 = vpop.xlane.xlu0 %5926
  %v5928 = vsel %vm912, %v5893, 0.0
  %5929 = vadd.xlane.f32.xlu0 %v5928
  %v5930 = vpop.xlane.xlu0 %5929
  %v5931 = vsel %vm912, %v5895, 0.0
  %5932 = vadd.xlane.f32.xlu0 %v5931
  %v5933 = vpop.xlane.xlu0 %5932
  %v5934 = vsel %vm912, %v5897, 0.0
  %5935 = vadd.xlane.f32.xlu0 %v5934
  %v5936 = vpop.xlane.xlu0 %5935
  %v5937 = vsel %vm912, %v5899, 0.0
  %5938 = vadd.xlane.f32.xlu0 %v5937
  %v5939 = vpop.xlane.xlu0 %5938
  %v5940 = vsel %vm912, %v5901, 0.0
  %5941 = vadd.xlane.f32.xlu0 %v5940
  %v5942 = vpop.xlane.xlu0 %5941
  %v5943 = vsel %vm912, %v5903, 0.0
  %5944 = vadd.xlane.f32.xlu0 %v5943
  %v5945 = vpop.xlane.xlu0 %5944
  %v5946 = vsel %vm912, %v5905, 0.0
  %5947 = vadd.xlane.f32.xlu0 %v5946
  %v5948 = vpop.xlane.xlu0 %5947
  %v5949 = vsel %vm912, %v5907, 0.0
  %5950 = vadd.xlane.f32.xlu0 %v5949
  %v5951 = vpop.xlane.xlu0 %5950
  %v5952 = vsel %vm912, %v5909, 0.0
  %5953 = vadd.xlane.f32.xlu0 %v5952
  %v5954 = vpop.xlane.xlu0 %5953
  %v5955 = vsel %vm912, %v5911, 0.0
  %5956 = vadd.xlane.f32.xlu0 %v5955
  %v5957 = vpop.xlane.xlu0 %5956
  %v5958 = vsel %vm912, %v5913, 0.0
  %5959 = vadd.xlane.f32.xlu0 %v5958
  %v5960 = vpop.xlane.xlu0 %5959
  %v5961 = vsel %vm912, %v5915, 0.0
  %5962 = vadd.xlane.f32.xlu0 %v5961
  %v5963 = vpop.xlane.xlu0 %5962
  %v5964 = vrcp.pop %v5918
  %v5965 = vrcp.pop %v5921
  %v5966 = vrcp.pop %v5924
  %v5967 = vrcp.pop %v5927
  %v5968 = vrcp.pop %v5930
  %v5969 = vrcp.pop %v5933
  %v5970 = vrcp.pop %v5936
  %v5971 = vrcp.pop %v5939
  %v5972 = vrcp.pop %v5942
  %v5973 = vrcp.pop %v5945
  %v5974 = vrcp.pop %v5948
  %v5975 = vrcp.pop %v5951
  %v5976 = vrcp.pop %v5954
  %v5977 = vrcp.pop %v5957
  %v5978 = vrcp.pop %v5960
  %v5979 = vrcp.pop %v5963
  %v5980 = vmul.f32 %v5885, %v5964
  %v5981 = vmul.f32 %v5887, %v5965
  %v5982 = vmul.f32 %v5889, %v5966
  %v5983 = vmul.f32 %v5891, %v5967
  %v5984 = vmul.f32 %v5893, %v5968
  %v5985 = vmul.f32 %v5895, %v5969
  %v5986 = vmul.f32 %v5897, %v5970
  %v5987 = vmul.f32 %v5899, %v5971
  %v5988 = vmul.f32 %v5901, %v5972
  %v5989 = vmul.f32 %v5903, %v5973
  %v5990 = vmul.f32 %v5905, %v5974
  %v5991 = vmul.f32 %v5907, %v5975
  %v5992 = vmul.f32 %v5909, %v5976
  %v5993 = vmul.f32 %v5911, %v5977
  %v5994 = vmul.f32 %v5913, %v5978
  %v5995 = vmul.f32 %v5915, %v5979
  %v5996 = vpack.c.bf16 %v5981, %v5980
  %v5997 = vpack.c.bf16 %v5983, %v5982
  %v5998 = vpack.c.bf16 %v5985, %v5984
  %v5999 = vpack.c.bf16 %v5987, %v5986
  %v6000 = vpack.c.bf16 %v5989, %v5988
  %v6001 = vpack.c.bf16 %v5991, %v5990
  %v6002 = vpack.c.bf16 %v5993, %v5992
  %v6003 = vpack.c.bf16 %v5995, %v5994
  %v6005 = vsel %vm912, %v5996, 0
  %6007 = vmatprep.subr.bf16.mxu0 0
  %6008 = vmatpush1.bf16.msra.mxu0 0
  %6009 = vmatprep.subr.bf16.mxu0 0
  %6010 = vmatpush1.bf16.msra.mxu0 0
  %6011 = vmatprep.subr.bf16.mxu0 0
  %6012 = vmatpush1.bf16.msra.mxu0 0
  %6013 = vmatprep.subr.bf16.mxu0 0
  %6014 = vmatpush1.bf16.msra.mxu0 0
  %6015 = vmatprep.subr.bf16.mxu0 0
  %6016 = vmatpush1.bf16.msra.mxu0 0
  %6017 = vmatprep.subr.bf16.mxu0 0
  %6018 = vmatpush1.bf16.msra.mxu0 0
  %6019 = vmatprep.subr.bf16.mxu0 0
  %6020 = vmatpush1.bf16.msra.mxu0 0
  %6021 = vmatprep.subr.bf16.mxu0 0
  %6022 = vmatpush1.bf16.msra.mxu0 %v5436
  %6023 = vmatprep.subr.bf16.mxu0 0
  %6024 = vmatpush2.bf16.msra.mxu0 0
  %6025 = vmatprep.subr.bf16.mxu0 0
  %6026 = vmatpush2.bf16.msra.mxu0 0
  %6027 = vmatprep.subr.bf16.mxu0 0
  %6028 = vmatpush2.bf16.msra.mxu0 0
  %6029 = vmatprep.subr.bf16.mxu0 0
  %6030 = vmatpush2.bf16.msra.mxu0 0
  %6031 = vmatprep.subr.bf16.mxu0 0
  %6032 = vmatpush2.bf16.msra.mxu0 0
  %6033 = vmatprep.subr.bf16.mxu0 0
  %6034 = vmatpush2.bf16.msra.mxu0 0
  %6035 = vmatprep.subr.bf16.mxu0 0
  %6036 = vmatpush2.bf16.msra.mxu0 0
  %6037 = vmatprep.subr.bf16.mxu0 0
  %6038 = vmatpush2.bf16.msra.mxu0 0
  %6039 = vmatprep.mubr.bf16.mxu0 0
  %6040 = vmatmul.mubr.bf16.gmra.mxu0 %v6005
  %v6041 = vpop.f32.mrf.mxu0
  %v6042 = vadd.f32 0.0, %v6041
  %v6043 = vpop.f32.mrf.mxu0
  %v6044 = vpop.f32.mrf.mxu0
  %v6045 = vadd.f32 0.0, %v6044
  %v6046 = vpop.f32.mrf.mxu0
  %6047 = vdwg.mxu0
  %v6049 = vsel %vm912, %v5997, 0
  %6051 = vmatprep.subr.bf16.mxu0 0
  %6052 = vmatpush1.bf16.msra.mxu0 0
  %6053 = vmatprep.subr.bf16.mxu0 0
  %6054 = vmatpush1.bf16.msra.mxu0 0
  %6055 = vmatprep.subr.bf16.mxu0 0
  %6056 = vmatpush1.bf16.msra.mxu0 0
  %6057 = vmatprep.subr.bf16.mxu0 0
  %6058 = vmatpush1.bf16.msra.mxu0 0
  %6059 = vmatprep.subr.bf16.mxu0 0
  %6060 = vmatpush1.bf16.msra.mxu0 0
  %6061 = vmatprep.subr.bf16.mxu0 0
  %6062 = vmatpush1.bf16.msra.mxu0 0
  %6063 = vmatprep.subr.bf16.mxu0 0
  %6064 = vmatpush1.bf16.msra.mxu0 0
  %6065 = vmatprep.subr.bf16.mxu0 0
  %6066 = vmatpush1.bf16.msra.mxu0 %v5437
  %6067 = vmatprep.subr.bf16.mxu0 0
  %6068 = vmatpush2.bf16.msra.mxu0 0
  %6069 = vmatprep.subr.bf16.mxu0 0
  %6070 = vmatpush2.bf16.msra.mxu0 0
  %6071 = vmatprep.subr.bf16.mxu0 0
  %6072 = vmatpush2.bf16.msra.mxu0 0
  %6073 = vmatprep.subr.bf16.mxu0 0
  %6074 = vmatpush2.bf16.msra.mxu0 0
  %6075 = vmatprep.subr.bf16.mxu0 0
  %6076 = vmatpush2.bf16.msra.mxu0 0
  %6077 = vmatprep.subr.bf16.mxu0 0
  %6078 = vmatpush2.bf16.msra.mxu0 0
  %6079 = vmatprep.subr.bf16.mxu0 0
  %6080 = vmatpush2.bf16.msra.mxu0 0
  %6081 = vmatprep.subr.bf16.mxu0 0
  %6082 = vmatpush2.bf16.msra.mxu0 0
  %6083 = vmatprep.mubr.bf16.mxu0 0
  %6084 = vmatmul.mubr.bf16.gmra.mxu0 %v6049
  %v6085 = vpop.f32.mrf.mxu0
  %v6086 = vadd.f32 0.0, %v6085
  %v6087 = vpop.f32.mrf.mxu0
  %v6088 = vpop.f32.mrf.mxu0
  %v6089 = vadd.f32 0.0, %v6088
  %v6090 = vpop.f32.mrf.mxu0
  %6091 = vdwg.mxu0
  %v6093 = vsel %vm912, %v5998, 0
  %6095 = vmatprep.subr.bf16.mxu0 0
  %6096 = vmatpush1.bf16.msra.mxu0 0
  %6097 = vmatprep.subr.bf16.mxu0 0
  %6098 = vmatpush1.bf16.msra.mxu0 0
  %6099 = vmatprep.subr.bf16.mxu0 0
  %6100 = vmatpush1.bf16.msra.mxu0 0
  %6101 = vmatprep.subr.bf16.mxu0 0
  %6102 = vmatpush1.bf16.msra.mxu0 0
  %6103 = vmatprep.subr.bf16.mxu0 0
  %6104 = vmatpush1.bf16.msra.mxu0 0
  %6105 = vmatprep.subr.bf16.mxu0 0
  %6106 = vmatpush1.bf16.msra.mxu0 0
  %6107 = vmatprep.subr.bf16.mxu0 0
  %6108 = vmatpush1.bf16.msra.mxu0 0
  %6109 = vmatprep.subr.bf16.mxu0 0
  %6110 = vmatpush1.bf16.msra.mxu0 %v5438
  %6111 = vmatprep.subr.bf16.mxu0 0
  %6112 = vmatpush2.bf16.msra.mxu0 0
  %6113 = vmatprep.subr.bf16.mxu0 0
  %6114 = vmatpush2.bf16.msra.mxu0 0
  %6115 = vmatprep.subr.bf16.mxu0 0
  %6116 = vmatpush2.bf16.msra.mxu0 0
  %6117 = vmatprep.subr.bf16.mxu0 0
  %6118 = vmatpush2.bf16.msra.mxu0 0
  %6119 = vmatprep.subr.bf16.mxu0 0
  %6120 = vmatpush2.bf16.msra.mxu0 0
  %6121 = vmatprep.subr.bf16.mxu0 0
  %6122 = vmatpush2.bf16.msra.mxu0 0
  %6123 = vmatprep.subr.bf16.mxu0 0
  %6124 = vmatpush2.bf16.msra.mxu0 0
  %6125 = vmatprep.subr.bf16.mxu0 0
  %6126 = vmatpush2.bf16.msra.mxu0 0
  %6127 = vmatprep.mubr.bf16.mxu0 0
  %6128 = vmatmul.mubr.bf16.gmra.mxu0 %v6093
  %v6129 = vpop.f32.mrf.mxu0
  %v6130 = vadd.f32 0.0, %v6129
  %v6131 = vpop.f32.mrf.mxu0
  %v6132 = vpop.f32.mrf.mxu0
  %v6133 = vadd.f32 0.0, %v6132
  %v6134 = vpop.f32.mrf.mxu0
  %6135 = vdwg.mxu0
  %v6137 = vsel %vm912, %v5999, 0
  %6139 = vmatprep.subr.bf16.mxu0 0
  %6140 = vmatpush1.bf16.msra.mxu0 0
  %6141 = vmatprep.subr.bf16.mxu0 0
  %6142 = vmatpush1.bf16.msra.mxu0 0
  %6143 = vmatprep.subr.bf16.mxu0 0
  %6144 = vmatpush1.bf16.msra.mxu0 0
  %6145 = vmatprep.subr.bf16.mxu0 0
  %6146 = vmatpush1.bf16.msra.mxu0 0
  %6147 = vmatprep.subr.bf16.mxu0 0
  %6148 = vmatpush1.bf16.msra.mxu0 0
  %6149 = vmatprep.subr.bf16.mxu0 0
  %6150 = vmatpush1.bf16.msra.mxu0 0
  %6151 = vmatprep.subr.bf16.mxu0 0
  %6152 = vmatpush1.bf16.msra.mxu0 0
  %6153 = vmatprep.subr.bf16.mxu0 0
  %6154 = vmatpush1.bf16.msra.mxu0 %v5439
  %6155 = vmatprep.subr.bf16.mxu0 0
  %6156 = vmatpush2.bf16.msra.mxu0 0
  %6157 = vmatprep.subr.bf16.mxu0 0
  %6158 = vmatpush2.bf16.msra.mxu0 0
  %6159 = vmatprep.subr.bf16.mxu0 0
  %6160 = vmatpush2.bf16.msra.mxu0 0
  %6161 = vmatprep.subr.bf16.mxu0 0
  %6162 = vmatpush2.bf16.msra.mxu0 0
  %6163 = vmatprep.subr.bf16.mxu0 0
  %6164 = vmatpush2.bf16.msra.mxu0 0
  %6165 = vmatprep.subr.bf16.mxu0 0
  %6166 = vmatpush2.bf16.msra.mxu0 0
  %6167 = vmatprep.subr.bf16.mxu0 0
  %6168 = vmatpush2.bf16.msra.mxu0 0
  %6169 = vmatprep.subr.bf16.mxu0 0
  %6170 = vmatpush2.bf16.msra.mxu0 0
  %6171 = vmatprep.mubr.bf16.mxu0 0
  %6172 = vmatmul.mubr.bf16.gmra.mxu0 %v6137
  %v6173 = vpop.f32.mrf.mxu0
  %v6174 = vadd.f32 0.0, %v6173
  %v6175 = vpop.f32.mrf.mxu0
  %v6176 = vpop.f32.mrf.mxu0
  %v6177 = vadd.f32 0.0, %v6176
  %v6178 = vpop.f32.mrf.mxu0
  %6179 = vdwg.mxu0
  %v6181 = vsel %vm912, %v6000, 0
  %6183 = vmatprep.subr.bf16.mxu0 0
  %6184 = vmatpush1.bf16.msra.mxu0 0
  %6185 = vmatprep.subr.bf16.mxu0 0
  %6186 = vmatpush1.bf16.msra.mxu0 0
  %6187 = vmatprep.subr.bf16.mxu0 0
  %6188 = vmatpush1.bf16.msra.mxu0 0
  %6189 = vmatprep.subr.bf16.mxu0 0
  %6190 = vmatpush1.bf16.msra.mxu0 0
  %6191 = vmatprep.subr.bf16.mxu0 0
  %6192 = vmatpush1.bf16.msra.mxu0 0
  %6193 = vmatprep.subr.bf16.mxu0 0
  %6194 = vmatpush1.bf16.msra.mxu0 0
  %6195 = vmatprep.subr.bf16.mxu0 0
  %6196 = vmatpush1.bf16.msra.mxu0 0
  %6197 = vmatprep.subr.bf16.mxu0 0
  %6198 = vmatpush1.bf16.msra.mxu0 %v5440
  %6199 = vmatprep.subr.bf16.mxu0 0
  %6200 = vmatpush2.bf16.msra.mxu0 0
  %6201 = vmatprep.subr.bf16.mxu0 0
  %6202 = vmatpush2.bf16.msra.mxu0 0
  %6203 = vmatprep.subr.bf16.mxu0 0
  %6204 = vmatpush2.bf16.msra.mxu0 0
  %6205 = vmatprep.subr.bf16.mxu0 0
  %6206 = vmatpush2.bf16.msra.mxu0 0
  %6207 = vmatprep.subr.bf16.mxu0 0
  %6208 = vmatpush2.bf16.msra.mxu0 0
  %6209 = vmatprep.subr.bf16.mxu0 0
  %6210 = vmatpush2.bf16.msra.mxu0 0
  %6211 = vmatprep.subr.bf16.mxu0 0
  %6212 = vmatpush2.bf16.msra.mxu0 0
  %6213 = vmatprep.subr.bf16.mxu0 0
  %6214 = vmatpush2.bf16.msra.mxu0 0
  %6215 = vmatprep.mubr.bf16.mxu0 0
  %6216 = vmatmul.mubr.bf16.gmra.mxu0 %v6181
  %v6217 = vpop.f32.mrf.mxu0
  %v6218 = vadd.f32 0.0, %v6217
  %v6219 = vpop.f32.mrf.mxu0
  %v6220 = vpop.f32.mrf.mxu0
  %v6221 = vadd.f32 0.0, %v6220
  %v6222 = vpop.f32.mrf.mxu0
  %6223 = vdwg.mxu0
  %v6225 = vsel %vm912, %v6001, 0
  %6227 = vmatprep.subr.bf16.mxu0 0
  %6228 = vmatpush1.bf16.msra.mxu0 0
  %6229 = vmatprep.subr.bf16.mxu0 0
  %6230 = vmatpush1.bf16.msra.mxu0 0
  %6231 = vmatprep.subr.bf16.mxu0 0
  %6232 = vmatpush1.bf16.msra.mxu0 0
  %6233 = vmatprep.subr.bf16.mxu0 0
  %6234 = vmatpush1.bf16.msra.mxu0 0
  %6235 = vmatprep.subr.bf16.mxu0 0
  %6236 = vmatpush1.bf16.msra.mxu0 0
  %6237 = vmatprep.subr.bf16.mxu0 0
  %6238 = vmatpush1.bf16.msra.mxu0 0
  %6239 = vmatprep.subr.bf16.mxu0 0
  %6240 = vmatpush1.bf16.msra.mxu0 0
  %6241 = vmatprep.subr.bf16.mxu0 0
  %6242 = vmatpush1.bf16.msra.mxu0 %v5441
  %6243 = vmatprep.subr.bf16.mxu0 0
  %6244 = vmatpush2.bf16.msra.mxu0 0
  %6245 = vmatprep.subr.bf16.mxu0 0
  %6246 = vmatpush2.bf16.msra.mxu0 0
  %6247 = vmatprep.subr.bf16.mxu0 0
  %6248 = vmatpush2.bf16.msra.mxu0 0
  %6249 = vmatprep.subr.bf16.mxu0 0
  %6250 = vmatpush2.bf16.msra.mxu0 0
  %6251 = vmatprep.subr.bf16.mxu0 0
  %6252 = vmatpush2.bf16.msra.mxu0 0
  %6253 = vmatprep.subr.bf16.mxu0 0
  %6254 = vmatpush2.bf16.msra.mxu0 0
  %6255 = vmatprep.subr.bf16.mxu0 0
  %6256 = vmatpush2.bf16.msra.mxu0 0
  %6257 = vmatprep.subr.bf16.mxu0 0
  %6258 = vmatpush2.bf16.msra.mxu0 0
  %6259 = vmatprep.mubr.bf16.mxu0 0
  %6260 = vmatmul.mubr.bf16.gmra.mxu0 %v6225
  %v6261 = vpop.f32.mrf.mxu0
  %v6262 = vadd.f32 0.0, %v6261
  %v6263 = vpop.f32.mrf.mxu0
  %v6264 = vpop.f32.mrf.mxu0
  %v6265 = vadd.f32 0.0, %v6264
  %v6266 = vpop.f32.mrf.mxu0
  %6267 = vdwg.mxu0
  %v6269 = vsel %vm912, %v6002, 0
  %6271 = vmatprep.subr.bf16.mxu0 0
  %6272 = vmatpush1.bf16.msra.mxu0 0
  %6273 = vmatprep.subr.bf16.mxu0 0
  %6274 = vmatpush1.bf16.msra.mxu0 0
  %6275 = vmatprep.subr.bf16.mxu0 0
  %6276 = vmatpush1.bf16.msra.mxu0 0
  %6277 = vmatprep.subr.bf16.mxu0 0
  %6278 = vmatpush1.bf16.msra.mxu0 0
  %6279 = vmatprep.subr.bf16.mxu0 0
  %6280 = vmatpush1.bf16.msra.mxu0 0
  %6281 = vmatprep.subr.bf16.mxu0 0
  %6282 = vmatpush1.bf16.msra.mxu0 0
  %6283 = vmatprep.subr.bf16.mxu0 0
  %6284 = vmatpush1.bf16.msra.mxu0 0
  %6285 = vmatprep.subr.bf16.mxu0 0
  %6286 = vmatpush1.bf16.msra.mxu0 %v5442
  %6287 = vmatprep.subr.bf16.mxu0 0
  %6288 = vmatpush2.bf16.msra.mxu0 0
  %6289 = vmatprep.subr.bf16.mxu0 0
  %6290 = vmatpush2.bf16.msra.mxu0 0
  %6291 = vmatprep.subr.bf16.mxu0 0
  %6292 = vmatpush2.bf16.msra.mxu0 0
  %6293 = vmatprep.subr.bf16.mxu0 0
  %6294 = vmatpush2.bf16.msra.mxu0 0
  %6295 = vmatprep.subr.bf16.mxu0 0
  %6296 = vmatpush2.bf16.msra.mxu0 0
  %6297 = vmatprep.subr.bf16.mxu0 0
  %6298 = vmatpush2.bf16.msra.mxu0 0
  %6299 = vmatprep.subr.bf16.mxu0 0
  %6300 = vmatpush2.bf16.msra.mxu0 0
  %6301 = vmatprep.subr.bf16.mxu0 0
  %6302 = vmatpush2.bf16.msra.mxu0 0
  %6303 = vmatprep.mubr.bf16.mxu0 0
  %6304 = vmatmul.mubr.bf16.gmra.mxu0 %v6269
  %v6305 = vpop.f32.mrf.mxu0
  %v6306 = vadd.f32 0.0, %v6305
  %v6307 = vpop.f32.mrf.mxu0
  %v6308 = vpop.f32.mrf.mxu0
  %v6309 = vadd.f32 0.0, %v6308
  %v6310 = vpop.f32.mrf.mxu0
  %6311 = vdwg.mxu0
  %v6313 = vsel %vm912, %v6003, 0
  %6315 = vmatprep.subr.bf16.mxu0 0
  %6316 = vmatpush1.bf16.msra.mxu0 0
  %6317 = vmatprep.subr.bf16.mxu0 0
  %6318 = vmatpush1.bf16.msra.mxu0 0
  %6319 = vmatprep.subr.bf16.mxu0 0
  %6320 = vmatpush1.bf16.msra.mxu0 0
  %6321 = vmatprep.subr.bf16.mxu0 0
  %6322 = vmatpush1.bf16.msra.mxu0 0
  %6323 = vmatprep.subr.bf16.mxu0 0
  %6324 = vmatpush1.bf16.msra.mxu0 0
  %6325 = vmatprep.subr.bf16.mxu0 0
  %6326 = vmatpush1.bf16.msra.mxu0 0
  %6327 = vmatprep.subr.bf16.mxu0 0
  %6328 = vmatpush1.bf16.msra.mxu0 0
  %6329 = vmatprep.subr.bf16.mxu0 0
  %6330 = vmatpush1.bf16.msra.mxu0 %v5443
  %6331 = vmatprep.subr.bf16.mxu0 0
  %6332 = vmatpush2.bf16.msra.mxu0 0
  %6333 = vmatprep.subr.bf16.mxu0 0
  %6334 = vmatpush2.bf16.msra.mxu0 0
  %6335 = vmatprep.subr.bf16.mxu0 0
  %6336 = vmatpush2.bf16.msra.mxu0 0
  %6337 = vmatprep.subr.bf16.mxu0 0
  %6338 = vmatpush2.bf16.msra.mxu0 0
  %6339 = vmatprep.subr.bf16.mxu0 0
  %6340 = vmatpush2.bf16.msra.mxu0 0
  %6341 = vmatprep.subr.bf16.mxu0 0
  %6342 = vmatpush2.bf16.msra.mxu0 0
  %6343 = vmatprep.subr.bf16.mxu0 0
  %6344 = vmatpush2.bf16.msra.mxu0 0
  %6345 = vmatprep.subr.bf16.mxu0 0
  %6346 = vmatpush2.bf16.msra.mxu0 0
  %6347 = vmatprep.mubr.bf16.mxu0 0
  %6348 = vmatmul.mubr.bf16.gmra.mxu0 %v6313
  %v6349 = vpop.f32.mrf.mxu0
  %v6350 = vadd.f32 0.0, %v6349
  %v6351 = vpop.f32.mrf.mxu0
  %v6352 = vpop.f32.mrf.mxu0
  %v6353 = vadd.f32 0.0, %v6352
  %v6354 = vpop.f32.mrf.mxu0
  %6355 = vdwg.mxu0
  %6357 = vrot.lane.b32.xlu0 %v5420, 96
  %v6358 = vpop.permute.xlu0 %6357
  %6360 = vrot.lane.b32.xlu0 %v5428, 96
  %v6361 = vpop.permute.xlu0 %6360
  %v6363 = vsel %vm535, %v6358, 0
  %v6366 = vsel %vm535, %v6361, 0
  %6368 = vmatprep.subr.bf16.mxu0 0
  %6369 = vmatpush1.bf16.xpose.msra.mxu0 0
  %6370 = vmatprep.subr.bf16.mxu0 0
  %6371 = vmatpush1.bf16.xpose.msra.mxu0 0
  %6372 = vmatprep.subr.bf16.mxu0 0
  %6373 = vmatpush1.bf16.xpose.msra.mxu0 0
  %6374 = vmatprep.subr.bf16.mxu0 0
  %6375 = vmatpush1.bf16.xpose.msra.mxu0 0
  %6376 = vmatprep.subr.bf16.mxu0 0
  %6377 = vmatpush1.bf16.xpose.msra.mxu0 0
  %6378 = vmatprep.subr.bf16.mxu0 0
  %6379 = vmatpush1.bf16.xpose.msra.mxu0 0
  %6380 = vmatprep.subr.bf16.mxu0 0
  %6381 = vmatpush1.bf16.xpose.msra.mxu0 0
  %6382 = vmatprep.subr.bf16.mxu0 0
  %6383 = vmatpush1.bf16.xpose.msra.mxu0 %v6366
  %6384 = vmatprep.subr.bf16.mxu0 0
  %6385 = vmatpush2.bf16.xpose.msra.mxu0 0
  %6386 = vmatprep.subr.bf16.mxu0 0
  %6387 = vmatpush2.bf16.xpose.msra.mxu0 0
  %6388 = vmatprep.subr.bf16.mxu0 0
  %6389 = vmatpush2.bf16.xpose.msra.mxu0 0
  %6390 = vmatprep.subr.bf16.mxu0 0
  %6391 = vmatpush2.bf16.xpose.msra.mxu0 0
  %6392 = vmatprep.subr.bf16.mxu0 0
  %6393 = vmatpush2.bf16.xpose.msra.mxu0 0
  %6394 = vmatprep.subr.bf16.mxu0 0
  %6395 = vmatpush2.bf16.xpose.msra.mxu0 0
  %6396 = vmatprep.subr.bf16.mxu0 0
  %6397 = vmatpush2.bf16.xpose.msra.mxu0 0
  %6398 = vmatprep.subr.bf16.mxu0 0
  %6399 = vmatpush2.bf16.xpose.msra.mxu0 0
  %6400 = vmatprep.mubr.bf16.mxu0 0
  %6401 = vmatmul.mubr.bf16.gmra.mxu0 %v6363
  %v6402 = vpop.f32.mrf.mxu0
  %v6403 = vadd.f32 %v117, %v6402
  %v6404 = vpop.f32.mrf.mxu0
  %v6405 = vpop.f32.mrf.mxu0
  %v6406 = vadd.f32 %v118, %v6405
  %v6407 = vpop.f32.mrf.mxu0
  %6408 = vdwg.mxu0
  %6410 = vrot.lane.b32.xlu0 %v5421, 96
  %v6411 = vpop.permute.xlu0 %6410
  %6413 = vrot.lane.b32.xlu0 %v5429, 96
  %v6414 = vpop.permute.xlu0 %6413
  %v6416 = vsel %vm535, %v6411, 0
  %v6419 = vsel %vm535, %v6414, 0
  %6421 = vmatprep.subr.bf16.mxu0 0
  %6422 = vmatpush1.bf16.xpose.msra.mxu0 0
  %6423 = vmatprep.subr.bf16.mxu0 0
  %6424 = vmatpush1.bf16.xpose.msra.mxu0 0
  %6425 = vmatprep.subr.bf16.mxu0 0
  %6426 = vmatpush1.bf16.xpose.msra.mxu0 0
  %6427 = vmatprep.subr.bf16.mxu0 0
  %6428 = vmatpush1.bf16.xpose.msra.mxu0 0
  %6429 = vmatprep.subr.bf16.mxu0 0
  %6430 = vmatpush1.bf16.xpose.msra.mxu0 0
  %6431 = vmatprep.subr.bf16.mxu0 0
  %6432 = vmatpush1.bf16.xpose.msra.mxu0 0
  %6433 = vmatprep.subr.bf16.mxu0 0
  %6434 = vmatpush1.bf16.xpose.msra.mxu0 0
  %6435 = vmatprep.subr.bf16.mxu0 0
  %6436 = vmatpush1.bf16.xpose.msra.mxu0 %v6419
  %6437 = vmatprep.subr.bf16.mxu0 0
  %6438 = vmatpush2.bf16.xpose.msra.mxu0 0
  %6439 = vmatprep.subr.bf16.mxu0 0
  %6440 = vmatpush2.bf16.xpose.msra.mxu0 0
  %6441 = vmatprep.subr.bf16.mxu0 0
  %6442 = vmatpush2.bf16.xpose.msra.mxu0 0
  %6443 = vmatprep.subr.bf16.mxu0 0
  %6444 = vmatpush2.bf16.xpose.msra.mxu0 0
  %6445 = vmatprep.subr.bf16.mxu0 0
  %6446 = vmatpush2.bf16.xpose.msra.mxu0 0
  %6447 = vmatprep.subr.bf16.mxu0 0
  %6448 = vmatpush2.bf16.xpose.msra.mxu0 0
  %6449 = vmatprep.subr.bf16.mxu0 0
  %6450 = vmatpush2.bf16.xpose.msra.mxu0 0
  %6451 = vmatprep.subr.bf16.mxu0 0
  %6452 = vmatpush2.bf16.xpose.msra.mxu0 0
  %6453 = vmatprep.mubr.bf16.mxu0 0
  %6454 = vmatmul.mubr.bf16.gmra.mxu0 %v6416
  %v6455 = vpop.f32.mrf.mxu0
  %v6456 = vadd.f32 %v119, %v6455
  %v6457 = vpop.f32.mrf.mxu0
  %v6458 = vpop.f32.mrf.mxu0
  %v6459 = vadd.f32 %v120, %v6458
  %v6460 = vpop.f32.mrf.mxu0
  %6461 = vdwg.mxu0
  %6463 = vrot.lane.b32.xlu0 %v5422, 96
  %v6464 = vpop.permute.xlu0 %6463
  %6466 = vrot.lane.b32.xlu0 %v5430, 96
  %v6467 = vpop.permute.xlu0 %6466
  %v6469 = vsel %vm535, %v6464, 0
  %v6472 = vsel %vm535, %v6467, 0
  %6474 = vmatprep.subr.bf16.mxu0 0
  %6475 = vmatpush1.bf16.xpose.msra.mxu0 0
  %6476 = vmatprep.subr.bf16.mxu0 0
  %6477 = vmatpush1.bf16.xpose.msra.mxu0 0
  %6478 = vmatprep.subr.bf16.mxu0 0
  %6479 = vmatpush1.bf16.xpose.msra.mxu0 0
  %6480 = vmatprep.subr.bf16.mxu0 0
  %6481 = vmatpush1.bf16.xpose.msra.mxu0 0
  %6482 = vmatprep.subr.bf16.mxu0 0
  %6483 = vmatpush1.bf16.xpose.msra.mxu0 0
  %6484 = vmatprep.subr.bf16.mxu0 0
  %6485 = vmatpush1.bf16.xpose.msra.mxu0 0
  %6486 = vmatprep.subr.bf16.mxu0 0
  %6487 = vmatpush1.bf16.xpose.msra.mxu0 0
  %6488 = vmatprep.subr.bf16.mxu0 0
  %6489 = vmatpush1.bf16.xpose.msra.mxu0 %v6472
  %6490 = vmatprep.subr.bf16.mxu0 0
  %6491 = vmatpush2.bf16.xpose.msra.mxu0 0
  %6492 = vmatprep.subr.bf16.mxu0 0
  %6493 = vmatpush2.bf16.xpose.msra.mxu0 0
  %6494 = vmatprep.subr.bf16.mxu0 0
  %6495 = vmatpush2.bf16.xpose.msra.mxu0 0
  %6496 = vmatprep.subr.bf16.mxu0 0
  %6497 = vmatpush2.bf16.xpose.msra.mxu0 0
  %6498 = vmatprep.subr.bf16.mxu0 0
  %6499 = vmatpush2.bf16.xpose.msra.mxu0 0
  %6500 = vmatprep.subr.bf16.mxu0 0
  %6501 = vmatpush2.bf16.xpose.msra.mxu0 0
  %6502 = vmatprep.subr.bf16.mxu0 0
  %6503 = vmatpush2.bf16.xpose.msra.mxu0 0
  %6504 = vmatprep.subr.bf16.mxu0 0
  %6505 = vmatpush2.bf16.xpose.msra.mxu0 0
  %6506 = vmatprep.mubr.bf16.mxu0 0
  %6507 = vmatmul.mubr.bf16.gmra.mxu0 %v6469
  %v6508 = vpop.f32.mrf.mxu0
  %v6509 = vadd.f32 %v121, %v6508
  %v6510 = vpop.f32.mrf.mxu0
  %v6511 = vpop.f32.mrf.mxu0
  %v6512 = vadd.f32 %v122, %v6511
  %v6513 = vpop.f32.mrf.mxu0
  %6514 = vdwg.mxu0
  %6516 = vrot.lane.b32.xlu0 %v5423, 96
  %v6517 = vpop.permute.xlu0 %6516
  %6519 = vrot.lane.b32.xlu0 %v5431, 96
  %v6520 = vpop.permute.xlu0 %6519
  %v6522 = vsel %vm535, %v6517, 0
  %v6525 = vsel %vm535, %v6520, 0
  %6527 = vmatprep.subr.bf16.mxu0 0
  %6528 = vmatpush1.bf16.xpose.msra.mxu0 0
  %6529 = vmatprep.subr.bf16.mxu0 0
  %6530 = vmatpush1.bf16.xpose.msra.mxu0 0
  %6531 = vmatprep.subr.bf16.mxu0 0
  %6532 = vmatpush1.bf16.xpose.msra.mxu0 0
  %6533 = vmatprep.subr.bf16.mxu0 0
  %6534 = vmatpush1.bf16.xpose.msra.mxu0 0
  %6535 = vmatprep.subr.bf16.mxu0 0
  %6536 = vmatpush1.bf16.xpose.msra.mxu0 0
  %6537 = vmatprep.subr.bf16.mxu0 0
  %6538 = vmatpush1.bf16.xpose.msra.mxu0 0
  %6539 = vmatprep.subr.bf16.mxu0 0
  %6540 = vmatpush1.bf16.xpose.msra.mxu0 0
  %6541 = vmatprep.subr.bf16.mxu0 0
  %6542 = vmatpush1.bf16.xpose.msra.mxu0 %v6525
  %6543 = vmatprep.subr.bf16.mxu0 0
  %6544 = vmatpush2.bf16.xpose.msra.mxu0 0
  %6545 = vmatprep.subr.bf16.mxu0 0
  %6546 = vmatpush2.bf16.xpose.msra.mxu0 0
  %6547 = vmatprep.subr.bf16.mxu0 0
  %6548 = vmatpush2.bf16.xpose.msra.mxu0 0
  %6549 = vmatprep.subr.bf16.mxu0 0
  %6550 = vmatpush2.bf16.xpose.msra.mxu0 0
  %6551 = vmatprep.subr.bf16.mxu0 0
  %6552 = vmatpush2.bf16.xpose.msra.mxu0 0
  %6553 = vmatprep.subr.bf16.mxu0 0
  %6554 = vmatpush2.bf16.xpose.msra.mxu0 0
  %6555 = vmatprep.subr.bf16.mxu0 0
  %6556 = vmatpush2.bf16.xpose.msra.mxu0 0
  %6557 = vmatprep.subr.bf16.mxu0 0
  %6558 = vmatpush2.bf16.xpose.msra.mxu0 0
  %6559 = vmatprep.mubr.bf16.mxu0 0
  %6560 = vmatmul.mubr.bf16.gmra.mxu0 %v6522
  %v6561 = vpop.f32.mrf.mxu0
  %v6562 = vadd.f32 %v123, %v6561
  %v6563 = vpop.f32.mrf.mxu0
  %v6564 = vpop.f32.mrf.mxu0
  %v6565 = vadd.f32 %v124, %v6564
  %v6566 = vpop.f32.mrf.mxu0
  %6567 = vdwg.mxu0
  %6569 = vrot.lane.b32.xlu0 %v5424, 96
  %v6570 = vpop.permute.xlu0 %6569
  %6572 = vrot.lane.b32.xlu0 %v5432, 96
  %v6573 = vpop.permute.xlu0 %6572
  %v6575 = vsel %vm535, %v6570, 0
  %v6578 = vsel %vm535, %v6573, 0
  %6580 = vmatprep.subr.bf16.mxu0 0
  %6581 = vmatpush1.bf16.xpose.msra.mxu0 0
  %6582 = vmatprep.subr.bf16.mxu0 0
  %6583 = vmatpush1.bf16.xpose.msra.mxu0 0
  %6584 = vmatprep.subr.bf16.mxu0 0
  %6585 = vmatpush1.bf16.xpose.msra.mxu0 0
  %6586 = vmatprep.subr.bf16.mxu0 0
  %6587 = vmatpush1.bf16.xpose.msra.mxu0 0
  %6588 = vmatprep.subr.bf16.mxu0 0
  %6589 = vmatpush1.bf16.xpose.msra.mxu0 0
  %6590 = vmatprep.subr.bf16.mxu0 0
  %6591 = vmatpush1.bf16.xpose.msra.mxu0 0
  %6592 = vmatprep.subr.bf16.mxu0 0
  %6593 = vmatpush1.bf16.xpose.msra.mxu0 0
  %6594 = vmatprep.subr.bf16.mxu0 0
  %6595 = vmatpush1.bf16.xpose.msra.mxu0 %v6578
  %6596 = vmatprep.subr.bf16.mxu0 0
  %6597 = vmatpush2.bf16.xpose.msra.mxu0 0
  %6598 = vmatprep.subr.bf16.mxu0 0
  %6599 = vmatpush2.bf16.xpose.msra.mxu0 0
  %6600 = vmatprep.subr.bf16.mxu0 0
  %6601 = vmatpush2.bf16.xpose.msra.mxu0 0
  %6602 = vmatprep.subr.bf16.mxu0 0
  %6603 = vmatpush2.bf16.xpose.msra.mxu0 0
  %6604 = vmatprep.subr.bf16.mxu0 0
  %6605 = vmatpush2.bf16.xpose.msra.mxu0 0
  %6606 = vmatprep.subr.bf16.mxu0 0
  %6607 = vmatpush2.bf16.xpose.msra.mxu0 0
  %6608 = vmatprep.subr.bf16.mxu0 0
  %6609 = vmatpush2.bf16.xpose.msra.mxu0 0
  %6610 = vmatprep.subr.bf16.mxu0 0
  %6611 = vmatpush2.bf16.xpose.msra.mxu0 0
  %6612 = vmatprep.mubr.bf16.mxu0 0
  %6613 = vmatmul.mubr.bf16.gmra.mxu0 %v6575
  %v6614 = vpop.f32.mrf.mxu0
  %v6615 = vadd.f32 %v125, %v6614
  %v6616 = vpop.f32.mrf.mxu0
  %v6617 = vpop.f32.mrf.mxu0
  %v6618 = vadd.f32 %v126, %v6617
  %v6619 = vpop.f32.mrf.mxu0
  %6620 = vdwg.mxu0
  %6622 = vrot.lane.b32.xlu0 %v5425, 96
  %v6623 = vpop.permute.xlu0 %6622
  %6625 = vrot.lane.b32.xlu0 %v5433, 96
  %v6626 = vpop.permute.xlu0 %6625
  %v6628 = vsel %vm535, %v6623, 0
  %v6631 = vsel %vm535, %v6626, 0
  %6633 = vmatprep.subr.bf16.mxu0 0
  %6634 = vmatpush1.bf16.xpose.msra.mxu0 0
  %6635 = vmatprep.subr.bf16.mxu0 0
  %6636 = vmatpush1.bf16.xpose.msra.mxu0 0
  %6637 = vmatprep.subr.bf16.mxu0 0
  %6638 = vmatpush1.bf16.xpose.msra.mxu0 0
  %6639 = vmatprep.subr.bf16.mxu0 0
  %6640 = vmatpush1.bf16.xpose.msra.mxu0 0
  %6641 = vmatprep.subr.bf16.mxu0 0
  %6642 = vmatpush1.bf16.xpose.msra.mxu0 0
  %6643 = vmatprep.subr.bf16.mxu0 0
  %6644 = vmatpush1.bf16.xpose.msra.mxu0 0
  %6645 = vmatprep.subr.bf16.mxu0 0
  %6646 = vmatpush1.bf16.xpose.msra.mxu0 0
  %6647 = vmatprep.subr.bf16.mxu0 0
  %6648 = vmatpush1.bf16.xpose.msra.mxu0 %v6631
  %6649 = vmatprep.subr.bf16.mxu0 0
  %6650 = vmatpush2.bf16.xpose.msra.mxu0 0
  %6651 = vmatprep.subr.bf16.mxu0 0
  %6652 = vmatpush2.bf16.xpose.msra.mxu0 0
  %6653 = vmatprep.subr.bf16.mxu0 0
  %6654 = vmatpush2.bf16.xpose.msra.mxu0 0
  %6655 = vmatprep.subr.bf16.mxu0 0
  %6656 = vmatpush2.bf16.xpose.msra.mxu0 0
  %6657 = vmatprep.subr.bf16.mxu0 0
  %6658 = vmatpush2.bf16.xpose.msra.mxu0 0
  %6659 = vmatprep.subr.bf16.mxu0 0
  %6660 = vmatpush2.bf16.xpose.msra.mxu0 0
  %6661 = vmatprep.subr.bf16.mxu0 0
  %6662 = vmatpush2.bf16.xpose.msra.mxu0 0
  %6663 = vmatprep.subr.bf16.mxu0 0
  %6664 = vmatpush2.bf16.xpose.msra.mxu0 0
  %6665 = vmatprep.mubr.bf16.mxu0 0
  %6666 = vmatmul.mubr.bf16.gmra.mxu0 %v6628
  %v6667 = vpop.f32.mrf.mxu0
  %v6668 = vadd.f32 %v127, %v6667
  %v6669 = vpop.f32.mrf.mxu0
  %v6670 = vpop.f32.mrf.mxu0
  %v6671 = vadd.f32 %v128, %v6670
  %v6672 = vpop.f32.mrf.mxu0
  %6673 = vdwg.mxu0
  %6675 = vrot.lane.b32.xlu0 %v5426, 96
  %v6676 = vpop.permute.xlu0 %6675
  %6678 = vrot.lane.b32.xlu0 %v5434, 96
  %v6679 = vpop.permute.xlu0 %6678
  %v6681 = vsel %vm535, %v6676, 0
  %v6684 = vsel %vm535, %v6679, 0
  %6686 = vmatprep.subr.bf16.mxu0 0
  %6687 = vmatpush1.bf16.xpose.msra.mxu0 0
  %6688 = vmatprep.subr.bf16.mxu0 0
  %6689 = vmatpush1.bf16.xpose.msra.mxu0 0
  %6690 = vmatprep.subr.bf16.mxu0 0
  %6691 = vmatpush1.bf16.xpose.msra.mxu0 0
  %6692 = vmatprep.subr.bf16.mxu0 0
  %6693 = vmatpush1.bf16.xpose.msra.mxu0 0
  %6694 = vmatprep.subr.bf16.mxu0 0
  %6695 = vmatpush1.bf16.xpose.msra.mxu0 0
  %6696 = vmatprep.subr.bf16.mxu0 0
  %6697 = vmatpush1.bf16.xpose.msra.mxu0 0
  %6698 = vmatprep.subr.bf16.mxu0 0
  %6699 = vmatpush1.bf16.xpose.msra.mxu0 0
  %6700 = vmatprep.subr.bf16.mxu0 0
  %6701 = vmatpush1.bf16.xpose.msra.mxu0 %v6684
  %6702 = vmatprep.subr.bf16.mxu0 0
  %6703 = vmatpush2.bf16.xpose.msra.mxu0 0
  %6704 = vmatprep.subr.bf16.mxu0 0
  %6705 = vmatpush2.bf16.xpose.msra.mxu0 0
  %6706 = vmatprep.subr.bf16.mxu0 0
  %6707 = vmatpush2.bf16.xpose.msra.mxu0 0
  %6708 = vmatprep.subr.bf16.mxu0 0
  %6709 = vmatpush2.bf16.xpose.msra.mxu0 0
  %6710 = vmatprep.subr.bf16.mxu0 0
  %6711 = vmatpush2.bf16.xpose.msra.mxu0 0
  %6712 = vmatprep.subr.bf16.mxu0 0
  %6713 = vmatpush2.bf16.xpose.msra.mxu0 0
  %6714 = vmatprep.subr.bf16.mxu0 0
  %6715 = vmatpush2.bf16.xpose.msra.mxu0 0
  %6716 = vmatprep.subr.bf16.mxu0 0
  %6717 = vmatpush2.bf16.xpose.msra.mxu0 0
  %6718 = vmatprep.mubr.bf16.mxu0 0
  %6719 = vmatmul.mubr.bf16.gmra.mxu0 %v6681
  %v6720 = vpop.f32.mrf.mxu0
  %v6721 = vadd.f32 %v129, %v6720
  %v6722 = vpop.f32.mrf.mxu0
  %v6723 = vpop.f32.mrf.mxu0
  %v6724 = vadd.f32 %v130, %v6723
  %v6725 = vpop.f32.mrf.mxu0
  %6726 = vdwg.mxu0
  %6728 = vrot.lane.b32.xlu0 %v5427, 96
  %v6729 = vpop.permute.xlu0 %6728
  %6731 = vrot.lane.b32.xlu0 %v5435, 96
  %v6732 = vpop.permute.xlu0 %6731
  %v6734 = vsel %vm535, %v6729, 0
  %v6737 = vsel %vm535, %v6732, 0
  %6739 = vmatprep.subr.bf16.mxu0 0
  %6740 = vmatpush1.bf16.xpose.msra.mxu0 0
  %6741 = vmatprep.subr.bf16.mxu0 0
  %6742 = vmatpush1.bf16.xpose.msra.mxu0 0
  %6743 = vmatprep.subr.bf16.mxu0 0
  %6744 = vmatpush1.bf16.xpose.msra.mxu0 0
  %6745 = vmatprep.subr.bf16.mxu0 0
  %6746 = vmatpush1.bf16.xpose.msra.mxu0 0
  %6747 = vmatprep.subr.bf16.mxu0 0
  %6748 = vmatpush1.bf16.xpose.msra.mxu0 0
  %6749 = vmatprep.subr.bf16.mxu0 0
  %6750 = vmatpush1.bf16.xpose.msra.mxu0 0
  %6751 = vmatprep.subr.bf16.mxu0 0
  %6752 = vmatpush1.bf16.xpose.msra.mxu0 0
  %6753 = vmatprep.subr.bf16.mxu0 0
  %6754 = vmatpush1.bf16.xpose.msra.mxu0 %v6737
  %6755 = vmatprep.subr.bf16.mxu0 0
  %6756 = vmatpush2.bf16.xpose.msra.mxu0 0
  %6757 = vmatprep.subr.bf16.mxu0 0
  %6758 = vmatpush2.bf16.xpose.msra.mxu0 0
  %6759 = vmatprep.subr.bf16.mxu0 0
  %6760 = vmatpush2.bf16.xpose.msra.mxu0 0
  %6761 = vmatprep.subr.bf16.mxu0 0
  %6762 = vmatpush2.bf16.xpose.msra.mxu0 0
  %6763 = vmatprep.subr.bf16.mxu0 0
  %6764 = vmatpush2.bf16.xpose.msra.mxu0 0
  %6765 = vmatprep.subr.bf16.mxu0 0
  %6766 = vmatpush2.bf16.xpose.msra.mxu0 0
  %6767 = vmatprep.subr.bf16.mxu0 0
  %6768 = vmatpush2.bf16.xpose.msra.mxu0 0
  %6769 = vmatprep.subr.bf16.mxu0 0
  %6770 = vmatpush2.bf16.xpose.msra.mxu0 0
  %6771 = vmatprep.mubr.bf16.mxu0 0
  %6772 = vmatmul.mubr.bf16.gmra.mxu0 %v6734
  %v6773 = vpop.f32.mrf.mxu0
  %v6774 = vadd.f32 %v131, %v6773
  %v6775 = vpop.f32.mrf.mxu0
  %v6776 = vpop.f32.mrf.mxu0
  %v6777 = vadd.f32 %v132, %v6776
  %v6778 = vpop.f32.mrf.mxu0
  %6779 = vdwg.mxu0
  %v6780 = vsel %vm912, %v6403, -inf
  %6781 = vmax.xlane.f32.xlu0 %v6780
  %v6782 = vpop.xlane.xlu0 %6781
  %v6783 = vsel %vm912, %v6406, -inf
  %6784 = vmax.xlane.f32.xlu0 %v6783
  %v6785 = vpop.xlane.xlu0 %6784
  %v6786 = vsel %vm912, %v6456, -inf
  %6787 = vmax.xlane.f32.xlu0 %v6786
  %v6788 = vpop.xlane.xlu0 %6787
  %v6789 = vsel %vm912, %v6459, -inf
  %6790 = vmax.xlane.f32.xlu0 %v6789
  %v6791 = vpop.xlane.xlu0 %6790
  %v6792 = vsel %vm912, %v6509, -inf
  %6793 = vmax.xlane.f32.xlu0 %v6792
  %v6794 = vpop.xlane.xlu0 %6793
  %v6795 = vsel %vm912, %v6512, -inf
  %6796 = vmax.xlane.f32.xlu0 %v6795
  %v6797 = vpop.xlane.xlu0 %6796
  %v6798 = vsel %vm912, %v6562, -inf
  %6799 = vmax.xlane.f32.xlu0 %v6798
  %v6800 = vpop.xlane.xlu0 %6799
  %v6801 = vsel %vm912, %v6565, -inf
  %6802 = vmax.xlane.f32.xlu0 %v6801
  %v6803 = vpop.xlane.xlu0 %6802
  %v6804 = vsel %vm912, %v6615, -inf
  %6805 = vmax.xlane.f32.xlu0 %v6804
  %v6806 = vpop.xlane.xlu0 %6805
  %v6807 = vsel %vm912, %v6618, -inf
  %6808 = vmax.xlane.f32.xlu0 %v6807
  %v6809 = vpop.xlane.xlu0 %6808
  %v6810 = vsel %vm912, %v6668, -inf
  %6811 = vmax.xlane.f32.xlu0 %v6810
  %v6812 = vpop.xlane.xlu0 %6811
  %v6813 = vsel %vm912, %v6671, -inf
  %6814 = vmax.xlane.f32.xlu0 %v6813
  %v6815 = vpop.xlane.xlu0 %6814
  %v6816 = vsel %vm912, %v6721, -inf
  %6817 = vmax.xlane.f32.xlu0 %v6816
  %v6818 = vpop.xlane.xlu0 %6817
  %v6819 = vsel %vm912, %v6724, -inf
  %6820 = vmax.xlane.f32.xlu0 %v6819
  %v6821 = vpop.xlane.xlu0 %6820
  %v6822 = vsel %vm912, %v6774, -inf
  %6823 = vmax.xlane.f32.xlu0 %v6822
  %v6824 = vpop.xlane.xlu0 %6823
  %v6825 = vsel %vm912, %v6777, -inf
  %6826 = vmax.xlane.f32.xlu0 %v6825
  %v6827 = vpop.xlane.xlu0 %6826
  %v6828 = vsub.f32 %v6403, %v6782
  %v6829 = vsub.f32 %v6406, %v6785
  %v6830 = vsub.f32 %v6456, %v6788
  %v6831 = vsub.f32 %v6459, %v6791
  %v6832 = vsub.f32 %v6509, %v6794
  %v6833 = vsub.f32 %v6512, %v6797
  %v6834 = vsub.f32 %v6562, %v6800
  %v6835 = vsub.f32 %v6565, %v6803
  %v6836 = vsub.f32 %v6615, %v6806
  %v6837 = vsub.f32 %v6618, %v6809
  %v6838 = vsub.f32 %v6668, %v6812
  %v6839 = vsub.f32 %v6671, %v6815
  %v6840 = vsub.f32 %v6721, %v6818
  %v6841 = vsub.f32 %v6724, %v6821
  %v6842 = vsub.f32 %v6774, %v6824
  %v6843 = vsub.f32 %v6777, %v6827
  %v6844 = vmul.f32 %v6828, 1.442695
  %v6845 = vpow.pop %v6844
  %v6846 = vmul.f32 %v6829, 1.442695
  %v6847 = vpow.pop %v6846
  %v6848 = vmul.f32 %v6830, 1.442695
  %v6849 = vpow.pop %v6848
  %v6850 = vmul.f32 %v6831, 1.442695
  %v6851 = vpow.pop %v6850
  %v6852 = vmul.f32 %v6832, 1.442695
  %v6853 = vpow.pop %v6852
  %v6854 = vmul.f32 %v6833, 1.442695
  %v6855 = vpow.pop %v6854
  %v6856 = vmul.f32 %v6834, 1.442695
  %v6857 = vpow.pop %v6856
  %v6858 = vmul.f32 %v6835, 1.442695
  %v6859 = vpow.pop %v6858
  %v6860 = vmul.f32 %v6836, 1.442695
  %v6861 = vpow.pop %v6860
  %v6862 = vmul.f32 %v6837, 1.442695
  %v6863 = vpow.pop %v6862
  %v6864 = vmul.f32 %v6838, 1.442695
  %v6865 = vpow.pop %v6864
  %v6866 = vmul.f32 %v6839, 1.442695
  %v6867 = vpow.pop %v6866
  %v6868 = vmul.f32 %v6840, 1.442695
  %v6869 = vpow.pop %v6868
  %v6870 = vmul.f32 %v6841, 1.442695
  %v6871 = vpow.pop %v6870
  %v6872 = vmul.f32 %v6842, 1.442695
  %v6873 = vpow.pop %v6872
  %v6874 = vmul.f32 %v6843, 1.442695
  %v6875 = vpow.pop %v6874
  %v6876 = vsel %vm912, %v6845, 0.0
  %6877 = vadd.xlane.f32.xlu0 %v6876
  %v6878 = vpop.xlane.xlu0 %6877
  %v6879 = vsel %vm912, %v6847, 0.0
  %6880 = vadd.xlane.f32.xlu0 %v6879
  %v6881 = vpop.xlane.xlu0 %6880
  %v6882 = vsel %vm912, %v6849, 0.0
  %6883 = vadd.xlane.f32.xlu0 %v6882
  %v6884 = vpop.xlane.xlu0 %6883
  %v6885 = vsel %vm912, %v6851, 0.0
  %6886 = vadd.xlane.f32.xlu0 %v6885
  %v6887 = vpop.xlane.xlu0 %6886
  %v6888 = vsel %vm912, %v6853, 0.0
  %6889 = vadd.xlane.f32.xlu0 %v6888
  %v6890 = vpop.xlane.xlu0 %6889
  %v6891 = vsel %vm912, %v6855, 0.0
  %6892 = vadd.xlane.f32.xlu0 %v6891
  %v6893 = vpop.xlane.xlu0 %6892
  %v6894 = vsel %vm912, %v6857, 0.0
  %6895 = vadd.xlane.f32.xlu0 %v6894
  %v6896 = vpop.xlane.xlu0 %6895
  %v6897 = vsel %vm912, %v6859, 0.0
  %6898 = vadd.xlane.f32.xlu0 %v6897
  %v6899 = vpop.xlane.xlu0 %6898
  %v6900 = vsel %vm912, %v6861, 0.0
  %6901 = vadd.xlane.f32.xlu0 %v6900
  %v6902 = vpop.xlane.xlu0 %6901
  %v6903 = vsel %vm912, %v6863, 0.0
  %6904 = vadd.xlane.f32.xlu0 %v6903
  %v6905 = vpop.xlane.xlu0 %6904
  %v6906 = vsel %vm912, %v6865, 0.0
  %6907 = vadd.xlane.f32.xlu0 %v6906
  %v6908 = vpop.xlane.xlu0 %6907
  %v6909 = vsel %vm912, %v6867, 0.0
  %6910 = vadd.xlane.f32.xlu0 %v6909
  %v6911 = vpop.xlane.xlu0 %6910
  %v6912 = vsel %vm912, %v6869, 0.0
  %6913 = vadd.xlane.f32.xlu0 %v6912
  %v6914 = vpop.xlane.xlu0 %6913
  %v6915 = vsel %vm912, %v6871, 0.0
  %6916 = vadd.xlane.f32.xlu0 %v6915
  %v6917 = vpop.xlane.xlu0 %6916
  %v6918 = vsel %vm912, %v6873, 0.0
  %6919 = vadd.xlane.f32.xlu0 %v6918
  %v6920 = vpop.xlane.xlu0 %6919
  %v6921 = vsel %vm912, %v6875, 0.0
  %6922 = vadd.xlane.f32.xlu0 %v6921
  %v6923 = vpop.xlane.xlu0 %6922
  %v6924 = vrcp.pop %v6878
  %v6925 = vrcp.pop %v6881
  %v6926 = vrcp.pop %v6884
  %v6927 = vrcp.pop %v6887
  %v6928 = vrcp.pop %v6890
  %v6929 = vrcp.pop %v6893
  %v6930 = vrcp.pop %v6896
  %v6931 = vrcp.pop %v6899
  %v6932 = vrcp.pop %v6902
  %v6933 = vrcp.pop %v6905
  %v6934 = vrcp.pop %v6908
  %v6935 = vrcp.pop %v6911
  %v6936 = vrcp.pop %v6914
  %v6937 = vrcp.pop %v6917
  %v6938 = vrcp.pop %v6920
  %v6939 = vrcp.pop %v6923
  %v6940 = vmul.f32 %v6845, %v6924
  %v6941 = vmul.f32 %v6847, %v6925
  %v6942 = vmul.f32 %v6849, %v6926
  %v6943 = vmul.f32 %v6851, %v6927
  %v6944 = vmul.f32 %v6853, %v6928
  %v6945 = vmul.f32 %v6855, %v6929
  %v6946 = vmul.f32 %v6857, %v6930
  %v6947 = vmul.f32 %v6859, %v6931
  %v6948 = vmul.f32 %v6861, %v6932
  %v6949 = vmul.f32 %v6863, %v6933
  %v6950 = vmul.f32 %v6865, %v6934
  %v6951 = vmul.f32 %v6867, %v6935
  %v6952 = vmul.f32 %v6869, %v6936
  %v6953 = vmul.f32 %v6871, %v6937
  %v6954 = vmul.f32 %v6873, %v6938
  %v6955 = vmul.f32 %v6875, %v6939
  %v6956 = vpack.c.bf16 %v6941, %v6940
  %v6957 = vpack.c.bf16 %v6943, %v6942
  %v6958 = vpack.c.bf16 %v6945, %v6944
  %v6959 = vpack.c.bf16 %v6947, %v6946
  %v6960 = vpack.c.bf16 %v6949, %v6948
  %v6961 = vpack.c.bf16 %v6951, %v6950
  %v6962 = vpack.c.bf16 %v6953, %v6952
  %v6963 = vpack.c.bf16 %v6955, %v6954
  %6965 = vrot.lane.b32.xlu0 %v5436, 96
  %v6966 = vpop.permute.xlu0 %6965
  %v6969 = vsel %vm912, %v6956, 0
  %6971 = vmatprep.subr.bf16.mxu0 0
  %6972 = vmatpush1.bf16.msra.mxu0 0
  %6973 = vmatprep.subr.bf16.mxu0 0
  %6974 = vmatpush1.bf16.msra.mxu0 0
  %6975 = vmatprep.subr.bf16.mxu0 0
  %6976 = vmatpush1.bf16.msra.mxu0 0
  %6977 = vmatprep.subr.bf16.mxu0 0
  %6978 = vmatpush1.bf16.msra.mxu0 0
  %6979 = vmatprep.subr.bf16.mxu0 0
  %6980 = vmatpush1.bf16.msra.mxu0 0
  %6981 = vmatprep.subr.bf16.mxu0 0
  %6982 = vmatpush1.bf16.msra.mxu0 0
  %6983 = vmatprep.subr.bf16.mxu0 0
  %6984 = vmatpush1.bf16.msra.mxu0 0
  %6985 = vmatprep.subr.bf16.mxu0 0
  %6986 = vmatpush1.bf16.msra.mxu0 %v6966
  %6987 = vmatprep.subr.bf16.mxu0 0
  %6988 = vmatpush2.bf16.msra.mxu0 0
  %6989 = vmatprep.subr.bf16.mxu0 0
  %6990 = vmatpush2.bf16.msra.mxu0 0
  %6991 = vmatprep.subr.bf16.mxu0 0
  %6992 = vmatpush2.bf16.msra.mxu0 0
  %6993 = vmatprep.subr.bf16.mxu0 0
  %6994 = vmatpush2.bf16.msra.mxu0 0
  %6995 = vmatprep.subr.bf16.mxu0 0
  %6996 = vmatpush2.bf16.msra.mxu0 0
  %6997 = vmatprep.subr.bf16.mxu0 0
  %6998 = vmatpush2.bf16.msra.mxu0 0
  %6999 = vmatprep.subr.bf16.mxu0 0
  %7000 = vmatpush2.bf16.msra.mxu0 0
  %7001 = vmatprep.subr.bf16.mxu0 0
  %7002 = vmatpush2.bf16.msra.mxu0 0
  %7003 = vmatprep.mubr.bf16.mxu0 0
  %7004 = vmatmul.mubr.bf16.gmra.mxu0 %v6969
  %v7005 = vpop.f32.mrf.mxu0
  %v7006 = vadd.f32 0.0, %v7005
  %v7007 = vpop.f32.mrf.mxu0
  %v7008 = vpop.f32.mrf.mxu0
  %v7009 = vadd.f32 0.0, %v7008
  %v7010 = vpop.f32.mrf.mxu0
  %7011 = vdwg.mxu0
  %7013 = vrot.lane.b32.xlu0 %v5437, 96
  %v7014 = vpop.permute.xlu0 %7013
  %v7017 = vsel %vm912, %v6957, 0
  %7019 = vmatprep.subr.bf16.mxu0 0
  %7020 = vmatpush1.bf16.msra.mxu0 0
  %7021 = vmatprep.subr.bf16.mxu0 0
  %7022 = vmatpush1.bf16.msra.mxu0 0
  %7023 = vmatprep.subr.bf16.mxu0 0
  %7024 = vmatpush1.bf16.msra.mxu0 0
  %7025 = vmatprep.subr.bf16.mxu0 0
  %7026 = vmatpush1.bf16.msra.mxu0 0
  %7027 = vmatprep.subr.bf16.mxu0 0
  %7028 = vmatpush1.bf16.msra.mxu0 0
  %7029 = vmatprep.subr.bf16.mxu0 0
  %7030 = vmatpush1.bf16.msra.mxu0 0
  %7031 = vmatprep.subr.bf16.mxu0 0
  %7032 = vmatpush1.bf16.msra.mxu0 0
  %7033 = vmatprep.subr.bf16.mxu0 0
  %7034 = vmatpush1.bf16.msra.mxu0 %v7014
  %7035 = vmatprep.subr.bf16.mxu0 0
  %7036 = vmatpush2.bf16.msra.mxu0 0
  %7037 = vmatprep.subr.bf16.mxu0 0
  %7038 = vmatpush2.bf16.msra.mxu0 0
  %7039 = vmatprep.subr.bf16.mxu0 0
  %7040 = vmatpush2.bf16.msra.mxu0 0
  %7041 = vmatprep.subr.bf16.mxu0 0
  %7042 = vmatpush2.bf16.msra.mxu0 0
  %7043 = vmatprep.subr.bf16.mxu0 0
  %7044 = vmatpush2.bf16.msra.mxu0 0
  %7045 = vmatprep.subr.bf16.mxu0 0
  %7046 = vmatpush2.bf16.msra.mxu0 0
  %7047 = vmatprep.subr.bf16.mxu0 0
  %7048 = vmatpush2.bf16.msra.mxu0 0
  %7049 = vmatprep.subr.bf16.mxu0 0
  %7050 = vmatpush2.bf16.msra.mxu0 0
  %7051 = vmatprep.mubr.bf16.mxu0 0
  %7052 = vmatmul.mubr.bf16.gmra.mxu0 %v7017
  %v7053 = vpop.f32.mrf.mxu0
  %v7054 = vadd.f32 0.0, %v7053
  %v7055 = vpop.f32.mrf.mxu0
  %v7056 = vpop.f32.mrf.mxu0
  %v7057 = vadd.f32 0.0, %v7056
  %v7058 = vpop.f32.mrf.mxu0
  %7059 = vdwg.mxu0
  %7061 = vrot.lane.b32.xlu0 %v5438, 96
  %v7062 = vpop.permute.xlu0 %7061
  %v7065 = vsel %vm912, %v6958, 0
  %7067 = vmatprep.subr.bf16.mxu0 0
  %7068 = vmatpush1.bf16.msra.mxu0 0
  %7069 = vmatprep.subr.bf16.mxu0 0
  %7070 = vmatpush1.bf16.msra.mxu0 0
  %7071 = vmatprep.subr.bf16.mxu0 0
  %7072 = vmatpush1.bf16.msra.mxu0 0
  %7073 = vmatprep.subr.bf16.mxu0 0
  %7074 = vmatpush1.bf16.msra.mxu0 0
  %7075 = vmatprep.subr.bf16.mxu0 0
  %7076 = vmatpush1.bf16.msra.mxu0 0
  %7077 = vmatprep.subr.bf16.mxu0 0
  %7078 = vmatpush1.bf16.msra.mxu0 0
  %7079 = vmatprep.subr.bf16.mxu0 0
  %7080 = vmatpush1.bf16.msra.mxu0 0
  %7081 = vmatprep.subr.bf16.mxu0 0
  %7082 = vmatpush1.bf16.msra.mxu0 %v7062
  %7083 = vmatprep.subr.bf16.mxu0 0
  %7084 = vmatpush2.bf16.msra.mxu0 0
  %7085 = vmatprep.subr.bf16.mxu0 0
  %7086 = vmatpush2.bf16.msra.mxu0 0
  %7087 = vmatprep.subr.bf16.mxu0 0
  %7088 = vmatpush2.bf16.msra.mxu0 0
  %7089 = vmatprep.subr.bf16.mxu0 0
  %7090 = vmatpush2.bf16.msra.mxu0 0
  %7091 = vmatprep.subr.bf16.mxu0 0
  %7092 = vmatpush2.bf16.msra.mxu0 0
  %7093 = vmatprep.subr.bf16.mxu0 0
  %7094 = vmatpush2.bf16.msra.mxu0 0
  %7095 = vmatprep.subr.bf16.mxu0 0
  %7096 = vmatpush2.bf16.msra.mxu0 0
  %7097 = vmatprep.subr.bf16.mxu0 0
  %7098 = vmatpush2.bf16.msra.mxu0 0
  %7099 = vmatprep.mubr.bf16.mxu0 0
  %7100 = vmatmul.mubr.bf16.gmra.mxu0 %v7065
  %v7101 = vpop.f32.mrf.mxu0
  %v7102 = vadd.f32 0.0, %v7101
  %v7103 = vpop.f32.mrf.mxu0
  %v7104 = vpop.f32.mrf.mxu0
  %v7105 = vadd.f32 0.0, %v7104
  %v7106 = vpop.f32.mrf.mxu0
  %7107 = vdwg.mxu0
  %7109 = vrot.lane.b32.xlu0 %v5439, 96
  %v7110 = vpop.permute.xlu0 %7109
  %v7113 = vsel %vm912, %v6959, 0
  %7115 = vmatprep.subr.bf16.mxu0 0
  %7116 = vmatpush1.bf16.msra.mxu0 0
  %7117 = vmatprep.subr.bf16.mxu0 0
  %7118 = vmatpush1.bf16.msra.mxu0 0
  %7119 = vmatprep.subr.bf16.mxu0 0
  %7120 = vmatpush1.bf16.msra.mxu0 0
  %7121 = vmatprep.subr.bf16.mxu0 0
  %7122 = vmatpush1.bf16.msra.mxu0 0
  %7123 = vmatprep.subr.bf16.mxu0 0
  %7124 = vmatpush1.bf16.msra.mxu0 0
  %7125 = vmatprep.subr.bf16.mxu0 0
  %7126 = vmatpush1.bf16.msra.mxu0 0
  %7127 = vmatprep.subr.bf16.mxu0 0
  %7128 = vmatpush1.bf16.msra.mxu0 0
  %7129 = vmatprep.subr.bf16.mxu0 0
  %7130 = vmatpush1.bf16.msra.mxu0 %v7110
  %7131 = vmatprep.subr.bf16.mxu0 0
  %7132 = vmatpush2.bf16.msra.mxu0 0
  %7133 = vmatprep.subr.bf16.mxu0 0
  %7134 = vmatpush2.bf16.msra.mxu0 0
  %7135 = vmatprep.subr.bf16.mxu0 0
  %7136 = vmatpush2.bf16.msra.mxu0 0
  %7137 = vmatprep.subr.bf16.mxu0 0
  %7138 = vmatpush2.bf16.msra.mxu0 0
  %7139 = vmatprep.subr.bf16.mxu0 0
  %7140 = vmatpush2.bf16.msra.mxu0 0
  %7141 = vmatprep.subr.bf16.mxu0 0
  %7142 = vmatpush2.bf16.msra.mxu0 0
  %7143 = vmatprep.subr.bf16.mxu0 0
  %7144 = vmatpush2.bf16.msra.mxu0 0
  %7145 = vmatprep.subr.bf16.mxu0 0
  %7146 = vmatpush2.bf16.msra.mxu0 0
  %7147 = vmatprep.mubr.bf16.mxu0 0
  %7148 = vmatmul.mubr.bf16.gmra.mxu0 %v7113
  %v7149 = vpop.f32.mrf.mxu0
  %v7150 = vadd.f32 0.0, %v7149
  %v7151 = vpop.f32.mrf.mxu0
  %v7152 = vpop.f32.mrf.mxu0
  %v7153 = vadd.f32 0.0, %v7152
  %v7154 = vpop.f32.mrf.mxu0
  %7155 = vdwg.mxu0
  %7157 = vrot.lane.b32.xlu0 %v5440, 96
  %v7158 = vpop.permute.xlu0 %7157
  %v7161 = vsel %vm912, %v6960, 0
  %7163 = vmatprep.subr.bf16.mxu0 0
  %7164 = vmatpush1.bf16.msra.mxu0 0
  %7165 = vmatprep.subr.bf16.mxu0 0
  %7166 = vmatpush1.bf16.msra.mxu0 0
  %7167 = vmatprep.subr.bf16.mxu0 0
  %7168 = vmatpush1.bf16.msra.mxu0 0
  %7169 = vmatprep.subr.bf16.mxu0 0
  %7170 = vmatpush1.bf16.msra.mxu0 0
  %7171 = vmatprep.subr.bf16.mxu0 0
  %7172 = vmatpush1.bf16.msra.mxu0 0
  %7173 = vmatprep.subr.bf16.mxu0 0
  %7174 = vmatpush1.bf16.msra.mxu0 0
  %7175 = vmatprep.subr.bf16.mxu0 0
  %7176 = vmatpush1.bf16.msra.mxu0 0
  %7177 = vmatprep.subr.bf16.mxu0 0
  %7178 = vmatpush1.bf16.msra.mxu0 %v7158
  %7179 = vmatprep.subr.bf16.mxu0 0
  %7180 = vmatpush2.bf16.msra.mxu0 0
  %7181 = vmatprep.subr.bf16.mxu0 0
  %7182 = vmatpush2.bf16.msra.mxu0 0
  %7183 = vmatprep.subr.bf16.mxu0 0
  %7184 = vmatpush2.bf16.msra.mxu0 0
  %7185 = vmatprep.subr.bf16.mxu0 0
  %7186 = vmatpush2.bf16.msra.mxu0 0
  %7187 = vmatprep.subr.bf16.mxu0 0
  %7188 = vmatpush2.bf16.msra.mxu0 0
  %7189 = vmatprep.subr.bf16.mxu0 0
  %7190 = vmatpush2.bf16.msra.mxu0 0
  %7191 = vmatprep.subr.bf16.mxu0 0
  %7192 = vmatpush2.bf16.msra.mxu0 0
  %7193 = vmatprep.subr.bf16.mxu0 0
  %7194 = vmatpush2.bf16.msra.mxu0 0
  %7195 = vmatprep.mubr.bf16.mxu0 0
  %7196 = vmatmul.mubr.bf16.gmra.mxu0 %v7161
  %v7197 = vpop.f32.mrf.mxu0
  %v7198 = vadd.f32 0.0, %v7197
  %v7199 = vpop.f32.mrf.mxu0
  %v7200 = vpop.f32.mrf.mxu0
  %v7201 = vadd.f32 0.0, %v7200
  %v7202 = vpop.f32.mrf.mxu0
  %7203 = vdwg.mxu0
  %7205 = vrot.lane.b32.xlu0 %v5441, 96
  %v7206 = vpop.permute.xlu0 %7205
  %v7209 = vsel %vm912, %v6961, 0
  %7211 = vmatprep.subr.bf16.mxu0 0
  %7212 = vmatpush1.bf16.msra.mxu0 0
  %7213 = vmatprep.subr.bf16.mxu0 0
  %7214 = vmatpush1.bf16.msra.mxu0 0
  %7215 = vmatprep.subr.bf16.mxu0 0
  %7216 = vmatpush1.bf16.msra.mxu0 0
  %7217 = vmatprep.subr.bf16.mxu0 0
  %7218 = vmatpush1.bf16.msra.mxu0 0
  %7219 = vmatprep.subr.bf16.mxu0 0
  %7220 = vmatpush1.bf16.msra.mxu0 0
  %7221 = vmatprep.subr.bf16.mxu0 0
  %7222 = vmatpush1.bf16.msra.mxu0 0
  %7223 = vmatprep.subr.bf16.mxu0 0
  %7224 = vmatpush1.bf16.msra.mxu0 0
  %7225 = vmatprep.subr.bf16.mxu0 0
  %7226 = vmatpush1.bf16.msra.mxu0 %v7206
  %7227 = vmatprep.subr.bf16.mxu0 0
  %7228 = vmatpush2.bf16.msra.mxu0 0
  %7229 = vmatprep.subr.bf16.mxu0 0
  %7230 = vmatpush2.bf16.msra.mxu0 0
  %7231 = vmatprep.subr.bf16.mxu0 0
  %7232 = vmatpush2.bf16.msra.mxu0 0
  %7233 = vmatprep.subr.bf16.mxu0 0
  %7234 = vmatpush2.bf16.msra.mxu0 0
  %7235 = vmatprep.subr.bf16.mxu0 0
  %7236 = vmatpush2.bf16.msra.mxu0 0
  %7237 = vmatprep.subr.bf16.mxu0 0
  %7238 = vmatpush2.bf16.msra.mxu0 0
  %7239 = vmatprep.subr.bf16.mxu0 0
  %7240 = vmatpush2.bf16.msra.mxu0 0
  %7241 = vmatprep.subr.bf16.mxu0 0
  %7242 = vmatpush2.bf16.msra.mxu0 0
  %7243 = vmatprep.mubr.bf16.mxu0 0
  %7244 = vmatmul.mubr.bf16.gmra.mxu0 %v7209
  %v7245 = vpop.f32.mrf.mxu0
  %v7246 = vadd.f32 0.0, %v7245
  %v7247 = vpop.f32.mrf.mxu0
  %v7248 = vpop.f32.mrf.mxu0
  %v7249 = vadd.f32 0.0, %v7248
  %v7250 = vpop.f32.mrf.mxu0
  %7251 = vdwg.mxu0
  %7253 = vrot.lane.b32.xlu0 %v5442, 96
  %v7254 = vpop.permute.xlu0 %7253
  %v7257 = vsel %vm912, %v6962, 0
  %7259 = vmatprep.subr.bf16.mxu0 0
  %7260 = vmatpush1.bf16.msra.mxu0 0
  %7261 = vmatprep.subr.bf16.mxu0 0
  %7262 = vmatpush1.bf16.msra.mxu0 0
  %7263 = vmatprep.subr.bf16.mxu0 0
  %7264 = vmatpush1.bf16.msra.mxu0 0
  %7265 = vmatprep.subr.bf16.mxu0 0
  %7266 = vmatpush1.bf16.msra.mxu0 0
  %7267 = vmatprep.subr.bf16.mxu0 0
  %7268 = vmatpush1.bf16.msra.mxu0 0
  %7269 = vmatprep.subr.bf16.mxu0 0
  %7270 = vmatpush1.bf16.msra.mxu0 0
  %7271 = vmatprep.subr.bf16.mxu0 0
  %7272 = vmatpush1.bf16.msra.mxu0 0
  %7273 = vmatprep.subr.bf16.mxu0 0
  %7274 = vmatpush1.bf16.msra.mxu0 %v7254
  %7275 = vmatprep.subr.bf16.mxu0 0
  %7276 = vmatpush2.bf16.msra.mxu0 0
  %7277 = vmatprep.subr.bf16.mxu0 0
  %7278 = vmatpush2.bf16.msra.mxu0 0
  %7279 = vmatprep.subr.bf16.mxu0 0
  %7280 = vmatpush2.bf16.msra.mxu0 0
  %7281 = vmatprep.subr.bf16.mxu0 0
  %7282 = vmatpush2.bf16.msra.mxu0 0
  %7283 = vmatprep.subr.bf16.mxu0 0
  %7284 = vmatpush2.bf16.msra.mxu0 0
  %7285 = vmatprep.subr.bf16.mxu0 0
  %7286 = vmatpush2.bf16.msra.mxu0 0
  %7287 = vmatprep.subr.bf16.mxu0 0
  %7288 = vmatpush2.bf16.msra.mxu0 0
  %7289 = vmatprep.subr.bf16.mxu0 0
  %7290 = vmatpush2.bf16.msra.mxu0 0
  %7291 = vmatprep.mubr.bf16.mxu0 0
  %7292 = vmatmul.mubr.bf16.gmra.mxu0 %v7257
  %v7293 = vpop.f32.mrf.mxu0
  %v7294 = vadd.f32 0.0, %v7293
  %v7295 = vpop.f32.mrf.mxu0
  %v7296 = vpop.f32.mrf.mxu0
  %v7297 = vadd.f32 0.0, %v7296
  %v7298 = vpop.f32.mrf.mxu0
  %7299 = vdwg.mxu0
  %7301 = vrot.lane.b32.xlu0 %v5443, 96
  %v7302 = vpop.permute.xlu0 %7301
  %v7305 = vsel %vm912, %v6963, 0
  %7307 = vmatprep.subr.bf16.mxu0 0
  %7308 = vmatpush1.bf16.msra.mxu0 0
  %7309 = vmatprep.subr.bf16.mxu0 0
  %7310 = vmatpush1.bf16.msra.mxu0 0
  %7311 = vmatprep.subr.bf16.mxu0 0
  %7312 = vmatpush1.bf16.msra.mxu0 0
  %7313 = vmatprep.subr.bf16.mxu0 0
  %7314 = vmatpush1.bf16.msra.mxu0 0
  %7315 = vmatprep.subr.bf16.mxu0 0
  %7316 = vmatpush1.bf16.msra.mxu0 0
  %7317 = vmatprep.subr.bf16.mxu0 0
  %7318 = vmatpush1.bf16.msra.mxu0 0
  %7319 = vmatprep.subr.bf16.mxu0 0
  %7320 = vmatpush1.bf16.msra.mxu0 0
  %7321 = vmatprep.subr.bf16.mxu0 0
  %7322 = vmatpush1.bf16.msra.mxu0 %v7302
  %7323 = vmatprep.subr.bf16.mxu0 0
  %7324 = vmatpush2.bf16.msra.mxu0 0
  %7325 = vmatprep.subr.bf16.mxu0 0
  %7326 = vmatpush2.bf16.msra.mxu0 0
  %7327 = vmatprep.subr.bf16.mxu0 0
  %7328 = vmatpush2.bf16.msra.mxu0 0
  %7329 = vmatprep.subr.bf16.mxu0 0
  %7330 = vmatpush2.bf16.msra.mxu0 0
  %7331 = vmatprep.subr.bf16.mxu0 0
  %7332 = vmatpush2.bf16.msra.mxu0 0
  %7333 = vmatprep.subr.bf16.mxu0 0
  %7334 = vmatpush2.bf16.msra.mxu0 0
  %7335 = vmatprep.subr.bf16.mxu0 0
  %7336 = vmatpush2.bf16.msra.mxu0 0
  %7337 = vmatprep.subr.bf16.mxu0 0
  %7338 = vmatpush2.bf16.msra.mxu0 0
  %7339 = vmatprep.mubr.bf16.mxu0 0
  %7340 = vmatmul.mubr.bf16.gmra.mxu0 %v7305
  %v7341 = vpop.f32.mrf.mxu0
  %v7342 = vadd.f32 0.0, %v7341
  %v7343 = vpop.f32.mrf.mxu0
  %v7344 = vpop.f32.mrf.mxu0
  %v7345 = vadd.f32 0.0, %v7344
  %v7346 = vpop.f32.mrf.mxu0
  %7347 = vdwg.mxu0
  %7348 = vrot.lane.b32.xlu0 %v5420, 64
  %v7349 = vpop.permute.xlu0 %7348
  %7350 = vrot.lane.b32.xlu0 %v5428, 64
  %v7351 = vpop.permute.xlu0 %7350
  %v7353 = vsel %vm535, %v7349, 0
  %v7356 = vsel %vm535, %v7351, 0
  %7358 = vmatprep.subr.bf16.mxu0 0
  %7359 = vmatpush1.bf16.xpose.msra.mxu0 0
  %7360 = vmatprep.subr.bf16.mxu0 0
  %7361 = vmatpush1.bf16.xpose.msra.mxu0 0
  %7362 = vmatprep.subr.bf16.mxu0 0
  %7363 = vmatpush1.bf16.xpose.msra.mxu0 0
  %7364 = vmatprep.subr.bf16.mxu0 0
  %7365 = vmatpush1.bf16.xpose.msra.mxu0 0
  %7366 = vmatprep.subr.bf16.mxu0 0
  %7367 = vmatpush1.bf16.xpose.msra.mxu0 0
  %7368 = vmatprep.subr.bf16.mxu0 0
  %7369 = vmatpush1.bf16.xpose.msra.mxu0 0
  %7370 = vmatprep.subr.bf16.mxu0 0
  %7371 = vmatpush1.bf16.xpose.msra.mxu0 0
  %7372 = vmatprep.subr.bf16.mxu0 0
  %7373 = vmatpush1.bf16.xpose.msra.mxu0 %v7356
  %7374 = vmatprep.subr.bf16.mxu0 0
  %7375 = vmatpush2.bf16.xpose.msra.mxu0 0
  %7376 = vmatprep.subr.bf16.mxu0 0
  %7377 = vmatpush2.bf16.xpose.msra.mxu0 0
  %7378 = vmatprep.subr.bf16.mxu0 0
  %7379 = vmatpush2.bf16.xpose.msra.mxu0 0
  %7380 = vmatprep.subr.bf16.mxu0 0
  %7381 = vmatpush2.bf16.xpose.msra.mxu0 0
  %7382 = vmatprep.subr.bf16.mxu0 0
  %7383 = vmatpush2.bf16.xpose.msra.mxu0 0
  %7384 = vmatprep.subr.bf16.mxu0 0
  %7385 = vmatpush2.bf16.xpose.msra.mxu0 0
  %7386 = vmatprep.subr.bf16.mxu0 0
  %7387 = vmatpush2.bf16.xpose.msra.mxu0 0
  %7388 = vmatprep.subr.bf16.mxu0 0
  %7389 = vmatpush2.bf16.xpose.msra.mxu0 0
  %7390 = vmatprep.mubr.bf16.mxu0 0
  %7391 = vmatmul.mubr.bf16.gmra.mxu0 %v7353
  %v7392 = vpop.f32.mrf.mxu0
  %v7393 = vadd.f32 %v117, %v7392
  %v7394 = vpop.f32.mrf.mxu0
  %v7395 = vpop.f32.mrf.mxu0
  %v7396 = vadd.f32 %v118, %v7395
  %v7397 = vpop.f32.mrf.mxu0
  %7398 = vdwg.mxu0
  %7399 = vrot.lane.b32.xlu0 %v5421, 64
  %v7400 = vpop.permute.xlu0 %7399
  %7401 = vrot.lane.b32.xlu0 %v5429, 64
  %v7402 = vpop.permute.xlu0 %7401
  %v7404 = vsel %vm535, %v7400, 0
  %v7407 = vsel %vm535, %v7402, 0
  %7409 = vmatprep.subr.bf16.mxu0 0
  %7410 = vmatpush1.bf16.xpose.msra.mxu0 0
  %7411 = vmatprep.subr.bf16.mxu0 0
  %7412 = vmatpush1.bf16.xpose.msra.mxu0 0
  %7413 = vmatprep.subr.bf16.mxu0 0
  %7414 = vmatpush1.bf16.xpose.msra.mxu0 0
  %7415 = vmatprep.subr.bf16.mxu0 0
  %7416 = vmatpush1.bf16.xpose.msra.mxu0 0
  %7417 = vmatprep.subr.bf16.mxu0 0
  %7418 = vmatpush1.bf16.xpose.msra.mxu0 0
  %7419 = vmatprep.subr.bf16.mxu0 0
  %7420 = vmatpush1.bf16.xpose.msra.mxu0 0
  %7421 = vmatprep.subr.bf16.mxu0 0
  %7422 = vmatpush1.bf16.xpose.msra.mxu0 0
  %7423 = vmatprep.subr.bf16.mxu0 0
  %7424 = vmatpush1.bf16.xpose.msra.mxu0 %v7407
  %7425 = vmatprep.subr.bf16.mxu0 0
  %7426 = vmatpush2.bf16.xpose.msra.mxu0 0
  %7427 = vmatprep.subr.bf16.mxu0 0
  %7428 = vmatpush2.bf16.xpose.msra.mxu0 0
  %7429 = vmatprep.subr.bf16.mxu0 0
  %7430 = vmatpush2.bf16.xpose.msra.mxu0 0
  %7431 = vmatprep.subr.bf16.mxu0 0
  %7432 = vmatpush2.bf16.xpose.msra.mxu0 0
  %7433 = vmatprep.subr.bf16.mxu0 0
  %7434 = vmatpush2.bf16.xpose.msra.mxu0 0
  %7435 = vmatprep.subr.bf16.mxu0 0
  %7436 = vmatpush2.bf16.xpose.msra.mxu0 0
  %7437 = vmatprep.subr.bf16.mxu0 0
  %7438 = vmatpush2.bf16.xpose.msra.mxu0 0
  %7439 = vmatprep.subr.bf16.mxu0 0
  %7440 = vmatpush2.bf16.xpose.msra.mxu0 0
  %7441 = vmatprep.mubr.bf16.mxu0 0
  %7442 = vmatmul.mubr.bf16.gmra.mxu0 %v7404
  %v7443 = vpop.f32.mrf.mxu0
  %v7444 = vadd.f32 %v119, %v7443
  %v7445 = vpop.f32.mrf.mxu0
  %v7446 = vpop.f32.mrf.mxu0
  %v7447 = vadd.f32 %v120, %v7446
  %v7448 = vpop.f32.mrf.mxu0
  %7449 = vdwg.mxu0
  %7450 = vrot.lane.b32.xlu0 %v5422, 64
  %v7451 = vpop.permute.xlu0 %7450
  %7452 = vrot.lane.b32.xlu0 %v5430, 64
  %v7453 = vpop.permute.xlu0 %7452
  %v7455 = vsel %vm535, %v7451, 0
  %v7458 = vsel %vm535, %v7453, 0
  %7460 = vmatprep.subr.bf16.mxu0 0
  %7461 = vmatpush1.bf16.xpose.msra.mxu0 0
  %7462 = vmatprep.subr.bf16.mxu0 0
  %7463 = vmatpush1.bf16.xpose.msra.mxu0 0
  %7464 = vmatprep.subr.bf16.mxu0 0
  %7465 = vmatpush1.bf16.xpose.msra.mxu0 0
  %7466 = vmatprep.subr.bf16.mxu0 0
  %7467 = vmatpush1.bf16.xpose.msra.mxu0 0
  %7468 = vmatprep.subr.bf16.mxu0 0
  %7469 = vmatpush1.bf16.xpose.msra.mxu0 0
  %7470 = vmatprep.subr.bf16.mxu0 0
  %7471 = vmatpush1.bf16.xpose.msra.mxu0 0
  %7472 = vmatprep.subr.bf16.mxu0 0
  %7473 = vmatpush1.bf16.xpose.msra.mxu0 0
  %7474 = vmatprep.subr.bf16.mxu0 0
  %7475 = vmatpush1.bf16.xpose.msra.mxu0 %v7458
  %7476 = vmatprep.subr.bf16.mxu0 0
  %7477 = vmatpush2.bf16.xpose.msra.mxu0 0
  %7478 = vmatprep.subr.bf16.mxu0 0
  %7479 = vmatpush2.bf16.xpose.msra.mxu0 0
  %7480 = vmatprep.subr.bf16.mxu0 0
  %7481 = vmatpush2.bf16.xpose.msra.mxu0 0
  %7482 = vmatprep.subr.bf16.mxu0 0
  %7483 = vmatpush2.bf16.xpose.msra.mxu0 0
  %7484 = vmatprep.subr.bf16.mxu0 0
  %7485 = vmatpush2.bf16.xpose.msra.mxu0 0
  %7486 = vmatprep.subr.bf16.mxu0 0
  %7487 = vmatpush2.bf16.xpose.msra.mxu0 0
  %7488 = vmatprep.subr.bf16.mxu0 0
  %7489 = vmatpush2.bf16.xpose.msra.mxu0 0
  %7490 = vmatprep.subr.bf16.mxu0 0
  %7491 = vmatpush2.bf16.xpose.msra.mxu0 0
  %7492 = vmatprep.mubr.bf16.mxu0 0
  %7493 = vmatmul.mubr.bf16.gmra.mxu0 %v7455
  %v7494 = vpop.f32.mrf.mxu0
  %v7495 = vadd.f32 %v121, %v7494
  %v7496 = vpop.f32.mrf.mxu0
  %v7497 = vpop.f32.mrf.mxu0
  %v7498 = vadd.f32 %v122, %v7497
  %v7499 = vpop.f32.mrf.mxu0
  %7500 = vdwg.mxu0
  %7501 = vrot.lane.b32.xlu0 %v5423, 64
  %v7502 = vpop.permute.xlu0 %7501
  %7503 = vrot.lane.b32.xlu0 %v5431, 64
  %v7504 = vpop.permute.xlu0 %7503
  %v7506 = vsel %vm535, %v7502, 0
  %v7509 = vsel %vm535, %v7504, 0
  %7511 = vmatprep.subr.bf16.mxu0 0
  %7512 = vmatpush1.bf16.xpose.msra.mxu0 0
  %7513 = vmatprep.subr.bf16.mxu0 0
  %7514 = vmatpush1.bf16.xpose.msra.mxu0 0
  %7515 = vmatprep.subr.bf16.mxu0 0
  %7516 = vmatpush1.bf16.xpose.msra.mxu0 0
  %7517 = vmatprep.subr.bf16.mxu0 0
  %7518 = vmatpush1.bf16.xpose.msra.mxu0 0
  %7519 = vmatprep.subr.bf16.mxu0 0
  %7520 = vmatpush1.bf16.xpose.msra.mxu0 0
  %7521 = vmatprep.subr.bf16.mxu0 0
  %7522 = vmatpush1.bf16.xpose.msra.mxu0 0
  %7523 = vmatprep.subr.bf16.mxu0 0
  %7524 = vmatpush1.bf16.xpose.msra.mxu0 0
  %7525 = vmatprep.subr.bf16.mxu0 0
  %7526 = vmatpush1.bf16.xpose.msra.mxu0 %v7509
  %7527 = vmatprep.subr.bf16.mxu0 0
  %7528 = vmatpush2.bf16.xpose.msra.mxu0 0
  %7529 = vmatprep.subr.bf16.mxu0 0
  %7530 = vmatpush2.bf16.xpose.msra.mxu0 0
  %7531 = vmatprep.subr.bf16.mxu0 0
  %7532 = vmatpush2.bf16.xpose.msra.mxu0 0
  %7533 = vmatprep.subr.bf16.mxu0 0
  %7534 = vmatpush2.bf16.xpose.msra.mxu0 0
  %7535 = vmatprep.subr.bf16.mxu0 0
  %7536 = vmatpush2.bf16.xpose.msra.mxu0 0
  %7537 = vmatprep.subr.bf16.mxu0 0
  %7538 = vmatpush2.bf16.xpose.msra.mxu0 0
  %7539 = vmatprep.subr.bf16.mxu0 0
  %7540 = vmatpush2.bf16.xpose.msra.mxu0 0
  %7541 = vmatprep.subr.bf16.mxu0 0
  %7542 = vmatpush2.bf16.xpose.msra.mxu0 0
  %7543 = vmatprep.mubr.bf16.mxu0 0
  %7544 = vmatmul.mubr.bf16.gmra.mxu0 %v7506
  %v7545 = vpop.f32.mrf.mxu0
  %v7546 = vadd.f32 %v123, %v7545
  %v7547 = vpop.f32.mrf.mxu0
  %v7548 = vpop.f32.mrf.mxu0
  %v7549 = vadd.f32 %v124, %v7548
  %v7550 = vpop.f32.mrf.mxu0
  %7551 = vdwg.mxu0
  %7552 = vrot.lane.b32.xlu0 %v5424, 64
  %v7553 = vpop.permute.xlu0 %7552
  %7554 = vrot.lane.b32.xlu0 %v5432, 64
  %v7555 = vpop.permute.xlu0 %7554
  %v7557 = vsel %vm535, %v7553, 0
  %v7560 = vsel %vm535, %v7555, 0
  %7562 = vmatprep.subr.bf16.mxu0 0
  %7563 = vmatpush1.bf16.xpose.msra.mxu0 0
  %7564 = vmatprep.subr.bf16.mxu0 0
  %7565 = vmatpush1.bf16.xpose.msra.mxu0 0
  %7566 = vmatprep.subr.bf16.mxu0 0
  %7567 = vmatpush1.bf16.xpose.msra.mxu0 0
  %7568 = vmatprep.subr.bf16.mxu0 0
  %7569 = vmatpush1.bf16.xpose.msra.mxu0 0
  %7570 = vmatprep.subr.bf16.mxu0 0
  %7571 = vmatpush1.bf16.xpose.msra.mxu0 0
  %7572 = vmatprep.subr.bf16.mxu0 0
  %7573 = vmatpush1.bf16.xpose.msra.mxu0 0
  %7574 = vmatprep.subr.bf16.mxu0 0
  %7575 = vmatpush1.bf16.xpose.msra.mxu0 0
  %7576 = vmatprep.subr.bf16.mxu0 0
  %7577 = vmatpush1.bf16.xpose.msra.mxu0 %v7560
  %7578 = vmatprep.subr.bf16.mxu0 0
  %7579 = vmatpush2.bf16.xpose.msra.mxu0 0
  %7580 = vmatprep.subr.bf16.mxu0 0
  %7581 = vmatpush2.bf16.xpose.msra.mxu0 0
  %7582 = vmatprep.subr.bf16.mxu0 0
  %7583 = vmatpush2.bf16.xpose.msra.mxu0 0
  %7584 = vmatprep.subr.bf16.mxu0 0
  %7585 = vmatpush2.bf16.xpose.msra.mxu0 0
  %7586 = vmatprep.subr.bf16.mxu0 0
  %7587 = vmatpush2.bf16.xpose.msra.mxu0 0
  %7588 = vmatprep.subr.bf16.mxu0 0
  %7589 = vmatpush2.bf16.xpose.msra.mxu0 0
  %7590 = vmatprep.subr.bf16.mxu0 0
  %7591 = vmatpush2.bf16.xpose.msra.mxu0 0
  %7592 = vmatprep.subr.bf16.mxu0 0
  %7593 = vmatpush2.bf16.xpose.msra.mxu0 0
  %7594 = vmatprep.mubr.bf16.mxu0 0
  %7595 = vmatmul.mubr.bf16.gmra.mxu0 %v7557
  %v7596 = vpop.f32.mrf.mxu0
  %v7597 = vadd.f32 %v125, %v7596
  %v7598 = vpop.f32.mrf.mxu0
  %v7599 = vpop.f32.mrf.mxu0
  %v7600 = vadd.f32 %v126, %v7599
  %v7601 = vpop.f32.mrf.mxu0
  %7602 = vdwg.mxu0
  %7603 = vrot.lane.b32.xlu0 %v5425, 64
  %v7604 = vpop.permute.xlu0 %7603
  %7605 = vrot.lane.b32.xlu0 %v5433, 64
  %v7606 = vpop.permute.xlu0 %7605
  %v7608 = vsel %vm535, %v7604, 0
  %v7611 = vsel %vm535, %v7606, 0
  %7613 = vmatprep.subr.bf16.mxu0 0
  %7614 = vmatpush1.bf16.xpose.msra.mxu0 0
  %7615 = vmatprep.subr.bf16.mxu0 0
  %7616 = vmatpush1.bf16.xpose.msra.mxu0 0
  %7617 = vmatprep.subr.bf16.mxu0 0
  %7618 = vmatpush1.bf16.xpose.msra.mxu0 0
  %7619 = vmatprep.subr.bf16.mxu0 0
  %7620 = vmatpush1.bf16.xpose.msra.mxu0 0
  %7621 = vmatprep.subr.bf16.mxu0 0
  %7622 = vmatpush1.bf16.xpose.msra.mxu0 0
  %7623 = vmatprep.subr.bf16.mxu0 0
  %7624 = vmatpush1.bf16.xpose.msra.mxu0 0
  %7625 = vmatprep.subr.bf16.mxu0 0
  %7626 = vmatpush1.bf16.xpose.msra.mxu0 0
  %7627 = vmatprep.subr.bf16.mxu0 0
  %7628 = vmatpush1.bf16.xpose.msra.mxu0 %v7611
  %7629 = vmatprep.subr.bf16.mxu0 0
  %7630 = vmatpush2.bf16.xpose.msra.mxu0 0
  %7631 = vmatprep.subr.bf16.mxu0 0
  %7632 = vmatpush2.bf16.xpose.msra.mxu0 0
  %7633 = vmatprep.subr.bf16.mxu0 0
  %7634 = vmatpush2.bf16.xpose.msra.mxu0 0
  %7635 = vmatprep.subr.bf16.mxu0 0
  %7636 = vmatpush2.bf16.xpose.msra.mxu0 0
  %7637 = vmatprep.subr.bf16.mxu0 0
  %7638 = vmatpush2.bf16.xpose.msra.mxu0 0
  %7639 = vmatprep.subr.bf16.mxu0 0
  %7640 = vmatpush2.bf16.xpose.msra.mxu0 0
  %7641 = vmatprep.subr.bf16.mxu0 0
  %7642 = vmatpush2.bf16.xpose.msra.mxu0 0
  %7643 = vmatprep.subr.bf16.mxu0 0
  %7644 = vmatpush2.bf16.xpose.msra.mxu0 0
  %7645 = vmatprep.mubr.bf16.mxu0 0
  %7646 = vmatmul.mubr.bf16.gmra.mxu0 %v7608
  %v7647 = vpop.f32.mrf.mxu0
  %v7648 = vadd.f32 %v127, %v7647
  %v7649 = vpop.f32.mrf.mxu0
  %v7650 = vpop.f32.mrf.mxu0
  %v7651 = vadd.f32 %v128, %v7650
  %v7652 = vpop.f32.mrf.mxu0
  %7653 = vdwg.mxu0
  %7654 = vrot.lane.b32.xlu0 %v5426, 64
  %v7655 = vpop.permute.xlu0 %7654
  %7656 = vrot.lane.b32.xlu0 %v5434, 64
  %v7657 = vpop.permute.xlu0 %7656
  %v7659 = vsel %vm535, %v7655, 0
  %v7662 = vsel %vm535, %v7657, 0
  %7664 = vmatprep.subr.bf16.mxu0 0
  %7665 = vmatpush1.bf16.xpose.msra.mxu0 0
  %7666 = vmatprep.subr.bf16.mxu0 0
  %7667 = vmatpush1.bf16.xpose.msra.mxu0 0
  %7668 = vmatprep.subr.bf16.mxu0 0
  %7669 = vmatpush1.bf16.xpose.msra.mxu0 0
  %7670 = vmatprep.subr.bf16.mxu0 0
  %7671 = vmatpush1.bf16.xpose.msra.mxu0 0
  %7672 = vmatprep.subr.bf16.mxu0 0
  %7673 = vmatpush1.bf16.xpose.msra.mxu0 0
  %7674 = vmatprep.subr.bf16.mxu0 0
  %7675 = vmatpush1.bf16.xpose.msra.mxu0 0
  %7676 = vmatprep.subr.bf16.mxu0 0
  %7677 = vmatpush1.bf16.xpose.msra.mxu0 0
  %7678 = vmatprep.subr.bf16.mxu0 0
  %7679 = vmatpush1.bf16.xpose.msra.mxu0 %v7662
  %7680 = vmatprep.subr.bf16.mxu0 0
  %7681 = vmatpush2.bf16.xpose.msra.mxu0 0
  %7682 = vmatprep.subr.bf16.mxu0 0
  %7683 = vmatpush2.bf16.xpose.msra.mxu0 0
  %7684 = vmatprep.subr.bf16.mxu0 0
  %7685 = vmatpush2.bf16.xpose.msra.mxu0 0
  %7686 = vmatprep.subr.bf16.mxu0 0
  %7687 = vmatpush2.bf16.xpose.msra.mxu0 0
  %7688 = vmatprep.subr.bf16.mxu0 0
  %7689 = vmatpush2.bf16.xpose.msra.mxu0 0
  %7690 = vmatprep.subr.bf16.mxu0 0
  %7691 = vmatpush2.bf16.xpose.msra.mxu0 0
  %7692 = vmatprep.subr.bf16.mxu0 0
  %7693 = vmatpush2.bf16.xpose.msra.mxu0 0
  %7694 = vmatprep.subr.bf16.mxu0 0
  %7695 = vmatpush2.bf16.xpose.msra.mxu0 0
  %7696 = vmatprep.mubr.bf16.mxu0 0
  %7697 = vmatmul.mubr.bf16.gmra.mxu0 %v7659
  %v7698 = vpop.f32.mrf.mxu0
  %v7699 = vadd.f32 %v129, %v7698
  %v7700 = vpop.f32.mrf.mxu0
  %v7701 = vpop.f32.mrf.mxu0
  %v7702 = vadd.f32 %v130, %v7701
  %v7703 = vpop.f32.mrf.mxu0
  %7704 = vdwg.mxu0
  %7705 = vrot.lane.b32.xlu0 %v5427, 64
  %v7706 = vpop.permute.xlu0 %7705
  %7707 = vrot.lane.b32.xlu0 %v5435, 64
  %v7708 = vpop.permute.xlu0 %7707
  %v7710 = vsel %vm535, %v7706, 0
  %v7713 = vsel %vm535, %v7708, 0
  %7715 = vmatprep.subr.bf16.mxu0 0
  %7716 = vmatpush1.bf16.xpose.msra.mxu0 0
  %7717 = vmatprep.subr.bf16.mxu0 0
  %7718 = vmatpush1.bf16.xpose.msra.mxu0 0
  %7719 = vmatprep.subr.bf16.mxu0 0
  %7720 = vmatpush1.bf16.xpose.msra.mxu0 0
  %7721 = vmatprep.subr.bf16.mxu0 0
  %7722 = vmatpush1.bf16.xpose.msra.mxu0 0
  %7723 = vmatprep.subr.bf16.mxu0 0
  %7724 = vmatpush1.bf16.xpose.msra.mxu0 0
  %7725 = vmatprep.subr.bf16.mxu0 0
  %7726 = vmatpush1.bf16.xpose.msra.mxu0 0
  %7727 = vmatprep.subr.bf16.mxu0 0
  %7728 = vmatpush1.bf16.xpose.msra.mxu0 0
  %7729 = vmatprep.subr.bf16.mxu0 0
  %7730 = vmatpush1.bf16.xpose.msra.mxu0 %v7713
  %7731 = vmatprep.subr.bf16.mxu0 0
  %7732 = vmatpush2.bf16.xpose.msra.mxu0 0
  %7733 = vmatprep.subr.bf16.mxu0 0
  %7734 = vmatpush2.bf16.xpose.msra.mxu0 0
  %7735 = vmatprep.subr.bf16.mxu0 0
  %7736 = vmatpush2.bf16.xpose.msra.mxu0 0
  %7737 = vmatprep.subr.bf16.mxu0 0
  %7738 = vmatpush2.bf16.xpose.msra.mxu0 0
  %7739 = vmatprep.subr.bf16.mxu0 0
  %7740 = vmatpush2.bf16.xpose.msra.mxu0 0
  %7741 = vmatprep.subr.bf16.mxu0 0
  %7742 = vmatpush2.bf16.xpose.msra.mxu0 0
  %7743 = vmatprep.subr.bf16.mxu0 0
  %7744 = vmatpush2.bf16.xpose.msra.mxu0 0
  %7745 = vmatprep.subr.bf16.mxu0 0
  %7746 = vmatpush2.bf16.xpose.msra.mxu0 0
  %7747 = vmatprep.mubr.bf16.mxu0 0
  %7748 = vmatmul.mubr.bf16.gmra.mxu0 %v7710
  %v7749 = vpop.f32.mrf.mxu0
  %v7750 = vadd.f32 %v131, %v7749
  %v7751 = vpop.f32.mrf.mxu0
  %v7752 = vpop.f32.mrf.mxu0
  %v7753 = vadd.f32 %v132, %v7752
  %v7754 = vpop.f32.mrf.mxu0
  %7755 = vdwg.mxu0
  %v7756 = vsel %vm912, %v7393, -inf
  %7757 = vmax.xlane.f32.xlu0 %v7756
  %v7758 = vpop.xlane.xlu0 %7757
  %v7759 = vsel %vm912, %v7396, -inf
  %7760 = vmax.xlane.f32.xlu0 %v7759
  %v7761 = vpop.xlane.xlu0 %7760
  %v7762 = vsel %vm912, %v7444, -inf
  %7763 = vmax.xlane.f32.xlu0 %v7762
  %v7764 = vpop.xlane.xlu0 %7763
  %v7765 = vsel %vm912, %v7447, -inf
  %7766 = vmax.xlane.f32.xlu0 %v7765
  %v7767 = vpop.xlane.xlu0 %7766
  %v7768 = vsel %vm912, %v7495, -inf
  %7769 = vmax.xlane.f32.xlu0 %v7768
  %v7770 = vpop.xlane.xlu0 %7769
  %v7771 = vsel %vm912, %v7498, -inf
  %7772 = vmax.xlane.f32.xlu0 %v7771
  %v7773 = vpop.xlane.xlu0 %7772
  %v7774 = vsel %vm912, %v7546, -inf
  %7775 = vmax.xlane.f32.xlu0 %v7774
  %v7776 = vpop.xlane.xlu0 %7775
  %v7777 = vsel %vm912, %v7549, -inf
  %7778 = vmax.xlane.f32.xlu0 %v7777
  %v7779 = vpop.xlane.xlu0 %7778
  %v7780 = vsel %vm912, %v7597, -inf
  %7781 = vmax.xlane.f32.xlu0 %v7780
  %v7782 = vpop.xlane.xlu0 %7781
  %v7783 = vsel %vm912, %v7600, -inf
  %7784 = vmax.xlane.f32.xlu0 %v7783
  %v7785 = vpop.xlane.xlu0 %7784
  %v7786 = vsel %vm912, %v7648, -inf
  %7787 = vmax.xlane.f32.xlu0 %v7786
  %v7788 = vpop.xlane.xlu0 %7787
  %v7789 = vsel %vm912, %v7651, -inf
  %7790 = vmax.xlane.f32.xlu0 %v7789
  %v7791 = vpop.xlane.xlu0 %7790
  %v7792 = vsel %vm912, %v7699, -inf
  %7793 = vmax.xlane.f32.xlu0 %v7792
  %v7794 = vpop.xlane.xlu0 %7793
  %v7795 = vsel %vm912, %v7702, -inf
  %7796 = vmax.xlane.f32.xlu0 %v7795
  %v7797 = vpop.xlane.xlu0 %7796
  %v7798 = vsel %vm912, %v7750, -inf
  %7799 = vmax.xlane.f32.xlu0 %v7798
  %v7800 = vpop.xlane.xlu0 %7799
  %v7801 = vsel %vm912, %v7753, -inf
  %7802 = vmax.xlane.f32.xlu0 %v7801
  %v7803 = vpop.xlane.xlu0 %7802
  %v7804 = vsub.f32 %v7393, %v7758
  %v7805 = vsub.f32 %v7396, %v7761
  %v7806 = vsub.f32 %v7444, %v7764
  %v7807 = vsub.f32 %v7447, %v7767
  %v7808 = vsub.f32 %v7495, %v7770
  %v7809 = vsub.f32 %v7498, %v7773
  %v7810 = vsub.f32 %v7546, %v7776
  %v7811 = vsub.f32 %v7549, %v7779
  %v7812 = vsub.f32 %v7597, %v7782
  %v7813 = vsub.f32 %v7600, %v7785
  %v7814 = vsub.f32 %v7648, %v7788
  %v7815 = vsub.f32 %v7651, %v7791
  %v7816 = vsub.f32 %v7699, %v7794
  %v7817 = vsub.f32 %v7702, %v7797
  %v7818 = vsub.f32 %v7750, %v7800
  %v7819 = vsub.f32 %v7753, %v7803
  %v7820 = vmul.f32 %v7804, 1.442695
  %v7821 = vpow.pop %v7820
  %v7822 = vmul.f32 %v7805, 1.442695
  %v7823 = vpow.pop %v7822
  %v7824 = vmul.f32 %v7806, 1.442695
  %v7825 = vpow.pop %v7824
  %v7826 = vmul.f32 %v7807, 1.442695
  %v7827 = vpow.pop %v7826
  %v7828 = vmul.f32 %v7808, 1.442695
  %v7829 = vpow.pop %v7828
  %v7830 = vmul.f32 %v7809, 1.442695
  %v7831 = vpow.pop %v7830
  %v7832 = vmul.f32 %v7810, 1.442695
  %v7833 = vpow.pop %v7832
  %v7834 = vmul.f32 %v7811, 1.442695
  %v7835 = vpow.pop %v7834
  %v7836 = vmul.f32 %v7812, 1.442695
  %v7837 = vpow.pop %v7836
  %v7838 = vmul.f32 %v7813, 1.442695
  %v7839 = vpow.pop %v7838
  %v7840 = vmul.f32 %v7814, 1.442695
  %v7841 = vpow.pop %v7840
  %v7842 = vmul.f32 %v7815, 1.442695
  %v7843 = vpow.pop %v7842
  %v7844 = vmul.f32 %v7816, 1.442695
  %v7845 = vpow.pop %v7844
  %v7846 = vmul.f32 %v7817, 1.442695
  %v7847 = vpow.pop %v7846
  %v7848 = vmul.f32 %v7818, 1.442695
  %v7849 = vpow.pop %v7848
  %v7850 = vmul.f32 %v7819, 1.442695
  %v7851 = vpow.pop %v7850
  %v7852 = vsel %vm912, %v7821, 0.0
  %7853 = vadd.xlane.f32.xlu0 %v7852
  %v7854 = vpop.xlane.xlu0 %7853
  %v7855 = vsel %vm912, %v7823, 0.0
  %7856 = vadd.xlane.f32.xlu0 %v7855
  %v7857 = vpop.xlane.xlu0 %7856
  %v7858 = vsel %vm912, %v7825, 0.0
  %7859 = vadd.xlane.f32.xlu0 %v7858
  %v7860 = vpop.xlane.xlu0 %7859
  %v7861 = vsel %vm912, %v7827, 0.0
  %7862 = vadd.xlane.f32.xlu0 %v7861
  %v7863 = vpop.xlane.xlu0 %7862
  %v7864 = vsel %vm912, %v7829, 0.0
  %7865 = vadd.xlane.f32.xlu0 %v7864
  %v7866 = vpop.xlane.xlu0 %7865
  %v7867 = vsel %vm912, %v7831, 0.0
  %7868 = vadd.xlane.f32.xlu0 %v7867
  %v7869 = vpop.xlane.xlu0 %7868
  %v7870 = vsel %vm912, %v7833, 0.0
  %7871 = vadd.xlane.f32.xlu0 %v7870
  %v7872 = vpop.xlane.xlu0 %7871
  %v7873 = vsel %vm912, %v7835, 0.0
  %7874 = vadd.xlane.f32.xlu0 %v7873
  %v7875 = vpop.xlane.xlu0 %7874
  %v7876 = vsel %vm912, %v7837, 0.0
  %7877 = vadd.xlane.f32.xlu0 %v7876
  %v7878 = vpop.xlane.xlu0 %7877
  %v7879 = vsel %vm912, %v7839, 0.0
  %7880 = vadd.xlane.f32.xlu0 %v7879
  %v7881 = vpop.xlane.xlu0 %7880
  %v7882 = vsel %vm912, %v7841, 0.0
  %7883 = vadd.xlane.f32.xlu0 %v7882
  %v7884 = vpop.xlane.xlu0 %7883
  %v7885 = vsel %vm912, %v7843, 0.0
  %7886 = vadd.xlane.f32.xlu0 %v7885
  %v7887 = vpop.xlane.xlu0 %7886
  %v7888 = vsel %vm912, %v7845, 0.0
  %7889 = vadd.xlane.f32.xlu0 %v7888
  %v7890 = vpop.xlane.xlu0 %7889
  %v7891 = vsel %vm912, %v7847, 0.0
  %7892 = vadd.xlane.f32.xlu0 %v7891
  %v7893 = vpop.xlane.xlu0 %7892
  %v7894 = vsel %vm912, %v7849, 0.0
  %7895 = vadd.xlane.f32.xlu0 %v7894
  %v7896 = vpop.xlane.xlu0 %7895
  %v7897 = vsel %vm912, %v7851, 0.0
  %7898 = vadd.xlane.f32.xlu0 %v7897
  %v7899 = vpop.xlane.xlu0 %7898
  %v7900 = vrcp.pop %v7854
  %v7901 = vrcp.pop %v7857
  %v7902 = vrcp.pop %v7860
  %v7903 = vrcp.pop %v7863
  %v7904 = vrcp.pop %v7866
  %v7905 = vrcp.pop %v7869
  %v7906 = vrcp.pop %v7872
  %v7907 = vrcp.pop %v7875
  %v7908 = vrcp.pop %v7878
  %v7909 = vrcp.pop %v7881
  %v7910 = vrcp.pop %v7884
  %v7911 = vrcp.pop %v7887
  %v7912 = vrcp.pop %v7890
  %v7913 = vrcp.pop %v7893
  %v7914 = vrcp.pop %v7896
  %v7915 = vrcp.pop %v7899
  %v7916 = vmul.f32 %v7821, %v7900
  %v7917 = vmul.f32 %v7823, %v7901
  %v7918 = vmul.f32 %v7825, %v7902
  %v7919 = vmul.f32 %v7827, %v7903
  %v7920 = vmul.f32 %v7829, %v7904
  %v7921 = vmul.f32 %v7831, %v7905
  %v7922 = vmul.f32 %v7833, %v7906
  %v7923 = vmul.f32 %v7835, %v7907
  %v7924 = vmul.f32 %v7837, %v7908
  %v7925 = vmul.f32 %v7839, %v7909
  %v7926 = vmul.f32 %v7841, %v7910
  %v7927 = vmul.f32 %v7843, %v7911
  %v7928 = vmul.f32 %v7845, %v7912
  %v7929 = vmul.f32 %v7847, %v7913
  %v7930 = vmul.f32 %v7849, %v7914
  %v7931 = vmul.f32 %v7851, %v7915
  %v7932 = vpack.c.bf16 %v7917, %v7916
  %v7933 = vpack.c.bf16 %v7919, %v7918
  %v7934 = vpack.c.bf16 %v7921, %v7920
  %v7935 = vpack.c.bf16 %v7923, %v7922
  %v7936 = vpack.c.bf16 %v7925, %v7924
  %v7937 = vpack.c.bf16 %v7927, %v7926
  %v7938 = vpack.c.bf16 %v7929, %v7928
  %v7939 = vpack.c.bf16 %v7931, %v7930
  %7940 = vrot.lane.b32.xlu0 %v5436, 64
  %v7941 = vpop.permute.xlu0 %7940
  %v7944 = vsel %vm912, %v7932, 0
  %7946 = vmatprep.subr.bf16.mxu0 0
  %7947 = vmatpush1.bf16.msra.mxu0 0
  %7948 = vmatprep.subr.bf16.mxu0 0
  %7949 = vmatpush1.bf16.msra.mxu0 0
  %7950 = vmatprep.subr.bf16.mxu0 0
  %7951 = vmatpush1.bf16.msra.mxu0 0
  %7952 = vmatprep.subr.bf16.mxu0 0
  %7953 = vmatpush1.bf16.msra.mxu0 0
  %7954 = vmatprep.subr.bf16.mxu0 0
  %7955 = vmatpush1.bf16.msra.mxu0 0
  %7956 = vmatprep.subr.bf16.mxu0 0
  %7957 = vmatpush1.bf16.msra.mxu0 0
  %7958 = vmatprep.subr.bf16.mxu0 0
  %7959 = vmatpush1.bf16.msra.mxu0 0
  %7960 = vmatprep.subr.bf16.mxu0 0
  %7961 = vmatpush1.bf16.msra.mxu0 %v7941
  %7962 = vmatprep.subr.bf16.mxu0 0
  %7963 = vmatpush2.bf16.msra.mxu0 0
  %7964 = vmatprep.subr.bf16.mxu0 0
  %7965 = vmatpush2.bf16.msra.mxu0 0
  %7966 = vmatprep.subr.bf16.mxu0 0
  %7967 = vmatpush2.bf16.msra.mxu0 0
  %7968 = vmatprep.subr.bf16.mxu0 0
  %7969 = vmatpush2.bf16.msra.mxu0 0
  %7970 = vmatprep.subr.bf16.mxu0 0
  %7971 = vmatpush2.bf16.msra.mxu0 0
  %7972 = vmatprep.subr.bf16.mxu0 0
  %7973 = vmatpush2.bf16.msra.mxu0 0
  %7974 = vmatprep.subr.bf16.mxu0 0
  %7975 = vmatpush2.bf16.msra.mxu0 0
  %7976 = vmatprep.subr.bf16.mxu0 0
  %7977 = vmatpush2.bf16.msra.mxu0 0
  %7978 = vmatprep.mubr.bf16.mxu0 0
  %7979 = vmatmul.mubr.bf16.gmra.mxu0 %v7944
  %v7980 = vpop.f32.mrf.mxu0
  %v7981 = vadd.f32 0.0, %v7980
  %v7982 = vpop.f32.mrf.mxu0
  %v7983 = vpop.f32.mrf.mxu0
  %v7984 = vadd.f32 0.0, %v7983
  %v7985 = vpop.f32.mrf.mxu0
  %7986 = vdwg.mxu0
  %7987 = vrot.lane.b32.xlu0 %v5437, 64
  %v7988 = vpop.permute.xlu0 %7987
  %v7991 = vsel %vm912, %v7933, 0
  %7993 = vmatprep.subr.bf16.mxu0 0
  %7994 = vmatpush1.bf16.msra.mxu0 0
  %7995 = vmatprep.subr.bf16.mxu0 0
  %7996 = vmatpush1.bf16.msra.mxu0 0
  %7997 = vmatprep.subr.bf16.mxu0 0
  %7998 = vmatpush1.bf16.msra.mxu0 0
  %7999 = vmatprep.subr.bf16.mxu0 0
  %8000 = vmatpush1.bf16.msra.mxu0 0
  %8001 = vmatprep.subr.bf16.mxu0 0
  %8002 = vmatpush1.bf16.msra.mxu0 0
  %8003 = vmatprep.subr.bf16.mxu0 0
  %8004 = vmatpush1.bf16.msra.mxu0 0
  %8005 = vmatprep.subr.bf16.mxu0 0
  %8006 = vmatpush1.bf16.msra.mxu0 0
  %8007 = vmatprep.subr.bf16.mxu0 0
  %8008 = vmatpush1.bf16.msra.mxu0 %v7988
  %8009 = vmatprep.subr.bf16.mxu0 0
  %8010 = vmatpush2.bf16.msra.mxu0 0
  %8011 = vmatprep.subr.bf16.mxu0 0
  %8012 = vmatpush2.bf16.msra.mxu0 0
  %8013 = vmatprep.subr.bf16.mxu0 0
  %8014 = vmatpush2.bf16.msra.mxu0 0
  %8015 = vmatprep.subr.bf16.mxu0 0
  %8016 = vmatpush2.bf16.msra.mxu0 0
  %8017 = vmatprep.subr.bf16.mxu0 0
  %8018 = vmatpush2.bf16.msra.mxu0 0
  %8019 = vmatprep.subr.bf16.mxu0 0
  %8020 = vmatpush2.bf16.msra.mxu0 0
  %8021 = vmatprep.subr.bf16.mxu0 0
  %8022 = vmatpush2.bf16.msra.mxu0 0
  %8023 = vmatprep.subr.bf16.mxu0 0
  %8024 = vmatpush2.bf16.msra.mxu0 0
  %8025 = vmatprep.mubr.bf16.mxu0 0
  %8026 = vmatmul.mubr.bf16.gmra.mxu0 %v7991
  %v8027 = vpop.f32.mrf.mxu0
  %v8028 = vadd.f32 0.0, %v8027
  %v8029 = vpop.f32.mrf.mxu0
  %v8030 = vpop.f32.mrf.mxu0
  %v8031 = vadd.f32 0.0, %v8030
  %v8032 = vpop.f32.mrf.mxu0
  %8033 = vdwg.mxu0
  %8034 = vrot.lane.b32.xlu0 %v5438, 64
  %v8035 = vpop.permute.xlu0 %8034
  %v8038 = vsel %vm912, %v7934, 0
  %8040 = vmatprep.subr.bf16.mxu0 0
  %8041 = vmatpush1.bf16.msra.mxu0 0
  %8042 = vmatprep.subr.bf16.mxu0 0
  %8043 = vmatpush1.bf16.msra.mxu0 0
  %8044 = vmatprep.subr.bf16.mxu0 0
  %8045 = vmatpush1.bf16.msra.mxu0 0
  %8046 = vmatprep.subr.bf16.mxu0 0
  %8047 = vmatpush1.bf16.msra.mxu0 0
  %8048 = vmatprep.subr.bf16.mxu0 0
  %8049 = vmatpush1.bf16.msra.mxu0 0
  %8050 = vmatprep.subr.bf16.mxu0 0
  %8051 = vmatpush1.bf16.msra.mxu0 0
  %8052 = vmatprep.subr.bf16.mxu0 0
  %8053 = vmatpush1.bf16.msra.mxu0 0
  %8054 = vmatprep.subr.bf16.mxu0 0
  %8055 = vmatpush1.bf16.msra.mxu0 %v8035
  %8056 = vmatprep.subr.bf16.mxu0 0
  %8057 = vmatpush2.bf16.msra.mxu0 0
  %8058 = vmatprep.subr.bf16.mxu0 0
  %8059 = vmatpush2.bf16.msra.mxu0 0
  %8060 = vmatprep.subr.bf16.mxu0 0
  %8061 = vmatpush2.bf16.msra.mxu0 0
  %8062 = vmatprep.subr.bf16.mxu0 0
  %8063 = vmatpush2.bf16.msra.mxu0 0
  %8064 = vmatprep.subr.bf16.mxu0 0
  %8065 = vmatpush2.bf16.msra.mxu0 0
  %8066 = vmatprep.subr.bf16.mxu0 0
  %8067 = vmatpush2.bf16.msra.mxu0 0
  %8068 = vmatprep.subr.bf16.mxu0 0
  %8069 = vmatpush2.bf16.msra.mxu0 0
  %8070 = vmatprep.subr.bf16.mxu0 0
  %8071 = vmatpush2.bf16.msra.mxu0 0
  %8072 = vmatprep.mubr.bf16.mxu0 0
  %8073 = vmatmul.mubr.bf16.gmra.mxu0 %v8038
  %v8074 = vpop.f32.mrf.mxu0
  %v8075 = vadd.f32 0.0, %v8074
  %v8076 = vpop.f32.mrf.mxu0
  %v8077 = vpop.f32.mrf.mxu0
  %v8078 = vadd.f32 0.0, %v8077
  %v8079 = vpop.f32.mrf.mxu0
  %8080 = vdwg.mxu0
  %8081 = vrot.lane.b32.xlu0 %v5439, 64
  %v8082 = vpop.permute.xlu0 %8081
  %v8085 = vsel %vm912, %v7935, 0
  %8087 = vmatprep.subr.bf16.mxu0 0
  %8088 = vmatpush1.bf16.msra.mxu0 0
  %8089 = vmatprep.subr.bf16.mxu0 0
  %8090 = vmatpush1.bf16.msra.mxu0 0
  %8091 = vmatprep.subr.bf16.mxu0 0
  %8092 = vmatpush1.bf16.msra.mxu0 0
  %8093 = vmatprep.subr.bf16.mxu0 0
  %8094 = vmatpush1.bf16.msra.mxu0 0
  %8095 = vmatprep.subr.bf16.mxu0 0
  %8096 = vmatpush1.bf16.msra.mxu0 0
  %8097 = vmatprep.subr.bf16.mxu0 0
  %8098 = vmatpush1.bf16.msra.mxu0 0
  %8099 = vmatprep.subr.bf16.mxu0 0
  %8100 = vmatpush1.bf16.msra.mxu0 0
  %8101 = vmatprep.subr.bf16.mxu0 0
  %8102 = vmatpush1.bf16.msra.mxu0 %v8082
  %8103 = vmatprep.subr.bf16.mxu0 0
  %8104 = vmatpush2.bf16.msra.mxu0 0
  %8105 = vmatprep.subr.bf16.mxu0 0
  %8106 = vmatpush2.bf16.msra.mxu0 0
  %8107 = vmatprep.subr.bf16.mxu0 0
  %8108 = vmatpush2.bf16.msra.mxu0 0
  %8109 = vmatprep.subr.bf16.mxu0 0
  %8110 = vmatpush2.bf16.msra.mxu0 0
  %8111 = vmatprep.subr.bf16.mxu0 0
  %8112 = vmatpush2.bf16.msra.mxu0 0
  %8113 = vmatprep.subr.bf16.mxu0 0
  %8114 = vmatpush2.bf16.msra.mxu0 0
  %8115 = vmatprep.subr.bf16.mxu0 0
  %8116 = vmatpush2.bf16.msra.mxu0 0
  %8117 = vmatprep.subr.bf16.mxu0 0
  %8118 = vmatpush2.bf16.msra.mxu0 0
  %8119 = vmatprep.mubr.bf16.mxu0 0
  %8120 = vmatmul.mubr.bf16.gmra.mxu0 %v8085
  %v8121 = vpop.f32.mrf.mxu0
  %v8122 = vadd.f32 0.0, %v8121
  %v8123 = vpop.f32.mrf.mxu0
  %v8124 = vpop.f32.mrf.mxu0
  %v8125 = vadd.f32 0.0, %v8124
  %v8126 = vpop.f32.mrf.mxu0
  %8127 = vdwg.mxu0
  %8128 = vrot.lane.b32.xlu0 %v5440, 64
  %v8129 = vpop.permute.xlu0 %8128
  %v8132 = vsel %vm912, %v7936, 0
  %8134 = vmatprep.subr.bf16.mxu0 0
  %8135 = vmatpush1.bf16.msra.mxu0 0
  %8136 = vmatprep.subr.bf16.mxu0 0
  %8137 = vmatpush1.bf16.msra.mxu0 0
  %8138 = vmatprep.subr.bf16.mxu0 0
  %8139 = vmatpush1.bf16.msra.mxu0 0
  %8140 = vmatprep.subr.bf16.mxu0 0
  %8141 = vmatpush1.bf16.msra.mxu0 0
  %8142 = vmatprep.subr.bf16.mxu0 0
  %8143 = vmatpush1.bf16.msra.mxu0 0
  %8144 = vmatprep.subr.bf16.mxu0 0
  %8145 = vmatpush1.bf16.msra.mxu0 0
  %8146 = vmatprep.subr.bf16.mxu0 0
  %8147 = vmatpush1.bf16.msra.mxu0 0
  %8148 = vmatprep.subr.bf16.mxu0 0
  %8149 = vmatpush1.bf16.msra.mxu0 %v8129
  %8150 = vmatprep.subr.bf16.mxu0 0
  %8151 = vmatpush2.bf16.msra.mxu0 0
  %8152 = vmatprep.subr.bf16.mxu0 0
  %8153 = vmatpush2.bf16.msra.mxu0 0
  %8154 = vmatprep.subr.bf16.mxu0 0
  %8155 = vmatpush2.bf16.msra.mxu0 0
  %8156 = vmatprep.subr.bf16.mxu0 0
  %8157 = vmatpush2.bf16.msra.mxu0 0
  %8158 = vmatprep.subr.bf16.mxu0 0
  %8159 = vmatpush2.bf16.msra.mxu0 0
  %8160 = vmatprep.subr.bf16.mxu0 0
  %8161 = vmatpush2.bf16.msra.mxu0 0
  %8162 = vmatprep.subr.bf16.mxu0 0
  %8163 = vmatpush2.bf16.msra.mxu0 0
  %8164 = vmatprep.subr.bf16.mxu0 0
  %8165 = vmatpush2.bf16.msra.mxu0 0
  %8166 = vmatprep.mubr.bf16.mxu0 0
  %8167 = vmatmul.mubr.bf16.gmra.mxu0 %v8132
  %v8168 = vpop.f32.mrf.mxu0
  %v8169 = vadd.f32 0.0, %v8168
  %v8170 = vpop.f32.mrf.mxu0
  %v8171 = vpop.f32.mrf.mxu0
  %v8172 = vadd.f32 0.0, %v8171
  %v8173 = vpop.f32.mrf.mxu0
  %8174 = vdwg.mxu0
  %8175 = vrot.lane.b32.xlu0 %v5441, 64
  %v8176 = vpop.permute.xlu0 %8175
  %v8179 = vsel %vm912, %v7937, 0
  %8181 = vmatprep.subr.bf16.mxu0 0
  %8182 = vmatpush1.bf16.msra.mxu0 0
  %8183 = vmatprep.subr.bf16.mxu0 0
  %8184 = vmatpush1.bf16.msra.mxu0 0
  %8185 = vmatprep.subr.bf16.mxu0 0
  %8186 = vmatpush1.bf16.msra.mxu0 0
  %8187 = vmatprep.subr.bf16.mxu0 0
  %8188 = vmatpush1.bf16.msra.mxu0 0
  %8189 = vmatprep.subr.bf16.mxu0 0
  %8190 = vmatpush1.bf16.msra.mxu0 0
  %8191 = vmatprep.subr.bf16.mxu0 0
  %8192 = vmatpush1.bf16.msra.mxu0 0
  %8193 = vmatprep.subr.bf16.mxu0 0
  %8194 = vmatpush1.bf16.msra.mxu0 0
  %8195 = vmatprep.subr.bf16.mxu0 0
  %8196 = vmatpush1.bf16.msra.mxu0 %v8176
  %8197 = vmatprep.subr.bf16.mxu0 0
  %8198 = vmatpush2.bf16.msra.mxu0 0
  %8199 = vmatprep.subr.bf16.mxu0 0
  %8200 = vmatpush2.bf16.msra.mxu0 0
  %8201 = vmatprep.subr.bf16.mxu0 0
  %8202 = vmatpush2.bf16.msra.mxu0 0
  %8203 = vmatprep.subr.bf16.mxu0 0
  %8204 = vmatpush2.bf16.msra.mxu0 0
  %8205 = vmatprep.subr.bf16.mxu0 0
  %8206 = vmatpush2.bf16.msra.mxu0 0
  %8207 = vmatprep.subr.bf16.mxu0 0
  %8208 = vmatpush2.bf16.msra.mxu0 0
  %8209 = vmatprep.subr.bf16.mxu0 0
  %8210 = vmatpush2.bf16.msra.mxu0 0
  %8211 = vmatprep.subr.bf16.mxu0 0
  %8212 = vmatpush2.bf16.msra.mxu0 0
  %8213 = vmatprep.mubr.bf16.mxu0 0
  %8214 = vmatmul.mubr.bf16.gmra.mxu0 %v8179
  %v8215 = vpop.f32.mrf.mxu0
  %v8216 = vadd.f32 0.0, %v8215
  %v8217 = vpop.f32.mrf.mxu0
  %v8218 = vpop.f32.mrf.mxu0
  %v8219 = vadd.f32 0.0, %v8218
  %v8220 = vpop.f32.mrf.mxu0
  %8221 = vdwg.mxu0
  %8222 = vrot.lane.b32.xlu0 %v5442, 64
  %v8223 = vpop.permute.xlu0 %8222
  %v8226 = vsel %vm912, %v7938, 0
  %8228 = vmatprep.subr.bf16.mxu0 0
  %8229 = vmatpush1.bf16.msra.mxu0 0
  %8230 = vmatprep.subr.bf16.mxu0 0
  %8231 = vmatpush1.bf16.msra.mxu0 0
  %8232 = vmatprep.subr.bf16.mxu0 0
  %8233 = vmatpush1.bf16.msra.mxu0 0
  %8234 = vmatprep.subr.bf16.mxu0 0
  %8235 = vmatpush1.bf16.msra.mxu0 0
  %8236 = vmatprep.subr.bf16.mxu0 0
  %8237 = vmatpush1.bf16.msra.mxu0 0
  %8238 = vmatprep.subr.bf16.mxu0 0
  %8239 = vmatpush1.bf16.msra.mxu0 0
  %8240 = vmatprep.subr.bf16.mxu0 0
  %8241 = vmatpush1.bf16.msra.mxu0 0
  %8242 = vmatprep.subr.bf16.mxu0 0
  %8243 = vmatpush1.bf16.msra.mxu0 %v8223
  %8244 = vmatprep.subr.bf16.mxu0 0
  %8245 = vmatpush2.bf16.msra.mxu0 0
  %8246 = vmatprep.subr.bf16.mxu0 0
  %8247 = vmatpush2.bf16.msra.mxu0 0
  %8248 = vmatprep.subr.bf16.mxu0 0
  %8249 = vmatpush2.bf16.msra.mxu0 0
  %8250 = vmatprep.subr.bf16.mxu0 0
  %8251 = vmatpush2.bf16.msra.mxu0 0
  %8252 = vmatprep.subr.bf16.mxu0 0
  %8253 = vmatpush2.bf16.msra.mxu0 0
  %8254 = vmatprep.subr.bf16.mxu0 0
  %8255 = vmatpush2.bf16.msra.mxu0 0
  %8256 = vmatprep.subr.bf16.mxu0 0
  %8257 = vmatpush2.bf16.msra.mxu0 0
  %8258 = vmatprep.subr.bf16.mxu0 0
  %8259 = vmatpush2.bf16.msra.mxu0 0
  %8260 = vmatprep.mubr.bf16.mxu0 0
  %8261 = vmatmul.mubr.bf16.gmra.mxu0 %v8226
  %v8262 = vpop.f32.mrf.mxu0
  %v8263 = vadd.f32 0.0, %v8262
  %v8264 = vpop.f32.mrf.mxu0
  %v8265 = vpop.f32.mrf.mxu0
  %v8266 = vadd.f32 0.0, %v8265
  %v8267 = vpop.f32.mrf.mxu0
  %8268 = vdwg.mxu0
  %8269 = vrot.lane.b32.xlu0 %v5443, 64
  %v8270 = vpop.permute.xlu0 %8269
  %v8273 = vsel %vm912, %v7939, 0
  %8275 = vmatprep.subr.bf16.mxu0 0
  %8276 = vmatpush1.bf16.msra.mxu0 0
  %8277 = vmatprep.subr.bf16.mxu0 0
  %8278 = vmatpush1.bf16.msra.mxu0 0
  %8279 = vmatprep.subr.bf16.mxu0 0
  %8280 = vmatpush1.bf16.msra.mxu0 0
  %8281 = vmatprep.subr.bf16.mxu0 0
  %8282 = vmatpush1.bf16.msra.mxu0 0
  %8283 = vmatprep.subr.bf16.mxu0 0
  %8284 = vmatpush1.bf16.msra.mxu0 0
  %8285 = vmatprep.subr.bf16.mxu0 0
  %8286 = vmatpush1.bf16.msra.mxu0 0
  %8287 = vmatprep.subr.bf16.mxu0 0
  %8288 = vmatpush1.bf16.msra.mxu0 0
  %8289 = vmatprep.subr.bf16.mxu0 0
  %8290 = vmatpush1.bf16.msra.mxu0 %v8270
  %8291 = vmatprep.subr.bf16.mxu0 0
  %8292 = vmatpush2.bf16.msra.mxu0 0
  %8293 = vmatprep.subr.bf16.mxu0 0
  %8294 = vmatpush2.bf16.msra.mxu0 0
  %8295 = vmatprep.subr.bf16.mxu0 0
  %8296 = vmatpush2.bf16.msra.mxu0 0
  %8297 = vmatprep.subr.bf16.mxu0 0
  %8298 = vmatpush2.bf16.msra.mxu0 0
  %8299 = vmatprep.subr.bf16.mxu0 0
  %8300 = vmatpush2.bf16.msra.mxu0 0
  %8301 = vmatprep.subr.bf16.mxu0 0
  %8302 = vmatpush2.bf16.msra.mxu0 0
  %8303 = vmatprep.subr.bf16.mxu0 0
  %8304 = vmatpush2.bf16.msra.mxu0 0
  %8305 = vmatprep.subr.bf16.mxu0 0
  %8306 = vmatpush2.bf16.msra.mxu0 0
  %8307 = vmatprep.mubr.bf16.mxu0 0
  %8308 = vmatmul.mubr.bf16.gmra.mxu0 %v8273
  %v8309 = vpop.f32.mrf.mxu0
  %v8310 = vadd.f32 0.0, %v8309
  %v8311 = vpop.f32.mrf.mxu0
  %v8312 = vpop.f32.mrf.mxu0
  %v8313 = vadd.f32 0.0, %v8312
  %v8314 = vpop.f32.mrf.mxu0
  %8315 = vdwg.mxu0
  %8316 = vrot.lane.b32.xlu0 %v5420, 32
  %v8317 = vpop.permute.xlu0 %8316
  %8318 = vrot.lane.b32.xlu0 %v5428, 32
  %v8319 = vpop.permute.xlu0 %8318
  %v8321 = vsel %vm535, %v8317, 0
  %v8324 = vsel %vm535, %v8319, 0
  %8326 = vmatprep.subr.bf16.mxu0 0
  %8327 = vmatpush1.bf16.xpose.msra.mxu0 0
  %8328 = vmatprep.subr.bf16.mxu0 0
  %8329 = vmatpush1.bf16.xpose.msra.mxu0 0
  %8330 = vmatprep.subr.bf16.mxu0 0
  %8331 = vmatpush1.bf16.xpose.msra.mxu0 0
  %8332 = vmatprep.subr.bf16.mxu0 0
  %8333 = vmatpush1.bf16.xpose.msra.mxu0 0
  %8334 = vmatprep.subr.bf16.mxu0 0
  %8335 = vmatpush1.bf16.xpose.msra.mxu0 0
  %8336 = vmatprep.subr.bf16.mxu0 0
  %8337 = vmatpush1.bf16.xpose.msra.mxu0 0
  %8338 = vmatprep.subr.bf16.mxu0 0
  %8339 = vmatpush1.bf16.xpose.msra.mxu0 0
  %8340 = vmatprep.subr.bf16.mxu0 0
  %8341 = vmatpush1.bf16.xpose.msra.mxu0 %v8324
  %8342 = vmatprep.subr.bf16.mxu0 0
  %8343 = vmatpush2.bf16.xpose.msra.mxu0 0
  %8344 = vmatprep.subr.bf16.mxu0 0
  %8345 = vmatpush2.bf16.xpose.msra.mxu0 0
  %8346 = vmatprep.subr.bf16.mxu0 0
  %8347 = vmatpush2.bf16.xpose.msra.mxu0 0
  %8348 = vmatprep.subr.bf16.mxu0 0
  %8349 = vmatpush2.bf16.xpose.msra.mxu0 0
  %8350 = vmatprep.subr.bf16.mxu0 0
  %8351 = vmatpush2.bf16.xpose.msra.mxu0 0
  %8352 = vmatprep.subr.bf16.mxu0 0
  %8353 = vmatpush2.bf16.xpose.msra.mxu0 0
  %8354 = vmatprep.subr.bf16.mxu0 0
  %8355 = vmatpush2.bf16.xpose.msra.mxu0 0
  %8356 = vmatprep.subr.bf16.mxu0 0
  %8357 = vmatpush2.bf16.xpose.msra.mxu0 0
  %8358 = vmatprep.mubr.bf16.mxu0 0
  %8359 = vmatmul.mubr.bf16.gmra.mxu0 %v8321
  %v8360 = vpop.f32.mrf.mxu0
  %v8361 = vadd.f32 %v117, %v8360
  %v8362 = vpop.f32.mrf.mxu0
  %v8363 = vpop.f32.mrf.mxu0
  %v8364 = vadd.f32 %v118, %v8363
  %v8365 = vpop.f32.mrf.mxu0
  %8366 = vdwg.mxu0
  %8367 = vrot.lane.b32.xlu0 %v5421, 32
  %v8368 = vpop.permute.xlu0 %8367
  %8369 = vrot.lane.b32.xlu0 %v5429, 32
  %v8370 = vpop.permute.xlu0 %8369
  %v8372 = vsel %vm535, %v8368, 0
  %v8375 = vsel %vm535, %v8370, 0
  %8377 = vmatprep.subr.bf16.mxu0 0
  %8378 = vmatpush1.bf16.xpose.msra.mxu0 0
  %8379 = vmatprep.subr.bf16.mxu0 0
  %8380 = vmatpush1.bf16.xpose.msra.mxu0 0
  %8381 = vmatprep.subr.bf16.mxu0 0
  %8382 = vmatpush1.bf16.xpose.msra.mxu0 0
  %8383 = vmatprep.subr.bf16.mxu0 0
  %8384 = vmatpush1.bf16.xpose.msra.mxu0 0
  %8385 = vmatprep.subr.bf16.mxu0 0
  %8386 = vmatpush1.bf16.xpose.msra.mxu0 0
  %8387 = vmatprep.subr.bf16.mxu0 0
  %8388 = vmatpush1.bf16.xpose.msra.mxu0 0
  %8389 = vmatprep.subr.bf16.mxu0 0
  %8390 = vmatpush1.bf16.xpose.msra.mxu0 0
  %8391 = vmatprep.subr.bf16.mxu0 0
  %8392 = vmatpush1.bf16.xpose.msra.mxu0 %v8375
  %8393 = vmatprep.subr.bf16.mxu0 0
  %8394 = vmatpush2.bf16.xpose.msra.mxu0 0
  %8395 = vmatprep.subr.bf16.mxu0 0
  %8396 = vmatpush2.bf16.xpose.msra.mxu0 0
  %8397 = vmatprep.subr.bf16.mxu0 0
  %8398 = vmatpush2.bf16.xpose.msra.mxu0 0
  %8399 = vmatprep.subr.bf16.mxu0 0
  %8400 = vmatpush2.bf16.xpose.msra.mxu0 0
  %8401 = vmatprep.subr.bf16.mxu0 0
  %8402 = vmatpush2.bf16.xpose.msra.mxu0 0
  %8403 = vmatprep.subr.bf16.mxu0 0
  %8404 = vmatpush2.bf16.xpose.msra.mxu0 0
  %8405 = vmatprep.subr.bf16.mxu0 0
  %8406 = vmatpush2.bf16.xpose.msra.mxu0 0
  %8407 = vmatprep.subr.bf16.mxu0 0
  %8408 = vmatpush2.bf16.xpose.msra.mxu0 0
  %8409 = vmatprep.mubr.bf16.mxu0 0
  %8410 = vmatmul.mubr.bf16.gmra.mxu0 %v8372
  %v8411 = vpop.f32.mrf.mxu0
  %v8412 = vadd.f32 %v119, %v8411
  %v8413 = vpop.f32.mrf.mxu0
  %v8414 = vpop.f32.mrf.mxu0
  %v8415 = vadd.f32 %v120, %v8414
  %v8416 = vpop.f32.mrf.mxu0
  %8417 = vdwg.mxu0
  %8418 = vrot.lane.b32.xlu0 %v5422, 32
  %v8419 = vpop.permute.xlu0 %8418
  %8420 = vrot.lane.b32.xlu0 %v5430, 32
  %v8421 = vpop.permute.xlu0 %8420
  %v8423 = vsel %vm535, %v8419, 0
  %v8426 = vsel %vm535, %v8421, 0
  %8428 = vmatprep.subr.bf16.mxu0 0
  %8429 = vmatpush1.bf16.xpose.msra.mxu0 0
  %8430 = vmatprep.subr.bf16.mxu0 0
  %8431 = vmatpush1.bf16.xpose.msra.mxu0 0
  %8432 = vmatprep.subr.bf16.mxu0 0
  %8433 = vmatpush1.bf16.xpose.msra.mxu0 0
  %8434 = vmatprep.subr.bf16.mxu0 0
  %8435 = vmatpush1.bf16.xpose.msra.mxu0 0
  %8436 = vmatprep.subr.bf16.mxu0 0
  %8437 = vmatpush1.bf16.xpose.msra.mxu0 0
  %8438 = vmatprep.subr.bf16.mxu0 0
  %8439 = vmatpush1.bf16.xpose.msra.mxu0 0
  %8440 = vmatprep.subr.bf16.mxu0 0
  %8441 = vmatpush1.bf16.xpose.msra.mxu0 0
  %8442 = vmatprep.subr.bf16.mxu0 0
  %8443 = vmatpush1.bf16.xpose.msra.mxu0 %v8426
  %8444 = vmatprep.subr.bf16.mxu0 0
  %8445 = vmatpush2.bf16.xpose.msra.mxu0 0
  %8446 = vmatprep.subr.bf16.mxu0 0
  %8447 = vmatpush2.bf16.xpose.msra.mxu0 0
  %8448 = vmatprep.subr.bf16.mxu0 0
  %8449 = vmatpush2.bf16.xpose.msra.mxu0 0
  %8450 = vmatprep.subr.bf16.mxu0 0
  %8451 = vmatpush2.bf16.xpose.msra.mxu0 0
  %8452 = vmatprep.subr.bf16.mxu0 0
  %8453 = vmatpush2.bf16.xpose.msra.mxu0 0
  %8454 = vmatprep.subr.bf16.mxu0 0
  %8455 = vmatpush2.bf16.xpose.msra.mxu0 0
  %8456 = vmatprep.subr.bf16.mxu0 0
  %8457 = vmatpush2.bf16.xpose.msra.mxu0 0
  %8458 = vmatprep.subr.bf16.mxu0 0
  %8459 = vmatpush2.bf16.xpose.msra.mxu0 0
  %8460 = vmatprep.mubr.bf16.mxu0 0
  %8461 = vmatmul.mubr.bf16.gmra.mxu0 %v8423
  %v8462 = vpop.f32.mrf.mxu0
  %v8463 = vadd.f32 %v121, %v8462
  %v8464 = vpop.f32.mrf.mxu0
  %v8465 = vpop.f32.mrf.mxu0
  %v8466 = vadd.f32 %v122, %v8465
  %v8467 = vpop.f32.mrf.mxu0
  %8468 = vdwg.mxu0
  %8469 = vrot.lane.b32.xlu0 %v5423, 32
  %v8470 = vpop.permute.xlu0 %8469
  %8471 = vrot.lane.b32.xlu0 %v5431, 32
  %v8472 = vpop.permute.xlu0 %8471
  %v8474 = vsel %vm535, %v8470, 0
  %v8477 = vsel %vm535, %v8472, 0
  %8479 = vmatprep.subr.bf16.mxu0 0
  %8480 = vmatpush1.bf16.xpose.msra.mxu0 0
  %8481 = vmatprep.subr.bf16.mxu0 0
  %8482 = vmatpush1.bf16.xpose.msra.mxu0 0
  %8483 = vmatprep.subr.bf16.mxu0 0
  %8484 = vmatpush1.bf16.xpose.msra.mxu0 0
  %8485 = vmatprep.subr.bf16.mxu0 0
  %8486 = vmatpush1.bf16.xpose.msra.mxu0 0
  %8487 = vmatprep.subr.bf16.mxu0 0
  %8488 = vmatpush1.bf16.xpose.msra.mxu0 0
  %8489 = vmatprep.subr.bf16.mxu0 0
  %8490 = vmatpush1.bf16.xpose.msra.mxu0 0
  %8491 = vmatprep.subr.bf16.mxu0 0
  %8492 = vmatpush1.bf16.xpose.msra.mxu0 0
  %8493 = vmatprep.subr.bf16.mxu0 0
  %8494 = vmatpush1.bf16.xpose.msra.mxu0 %v8477
  %8495 = vmatprep.subr.bf16.mxu0 0
  %8496 = vmatpush2.bf16.xpose.msra.mxu0 0
  %8497 = vmatprep.subr.bf16.mxu0 0
  %8498 = vmatpush2.bf16.xpose.msra.mxu0 0
  %8499 = vmatprep.subr.bf16.mxu0 0
  %8500 = vmatpush2.bf16.xpose.msra.mxu0 0
  %8501 = vmatprep.subr.bf16.mxu0 0
  %8502 = vmatpush2.bf16.xpose.msra.mxu0 0
  %8503 = vmatprep.subr.bf16.mxu0 0
  %8504 = vmatpush2.bf16.xpose.msra.mxu0 0
  %8505 = vmatprep.subr.bf16.mxu0 0
  %8506 = vmatpush2.bf16.xpose.msra.mxu0 0
  %8507 = vmatprep.subr.bf16.mxu0 0
  %8508 = vmatpush2.bf16.xpose.msra.mxu0 0
  %8509 = vmatprep.subr.bf16.mxu0 0
  %8510 = vmatpush2.bf16.xpose.msra.mxu0 0
  %8511 = vmatprep.mubr.bf16.mxu0 0
  %8512 = vmatmul.mubr.bf16.gmra.mxu0 %v8474
  %v8513 = vpop.f32.mrf.mxu0
  %v8514 = vadd.f32 %v123, %v8513
  %v8515 = vpop.f32.mrf.mxu0
  %v8516 = vpop.f32.mrf.mxu0
  %v8517 = vadd.f32 %v124, %v8516
  %v8518 = vpop.f32.mrf.mxu0
  %8519 = vdwg.mxu0
  %8520 = vrot.lane.b32.xlu0 %v5424, 32
  %v8521 = vpop.permute.xlu0 %8520
  %8522 = vrot.lane.b32.xlu0 %v5432, 32
  %v8523 = vpop.permute.xlu0 %8522
  %v8525 = vsel %vm535, %v8521, 0
  %v8528 = vsel %vm535, %v8523, 0
  %8530 = vmatprep.subr.bf16.mxu0 0
  %8531 = vmatpush1.bf16.xpose.msra.mxu0 0
  %8532 = vmatprep.subr.bf16.mxu0 0
  %8533 = vmatpush1.bf16.xpose.msra.mxu0 0
  %8534 = vmatprep.subr.bf16.mxu0 0
  %8535 = vmatpush1.bf16.xpose.msra.mxu0 0
  %8536 = vmatprep.subr.bf16.mxu0 0
  %8537 = vmatpush1.bf16.xpose.msra.mxu0 0
  %8538 = vmatprep.subr.bf16.mxu0 0
  %8539 = vmatpush1.bf16.xpose.msra.mxu0 0
  %8540 = vmatprep.subr.bf16.mxu0 0
  %8541 = vmatpush1.bf16.xpose.msra.mxu0 0
  %8542 = vmatprep.subr.bf16.mxu0 0
  %8543 = vmatpush1.bf16.xpose.msra.mxu0 0
  %8544 = vmatprep.subr.bf16.mxu0 0
  %8545 = vmatpush1.bf16.xpose.msra.mxu0 %v8528
  %8546 = vmatprep.subr.bf16.mxu0 0
  %8547 = vmatpush2.bf16.xpose.msra.mxu0 0
  %8548 = vmatprep.subr.bf16.mxu0 0
  %8549 = vmatpush2.bf16.xpose.msra.mxu0 0
  %8550 = vmatprep.subr.bf16.mxu0 0
  %8551 = vmatpush2.bf16.xpose.msra.mxu0 0
  %8552 = vmatprep.subr.bf16.mxu0 0
  %8553 = vmatpush2.bf16.xpose.msra.mxu0 0
  %8554 = vmatprep.subr.bf16.mxu0 0
  %8555 = vmatpush2.bf16.xpose.msra.mxu0 0
  %8556 = vmatprep.subr.bf16.mxu0 0
  %8557 = vmatpush2.bf16.xpose.msra.mxu0 0
  %8558 = vmatprep.subr.bf16.mxu0 0
  %8559 = vmatpush2.bf16.xpose.msra.mxu0 0
  %8560 = vmatprep.subr.bf16.mxu0 0
  %8561 = vmatpush2.bf16.xpose.msra.mxu0 0
  %8562 = vmatprep.mubr.bf16.mxu0 0
  %8563 = vmatmul.mubr.bf16.gmra.mxu0 %v8525
  %v8564 = vpop.f32.mrf.mxu0
  %v8565 = vadd.f32 %v125, %v8564
  %v8566 = vpop.f32.mrf.mxu0
  %v8567 = vpop.f32.mrf.mxu0
  %v8568 = vadd.f32 %v126, %v8567
  %v8569 = vpop.f32.mrf.mxu0
  %8570 = vdwg.mxu0
  %8571 = vrot.lane.b32.xlu0 %v5425, 32
  %v8572 = vpop.permute.xlu0 %8571
  %8573 = vrot.lane.b32.xlu0 %v5433, 32
  %v8574 = vpop.permute.xlu0 %8573
  %v8576 = vsel %vm535, %v8572, 0
  %v8579 = vsel %vm535, %v8574, 0
  %8581 = vmatprep.subr.bf16.mxu0 0
  %8582 = vmatpush1.bf16.xpose.msra.mxu0 0
  %8583 = vmatprep.subr.bf16.mxu0 0
  %8584 = vmatpush1.bf16.xpose.msra.mxu0 0
  %8585 = vmatprep.subr.bf16.mxu0 0
  %8586 = vmatpush1.bf16.xpose.msra.mxu0 0
  %8587 = vmatprep.subr.bf16.mxu0 0
  %8588 = vmatpush1.bf16.xpose.msra.mxu0 0
  %8589 = vmatprep.subr.bf16.mxu0 0
  %8590 = vmatpush1.bf16.xpose.msra.mxu0 0
  %8591 = vmatprep.subr.bf16.mxu0 0
  %8592 = vmatpush1.bf16.xpose.msra.mxu0 0
  %8593 = vmatprep.subr.bf16.mxu0 0
  %8594 = vmatpush1.bf16.xpose.msra.mxu0 0
  %8595 = vmatprep.subr.bf16.mxu0 0
  %8596 = vmatpush1.bf16.xpose.msra.mxu0 %v8579
  %8597 = vmatprep.subr.bf16.mxu0 0
  %8598 = vmatpush2.bf16.xpose.msra.mxu0 0
  %8599 = vmatprep.subr.bf16.mxu0 0
  %8600 = vmatpush2.bf16.xpose.msra.mxu0 0
  %8601 = vmatprep.subr.bf16.mxu0 0
  %8602 = vmatpush2.bf16.xpose.msra.mxu0 0
  %8603 = vmatprep.subr.bf16.mxu0 0
  %8604 = vmatpush2.bf16.xpose.msra.mxu0 0
  %8605 = vmatprep.subr.bf16.mxu0 0
  %8606 = vmatpush2.bf16.xpose.msra.mxu0 0
  %8607 = vmatprep.subr.bf16.mxu0 0
  %8608 = vmatpush2.bf16.xpose.msra.mxu0 0
  %8609 = vmatprep.subr.bf16.mxu0 0
  %8610 = vmatpush2.bf16.xpose.msra.mxu0 0
  %8611 = vmatprep.subr.bf16.mxu0 0
  %8612 = vmatpush2.bf16.xpose.msra.mxu0 0
  %8613 = vmatprep.mubr.bf16.mxu0 0
  %8614 = vmatmul.mubr.bf16.gmra.mxu0 %v8576
  %v8615 = vpop.f32.mrf.mxu0
  %v8616 = vadd.f32 %v127, %v8615
  %v8617 = vpop.f32.mrf.mxu0
  %v8618 = vpop.f32.mrf.mxu0
  %v8619 = vadd.f32 %v128, %v8618
  %v8620 = vpop.f32.mrf.mxu0
  %8621 = vdwg.mxu0
  %8622 = vrot.lane.b32.xlu0 %v5426, 32
  %v8623 = vpop.permute.xlu0 %8622
  %8624 = vrot.lane.b32.xlu0 %v5434, 32
  %v8625 = vpop.permute.xlu0 %8624
  %v8627 = vsel %vm535, %v8623, 0
  %v8630 = vsel %vm535, %v8625, 0
  %8632 = vmatprep.subr.bf16.mxu0 0
  %8633 = vmatpush1.bf16.xpose.msra.mxu0 0
  %8634 = vmatprep.subr.bf16.mxu0 0
  %8635 = vmatpush1.bf16.xpose.msra.mxu0 0
  %8636 = vmatprep.subr.bf16.mxu0 0
  %8637 = vmatpush1.bf16.xpose.msra.mxu0 0
  %8638 = vmatprep.subr.bf16.mxu0 0
  %8639 = vmatpush1.bf16.xpose.msra.mxu0 0
  %8640 = vmatprep.subr.bf16.mxu0 0
  %8641 = vmatpush1.bf16.xpose.msra.mxu0 0
  %8642 = vmatprep.subr.bf16.mxu0 0
  %8643 = vmatpush1.bf16.xpose.msra.mxu0 0
  %8644 = vmatprep.subr.bf16.mxu0 0
  %8645 = vmatpush1.bf16.xpose.msra.mxu0 0
  %8646 = vmatprep.subr.bf16.mxu0 0
  %8647 = vmatpush1.bf16.xpose.msra.mxu0 %v8630
  %8648 = vmatprep.subr.bf16.mxu0 0
  %8649 = vmatpush2.bf16.xpose.msra.mxu0 0
  %8650 = vmatprep.subr.bf16.mxu0 0
  %8651 = vmatpush2.bf16.xpose.msra.mxu0 0
  %8652 = vmatprep.subr.bf16.mxu0 0
  %8653 = vmatpush2.bf16.xpose.msra.mxu0 0
  %8654 = vmatprep.subr.bf16.mxu0 0
  %8655 = vmatpush2.bf16.xpose.msra.mxu0 0
  %8656 = vmatprep.subr.bf16.mxu0 0
  %8657 = vmatpush2.bf16.xpose.msra.mxu0 0
  %8658 = vmatprep.subr.bf16.mxu0 0
  %8659 = vmatpush2.bf16.xpose.msra.mxu0 0
  %8660 = vmatprep.subr.bf16.mxu0 0
  %8661 = vmatpush2.bf16.xpose.msra.mxu0 0
  %8662 = vmatprep.subr.bf16.mxu0 0
  %8663 = vmatpush2.bf16.xpose.msra.mxu0 0
  %8664 = vmatprep.mubr.bf16.mxu0 0
  %8665 = vmatmul.mubr.bf16.gmra.mxu0 %v8627
  %v8666 = vpop.f32.mrf.mxu0
  %v8667 = vadd.f32 %v129, %v8666
  %v8668 = vpop.f32.mrf.mxu0
  %v8669 = vpop.f32.mrf.mxu0
  %v8670 = vadd.f32 %v130, %v8669
  %v8671 = vpop.f32.mrf.mxu0
  %8672 = vdwg.mxu0
  %8673 = vrot.lane.b32.xlu0 %v5427, 32
  %v8674 = vpop.permute.xlu0 %8673
  %8675 = vrot.lane.b32.xlu0 %v5435, 32
  %v8676 = vpop.permute.xlu0 %8675
  %v8678 = vsel %vm535, %v8674, 0
  %v8681 = vsel %vm535, %v8676, 0
  %8683 = vmatprep.subr.bf16.mxu0 0
  %8684 = vmatpush1.bf16.xpose.msra.mxu0 0
  %8685 = vmatprep.subr.bf16.mxu0 0
  %8686 = vmatpush1.bf16.xpose.msra.mxu0 0
  %8687 = vmatprep.subr.bf16.mxu0 0
  %8688 = vmatpush1.bf16.xpose.msra.mxu0 0
  %8689 = vmatprep.subr.bf16.mxu0 0
  %8690 = vmatpush1.bf16.xpose.msra.mxu0 0
  %8691 = vmatprep.subr.bf16.mxu0 0
  %8692 = vmatpush1.bf16.xpose.msra.mxu0 0
  %8693 = vmatprep.subr.bf16.mxu0 0
  %8694 = vmatpush1.bf16.xpose.msra.mxu0 0
  %8695 = vmatprep.subr.bf16.mxu0 0
  %8696 = vmatpush1.bf16.xpose.msra.mxu0 0
  %8697 = vmatprep.subr.bf16.mxu0 0
  %8698 = vmatpush1.bf16.xpose.msra.mxu0 %v8681
  %8699 = vmatprep.subr.bf16.mxu0 0
  %8700 = vmatpush2.bf16.xpose.msra.mxu0 0
  %8701 = vmatprep.subr.bf16.mxu0 0
  %8702 = vmatpush2.bf16.xpose.msra.mxu0 0
  %8703 = vmatprep.subr.bf16.mxu0 0
  %8704 = vmatpush2.bf16.xpose.msra.mxu0 0
  %8705 = vmatprep.subr.bf16.mxu0 0
  %8706 = vmatpush2.bf16.xpose.msra.mxu0 0
  %8707 = vmatprep.subr.bf16.mxu0 0
  %8708 = vmatpush2.bf16.xpose.msra.mxu0 0
  %8709 = vmatprep.subr.bf16.mxu0 0
  %8710 = vmatpush2.bf16.xpose.msra.mxu0 0
  %8711 = vmatprep.subr.bf16.mxu0 0
  %8712 = vmatpush2.bf16.xpose.msra.mxu0 0
  %8713 = vmatprep.subr.bf16.mxu0 0
  %8714 = vmatpush2.bf16.xpose.msra.mxu0 0
  %8715 = vmatprep.mubr.bf16.mxu0 0
  %8716 = vmatmul.mubr.bf16.gmra.mxu0 %v8678
  %v8717 = vpop.f32.mrf.mxu0
  %v8718 = vadd.f32 %v131, %v8717
  %v8719 = vpop.f32.mrf.mxu0
  %v8720 = vpop.f32.mrf.mxu0
  %v8721 = vadd.f32 %v132, %v8720
  %v8722 = vpop.f32.mrf.mxu0
  %8723 = vdwg.mxu0
  %v8724 = vsel %vm912, %v8361, -inf
  %8725 = vmax.xlane.f32.xlu0 %v8724
  %v8726 = vpop.xlane.xlu0 %8725
  %v8727 = vsel %vm912, %v8364, -inf
  %8728 = vmax.xlane.f32.xlu0 %v8727
  %v8729 = vpop.xlane.xlu0 %8728
  %v8730 = vsel %vm912, %v8412, -inf
  %8731 = vmax.xlane.f32.xlu0 %v8730
  %v8732 = vpop.xlane.xlu0 %8731
  %v8733 = vsel %vm912, %v8415, -inf
  %8734 = vmax.xlane.f32.xlu0 %v8733
  %v8735 = vpop.xlane.xlu0 %8734
  %v8736 = vsel %vm912, %v8463, -inf
  %8737 = vmax.xlane.f32.xlu0 %v8736
  %v8738 = vpop.xlane.xlu0 %8737
  %v8739 = vsel %vm912, %v8466, -inf
  %8740 = vmax.xlane.f32.xlu0 %v8739
  %v8741 = vpop.xlane.xlu0 %8740
  %v8742 = vsel %vm912, %v8514, -inf
  %8743 = vmax.xlane.f32.xlu0 %v8742
  %v8744 = vpop.xlane.xlu0 %8743
  %v8745 = vsel %vm912, %v8517, -inf
  %8746 = vmax.xlane.f32.xlu0 %v8745
  %v8747 = vpop.xlane.xlu0 %8746
  %v8748 = vsel %vm912, %v8565, -inf
  %8749 = vmax.xlane.f32.xlu0 %v8748
  %v8750 = vpop.xlane.xlu0 %8749
  %v8751 = vsel %vm912, %v8568, -inf
  %8752 = vmax.xlane.f32.xlu0 %v8751
  %v8753 = vpop.xlane.xlu0 %8752
  %v8754 = vsel %vm912, %v8616, -inf
  %8755 = vmax.xlane.f32.xlu0 %v8754
  %v8756 = vpop.xlane.xlu0 %8755
  %v8757 = vsel %vm912, %v8619, -inf
  %8758 = vmax.xlane.f32.xlu0 %v8757
  %v8759 = vpop.xlane.xlu0 %8758
  %v8760 = vsel %vm912, %v8667, -inf
  %8761 = vmax.xlane.f32.xlu0 %v8760
  %v8762 = vpop.xlane.xlu0 %8761
  %v8763 = vsel %vm912, %v8670, -inf
  %8764 = vmax.xlane.f32.xlu0 %v8763
  %v8765 = vpop.xlane.xlu0 %8764
  %v8766 = vsel %vm912, %v8718, -inf
  %8767 = vmax.xlane.f32.xlu0 %v8766
  %v8768 = vpop.xlane.xlu0 %8767
  %v8769 = vsel %vm912, %v8721, -inf
  %8770 = vmax.xlane.f32.xlu0 %v8769
  %v8771 = vpop.xlane.xlu0 %8770
  %v8772 = vsub.f32 %v8361, %v8726
  %v8773 = vsub.f32 %v8364, %v8729
  %v8774 = vsub.f32 %v8412, %v8732
  %v8775 = vsub.f32 %v8415, %v8735
  %v8776 = vsub.f32 %v8463, %v8738
  %v8777 = vsub.f32 %v8466, %v8741
  %v8778 = vsub.f32 %v8514, %v8744
  %v8779 = vsub.f32 %v8517, %v8747
  %v8780 = vsub.f32 %v8565, %v8750
  %v8781 = vsub.f32 %v8568, %v8753
  %v8782 = vsub.f32 %v8616, %v8756
  %v8783 = vsub.f32 %v8619, %v8759
  %v8784 = vsub.f32 %v8667, %v8762
  %v8785 = vsub.f32 %v8670, %v8765
  %v8786 = vsub.f32 %v8718, %v8768
  %v8787 = vsub.f32 %v8721, %v8771
  %v8788 = vmul.f32 %v8772, 1.442695
  %v8789 = vpow.pop %v8788
  %v8790 = vmul.f32 %v8773, 1.442695
  %v8791 = vpow.pop %v8790
  %v8792 = vmul.f32 %v8774, 1.442695
  %v8793 = vpow.pop %v8792
  %v8794 = vmul.f32 %v8775, 1.442695
  %v8795 = vpow.pop %v8794
  %v8796 = vmul.f32 %v8776, 1.442695
  %v8797 = vpow.pop %v8796
  %v8798 = vmul.f32 %v8777, 1.442695
  %v8799 = vpow.pop %v8798
  %v8800 = vmul.f32 %v8778, 1.442695
  %v8801 = vpow.pop %v8800
  %v8802 = vmul.f32 %v8779, 1.442695
  %v8803 = vpow.pop %v8802
  %v8804 = vmul.f32 %v8780, 1.442695
  %v8805 = vpow.pop %v8804
  %v8806 = vmul.f32 %v8781, 1.442695
  %v8807 = vpow.pop %v8806
  %v8808 = vmul.f32 %v8782, 1.442695
  %v8809 = vpow.pop %v8808
  %v8810 = vmul.f32 %v8783, 1.442695
  %v8811 = vpow.pop %v8810
  %v8812 = vmul.f32 %v8784, 1.442695
  %v8813 = vpow.pop %v8812
  %v8814 = vmul.f32 %v8785, 1.442695
  %v8815 = vpow.pop %v8814
  %v8816 = vmul.f32 %v8786, 1.442695
  %v8817 = vpow.pop %v8816
  %v8818 = vmul.f32 %v8787, 1.442695
  %v8819 = vpow.pop %v8818
  %v8820 = vsel %vm912, %v8789, 0.0
  %8821 = vadd.xlane.f32.xlu0 %v8820
  %v8822 = vpop.xlane.xlu0 %8821
  %v8823 = vsel %vm912, %v8791, 0.0
  %8824 = vadd.xlane.f32.xlu0 %v8823
  %v8825 = vpop.xlane.xlu0 %8824
  %v8826 = vsel %vm912, %v8793, 0.0
  %8827 = vadd.xlane.f32.xlu0 %v8826
  %v8828 = vpop.xlane.xlu0 %8827
  %v8829 = vsel %vm912, %v8795, 0.0
  %8830 = vadd.xlane.f32.xlu0 %v8829
  %v8831 = vpop.xlane.xlu0 %8830
  %v8832 = vsel %vm912, %v8797, 0.0
  %8833 = vadd.xlane.f32.xlu0 %v8832
  %v8834 = vpop.xlane.xlu0 %8833
  %v8835 = vsel %vm912, %v8799, 0.0
  %8836 = vadd.xlane.f32.xlu0 %v8835
  %v8837 = vpop.xlane.xlu0 %8836
  %v8838 = vsel %vm912, %v8801, 0.0
  %8839 = vadd.xlane.f32.xlu0 %v8838
  %v8840 = vpop.xlane.xlu0 %8839
  %v8841 = vsel %vm912, %v8803, 0.0
  %8842 = vadd.xlane.f32.xlu0 %v8841
  %v8843 = vpop.xlane.xlu0 %8842
  %v8844 = vsel %vm912, %v8805, 0.0
  %8845 = vadd.xlane.f32.xlu0 %v8844
  %v8846 = vpop.xlane.xlu0 %8845
  %v8847 = vsel %vm912, %v8807, 0.0
  %8848 = vadd.xlane.f32.xlu0 %v8847
  %v8849 = vpop.xlane.xlu0 %8848
  %v8850 = vsel %vm912, %v8809, 0.0
  %8851 = vadd.xlane.f32.xlu0 %v8850
  %v8852 = vpop.xlane.xlu0 %8851
  %v8853 = vsel %vm912, %v8811, 0.0
  %8854 = vadd.xlane.f32.xlu0 %v8853
  %v8855 = vpop.xlane.xlu0 %8854
  %v8856 = vsel %vm912, %v8813, 0.0
  %8857 = vadd.xlane.f32.xlu0 %v8856
  %v8858 = vpop.xlane.xlu0 %8857
  %v8859 = vsel %vm912, %v8815, 0.0
  %8860 = vadd.xlane.f32.xlu0 %v8859
  %v8861 = vpop.xlane.xlu0 %8860
  %v8862 = vsel %vm912, %v8817, 0.0
  %8863 = vadd.xlane.f32.xlu0 %v8862
  %v8864 = vpop.xlane.xlu0 %8863
  %v8865 = vsel %vm912, %v8819, 0.0
  %8866 = vadd.xlane.f32.xlu0 %v8865
  %v8867 = vpop.xlane.xlu0 %8866
  %v8868 = vrcp.pop %v8822
  %v8869 = vrcp.pop %v8825
  %v8870 = vrcp.pop %v8828
  %v8871 = vrcp.pop %v8831
  %v8872 = vrcp.pop %v8834
  %v8873 = vrcp.pop %v8837
  %v8874 = vrcp.pop %v8840
  %v8875 = vrcp.pop %v8843
  %v8876 = vrcp.pop %v8846
  %v8877 = vrcp.pop %v8849
  %v8878 = vrcp.pop %v8852
  %v8879 = vrcp.pop %v8855
  %v8880 = vrcp.pop %v8858
  %v8881 = vrcp.pop %v8861
  %v8882 = vrcp.pop %v8864
  %v8883 = vrcp.pop %v8867
  %v8884 = vmul.f32 %v8789, %v8868
  %v8885 = vmul.f32 %v8791, %v8869
  %v8886 = vmul.f32 %v8793, %v8870
  %v8887 = vmul.f32 %v8795, %v8871
  %v8888 = vmul.f32 %v8797, %v8872
  %v8889 = vmul.f32 %v8799, %v8873
  %v8890 = vmul.f32 %v8801, %v8874
  %v8891 = vmul.f32 %v8803, %v8875
  %v8892 = vmul.f32 %v8805, %v8876
  %v8893 = vmul.f32 %v8807, %v8877
  %v8894 = vmul.f32 %v8809, %v8878
  %v8895 = vmul.f32 %v8811, %v8879
  %v8896 = vmul.f32 %v8813, %v8880
  %v8897 = vmul.f32 %v8815, %v8881
  %v8898 = vmul.f32 %v8817, %v8882
  %v8899 = vmul.f32 %v8819, %v8883
  %v8900 = vpack.c.bf16 %v8885, %v8884
  %v8901 = vpack.c.bf16 %v8887, %v8886
  %v8902 = vpack.c.bf16 %v8889, %v8888
  %v8903 = vpack.c.bf16 %v8891, %v8890
  %v8904 = vpack.c.bf16 %v8893, %v8892
  %v8905 = vpack.c.bf16 %v8895, %v8894
  %v8906 = vpack.c.bf16 %v8897, %v8896
  %v8907 = vpack.c.bf16 %v8899, %v8898
  %8908 = vrot.lane.b32.xlu0 %v5436, 32
  %v8909 = vpop.permute.xlu0 %8908
  %v8912 = vsel %vm912, %v8900, 0
  %8914 = vmatprep.subr.bf16.mxu0 0
  %8915 = vmatpush1.bf16.msra.mxu0 0
  %8916 = vmatprep.subr.bf16.mxu0 0
  %8917 = vmatpush1.bf16.msra.mxu0 0
  %8918 = vmatprep.subr.bf16.mxu0 0
  %8919 = vmatpush1.bf16.msra.mxu0 0
  %8920 = vmatprep.subr.bf16.mxu0 0
  %8921 = vmatpush1.bf16.msra.mxu0 0
  %8922 = vmatprep.subr.bf16.mxu0 0
  %8923 = vmatpush1.bf16.msra.mxu0 0
  %8924 = vmatprep.subr.bf16.mxu0 0
  %8925 = vmatpush1.bf16.msra.mxu0 0
  %8926 = vmatprep.subr.bf16.mxu0 0
  %8927 = vmatpush1.bf16.msra.mxu0 0
  %8928 = vmatprep.subr.bf16.mxu0 0
  %8929 = vmatpush1.bf16.msra.mxu0 %v8909
  %8930 = vmatprep.subr.bf16.mxu0 0
  %8931 = vmatpush2.bf16.msra.mxu0 0
  %8932 = vmatprep.subr.bf16.mxu0 0
  %8933 = vmatpush2.bf16.msra.mxu0 0
  %8934 = vmatprep.subr.bf16.mxu0 0
  %8935 = vmatpush2.bf16.msra.mxu0 0
  %8936 = vmatprep.subr.bf16.mxu0 0
  %8937 = vmatpush2.bf16.msra.mxu0 0
  %8938 = vmatprep.subr.bf16.mxu0 0
  %8939 = vmatpush2.bf16.msra.mxu0 0
  %8940 = vmatprep.subr.bf16.mxu0 0
  %8941 = vmatpush2.bf16.msra.mxu0 0
  %8942 = vmatprep.subr.bf16.mxu0 0
  %8943 = vmatpush2.bf16.msra.mxu0 0
  %8944 = vmatprep.subr.bf16.mxu0 0
  %8945 = vmatpush2.bf16.msra.mxu0 0
  %8946 = vmatprep.mubr.bf16.mxu0 0
  %8947 = vmatmul.mubr.bf16.gmra.mxu0 %v8912
  %v8948 = vpop.f32.mrf.mxu0
  %v8949 = vadd.f32 0.0, %v8948
  %v8950 = vpop.f32.mrf.mxu0
  %v8951 = vpop.f32.mrf.mxu0
  %v8952 = vadd.f32 0.0, %v8951
  %v8953 = vpop.f32.mrf.mxu0
  %8954 = vdwg.mxu0
  %8955 = vrot.lane.b32.xlu0 %v5437, 32
  %v8956 = vpop.permute.xlu0 %8955
  %v8959 = vsel %vm912, %v8901, 0
  %8961 = vmatprep.subr.bf16.mxu0 0
  %8962 = vmatpush1.bf16.msra.mxu0 0
  %8963 = vmatprep.subr.bf16.mxu0 0
  %8964 = vmatpush1.bf16.msra.mxu0 0
  %8965 = vmatprep.subr.bf16.mxu0 0
  %8966 = vmatpush1.bf16.msra.mxu0 0
  %8967 = vmatprep.subr.bf16.mxu0 0
  %8968 = vmatpush1.bf16.msra.mxu0 0
  %8969 = vmatprep.subr.bf16.mxu0 0
  %8970 = vmatpush1.bf16.msra.mxu0 0
  %8971 = vmatprep.subr.bf16.mxu0 0
  %8972 = vmatpush1.bf16.msra.mxu0 0
  %8973 = vmatprep.subr.bf16.mxu0 0
  %8974 = vmatpush1.bf16.msra.mxu0 0
  %8975 = vmatprep.subr.bf16.mxu0 0
  %8976 = vmatpush1.bf16.msra.mxu0 %v8956
  %8977 = vmatprep.subr.bf16.mxu0 0
  %8978 = vmatpush2.bf16.msra.mxu0 0
  %8979 = vmatprep.subr.bf16.mxu0 0
  %8980 = vmatpush2.bf16.msra.mxu0 0
  %8981 = vmatprep.subr.bf16.mxu0 0
  %8982 = vmatpush2.bf16.msra.mxu0 0
  %8983 = vmatprep.subr.bf16.mxu0 0
  %8984 = vmatpush2.bf16.msra.mxu0 0
  %8985 = vmatprep.subr.bf16.mxu0 0
  %8986 = vmatpush2.bf16.msra.mxu0 0
  %8987 = vmatprep.subr.bf16.mxu0 0
  %8988 = vmatpush2.bf16.msra.mxu0 0
  %8989 = vmatprep.subr.bf16.mxu0 0
  %8990 = vmatpush2.bf16.msra.mxu0 0
  %8991 = vmatprep.subr.bf16.mxu0 0
  %8992 = vmatpush2.bf16.msra.mxu0 0
  %8993 = vmatprep.mubr.bf16.mxu0 0
  %8994 = vmatmul.mubr.bf16.gmra.mxu0 %v8959
  %v8995 = vpop.f32.mrf.mxu0
  %v8996 = vadd.f32 0.0, %v8995
  %v8997 = vpop.f32.mrf.mxu0
  %v8998 = vpop.f32.mrf.mxu0
  %v8999 = vadd.f32 0.0, %v8998
  %v9000 = vpop.f32.mrf.mxu0
  %9001 = vdwg.mxu0
  %9002 = vrot.lane.b32.xlu0 %v5438, 32
  %v9003 = vpop.permute.xlu0 %9002
  %v9006 = vsel %vm912, %v8902, 0
  %9008 = vmatprep.subr.bf16.mxu0 0
  %9009 = vmatpush1.bf16.msra.mxu0 0
  %9010 = vmatprep.subr.bf16.mxu0 0
  %9011 = vmatpush1.bf16.msra.mxu0 0
  %9012 = vmatprep.subr.bf16.mxu0 0
  %9013 = vmatpush1.bf16.msra.mxu0 0
  %9014 = vmatprep.subr.bf16.mxu0 0
  %9015 = vmatpush1.bf16.msra.mxu0 0
  %9016 = vmatprep.subr.bf16.mxu0 0
  %9017 = vmatpush1.bf16.msra.mxu0 0
  %9018 = vmatprep.subr.bf16.mxu0 0
  %9019 = vmatpush1.bf16.msra.mxu0 0
  %9020 = vmatprep.subr.bf16.mxu0 0
  %9021 = vmatpush1.bf16.msra.mxu0 0
  %9022 = vmatprep.subr.bf16.mxu0 0
  %9023 = vmatpush1.bf16.msra.mxu0 %v9003
  %9024 = vmatprep.subr.bf16.mxu0 0
  %9025 = vmatpush2.bf16.msra.mxu0 0
  %9026 = vmatprep.subr.bf16.mxu0 0
  %9027 = vmatpush2.bf16.msra.mxu0 0
  %9028 = vmatprep.subr.bf16.mxu0 0
  %9029 = vmatpush2.bf16.msra.mxu0 0
  %9030 = vmatprep.subr.bf16.mxu0 0
  %9031 = vmatpush2.bf16.msra.mxu0 0
  %9032 = vmatprep.subr.bf16.mxu0 0
  %9033 = vmatpush2.bf16.msra.mxu0 0
  %9034 = vmatprep.subr.bf16.mxu0 0
  %9035 = vmatpush2.bf16.msra.mxu0 0
  %9036 = vmatprep.subr.bf16.mxu0 0
  %9037 = vmatpush2.bf16.msra.mxu0 0
  %9038 = vmatprep.subr.bf16.mxu0 0
  %9039 = vmatpush2.bf16.msra.mxu0 0
  %9040 = vmatprep.mubr.bf16.mxu0 0
  %9041 = vmatmul.mubr.bf16.gmra.mxu0 %v9006
  %v9042 = vpop.f32.mrf.mxu0
  %v9043 = vadd.f32 0.0, %v9042
  %v9044 = vpop.f32.mrf.mxu0
  %v9045 = vpop.f32.mrf.mxu0
  %v9046 = vadd.f32 0.0, %v9045
  %v9047 = vpop.f32.mrf.mxu0
  %9048 = vdwg.mxu0
  %9049 = vrot.lane.b32.xlu0 %v5439, 32
  %v9050 = vpop.permute.xlu0 %9049
  %v9053 = vsel %vm912, %v8903, 0
  %9055 = vmatprep.subr.bf16.mxu0 0
  %9056 = vmatpush1.bf16.msra.mxu0 0
  %9057 = vmatprep.subr.bf16.mxu0 0
  %9058 = vmatpush1.bf16.msra.mxu0 0
  %9059 = vmatprep.subr.bf16.mxu0 0
  %9060 = vmatpush1.bf16.msra.mxu0 0
  %9061 = vmatprep.subr.bf16.mxu0 0
  %9062 = vmatpush1.bf16.msra.mxu0 0
  %9063 = vmatprep.subr.bf16.mxu0 0
  %9064 = vmatpush1.bf16.msra.mxu0 0
  %9065 = vmatprep.subr.bf16.mxu0 0
  %9066 = vmatpush1.bf16.msra.mxu0 0
  %9067 = vmatprep.subr.bf16.mxu0 0
  %9068 = vmatpush1.bf16.msra.mxu0 0
  %9069 = vmatprep.subr.bf16.mxu0 0
  %9070 = vmatpush1.bf16.msra.mxu0 %v9050
  %9071 = vmatprep.subr.bf16.mxu0 0
  %9072 = vmatpush2.bf16.msra.mxu0 0
  %9073 = vmatprep.subr.bf16.mxu0 0
  %9074 = vmatpush2.bf16.msra.mxu0 0
  %9075 = vmatprep.subr.bf16.mxu0 0
  %9076 = vmatpush2.bf16.msra.mxu0 0
  %9077 = vmatprep.subr.bf16.mxu0 0
  %9078 = vmatpush2.bf16.msra.mxu0 0
  %9079 = vmatprep.subr.bf16.mxu0 0
  %9080 = vmatpush2.bf16.msra.mxu0 0
  %9081 = vmatprep.subr.bf16.mxu0 0
  %9082 = vmatpush2.bf16.msra.mxu0 0
  %9083 = vmatprep.subr.bf16.mxu0 0
  %9084 = vmatpush2.bf16.msra.mxu0 0
  %9085 = vmatprep.subr.bf16.mxu0 0
  %9086 = vmatpush2.bf16.msra.mxu0 0
  %9087 = vmatprep.mubr.bf16.mxu0 0
  %9088 = vmatmul.mubr.bf16.gmra.mxu0 %v9053
  %v9089 = vpop.f32.mrf.mxu0
  %v9090 = vadd.f32 0.0, %v9089
  %v9091 = vpop.f32.mrf.mxu0
  %v9092 = vpop.f32.mrf.mxu0
  %v9093 = vadd.f32 0.0, %v9092
  %v9094 = vpop.f32.mrf.mxu0
  %9095 = vdwg.mxu0
  %9096 = vrot.lane.b32.xlu0 %v5440, 32
  %v9097 = vpop.permute.xlu0 %9096
  %v9100 = vsel %vm912, %v8904, 0
  %9102 = vmatprep.subr.bf16.mxu0 0
  %9103 = vmatpush1.bf16.msra.mxu0 0
  %9104 = vmatprep.subr.bf16.mxu0 0
  %9105 = vmatpush1.bf16.msra.mxu0 0
  %9106 = vmatprep.subr.bf16.mxu0 0
  %9107 = vmatpush1.bf16.msra.mxu0 0
  %9108 = vmatprep.subr.bf16.mxu0 0
  %9109 = vmatpush1.bf16.msra.mxu0 0
  %9110 = vmatprep.subr.bf16.mxu0 0
  %9111 = vmatpush1.bf16.msra.mxu0 0
  %9112 = vmatprep.subr.bf16.mxu0 0
  %9113 = vmatpush1.bf16.msra.mxu0 0
  %9114 = vmatprep.subr.bf16.mxu0 0
  %9115 = vmatpush1.bf16.msra.mxu0 0
  %9116 = vmatprep.subr.bf16.mxu0 0
  %9117 = vmatpush1.bf16.msra.mxu0 %v9097
  %9118 = vmatprep.subr.bf16.mxu0 0
  %9119 = vmatpush2.bf16.msra.mxu0 0
  %9120 = vmatprep.subr.bf16.mxu0 0
  %9121 = vmatpush2.bf16.msra.mxu0 0
  %9122 = vmatprep.subr.bf16.mxu0 0
  %9123 = vmatpush2.bf16.msra.mxu0 0
  %9124 = vmatprep.subr.bf16.mxu0 0
  %9125 = vmatpush2.bf16.msra.mxu0 0
  %9126 = vmatprep.subr.bf16.mxu0 0
  %9127 = vmatpush2.bf16.msra.mxu0 0
  %9128 = vmatprep.subr.bf16.mxu0 0
  %9129 = vmatpush2.bf16.msra.mxu0 0
  %9130 = vmatprep.subr.bf16.mxu0 0
  %9131 = vmatpush2.bf16.msra.mxu0 0
  %9132 = vmatprep.subr.bf16.mxu0 0
  %9133 = vmatpush2.bf16.msra.mxu0 0
  %9134 = vmatprep.mubr.bf16.mxu0 0
  %9135 = vmatmul.mubr.bf16.gmra.mxu0 %v9100
  %v9136 = vpop.f32.mrf.mxu0
  %v9137 = vadd.f32 0.0, %v9136
  %v9138 = vpop.f32.mrf.mxu0
  %v9139 = vpop.f32.mrf.mxu0
  %v9140 = vadd.f32 0.0, %v9139
  %v9141 = vpop.f32.mrf.mxu0
  %9142 = vdwg.mxu0
  %9143 = vrot.lane.b32.xlu0 %v5441, 32
  %v9144 = vpop.permute.xlu0 %9143
  %v9147 = vsel %vm912, %v8905, 0
  %9149 = vmatprep.subr.bf16.mxu0 0
  %9150 = vmatpush1.bf16.msra.mxu0 0
  %9151 = vmatprep.subr.bf16.mxu0 0
  %9152 = vmatpush1.bf16.msra.mxu0 0
  %9153 = vmatprep.subr.bf16.mxu0 0
  %9154 = vmatpush1.bf16.msra.mxu0 0
  %9155 = vmatprep.subr.bf16.mxu0 0
  %9156 = vmatpush1.bf16.msra.mxu0 0
  %9157 = vmatprep.subr.bf16.mxu0 0
  %9158 = vmatpush1.bf16.msra.mxu0 0
  %9159 = vmatprep.subr.bf16.mxu0 0
  %9160 = vmatpush1.bf16.msra.mxu0 0
  %9161 = vmatprep.subr.bf16.mxu0 0
  %9162 = vmatpush1.bf16.msra.mxu0 0
  %9163 = vmatprep.subr.bf16.mxu0 0
  %9164 = vmatpush1.bf16.msra.mxu0 %v9144
  %9165 = vmatprep.subr.bf16.mxu0 0
  %9166 = vmatpush2.bf16.msra.mxu0 0
  %9167 = vmatprep.subr.bf16.mxu0 0
  %9168 = vmatpush2.bf16.msra.mxu0 0
  %9169 = vmatprep.subr.bf16.mxu0 0
  %9170 = vmatpush2.bf16.msra.mxu0 0
  %9171 = vmatprep.subr.bf16.mxu0 0
  %9172 = vmatpush2.bf16.msra.mxu0 0
  %9173 = vmatprep.subr.bf16.mxu0 0
  %9174 = vmatpush2.bf16.msra.mxu0 0
  %9175 = vmatprep.subr.bf16.mxu0 0
  %9176 = vmatpush2.bf16.msra.mxu0 0
  %9177 = vmatprep.subr.bf16.mxu0 0
  %9178 = vmatpush2.bf16.msra.mxu0 0
  %9179 = vmatprep.subr.bf16.mxu0 0
  %9180 = vmatpush2.bf16.msra.mxu0 0
  %9181 = vmatprep.mubr.bf16.mxu0 0
  %9182 = vmatmul.mubr.bf16.gmra.mxu0 %v9147
  %v9183 = vpop.f32.mrf.mxu0
  %v9184 = vadd.f32 0.0, %v9183
  %v9185 = vpop.f32.mrf.mxu0
  %v9186 = vpop.f32.mrf.mxu0
  %v9187 = vadd.f32 0.0, %v9186
  %v9188 = vpop.f32.mrf.mxu0
  %9189 = vdwg.mxu0
  %9190 = vrot.lane.b32.xlu0 %v5442, 32
  %v9191 = vpop.permute.xlu0 %9190
  %v9194 = vsel %vm912, %v8906, 0
  %9196 = vmatprep.subr.bf16.mxu0 0
  %9197 = vmatpush1.bf16.msra.mxu0 0
  %9198 = vmatprep.subr.bf16.mxu0 0
  %9199 = vmatpush1.bf16.msra.mxu0 0
  %9200 = vmatprep.subr.bf16.mxu0 0
  %9201 = vmatpush1.bf16.msra.mxu0 0
  %9202 = vmatprep.subr.bf16.mxu0 0
  %9203 = vmatpush1.bf16.msra.mxu0 0
  %9204 = vmatprep.subr.bf16.mxu0 0
  %9205 = vmatpush1.bf16.msra.mxu0 0
  %9206 = vmatprep.subr.bf16.mxu0 0
  %9207 = vmatpush1.bf16.msra.mxu0 0
  %9208 = vmatprep.subr.bf16.mxu0 0
  %9209 = vmatpush1.bf16.msra.mxu0 0
  %9210 = vmatprep.subr.bf16.mxu0 0
  %9211 = vmatpush1.bf16.msra.mxu0 %v9191
  %9212 = vmatprep.subr.bf16.mxu0 0
  %9213 = vmatpush2.bf16.msra.mxu0 0
  %9214 = vmatprep.subr.bf16.mxu0 0
  %9215 = vmatpush2.bf16.msra.mxu0 0
  %9216 = vmatprep.subr.bf16.mxu0 0
  %9217 = vmatpush2.bf16.msra.mxu0 0
  %9218 = vmatprep.subr.bf16.mxu0 0
  %9219 = vmatpush2.bf16.msra.mxu0 0
  %9220 = vmatprep.subr.bf16.mxu0 0
  %9221 = vmatpush2.bf16.msra.mxu0 0
  %9222 = vmatprep.subr.bf16.mxu0 0
  %9223 = vmatpush2.bf16.msra.mxu0 0
  %9224 = vmatprep.subr.bf16.mxu0 0
  %9225 = vmatpush2.bf16.msra.mxu0 0
  %9226 = vmatprep.subr.bf16.mxu0 0
  %9227 = vmatpush2.bf16.msra.mxu0 0
  %9228 = vmatprep.mubr.bf16.mxu0 0
  %9229 = vmatmul.mubr.bf16.gmra.mxu0 %v9194
  %v9230 = vpop.f32.mrf.mxu0
  %v9231 = vadd.f32 0.0, %v9230
  %v9232 = vpop.f32.mrf.mxu0
  %v9233 = vpop.f32.mrf.mxu0
  %v9234 = vadd.f32 0.0, %v9233
  %v9235 = vpop.f32.mrf.mxu0
  %9236 = vdwg.mxu0
  %9237 = vrot.lane.b32.xlu0 %v5443, 32
  %v9238 = vpop.permute.xlu0 %9237
  %v9241 = vsel %vm912, %v8907, 0
  %9243 = vmatprep.subr.bf16.mxu0 0
  %9244 = vmatpush1.bf16.msra.mxu0 0
  %9245 = vmatprep.subr.bf16.mxu0 0
  %9246 = vmatpush1.bf16.msra.mxu0 0
  %9247 = vmatprep.subr.bf16.mxu0 0
  %9248 = vmatpush1.bf16.msra.mxu0 0
  %9249 = vmatprep.subr.bf16.mxu0 0
  %9250 = vmatpush1.bf16.msra.mxu0 0
  %9251 = vmatprep.subr.bf16.mxu0 0
  %9252 = vmatpush1.bf16.msra.mxu0 0
  %9253 = vmatprep.subr.bf16.mxu0 0
  %9254 = vmatpush1.bf16.msra.mxu0 0
  %9255 = vmatprep.subr.bf16.mxu0 0
  %9256 = vmatpush1.bf16.msra.mxu0 0
  %9257 = vmatprep.subr.bf16.mxu0 0
  %9258 = vmatpush1.bf16.msra.mxu0 %v9238
  %9259 = vmatprep.subr.bf16.mxu0 0
  %9260 = vmatpush2.bf16.msra.mxu0 0
  %9261 = vmatprep.subr.bf16.mxu0 0
  %9262 = vmatpush2.bf16.msra.mxu0 0
  %9263 = vmatprep.subr.bf16.mxu0 0
  %9264 = vmatpush2.bf16.msra.mxu0 0
  %9265 = vmatprep.subr.bf16.mxu0 0
  %9266 = vmatpush2.bf16.msra.mxu0 0
  %9267 = vmatprep.subr.bf16.mxu0 0
  %9268 = vmatpush2.bf16.msra.mxu0 0
  %9269 = vmatprep.subr.bf16.mxu0 0
  %9270 = vmatpush2.bf16.msra.mxu0 0
  %9271 = vmatprep.subr.bf16.mxu0 0
  %9272 = vmatpush2.bf16.msra.mxu0 0
  %9273 = vmatprep.subr.bf16.mxu0 0
  %9274 = vmatpush2.bf16.msra.mxu0 0
  %9275 = vmatprep.mubr.bf16.mxu0 0
  %9276 = vmatmul.mubr.bf16.gmra.mxu0 %v9241
  %v9277 = vpop.f32.mrf.mxu0
  %v9278 = vadd.f32 0.0, %v9277
  %v9279 = vpop.f32.mrf.mxu0
  %v9280 = vpop.f32.mrf.mxu0
  %v9281 = vadd.f32 0.0, %v9280
  %v9282 = vpop.f32.mrf.mxu0
  %9283 = vdwg.mxu0
  %9300 = vrot.lane.b32.xlu0 %v7006, 32
  %v9301 = vpop.permute.xlu0 %9300
  %9302 = vrot.lane.b32.xlu0 %v7009, 32
  %v9303 = vpop.permute.xlu0 %9302
  %9304 = vrot.lane.b32.xlu0 %v7054, 32
  %v9305 = vpop.permute.xlu0 %9304
  %9306 = vrot.lane.b32.xlu0 %v7057, 32
  %v9307 = vpop.permute.xlu0 %9306
  %9308 = vrot.lane.b32.xlu0 %v7102, 32
  %v9309 = vpop.permute.xlu0 %9308
  %9310 = vrot.lane.b32.xlu0 %v7105, 32
  %v9311 = vpop.permute.xlu0 %9310
  %9312 = vrot.lane.b32.xlu0 %v7150, 32
  %v9313 = vpop.permute.xlu0 %9312
  %9314 = vrot.lane.b32.xlu0 %v7153, 32
  %v9315 = vpop.permute.xlu0 %9314
  %9316 = vrot.lane.b32.xlu0 %v7198, 32
  %v9317 = vpop.permute.xlu0 %9316
  %9318 = vrot.lane.b32.xlu0 %v7201, 32
  %v9319 = vpop.permute.xlu0 %9318
  %9320 = vrot.lane.b32.xlu0 %v7246, 32
  %v9321 = vpop.permute.xlu0 %9320
  %9322 = vrot.lane.b32.xlu0 %v7249, 32
  %v9323 = vpop.permute.xlu0 %9322
  %9324 = vrot.lane.b32.xlu0 %v7294, 32
  %v9325 = vpop.permute.xlu0 %9324
  %9326 = vrot.lane.b32.xlu0 %v7297, 32
  %v9327 = vpop.permute.xlu0 %9326
  %9328 = vrot.lane.b32.xlu0 %v7342, 32
  %v9329 = vpop.permute.xlu0 %9328
  %9330 = vrot.lane.b32.xlu0 %v7345, 32
  %v9331 = vpop.permute.xlu0 %9330
  %9364 = vrot.lane.b32.xlu0 %v7981, 64
  %v9365 = vpop.permute.xlu0 %9364
  %9366 = vrot.lane.b32.xlu0 %v7984, 64
  %v9367 = vpop.permute.xlu0 %9366
  %9368 = vrot.lane.b32.xlu0 %v8028, 64
  %v9369 = vpop.permute.xlu0 %9368
  %9370 = vrot.lane.b32.xlu0 %v8031, 64
  %v9371 = vpop.permute.xlu0 %9370
  %9372 = vrot.lane.b32.xlu0 %v8075, 64
  %v9373 = vpop.permute.xlu0 %9372
  %9374 = vrot.lane.b32.xlu0 %v8078, 64
  %v9375 = vpop.permute.xlu0 %9374
  %9376 = vrot.lane.b32.xlu0 %v8122, 64
  %v9377 = vpop.permute.xlu0 %9376
  %9378 = vrot.lane.b32.xlu0 %v8125, 64
  %v9379 = vpop.permute.xlu0 %9378
  %9380 = vrot.lane.b32.xlu0 %v8169, 64
  %v9381 = vpop.permute.xlu0 %9380
  %9382 = vrot.lane.b32.xlu0 %v8172, 64
  %v9383 = vpop.permute.xlu0 %9382
  %9384 = vrot.lane.b32.xlu0 %v8216, 64
  %v9385 = vpop.permute.xlu0 %9384
  %9386 = vrot.lane.b32.xlu0 %v8219, 64
  %v9387 = vpop.permute.xlu0 %9386
  %9388 = vrot.lane.b32.xlu0 %v8263, 64
  %v9389 = vpop.permute.xlu0 %9388
  %9390 = vrot.lane.b32.xlu0 %v8266, 64
  %v9391 = vpop.permute.xlu0 %9390
  %9392 = vrot.lane.b32.xlu0 %v8310, 64
  %v9393 = vpop.permute.xlu0 %9392
  %9394 = vrot.lane.b32.xlu0 %v8313, 64
  %v9395 = vpop.permute.xlu0 %9394
  %9428 = vrot.lane.b32.xlu0 %v8949, 96
  %v9429 = vpop.permute.xlu0 %9428
  %9430 = vrot.lane.b32.xlu0 %v8952, 96
  %v9431 = vpop.permute.xlu0 %9430
  %9432 = vrot.lane.b32.xlu0 %v8996, 96
  %v9433 = vpop.permute.xlu0 %9432
  %9434 = vrot.lane.b32.xlu0 %v8999, 96
  %v9435 = vpop.permute.xlu0 %9434
  %9436 = vrot.lane.b32.xlu0 %v9043, 96
  %v9437 = vpop.permute.xlu0 %9436
  %9438 = vrot.lane.b32.xlu0 %v9046, 96
  %v9439 = vpop.permute.xlu0 %9438
  %9440 = vrot.lane.b32.xlu0 %v9090, 96
  %v9441 = vpop.permute.xlu0 %9440
  %9442 = vrot.lane.b32.xlu0 %v9093, 96
  %v9443 = vpop.permute.xlu0 %9442
  %9444 = vrot.lane.b32.xlu0 %v9137, 96
  %v9445 = vpop.permute.xlu0 %9444
  %9446 = vrot.lane.b32.xlu0 %v9140, 96
  %v9447 = vpop.permute.xlu0 %9446
  %9448 = vrot.lane.b32.xlu0 %v9184, 96
  %v9449 = vpop.permute.xlu0 %9448
  %9450 = vrot.lane.b32.xlu0 %v9187, 96
  %v9451 = vpop.permute.xlu0 %9450
  %9452 = vrot.lane.b32.xlu0 %v9231, 96
  %v9453 = vpop.permute.xlu0 %9452
  %9454 = vrot.lane.b32.xlu0 %v9234, 96
  %v9455 = vpop.permute.xlu0 %9454
  %9456 = vrot.lane.b32.xlu0 %v9278, 96
  %v9457 = vpop.permute.xlu0 %9456
  %9458 = vrot.lane.b32.xlu0 %v9281, 96
  %v9459 = vpop.permute.xlu0 %9458
  %v9476 = vsel %vm535, %v6042, %v9301
  %v9477 = vsel %vm535, %v6045, %v9303
  %v9478 = vsel %vm535, %v6086, %v9305
  %v9479 = vsel %vm535, %v6089, %v9307
  %v9480 = vsel %vm535, %v6130, %v9309
  %v9481 = vsel %vm535, %v6133, %v9311
  %v9482 = vsel %vm535, %v6174, %v9313
  %v9483 = vsel %vm535, %v6177, %v9315
  %v9484 = vsel %vm535, %v6218, %v9317
  %v9485 = vsel %vm535, %v6221, %v9319
  %v9486 = vsel %vm535, %v6262, %v9321
  %v9487 = vsel %vm535, %v6265, %v9323
  %v9488 = vsel %vm535, %v6306, %v9325
  %v9489 = vsel %vm535, %v6309, %v9327
  %v9490 = vsel %vm535, %v6350, %v9329
  %v9491 = vsel %vm535, %v6353, %v9331
  %v9492 = vsel %vm4585, %v9476, %v9365
  %v9493 = vsel %vm4585, %v9477, %v9367
  %v9494 = vsel %vm4585, %v9478, %v9369
  %v9495 = vsel %vm4585, %v9479, %v9371
  %v9496 = vsel %vm4585, %v9480, %v9373
  %v9497 = vsel %vm4585, %v9481, %v9375
  %v9498 = vsel %vm4585, %v9482, %v9377
  %v9499 = vsel %vm4585, %v9483, %v9379
  %v9500 = vsel %vm4585, %v9484, %v9381
  %v9501 = vsel %vm4585, %v9485, %v9383
  %v9502 = vsel %vm4585, %v9486, %v9385
  %v9503 = vsel %vm4585, %v9487, %v9387
  %v9504 = vsel %vm4585, %v9488, %v9389
  %v9505 = vsel %vm4585, %v9489, %v9391
  %v9506 = vsel %vm4585, %v9490, %v9393
  %v9507 = vsel %vm4585, %v9491, %v9395
  %v9508 = vsel %vm4602, %v9492, %v9429
  %v9509 = vsel %vm4602, %v9493, %v9431
  %v9510 = vsel %vm4602, %v9494, %v9433
  %v9511 = vsel %vm4602, %v9495, %v9435
  %v9512 = vsel %vm4602, %v9496, %v9437
  %v9513 = vsel %vm4602, %v9497, %v9439
  %v9514 = vsel %vm4602, %v9498, %v9441
  %v9515 = vsel %vm4602, %v9499, %v9443
  %v9516 = vsel %vm4602, %v9500, %v9445
  %v9517 = vsel %vm4602, %v9501, %v9447
  %v9518 = vsel %vm4602, %v9502, %v9449
  %v9519 = vsel %vm4602, %v9503, %v9451
  %v9520 = vsel %vm4602, %v9504, %v9453
  %v9521 = vsel %vm4602, %v9505, %v9455
  %v9522 = vsel %vm4602, %v9506, %v9457
  %v9523 = vsel %vm4602, %v9507, %v9459
  %v9524 = vpack.c.bf16 %v9509, %v9508
  %v9525 = vpack.c.bf16 %v9511, %v9510
  %v9526 = vpack.c.bf16 %v9513, %v9512
  %v9527 = vpack.c.bf16 %v9515, %v9514
  %v9528 = vpack.c.bf16 %v9517, %v9516
  %v9529 = vpack.c.bf16 %v9519, %v9518
  %v9530 = vpack.c.bf16 %v9521, %v9520
  %v9531 = vpack.c.bf16 %v9523, %v9522
  %v9532 = vld [vmem:[%s11] sm:$0xf]
  %v9533 = vld [vmem:[%s11 + $0x4] sm:$0xf]
  %v9534 = vld [vmem:[%s11 + $0x8] sm:$0xf]
  %v9535 = vld [vmem:[%s11 + $0xc] sm:$0xf]
  %v9536 = vld [vmem:[%s11 + $0x10] sm:$0xf]
  %v9537 = vld [vmem:[%s11 + $0x14] sm:$0xf]
  %v9538 = vld [vmem:[%s11 + $0x18] sm:$0xf]
  %v9539 = vld [vmem:[%s11 + $0x1c] sm:$0xf]
  %v9540 = vld [vmem:[%s11 + $0x20] sm:$0xf]
  %v9541 = vld [vmem:[%s11 + $0x24] sm:$0xf]
  %v9542 = vld [vmem:[%s11 + $0x28] sm:$0xf]
  %v9543 = vld [vmem:[%s11 + $0x2c] sm:$0xf]
  %v9544 = vld [vmem:[%s11 + $0x30] sm:$0xf]
  %v9545 = vld [vmem:[%s11 + $0x34] sm:$0xf]
  %v9546 = vld [vmem:[%s11 + $0x38] sm:$0xf]
  %v9547 = vld [vmem:[%s11 + $0x3c] sm:$0xf]
  %v9548 = vld [vmem:[%s12] sm:$0x1]
  %v9550 = vlaneseq
  %v9551 = vshrl.u32 %v9550, 7
  %v9552 = vsub.s32 0, %v9551
  %v9553 = vrot.slane %v9548, %v9552
  %v9571 = vunpack.c.l.b16 %v9532
  %v9572 = vunpack.c.l.b16 %v9533
  %v9573 = vunpack.c.l.b16 %v9534
  %v9574 = vunpack.c.l.b16 %v9535
  %v9575 = vunpack.c.l.b16 %v9536
  %v9576 = vunpack.c.l.b16 %v9537
  %v9577 = vunpack.c.l.b16 %v9538
  %v9578 = vunpack.c.l.b16 %v9539
  %v9579 = vunpack.c.l.b16 %v9540
  %v9580 = vunpack.c.l.b16 %v9541
  %v9581 = vunpack.c.l.b16 %v9542
  %v9582 = vunpack.c.l.b16 %v9543
  %v9583 = vunpack.c.l.b16 %v9544
  %v9584 = vunpack.c.l.b16 %v9545
  %v9585 = vunpack.c.l.b16 %v9546
  %v9586 = vunpack.c.l.b16 %v9547
  %v9587 = vpack.c.b16 %v9572, %v9571
  %v9588 = vpack.c.b16 %v9574, %v9573
  %v9589 = vpack.c.b16 %v9576, %v9575
  %v9590 = vpack.c.b16 %v9578, %v9577
  %v9591 = vpack.c.b16 %v9580, %v9579
  %v9592 = vpack.c.b16 %v9582, %v9581
  %v9593 = vpack.c.b16 %v9584, %v9583
  %v9594 = vpack.c.b16 %v9586, %v9585
  %9603 = vmatprep.subr.bf16.mxu0 0
  %9604 = vmatpush1.bf16.msra.mxu0 %v9594
  %9605 = vmatprep.subr.bf16.mxu0 0
  %9606 = vmatpush1.bf16.msra.mxu0 %v9593
  %9607 = vmatprep.subr.bf16.mxu0 0
  %9608 = vmatpush1.bf16.msra.mxu0 %v9592
  %9609 = vmatprep.subr.bf16.mxu0 0
  %9610 = vmatpush1.bf16.msra.mxu0 %v9591
  %9611 = vmatprep.subr.bf16.mxu0 0
  %9612 = vmatpush1.bf16.msra.mxu0 %v9590
  %9613 = vmatprep.subr.bf16.mxu0 0
  %9614 = vmatpush1.bf16.msra.mxu0 %v9589
  %9615 = vmatprep.subr.bf16.mxu0 0
  %9616 = vmatpush1.bf16.msra.mxu0 %v9588
  %9617 = vmatprep.subr.bf16.mxu0 0
  %9618 = vmatpush1.bf16.msra.mxu0 %v9587
  %9619 = vmatprep.subr.bf16.mxu0 0
  %9620 = vmatpush2.bf16.msra.mxu0 0
  %9621 = vmatprep.subr.bf16.mxu0 0
  %9622 = vmatpush2.bf16.msra.mxu0 0
  %9623 = vmatprep.subr.bf16.mxu0 0
  %9624 = vmatpush2.bf16.msra.mxu0 0
  %9625 = vmatprep.subr.bf16.mxu0 0
  %9626 = vmatpush2.bf16.msra.mxu0 0
  %9627 = vmatprep.subr.bf16.mxu0 0
  %9628 = vmatpush2.bf16.msra.mxu0 0
  %9629 = vmatprep.subr.bf16.mxu0 0
  %9630 = vmatpush2.bf16.msra.mxu0 0
  %9631 = vmatprep.subr.bf16.mxu0 0
  %9632 = vmatpush2.bf16.msra.mxu0 0
  %9633 = vmatprep.subr.bf16.mxu0 0
  %9634 = vmatpush2.bf16.msra.mxu0 0
  %9635 = vmatprep.mubr.bf16.mxu0 0
  %9636 = vmatmul.mubr.bf16.gmra.mxu0 %v9524
  %v9637 = vpop.f32.mrf.mxu0
  %v9638 = vadd.f32 %v9553, %v9637
  %v9639 = vpop.f32.mrf.mxu0
  %v9640 = vpop.f32.mrf.mxu0
  %v9641 = vadd.f32 %v9553, %v9640
  %v9642 = vpop.f32.mrf.mxu0
  %9643 = vmatprep.mubr.bf16.mxu0 0
  %9644 = vmatmul.mubr.bf16.gmra.mxu0 %v9525
  %v9645 = vpop.f32.mrf.mxu0
  %v9646 = vadd.f32 %v9553, %v9645
  %v9647 = vpop.f32.mrf.mxu0
  %v9648 = vpop.f32.mrf.mxu0
  %v9649 = vadd.f32 %v9553, %v9648
  %v9650 = vpop.f32.mrf.mxu0
  %9651 = vmatprep.mubr.bf16.mxu0 0
  %9652 = vmatmul.mubr.bf16.gmra.mxu0 %v9526
  %v9653 = vpop.f32.mrf.mxu0
  %v9654 = vadd.f32 %v9553, %v9653
  %v9655 = vpop.f32.mrf.mxu0
  %v9656 = vpop.f32.mrf.mxu0
  %v9657 = vadd.f32 %v9553, %v9656
  %v9658 = vpop.f32.mrf.mxu0
  %9659 = vmatprep.mubr.bf16.mxu0 0
  %9660 = vmatmul.mubr.bf16.gmra.mxu0 %v9527
  %v9661 = vpop.f32.mrf.mxu0
  %v9662 = vadd.f32 %v9553, %v9661
  %v9663 = vpop.f32.mrf.mxu0
  %v9664 = vpop.f32.mrf.mxu0
  %v9665 = vadd.f32 %v9553, %v9664
  %v9666 = vpop.f32.mrf.mxu0
  %9667 = vmatprep.mubr.bf16.mxu0 0
  %9668 = vmatmul.mubr.bf16.gmra.mxu0 %v9528
  %v9669 = vpop.f32.mrf.mxu0
  %v9670 = vadd.f32 %v9553, %v9669
  %v9671 = vpop.f32.mrf.mxu0
  %v9672 = vpop.f32.mrf.mxu0
  %v9673 = vadd.f32 %v9553, %v9672
  %v9674 = vpop.f32.mrf.mxu0
  %9675 = vmatprep.mubr.bf16.mxu0 0
  %9676 = vmatmul.mubr.bf16.gmra.mxu0 %v9529
  %v9677 = vpop.f32.mrf.mxu0
  %v9678 = vadd.f32 %v9553, %v9677
  %v9679 = vpop.f32.mrf.mxu0
  %v9680 = vpop.f32.mrf.mxu0
  %v9681 = vadd.f32 %v9553, %v9680
  %v9682 = vpop.f32.mrf.mxu0
  %9683 = vmatprep.mubr.bf16.mxu0 0
  %9684 = vmatmul.mubr.bf16.gmra.mxu0 %v9530
  %v9685 = vpop.f32.mrf.mxu0
  %v9686 = vadd.f32 %v9553, %v9685
  %v9687 = vpop.f32.mrf.mxu0
  %v9688 = vpop.f32.mrf.mxu0
  %v9689 = vadd.f32 %v9553, %v9688
  %v9690 = vpop.f32.mrf.mxu0
  %9691 = vmatprep.mubr.bf16.mxu0 0
  %9692 = vmatmul.mubr.bf16.gmra.mxu0 %v9531
  %v9693 = vpop.f32.mrf.mxu0
  %v9694 = vadd.f32 %v9553, %v9693
  %v9695 = vpop.f32.mrf.mxu0
  %v9696 = vpop.f32.mrf.mxu0
  %v9697 = vadd.f32 %v9553, %v9696
  %v9698 = vpop.f32.mrf.mxu0
  %9699 = vdwg.mxu0
  %v9700 = vadd.f32 %v9638, %v5018
  %v9701 = vadd.f32 %v9641, %v5019
  %v9702 = vadd.f32 %v9646, %v5020
  %v9703 = vadd.f32 %v9649, %v5021
  %v9704 = vadd.f32 %v9654, %v5022
  %v9705 = vadd.f32 %v9657, %v5023
  %v9706 = vadd.f32 %v9662, %v5024
  %v9707 = vadd.f32 %v9665, %v5025
  %v9708 = vadd.f32 %v9670, %v5026
  %v9709 = vadd.f32 %v9673, %v5027
  %v9710 = vadd.f32 %v9678, %v5028
  %v9711 = vadd.f32 %v9681, %v5029
  %v9712 = vadd.f32 %v9686, %v5030
  %v9713 = vadd.f32 %v9689, %v5031
  %v9714 = vadd.f32 %v9694, %v5032
  %v9715 = vadd.f32 %v9697, %v5033
  %9716 = vadd.xlane.f32.xlu0 %v9700
  %v9717 = vpop.xlane.xlu0 %9716
  %9718 = vadd.xlane.f32.xlu0 %v9701
  %v9719 = vpop.xlane.xlu0 %9718
  %9720 = vadd.xlane.f32.xlu0 %v9702
  %v9721 = vpop.xlane.xlu0 %9720
  %9722 = vadd.xlane.f32.xlu0 %v9703
  %v9723 = vpop.xlane.xlu0 %9722
  %9724 = vadd.xlane.f32.xlu0 %v9704
  %v9725 = vpop.xlane.xlu0 %9724
  %9726 = vadd.xlane.f32.xlu0 %v9705
  %v9727 = vpop.xlane.xlu0 %9726
  %9728 = vadd.xlane.f32.xlu0 %v9706
  %v9729 = vpop.xlane.xlu0 %9728
  %9730 = vadd.xlane.f32.xlu0 %v9707
  %v9731 = vpop.xlane.xlu0 %9730
  %9732 = vadd.xlane.f32.xlu0 %v9708
  %v9733 = vpop.xlane.xlu0 %9732
  %9734 = vadd.xlane.f32.xlu0 %v9709
  %v9735 = vpop.xlane.xlu0 %9734
  %9736 = vadd.xlane.f32.xlu0 %v9710
  %v9737 = vpop.xlane.xlu0 %9736
  %9738 = vadd.xlane.f32.xlu0 %v9711
  %v9739 = vpop.xlane.xlu0 %9738
  %9740 = vadd.xlane.f32.xlu0 %v9712
  %v9741 = vpop.xlane.xlu0 %9740
  %9742 = vadd.xlane.f32.xlu0 %v9713
  %v9743 = vpop.xlane.xlu0 %9742
  %9744 = vadd.xlane.f32.xlu0 %v9714
  %v9745 = vpop.xlane.xlu0 %9744
  %9746 = vadd.xlane.f32.xlu0 %v9715
  %v9747 = vpop.xlane.xlu0 %9746
  %v9748 = vmul.f32 %v9717, %v4843
  %v9749 = vmul.f32 %v9719, %v4843
  %v9750 = vmul.f32 %v9721, %v4843
  %v9751 = vmul.f32 %v9723, %v4843
  %v9752 = vmul.f32 %v9725, %v4843
  %v9753 = vmul.f32 %v9727, %v4843
  %v9754 = vmul.f32 %v9729, %v4843
  %v9755 = vmul.f32 %v9731, %v4843
  %v9756 = vmul.f32 %v9733, %v4843
  %v9757 = vmul.f32 %v9735, %v4843
  %v9758 = vmul.f32 %v9737, %v4843
  %v9759 = vmul.f32 %v9739, %v4843
  %v9760 = vmul.f32 %v9741, %v4843
  %v9761 = vmul.f32 %v9743, %v4843
  %v9762 = vmul.f32 %v9745, %v4843
  %v9763 = vmul.f32 %v9747, %v4843
  %v9764 = vsub.f32 %v9700, %v9748
  %v9765 = vsub.f32 %v9701, %v9749
  %v9766 = vsub.f32 %v9702, %v9750
  %v9767 = vsub.f32 %v9703, %v9751
  %v9768 = vsub.f32 %v9704, %v9752
  %v9769 = vsub.f32 %v9705, %v9753
  %v9770 = vsub.f32 %v9706, %v9754
  %v9771 = vsub.f32 %v9707, %v9755
  %v9772 = vsub.f32 %v9708, %v9756
  %v9773 = vsub.f32 %v9709, %v9757
  %v9774 = vsub.f32 %v9710, %v9758
  %v9775 = vsub.f32 %v9711, %v9759
  %v9776 = vsub.f32 %v9712, %v9760
  %v9777 = vsub.f32 %v9713, %v9761
  %v9778 = vsub.f32 %v9714, %v9762
  %v9779 = vsub.f32 %v9715, %v9763
  %v9780 = vmul.f32 %v9764, %v9764
  %v9781 = vmul.f32 %v9765, %v9765
  %v9782 = vmul.f32 %v9766, %v9766
  %v9783 = vmul.f32 %v9767, %v9767
  %v9784 = vmul.f32 %v9768, %v9768
  %v9785 = vmul.f32 %v9769, %v9769
  %v9786 = vmul.f32 %v9770, %v9770
  %v9787 = vmul.f32 %v9771, %v9771
  %v9788 = vmul.f32 %v9772, %v9772
  %v9789 = vmul.f32 %v9773, %v9773
  %v9790 = vmul.f32 %v9774, %v9774
  %v9791 = vmul.f32 %v9775, %v9775
  %v9792 = vmul.f32 %v9776, %v9776
  %v9793 = vmul.f32 %v9777, %v9777
  %v9794 = vmul.f32 %v9778, %v9778
  %v9795 = vmul.f32 %v9779, %v9779
  %9796 = vadd.xlane.f32.xlu0 %v9780
  %v9797 = vpop.xlane.xlu0 %9796
  %9798 = vadd.xlane.f32.xlu0 %v9781
  %v9799 = vpop.xlane.xlu0 %9798
  %9800 = vadd.xlane.f32.xlu0 %v9782
  %v9801 = vpop.xlane.xlu0 %9800
  %9802 = vadd.xlane.f32.xlu0 %v9783
  %v9803 = vpop.xlane.xlu0 %9802
  %9804 = vadd.xlane.f32.xlu0 %v9784
  %v9805 = vpop.xlane.xlu0 %9804
  %9806 = vadd.xlane.f32.xlu0 %v9785
  %v9807 = vpop.xlane.xlu0 %9806
  %9808 = vadd.xlane.f32.xlu0 %v9786
  %v9809 = vpop.xlane.xlu0 %9808
  %9810 = vadd.xlane.f32.xlu0 %v9787
  %v9811 = vpop.xlane.xlu0 %9810
  %9812 = vadd.xlane.f32.xlu0 %v9788
  %v9813 = vpop.xlane.xlu0 %9812
  %9814 = vadd.xlane.f32.xlu0 %v9789
  %v9815 = vpop.xlane.xlu0 %9814
  %9816 = vadd.xlane.f32.xlu0 %v9790
  %v9817 = vpop.xlane.xlu0 %9816
  %9818 = vadd.xlane.f32.xlu0 %v9791
  %v9819 = vpop.xlane.xlu0 %9818
  %9820 = vadd.xlane.f32.xlu0 %v9792
  %v9821 = vpop.xlane.xlu0 %9820
  %9822 = vadd.xlane.f32.xlu0 %v9793
  %v9823 = vpop.xlane.xlu0 %9822
  %9824 = vadd.xlane.f32.xlu0 %v9794
  %v9825 = vpop.xlane.xlu0 %9824
  %9826 = vadd.xlane.f32.xlu0 %v9795
  %v9827 = vpop.xlane.xlu0 %9826
  %v9828 = vmul.f32 %v9797, %v4843
  %v9829 = vmul.f32 %v9799, %v4843
  %v9830 = vmul.f32 %v9801, %v4843
  %v9831 = vmul.f32 %v9803, %v4843
  %v9832 = vmul.f32 %v9805, %v4843
  %v9833 = vmul.f32 %v9807, %v4843
  %v9834 = vmul.f32 %v9809, %v4843
  %v9835 = vmul.f32 %v9811, %v4843
  %v9836 = vmul.f32 %v9813, %v4843
  %v9837 = vmul.f32 %v9815, %v4843
  %v9838 = vmul.f32 %v9817, %v4843
  %v9839 = vmul.f32 %v9819, %v4843
  %v9840 = vmul.f32 %v9821, %v4843
  %v9841 = vmul.f32 %v9823, %v4843
  %v9842 = vmul.f32 %v9825, %v4843
  %v9843 = vmul.f32 %v9827, %v4843
  %v9844 = vadd.f32 %v9828, 1e-05
  %v9845 = vadd.f32 %v9829, 1e-05
  %v9846 = vadd.f32 %v9830, 1e-05
  %v9847 = vadd.f32 %v9831, 1e-05
  %v9848 = vadd.f32 %v9832, 1e-05
  %v9849 = vadd.f32 %v9833, 1e-05
  %v9850 = vadd.f32 %v9834, 1e-05
  %v9851 = vadd.f32 %v9835, 1e-05
  %v9852 = vadd.f32 %v9836, 1e-05
  %v9853 = vadd.f32 %v9837, 1e-05
  %v9854 = vadd.f32 %v9838, 1e-05
  %v9855 = vadd.f32 %v9839, 1e-05
  %v9856 = vadd.f32 %v9840, 1e-05
  %v9857 = vadd.f32 %v9841, 1e-05
  %v9858 = vadd.f32 %v9842, 1e-05
  %v9859 = vadd.f32 %v9843, 1e-05
  %v9860 = vrsqrt.pop %v9844
  %v9861 = vrsqrt.pop %v9845
  %v9862 = vrsqrt.pop %v9846
  %v9863 = vrsqrt.pop %v9847
  %v9864 = vrsqrt.pop %v9848
  %v9865 = vrsqrt.pop %v9849
  %v9866 = vrsqrt.pop %v9850
  %v9867 = vrsqrt.pop %v9851
  %v9868 = vrsqrt.pop %v9852
  %v9869 = vrsqrt.pop %v9853
  %v9870 = vrsqrt.pop %v9854
  %v9871 = vrsqrt.pop %v9855
  %v9872 = vrsqrt.pop %v9856
  %v9873 = vrsqrt.pop %v9857
  %v9874 = vrsqrt.pop %v9858
  %v9875 = vrsqrt.pop %v9859
  %v9876 = vmul.f32 %v9764, %v9860
  %v9877 = vmul.f32 %v9765, %v9861
  %v9878 = vmul.f32 %v9766, %v9862
  %v9879 = vmul.f32 %v9767, %v9863
  %v9880 = vmul.f32 %v9768, %v9864
  %v9881 = vmul.f32 %v9769, %v9865
  %v9882 = vmul.f32 %v9770, %v9866
  %v9883 = vmul.f32 %v9771, %v9867
  %v9884 = vmul.f32 %v9772, %v9868
  %v9885 = vmul.f32 %v9773, %v9869
  %v9886 = vmul.f32 %v9774, %v9870
  %v9887 = vmul.f32 %v9775, %v9871
  %v9888 = vmul.f32 %v9776, %v9872
  %v9889 = vmul.f32 %v9777, %v9873
  %v9890 = vmul.f32 %v9778, %v9874
  %v9891 = vmul.f32 %v9779, %v9875
  %v9892 = vld [vmem:[%s13] sm:$0x1]
  %v9894 = vlaneseq
  %v9895 = vshrl.u32 %v9894, 7
  %v9896 = vsub.s32 0, %v9895
  %v9897 = vrot.slane %v9892, %v9896
  %v9899 = vmul.f32 %v9876, %v9897
  %v9900 = vmul.f32 %v9877, %v9897
  %v9901 = vmul.f32 %v9878, %v9897
  %v9902 = vmul.f32 %v9879, %v9897
  %v9903 = vmul.f32 %v9880, %v9897
  %v9904 = vmul.f32 %v9881, %v9897
  %v9905 = vmul.f32 %v9882, %v9897
  %v9906 = vmul.f32 %v9883, %v9897
  %v9907 = vmul.f32 %v9884, %v9897
  %v9908 = vmul.f32 %v9885, %v9897
  %v9909 = vmul.f32 %v9886, %v9897
  %v9910 = vmul.f32 %v9887, %v9897
  %v9911 = vmul.f32 %v9888, %v9897
  %v9912 = vmul.f32 %v9889, %v9897
  %v9913 = vmul.f32 %v9890, %v9897
  %v9914 = vmul.f32 %v9891, %v9897
  %v9915 = vld [vmem:[%s14] sm:$0x1]
  %v9917 = vlaneseq
  %v9918 = vshrl.u32 %v9917, 7
  %v9919 = vsub.s32 0, %v9918
  %v9920 = vrot.slane %v9915, %v9919
  %v9922 = vadd.f32 %v9899, %v9920
  %v9923 = vadd.f32 %v9900, %v9920
  %v9924 = vadd.f32 %v9901, %v9920
  %v9925 = vadd.f32 %v9902, %v9920
  %v9926 = vadd.f32 %v9903, %v9920
  %v9927 = vadd.f32 %v9904, %v9920
  %v9928 = vadd.f32 %v9905, %v9920
  %v9929 = vadd.f32 %v9906, %v9920
  %v9930 = vadd.f32 %v9907, %v9920
  %v9931 = vadd.f32 %v9908, %v9920
  %v9932 = vadd.f32 %v9909, %v9920
  %v9933 = vadd.f32 %v9910, %v9920
  %v9934 = vadd.f32 %v9911, %v9920
  %v9935 = vadd.f32 %v9912, %v9920
  %v9936 = vadd.f32 %v9913, %v9920
  %v9937 = vadd.f32 %v9914, %v9920
  %v9938 = vpack.c.bf16 %v9923, %v9922
  %v9939 = vpack.c.bf16 %v9925, %v9924
  %v9940 = vpack.c.bf16 %v9927, %v9926
  %v9941 = vpack.c.bf16 %v9929, %v9928
  %v9942 = vpack.c.bf16 %v9931, %v9930
  %v9943 = vpack.c.bf16 %v9933, %v9932
  %v9944 = vpack.c.bf16 %v9935, %v9934
  %v9945 = vpack.c.bf16 %v9937, %v9936
  %v9946 = vld [vmem:[%s17] sm:$0xff]
  %v9947 = vld [vmem:[%s17 + $0x8] sm:$0xff]
  %v9948 = vld [vmem:[%s17 + $0x10] sm:$0xff]
  %v9949 = vld [vmem:[%s17 + $0x18] sm:$0xff]
  %v9950 = vld [vmem:[%s17 + $0x20] sm:$0xff]
  %v9951 = vld [vmem:[%s17 + $0x28] sm:$0xff]
  %v9952 = vld [vmem:[%s17 + $0x30] sm:$0xff]
  %v9953 = vld [vmem:[%s17 + $0x38] sm:$0xff]
  %v9954 = vld [vmem:[%s17 + $0x40] sm:$0xff]
  %v9955 = vld [vmem:[%s17 + $0x48] sm:$0xff]
  %v9956 = vld [vmem:[%s17 + $0x50] sm:$0xff]
  %v9957 = vld [vmem:[%s17 + $0x58] sm:$0xff]
  %v9958 = vld [vmem:[%s17 + $0x60] sm:$0xff]
  %v9959 = vld [vmem:[%s17 + $0x68] sm:$0xff]
  %v9960 = vld [vmem:[%s17 + $0x70] sm:$0xff]
  %v9961 = vld [vmem:[%s17 + $0x78] sm:$0xff]
  %v9962 = vld [vmem:[%s18] sm:$0x3]
  %v9964 = vlaneseq
  %v9965 = vshrl.u32 %v9964, 7
  %v9966 = vsub.s32 0, %v9965
  %v9967 = vrot.slane %v9962, %v9966
  %v9968 = vlaneseq
  %v9969 = vshrl.u32 %v9968, 7
  %v9970 = vsub.s32 1, %v9969
  %v9971 = vrot.slane %v9962, %v9970
  %v9990 = vunpack.c.l.b16 %v9946
  %v9991 = vunpack.c.h.b16 %v9946
  %v9992 = vunpack.c.l.b16 %v9947
  %v9993 = vunpack.c.h.b16 %v9947
  %v9994 = vunpack.c.l.b16 %v9948
  %v9995 = vunpack.c.h.b16 %v9948
  %v9996 = vunpack.c.l.b16 %v9949
  %v9997 = vunpack.c.h.b16 %v9949
  %v9998 = vunpack.c.l.b16 %v9950
  %v9999 = vunpack.c.h.b16 %v9950
  %v10000 = vunpack.c.l.b16 %v9951
  %v10001 = vunpack.c.h.b16 %v9951
  %v10002 = vunpack.c.l.b16 %v9952
  %v10003 = vunpack.c.h.b16 %v9952
  %v10004 = vunpack.c.l.b16 %v9953
  %v10005 = vunpack.c.h.b16 %v9953
  %v10006 = vunpack.c.l.b16 %v9954
  %v10007 = vunpack.c.h.b16 %v9954
  %v10008 = vunpack.c.l.b16 %v9955
  %v10009 = vunpack.c.h.b16 %v9955
  %v10010 = vunpack.c.l.b16 %v9956
  %v10011 = vunpack.c.h.b16 %v9956
  %v10012 = vunpack.c.l.b16 %v9957
  %v10013 = vunpack.c.h.b16 %v9957
  %v10014 = vunpack.c.l.b16 %v9958
  %v10015 = vunpack.c.h.b16 %v9958
  %v10016 = vunpack.c.l.b16 %v9959
  %v10017 = vunpack.c.h.b16 %v9959
  %v10018 = vunpack.c.l.b16 %v9960
  %v10019 = vunpack.c.h.b16 %v9960
  %v10020 = vunpack.c.l.b16 %v9961
  %v10021 = vunpack.c.h.b16 %v9961
  %v10022 = vpack.c.b16 %v9992, %v9990
  %v10023 = vpack.c.b16 %v9993, %v9991
  %v10024 = vpack.c.b16 %v9996, %v9994
  %v10025 = vpack.c.b16 %v9997, %v9995
  %v10026 = vpack.c.b16 %v10000, %v9998
  %v10027 = vpack.c.b16 %v10001, %v9999
  %v10028 = vpack.c.b16 %v10004, %v10002
  %v10029 = vpack.c.b16 %v10005, %v10003
  %v10030 = vpack.c.b16 %v10008, %v10006
  %v10031 = vpack.c.b16 %v10009, %v10007
  %v10032 = vpack.c.b16 %v10012, %v10010
  %v10033 = vpack.c.b16 %v10013, %v10011
  %v10034 = vpack.c.b16 %v10016, %v10014
  %v10035 = vpack.c.b16 %v10017, %v10015
  %v10036 = vpack.c.b16 %v10020, %v10018
  %v10037 = vpack.c.b16 %v10021, %v10019
  %10054 = vmatprep.subr.bf16.mxu0 %v10037
  %10055 = vmatpush1.bf16.msra.mxu0 %v10036
  %10056 = vmatprep.subr.bf16.mxu0 %v10035
  %10057 = vmatpush1.bf16.msra.mxu0 %v10034
  %10058 = vmatprep.subr.bf16.mxu0 %v10033
  %10059 = vmatpush1.bf16.msra.mxu0 %v10032
  %10060 = vmatprep.subr.bf16.mxu0 %v10031
  %10061 = vmatpush1.bf16.msra.mxu0 %v10030
  %10062 = vmatprep.subr.bf16.mxu0 %v10029
  %10063 = vmatpush1.bf16.msra.mxu0 %v10028
  %10064 = vmatprep.subr.bf16.mxu0 %v10027
  %10065 = vmatpush1.bf16.msra.mxu0 %v10026
  %10066 = vmatprep.subr.bf16.mxu0 %v10025
  %10067 = vmatpush1.bf16.msra.mxu0 %v10024
  %10068 = vmatprep.subr.bf16.mxu0 %v10023
  %10069 = vmatpush1.bf16.msra.mxu0 %v10022
  %10070 = vmatprep.subr.bf16.mxu0 0
  %10071 = vmatpush2.bf16.msra.mxu0 0
  %10072 = vmatprep.subr.bf16.mxu0 0
  %10073 = vmatpush2.bf16.msra.mxu0 0
  %10074 = vmatprep.subr.bf16.mxu0 0
  %10075 = vmatpush2.bf16.msra.mxu0 0
  %10076 = vmatprep.subr.bf16.mxu0 0
  %10077 = vmatpush2.bf16.msra.mxu0 0
  %10078 = vmatprep.subr.bf16.mxu0 0
  %10079 = vmatpush2.bf16.msra.mxu0 0
  %10080 = vmatprep.subr.bf16.mxu0 0
  %10081 = vmatpush2.bf16.msra.mxu0 0
  %10082 = vmatprep.subr.bf16.mxu0 0
  %10083 = vmatpush2.bf16.msra.mxu0 0
  %10084 = vmatprep.subr.bf16.mxu0 0
  %10085 = vmatpush2.bf16.msra.mxu0 0
  %10086 = vmatprep.mubr.bf16.mxu0 0
  %10087 = vmatmul.mubr.bf16.gmra.mxu0 %v9938
  %v10088 = vpop.f32.mrf.mxu0
  %v10089 = vadd.f32 %v9967, %v10088
  %v10090 = vpop.f32.mrf.mxu0
  %v10091 = vadd.f32 %v9971, %v10090
  %v10092 = vpop.f32.mrf.mxu0
  %v10093 = vadd.f32 %v9967, %v10092
  %v10094 = vpop.f32.mrf.mxu0
  %v10095 = vadd.f32 %v9971, %v10094
  %10096 = vmatprep.mubr.bf16.mxu0 0
  %10097 = vmatmul.mubr.bf16.gmra.mxu0 %v9939
  %v10098 = vpop.f32.mrf.mxu0
  %v10099 = vadd.f32 %v9967, %v10098
  %v10100 = vpop.f32.mrf.mxu0
  %v10101 = vadd.f32 %v9971, %v10100
  %v10102 = vpop.f32.mrf.mxu0
  %v10103 = vadd.f32 %v9967, %v10102
  %v10104 = vpop.f32.mrf.mxu0
  %v10105 = vadd.f32 %v9971, %v10104
  %10106 = vmatprep.mubr.bf16.mxu0 0
  %10107 = vmatmul.mubr.bf16.gmra.mxu0 %v9940
  %v10108 = vpop.f32.mrf.mxu0
  %v10109 = vadd.f32 %v9967, %v10108
  %v10110 = vpop.f32.mrf.mxu0
  %v10111 = vadd.f32 %v9971, %v10110
  %v10112 = vpop.f32.mrf.mxu0
  %v10113 = vadd.f32 %v9967, %v10112
  %v10114 = vpop.f32.mrf.mxu0
  %v10115 = vadd.f32 %v9971, %v10114
  %10116 = vmatprep.mubr.bf16.mxu0 0
  %10117 = vmatmul.mubr.bf16.gmra.mxu0 %v9941
  %v10118 = vpop.f32.mrf.mxu0
  %v10119 = vadd.f32 %v9967, %v10118
  %v10120 = vpop.f32.mrf.mxu0
  %v10121 = vadd.f32 %v9971, %v10120
  %v10122 = vpop.f32.mrf.mxu0
  %v10123 = vadd.f32 %v9967, %v10122
  %v10124 = vpop.f32.mrf.mxu0
  %v10125 = vadd.f32 %v9971, %v10124
  %10126 = vmatprep.mubr.bf16.mxu0 0
  %10127 = vmatmul.mubr.bf16.gmra.mxu0 %v9942
  %v10128 = vpop.f32.mrf.mxu0
  %v10129 = vadd.f32 %v9967, %v10128
  %v10130 = vpop.f32.mrf.mxu0
  %v10131 = vadd.f32 %v9971, %v10130
  %v10132 = vpop.f32.mrf.mxu0
  %v10133 = vadd.f32 %v9967, %v10132
  %v10134 = vpop.f32.mrf.mxu0
  %v10135 = vadd.f32 %v9971, %v10134
  %10136 = vmatprep.mubr.bf16.mxu0 0
  %10137 = vmatmul.mubr.bf16.gmra.mxu0 %v9943
  %v10138 = vpop.f32.mrf.mxu0
  %v10139 = vadd.f32 %v9967, %v10138
  %v10140 = vpop.f32.mrf.mxu0
  %v10141 = vadd.f32 %v9971, %v10140
  %v10142 = vpop.f32.mrf.mxu0
  %v10143 = vadd.f32 %v9967, %v10142
  %v10144 = vpop.f32.mrf.mxu0
  %v10145 = vadd.f32 %v9971, %v10144
  %10146 = vmatprep.mubr.bf16.mxu0 0
  %10147 = vmatmul.mubr.bf16.gmra.mxu0 %v9944
  %v10148 = vpop.f32.mrf.mxu0
  %v10149 = vadd.f32 %v9967, %v10148
  %v10150 = vpop.f32.mrf.mxu0
  %v10151 = vadd.f32 %v9971, %v10150
  %v10152 = vpop.f32.mrf.mxu0
  %v10153 = vadd.f32 %v9967, %v10152
  %v10154 = vpop.f32.mrf.mxu0
  %v10155 = vadd.f32 %v9971, %v10154
  %10156 = vmatprep.mubr.bf16.mxu0 0
  %10157 = vmatmul.mubr.bf16.gmra.mxu0 %v9945
  %v10158 = vpop.f32.mrf.mxu0
  %v10159 = vadd.f32 %v9967, %v10158
  %v10160 = vpop.f32.mrf.mxu0
  %v10161 = vadd.f32 %v9971, %v10160
  %v10162 = vpop.f32.mrf.mxu0
  %v10163 = vadd.f32 %v9967, %v10162
  %v10164 = vpop.f32.mrf.mxu0
  %v10165 = vadd.f32 %v9971, %v10164
  %10166 = vdwg.mxu0
  %v10167 = vmax.f32 %v10089, 0.0
  %v10168 = vmax.f32 %v10091, 0.0
  %v10169 = vmax.f32 %v10093, 0.0
  %v10170 = vmax.f32 %v10095, 0.0
  %v10171 = vmax.f32 %v10099, 0.0
  %v10172 = vmax.f32 %v10101, 0.0
  %v10173 = vmax.f32 %v10103, 0.0
  %v10174 = vmax.f32 %v10105, 0.0
  %v10175 = vmax.f32 %v10109, 0.0
  %v10176 = vmax.f32 %v10111, 0.0
  %v10177 = vmax.f32 %v10113, 0.0
  %v10178 = vmax.f32 %v10115, 0.0
  %v10179 = vmax.f32 %v10119, 0.0
  %v10180 = vmax.f32 %v10121, 0.0
  %v10181 = vmax.f32 %v10123, 0.0
  %v10182 = vmax.f32 %v10125, 0.0
  %v10183 = vmax.f32 %v10129, 0.0
  %v10184 = vmax.f32 %v10131, 0.0
  %v10185 = vmax.f32 %v10133, 0.0
  %v10186 = vmax.f32 %v10135, 0.0
  %v10187 = vmax.f32 %v10139, 0.0
  %v10188 = vmax.f32 %v10141, 0.0
  %v10189 = vmax.f32 %v10143, 0.0
  %v10190 = vmax.f32 %v10145, 0.0
  %v10191 = vmax.f32 %v10149, 0.0
  %v10192 = vmax.f32 %v10151, 0.0
  %v10193 = vmax.f32 %v10153, 0.0
  %v10194 = vmax.f32 %v10155, 0.0
  %v10195 = vmax.f32 %v10159, 0.0
  %v10196 = vmax.f32 %v10161, 0.0
  %v10197 = vmax.f32 %v10163, 0.0
  %v10198 = vmax.f32 %v10165, 0.0
  %v10199 = vpack.c.bf16 %v10169, %v10167
  %v10200 = vpack.c.bf16 %v10170, %v10168
  %v10201 = vpack.c.bf16 %v10173, %v10171
  %v10202 = vpack.c.bf16 %v10174, %v10172
  %v10203 = vpack.c.bf16 %v10177, %v10175
  %v10204 = vpack.c.bf16 %v10178, %v10176
  %v10205 = vpack.c.bf16 %v10181, %v10179
  %v10206 = vpack.c.bf16 %v10182, %v10180
  %v10207 = vpack.c.bf16 %v10185, %v10183
  %v10208 = vpack.c.bf16 %v10186, %v10184
  %v10209 = vpack.c.bf16 %v10189, %v10187
  %v10210 = vpack.c.bf16 %v10190, %v10188
  %v10211 = vpack.c.bf16 %v10193, %v10191
  %v10212 = vpack.c.bf16 %v10194, %v10192
  %v10213 = vpack.c.bf16 %v10197, %v10195
  %v10214 = vpack.c.bf16 %v10198, %v10196
  %v10215 = vld [vmem:[%s19] sm:$0xf]
  %v10216 = vld [vmem:[%s19 + $0x4] sm:$0xf]
  %v10217 = vld [vmem:[%s19 + $0x8] sm:$0xf]
  %v10218 = vld [vmem:[%s19 + $0xc] sm:$0xf]
  %v10219 = vld [vmem:[%s19 + $0x10] sm:$0xf]
  %v10220 = vld [vmem:[%s19 + $0x14] sm:$0xf]
  %v10221 = vld [vmem:[%s19 + $0x18] sm:$0xf]
  %v10222 = vld [vmem:[%s19 + $0x1c] sm:$0xf]
  %v10223 = vld [vmem:[%s19 + $0x20] sm:$0xf]
  %v10224 = vld [vmem:[%s19 + $0x24] sm:$0xf]
  %v10225 = vld [vmem:[%s19 + $0x28] sm:$0xf]
  %v10226 = vld [vmem:[%s19 + $0x2c] sm:$0xf]
  %v10227 = vld [vmem:[%s19 + $0x30] sm:$0xf]
  %v10228 = vld [vmem:[%s19 + $0x34] sm:$0xf]
  %v10229 = vld [vmem:[%s19 + $0x38] sm:$0xf]
  %v10230 = vld [vmem:[%s19 + $0x3c] sm:$0xf]
  %v10231 = vld [vmem:[%s19 + $0x40] sm:$0xf]
  %v10232 = vld [vmem:[%s19 + $0x44] sm:$0xf]
  %v10233 = vld [vmem:[%s19 + $0x48] sm:$0xf]
  %v10234 = vld [vmem:[%s19 + $0x4c] sm:$0xf]
  %v10235 = vld [vmem:[%s19 + $0x50] sm:$0xf]
  %v10236 = vld [vmem:[%s19 + $0x54] sm:$0xf]
  %v10237 = vld [vmem:[%s19 + $0x58] sm:$0xf]
  %v10238 = vld [vmem:[%s19 + $0x5c] sm:$0xf]
  %v10239 = vld [vmem:[%s19 + $0x60] sm:$0xf]
  %v10240 = vld [vmem:[%s19 + $0x64] sm:$0xf]
  %v10241 = vld [vmem:[%s19 + $0x68] sm:$0xf]
  %v10242 = vld [vmem:[%s19 + $0x6c] sm:$0xf]
  %v10243 = vld [vmem:[%s19 + $0x70] sm:$0xf]
  %v10244 = vld [vmem:[%s19 + $0x74] sm:$0xf]
  %v10245 = vld [vmem:[%s19 + $0x78] sm:$0xf]
  %v10246 = vld [vmem:[%s19 + $0x7c] sm:$0xf]
  %v10247 = vld [vmem:[%s20] sm:$0x1]
  %v10249 = vlaneseq
  %v10250 = vshrl.u32 %v10249, 7
  %v10251 = vsub.s32 0, %v10250
  %v10252 = vrot.slane %v10247, %v10251
  %v10286 = vunpack.c.l.b16 %v10215
  %v10287 = vunpack.c.l.b16 %v10216
  %v10288 = vunpack.c.l.b16 %v10217
  %v10289 = vunpack.c.l.b16 %v10218
  %v10290 = vunpack.c.l.b16 %v10219
  %v10291 = vunpack.c.l.b16 %v10220
  %v10292 = vunpack.c.l.b16 %v10221
  %v10293 = vunpack.c.l.b16 %v10222
  %v10294 = vunpack.c.l.b16 %v10223
  %v10295 = vunpack.c.l.b16 %v10224
  %v10296 = vunpack.c.l.b16 %v10225
  %v10297 = vunpack.c.l.b16 %v10226
  %v10298 = vunpack.c.l.b16 %v10227
  %v10299 = vunpack.c.l.b16 %v10228
  %v10300 = vunpack.c.l.b16 %v10229
  %v10301 = vunpack.c.l.b16 %v10230
  %v10302 = vunpack.c.l.b16 %v10231
  %v10303 = vunpack.c.l.b16 %v10232
  %v10304 = vunpack.c.l.b16 %v10233
  %v10305 = vunpack.c.l.b16 %v10234
  %v10306 = vunpack.c.l.b16 %v10235
  %v10307 = vunpack.c.l.b16 %v10236
  %v10308 = vunpack.c.l.b16 %v10237
  %v10309 = vunpack.c.l.b16 %v10238
  %v10310 = vunpack.c.l.b16 %v10239
  %v10311 = vunpack.c.l.b16 %v10240
  %v10312 = vunpack.c.l.b16 %v10241
  %v10313 = vunpack.c.l.b16 %v10242
  %v10314 = vunpack.c.l.b16 %v10243
  %v10315 = vunpack.c.l.b16 %v10244
  %v10316 = vunpack.c.l.b16 %v10245
  %v10317 = vunpack.c.l.b16 %v10246
  %v10318 = vpack.c.b16 %v10287, %v10286
  %v10319 = vpack.c.b16 %v10289, %v10288
  %v10320 = vpack.c.b16 %v10291, %v10290
  %v10321 = vpack.c.b16 %v10293, %v10292
  %v10322 = vpack.c.b16 %v10295, %v10294
  %v10323 = vpack.c.b16 %v10297, %v10296
  %v10324 = vpack.c.b16 %v10299, %v10298
  %v10325 = vpack.c.b16 %v10301, %v10300
  %v10326 = vpack.c.b16 %v10303, %v10302
  %v10327 = vpack.c.b16 %v10305, %v10304
  %v10328 = vpack.c.b16 %v10307, %v10306
  %v10329 = vpack.c.b16 %v10309, %v10308
  %v10330 = vpack.c.b16 %v10311, %v10310
  %v10331 = vpack.c.b16 %v10313, %v10312
  %v10332 = vpack.c.b16 %v10315, %v10314
  %v10333 = vpack.c.b16 %v10317, %v10316
  %10350 = vmatprep.subr.bf16.mxu0 0
  %10351 = vmatpush1.bf16.msra.mxu0 %v10325
  %10352 = vmatprep.subr.bf16.mxu0 0
  %10353 = vmatpush1.bf16.msra.mxu0 %v10324
  %10354 = vmatprep.subr.bf16.mxu0 0
  %10355 = vmatpush1.bf16.msra.mxu0 %v10323
  %10356 = vmatprep.subr.bf16.mxu0 0
  %10357 = vmatpush1.bf16.msra.mxu0 %v10322
  %10358 = vmatprep.subr.bf16.mxu0 0
  %10359 = vmatpush1.bf16.msra.mxu0 %v10321
  %10360 = vmatprep.subr.bf16.mxu0 0
  %10361 = vmatpush1.bf16.msra.mxu0 %v10320
  %10362 = vmatprep.subr.bf16.mxu0 0
  %10363 = vmatpush1.bf16.msra.mxu0 %v10319
  %10364 = vmatprep.subr.bf16.mxu0 0
  %10365 = vmatpush1.bf16.msra.mxu0 %v10318
  %10366 = vmatprep.subr.bf16.mxu0 0
  %10367 = vmatpush2.bf16.msra.mxu0 %v10333
  %10368 = vmatprep.subr.bf16.mxu0 0
  %10369 = vmatpush2.bf16.msra.mxu0 %v10332
  %10370 = vmatprep.subr.bf16.mxu0 0
  %10371 = vmatpush2.bf16.msra.mxu0 %v10331
  %10372 = vmatprep.subr.bf16.mxu0 0
  %10373 = vmatpush2.bf16.msra.mxu0 %v10330
  %10374 = vmatprep.subr.bf16.mxu0 0
  %10375 = vmatpush2.bf16.msra.mxu0 %v10329
  %10376 = vmatprep.subr.bf16.mxu0 0
  %10377 = vmatpush2.bf16.msra.mxu0 %v10328
  %10378 = vmatprep.subr.bf16.mxu0 0
  %10379 = vmatpush2.bf16.msra.mxu0 %v10327
  %10380 = vmatprep.subr.bf16.mxu0 0
  %10381 = vmatpush2.bf16.msra.mxu0 %v10326
  %10382 = vmatprep.mubr.bf16.mxu0 %v10200
  %10383 = vmatmul.mubr.bf16.gmra.mxu0 %v10199
  %v10384 = vpop.f32.mrf.mxu0
  %v10385 = vadd.f32 %v10252, %v10384
  %v10386 = vpop.f32.mrf.mxu0
  %v10387 = vpop.f32.mrf.mxu0
  %v10388 = vadd.f32 %v10252, %v10387
  %v10389 = vpop.f32.mrf.mxu0
  %10390 = vmatprep.mubr.bf16.mxu0 %v10202
  %10391 = vmatmul.mubr.bf16.gmra.mxu0 %v10201
  %v10392 = vpop.f32.mrf.mxu0
  %v10393 = vadd.f32 %v10252, %v10392
  %v10394 = vpop.f32.mrf.mxu0
  %v10395 = vpop.f32.mrf.mxu0
  %v10396 = vadd.f32 %v10252, %v10395
  %v10397 = vpop.f32.mrf.mxu0
  %10398 = vmatprep.mubr.bf16.mxu0 %v10204
  %10399 = vmatmul.mubr.bf16.gmra.mxu0 %v10203
  %v10400 = vpop.f32.mrf.mxu0
  %v10401 = vadd.f32 %v10252, %v10400
  %v10402 = vpop.f32.mrf.mxu0
  %v10403 = vpop.f32.mrf.mxu0
  %v10404 = vadd.f32 %v10252, %v10403
  %v10405 = vpop.f32.mrf.mxu0
  %10406 = vmatprep.mubr.bf16.mxu0 %v10206
  %10407 = vmatmul.mubr.bf16.gmra.mxu0 %v10205
  %v10408 = vpop.f32.mrf.mxu0
  %v10409 = vadd.f32 %v10252, %v10408
  %v10410 = vpop.f32.mrf.mxu0
  %v10411 = vpop.f32.mrf.mxu0
  %v10412 = vadd.f32 %v10252, %v10411
  %v10413 = vpop.f32.mrf.mxu0
  %10414 = vmatprep.mubr.bf16.mxu0 %v10208
  %10415 = vmatmul.mubr.bf16.gmra.mxu0 %v10207
  %v10416 = vpop.f32.mrf.mxu0
  %v10417 = vadd.f32 %v10252, %v10416
  %v10418 = vpop.f32.mrf.mxu0
  %v10419 = vpop.f32.mrf.mxu0
  %v10420 = vadd.f32 %v10252, %v10419
  %v10421 = vpop.f32.mrf.mxu0
  %10422 = vmatprep.mubr.bf16.mxu0 %v10210
  %10423 = vmatmul.mubr.bf16.gmra.mxu0 %v10209
  %v10424 = vpop.f32.mrf.mxu0
  %v10425 = vadd.f32 %v10252, %v10424
  %v10426 = vpop.f32.mrf.mxu0
  %v10427 = vpop.f32.mrf.mxu0
  %v10428 = vadd.f32 %v10252, %v10427
  %v10429 = vpop.f32.mrf.mxu0
  %10430 = vmatprep.mubr.bf16.mxu0 %v10212
  %10431 = vmatmul.mubr.bf16.gmra.mxu0 %v10211
  %v10432 = vpop.f32.mrf.mxu0
  %v10433 = vadd.f32 %v10252, %v10432
  %v10434 = vpop.f32.mrf.mxu0
  %v10435 = vpop.f32.mrf.mxu0
  %v10436 = vadd.f32 %v10252, %v10435
  %v10437 = vpop.f32.mrf.mxu0
  %10438 = vmatprep.mubr.bf16.mxu0 %v10214
  %10439 = vmatmul.mubr.bf16.gmra.mxu0 %v10213
  %v10440 = vpop.f32.mrf.mxu0
  %v10441 = vadd.f32 %v10252, %v10440
  %v10442 = vpop.f32.mrf.mxu0
  %v10443 = vpop.f32.mrf.mxu0
  %v10444 = vadd.f32 %v10252, %v10443
  %v10445 = vpop.f32.mrf.mxu0
  %10446 = vdwg.mxu0
  %v10447 = vadd.f32 %v9922, %v10385
  %v10448 = vadd.f32 %v9923, %v10388
  %v10449 = vadd.f32 %v9924, %v10393
  %v10450 = vadd.f32 %v9925, %v10396
  %v10451 = vadd.f32 %v9926, %v10401
  %v10452 = vadd.f32 %v9927, %v10404
  %v10453 = vadd.f32 %v9928, %v10409
  %v10454 = vadd.f32 %v9929, %v10412
  %v10455 = vadd.f32 %v9930, %v10417
  %v10456 = vadd.f32 %v9931, %v10420
  %v10457 = vadd.f32 %v9932, %v10425
  %v10458 = vadd.f32 %v9933, %v10428
  %v10459 = vadd.f32 %v9934, %v10433
  %v10460 = vadd.f32 %v9935, %v10436
  %v10461 = vadd.f32 %v9936, %v10441
  %v10462 = vadd.f32 %v9937, %v10444
  %10463 = vadd.xlane.f32.xlu0 %v10447
  %v10464 = vpop.xlane.xlu0 %10463
  %10465 = vadd.xlane.f32.xlu0 %v10448
  %v10466 = vpop.xlane.xlu0 %10465
  %10467 = vadd.xlane.f32.xlu0 %v10449
  %v10468 = vpop.xlane.xlu0 %10467
  %10469 = vadd.xlane.f32.xlu0 %v10450
  %v10470 = vpop.xlane.xlu0 %10469
  %10471 = vadd.xlane.f32.xlu0 %v10451
  %v10472 = vpop.xlane.xlu0 %10471
  %10473 = vadd.xlane.f32.xlu0 %v10452
  %v10474 = vpop.xlane.xlu0 %10473
  %10475 = vadd.xlane.f32.xlu0 %v10453
  %v10476 = vpop.xlane.xlu0 %10475
  %10477 = vadd.xlane.f32.xlu0 %v10454
  %v10478 = vpop.xlane.xlu0 %10477
  %10479 = vadd.xlane.f32.xlu0 %v10455
  %v10480 = vpop.xlane.xlu0 %10479
  %10481 = vadd.xlane.f32.xlu0 %v10456
  %v10482 = vpop.xlane.xlu0 %10481
  %10483 = vadd.xlane.f32.xlu0 %v10457
  %v10484 = vpop.xlane.xlu0 %10483
  %10485 = vadd.xlane.f32.xlu0 %v10458
  %v10486 = vpop.xlane.xlu0 %10485
  %10487 = vadd.xlane.f32.xlu0 %v10459
  %v10488 = vpop.xlane.xlu0 %10487
  %10489 = vadd.xlane.f32.xlu0 %v10460
  %v10490 = vpop.xlane.xlu0 %10489
  %10491 = vadd.xlane.f32.xlu0 %v10461
  %v10492 = vpop.xlane.xlu0 %10491
  %10493 = vadd.xlane.f32.xlu0 %v10462
  %v10494 = vpop.xlane.xlu0 %10493
  %v10495 = vmul.f32 %v10464, %v4843
  %v10496 = vmul.f32 %v10466, %v4843
  %v10497 = vmul.f32 %v10468, %v4843
  %v10498 = vmul.f32 %v10470, %v4843
  %v10499 = vmul.f32 %v10472, %v4843
  %v10500 = vmul.f32 %v10474, %v4843
  %v10501 = vmul.f32 %v10476, %v4843
  %v10502 = vmul.f32 %v10478, %v4843
  %v10503 = vmul.f32 %v10480, %v4843
  %v10504 = vmul.f32 %v10482, %v4843
  %v10505 = vmul.f32 %v10484, %v4843
  %v10506 = vmul.f32 %v10486, %v4843
  %v10507 = vmul.f32 %v10488, %v4843
  %v10508 = vmul.f32 %v10490, %v4843
  %v10509 = vmul.f32 %v10492, %v4843
  %v10510 = vmul.f32 %v10494, %v4843
  %v10511 = vsub.f32 %v10447, %v10495
  %v10512 = vsub.f32 %v10448, %v10496
  %v10513 = vsub.f32 %v10449, %v10497
  %v10514 = vsub.f32 %v10450, %v10498
  %v10515 = vsub.f32 %v10451, %v10499
  %v10516 = vsub.f32 %v10452, %v10500
  %v10517 = vsub.f32 %v10453, %v10501
  %v10518 = vsub.f32 %v10454, %v10502
  %v10519 = vsub.f32 %v10455, %v10503
  %v10520 = vsub.f32 %v10456, %v10504
  %v10521 = vsub.f32 %v10457, %v10505
  %v10522 = vsub.f32 %v10458, %v10506
  %v10523 = vsub.f32 %v10459, %v10507
  %v10524 = vsub.f32 %v10460, %v10508
  %v10525 = vsub.f32 %v10461, %v10509
  %v10526 = vsub.f32 %v10462, %v10510
  %v10527 = vmul.f32 %v10511, %v10511
  %v10528 = vmul.f32 %v10512, %v10512
  %v10529 = vmul.f32 %v10513, %v10513
  %v10530 = vmul.f32 %v10514, %v10514
  %v10531 = vmul.f32 %v10515, %v10515
  %v10532 = vmul.f32 %v10516, %v10516
  %v10533 = vmul.f32 %v10517, %v10517
  %v10534 = vmul.f32 %v10518, %v10518
  %v10535 = vmul.f32 %v10519, %v10519
  %v10536 = vmul.f32 %v10520, %v10520
  %v10537 = vmul.f32 %v10521, %v10521
  %v10538 = vmul.f32 %v10522, %v10522
  %v10539 = vmul.f32 %v10523, %v10523
  %v10540 = vmul.f32 %v10524, %v10524
  %v10541 = vmul.f32 %v10525, %v10525
  %v10542 = vmul.f32 %v10526, %v10526
  %10543 = vadd.xlane.f32.xlu0 %v10527
  %v10544 = vpop.xlane.xlu0 %10543
  %10545 = vadd.xlane.f32.xlu0 %v10528
  %v10546 = vpop.xlane.xlu0 %10545
  %10547 = vadd.xlane.f32.xlu0 %v10529
  %v10548 = vpop.xlane.xlu0 %10547
  %10549 = vadd.xlane.f32.xlu0 %v10530
  %v10550 = vpop.xlane.xlu0 %10549
  %10551 = vadd.xlane.f32.xlu0 %v10531
  %v10552 = vpop.xlane.xlu0 %10551
  %10553 = vadd.xlane.f32.xlu0 %v10532
  %v10554 = vpop.xlane.xlu0 %10553
  %10555 = vadd.xlane.f32.xlu0 %v10533
  %v10556 = vpop.xlane.xlu0 %10555
  %10557 = vadd.xlane.f32.xlu0 %v10534
  %v10558 = vpop.xlane.xlu0 %10557
  %10559 = vadd.xlane.f32.xlu0 %v10535
  %v10560 = vpop.xlane.xlu0 %10559
  %10561 = vadd.xlane.f32.xlu0 %v10536
  %v10562 = vpop.xlane.xlu0 %10561
  %10563 = vadd.xlane.f32.xlu0 %v10537
  %v10564 = vpop.xlane.xlu0 %10563
  %10565 = vadd.xlane.f32.xlu0 %v10538
  %v10566 = vpop.xlane.xlu0 %10565
  %10567 = vadd.xlane.f32.xlu0 %v10539
  %v10568 = vpop.xlane.xlu0 %10567
  %10569 = vadd.xlane.f32.xlu0 %v10540
  %v10570 = vpop.xlane.xlu0 %10569
  %10571 = vadd.xlane.f32.xlu0 %v10541
  %v10572 = vpop.xlane.xlu0 %10571
  %10573 = vadd.xlane.f32.xlu0 %v10542
  %v10574 = vpop.xlane.xlu0 %10573
  %v10575 = vmul.f32 %v10544, %v4843
  %v10576 = vmul.f32 %v10546, %v4843
  %v10577 = vmul.f32 %v10548, %v4843
  %v10578 = vmul.f32 %v10550, %v4843
  %v10579 = vmul.f32 %v10552, %v4843
  %v10580 = vmul.f32 %v10554, %v4843
  %v10581 = vmul.f32 %v10556, %v4843
  %v10582 = vmul.f32 %v10558, %v4843
  %v10583 = vmul.f32 %v10560, %v4843
  %v10584 = vmul.f32 %v10562, %v4843
  %v10585 = vmul.f32 %v10564, %v4843
  %v10586 = vmul.f32 %v10566, %v4843
  %v10587 = vmul.f32 %v10568, %v4843
  %v10588 = vmul.f32 %v10570, %v4843
  %v10589 = vmul.f32 %v10572, %v4843
  %v10590 = vmul.f32 %v10574, %v4843
  %v10591 = vadd.f32 %v10575, 1e-05
  %v10592 = vadd.f32 %v10576, 1e-05
  %v10593 = vadd.f32 %v10577, 1e-05
  %v10594 = vadd.f32 %v10578, 1e-05
  %v10595 = vadd.f32 %v10579, 1e-05
  %v10596 = vadd.f32 %v10580, 1e-05
  %v10597 = vadd.f32 %v10581, 1e-05
  %v10598 = vadd.f32 %v10582, 1e-05
  %v10599 = vadd.f32 %v10583, 1e-05
  %v10600 = vadd.f32 %v10584, 1e-05
  %v10601 = vadd.f32 %v10585, 1e-05
  %v10602 = vadd.f32 %v10586, 1e-05
  %v10603 = vadd.f32 %v10587, 1e-05
  %v10604 = vadd.f32 %v10588, 1e-05
  %v10605 = vadd.f32 %v10589, 1e-05
  %v10606 = vadd.f32 %v10590, 1e-05
  %v10607 = vrsqrt.pop %v10591
  %v10608 = vrsqrt.pop %v10592
  %v10609 = vrsqrt.pop %v10593
  %v10610 = vrsqrt.pop %v10594
  %v10611 = vrsqrt.pop %v10595
  %v10612 = vrsqrt.pop %v10596
  %v10613 = vrsqrt.pop %v10597
  %v10614 = vrsqrt.pop %v10598
  %v10615 = vrsqrt.pop %v10599
  %v10616 = vrsqrt.pop %v10600
  %v10617 = vrsqrt.pop %v10601
  %v10618 = vrsqrt.pop %v10602
  %v10619 = vrsqrt.pop %v10603
  %v10620 = vrsqrt.pop %v10604
  %v10621 = vrsqrt.pop %v10605
  %v10622 = vrsqrt.pop %v10606
  %v10623 = vmul.f32 %v10511, %v10607
  %v10624 = vmul.f32 %v10512, %v10608
  %v10625 = vmul.f32 %v10513, %v10609
  %v10626 = vmul.f32 %v10514, %v10610
  %v10627 = vmul.f32 %v10515, %v10611
  %v10628 = vmul.f32 %v10516, %v10612
  %v10629 = vmul.f32 %v10517, %v10613
  %v10630 = vmul.f32 %v10518, %v10614
  %v10631 = vmul.f32 %v10519, %v10615
  %v10632 = vmul.f32 %v10520, %v10616
  %v10633 = vmul.f32 %v10521, %v10617
  %v10634 = vmul.f32 %v10522, %v10618
  %v10635 = vmul.f32 %v10523, %v10619
  %v10636 = vmul.f32 %v10524, %v10620
  %v10637 = vmul.f32 %v10525, %v10621
  %v10638 = vmul.f32 %v10526, %v10622
  %v10639 = vld [vmem:[%s15] sm:$0x1]
  %v10641 = vlaneseq
  %v10642 = vshrl.u32 %v10641, 7
  %v10643 = vsub.s32 0, %v10642
  %v10644 = vrot.slane %v10639, %v10643
  %v10646 = vmul.f32 %v10623, %v10644
  %v10647 = vmul.f32 %v10624, %v10644
  %v10648 = vmul.f32 %v10625, %v10644
  %v10649 = vmul.f32 %v10626, %v10644
  %v10650 = vmul.f32 %v10627, %v10644
  %v10651 = vmul.f32 %v10628, %v10644
  %v10652 = vmul.f32 %v10629, %v10644
  %v10653 = vmul.f32 %v10630, %v10644
  %v10654 = vmul.f32 %v10631, %v10644
  %v10655 = vmul.f32 %v10632, %v10644
  %v10656 = vmul.f32 %v10633, %v10644
  %v10657 = vmul.f32 %v10634, %v10644
  %v10658 = vmul.f32 %v10635, %v10644
  %v10659 = vmul.f32 %v10636, %v10644
  %v10660 = vmul.f32 %v10637, %v10644
  %v10661 = vmul.f32 %v10638, %v10644
  %v10662 = vld [vmem:[%s16] sm:$0x1]
  %v10664 = vlaneseq
  %v10665 = vshrl.u32 %v10664, 7
  %v10666 = vsub.s32 0, %v10665
  %v10667 = vrot.slane %v10662, %v10666
  %v10669 = vadd.f32 %v10646, %v10667
  %v10670 = vadd.f32 %v10647, %v10667
  %v10671 = vadd.f32 %v10648, %v10667
  %v10672 = vadd.f32 %v10649, %v10667
  %v10673 = vadd.f32 %v10650, %v10667
  %v10674 = vadd.f32 %v10651, %v10667
  %v10675 = vadd.f32 %v10652, %v10667
  %v10676 = vadd.f32 %v10653, %v10667
  %v10677 = vadd.f32 %v10654, %v10667
  %v10678 = vadd.f32 %v10655, %v10667
  %v10679 = vadd.f32 %v10656, %v10667
  %v10680 = vadd.f32 %v10657, %v10667
  %v10681 = vadd.f32 %v10658, %v10667
  %v10682 = vadd.f32 %v10659, %v10667
  %v10683 = vadd.f32 %v10660, %v10667
  %v10684 = vadd.f32 %v10661, %v10667
  %10685 = vst [vmem:[%s21] sm:$0xff] %v10669
  %10686 = vst [vmem:[%s21 + $0x8] sm:$0xff] %v10670
  %10687 = vst [vmem:[%s21 + $0x10] sm:$0xff] %v10671
  %10688 = vst [vmem:[%s21 + $0x18] sm:$0xff] %v10672
  %10689 = vst [vmem:[%s21 + $0x20] sm:$0xff] %v10673
  %10690 = vst [vmem:[%s21 + $0x28] sm:$0xff] %v10674
  %10691 = vst [vmem:[%s21 + $0x30] sm:$0xff] %v10675
  %10692 = vst [vmem:[%s21 + $0x38] sm:$0xff] %v10676
  %10693 = vst [vmem:[%s21 + $0x40] sm:$0xff] %v10677
  %10694 = vst [vmem:[%s21 + $0x48] sm:$0xff] %v10678
  %10695 = vst [vmem:[%s21 + $0x50] sm:$0xff] %v10679
  %10696 = vst [vmem:[%s21 + $0x58] sm:$0xff] %v10680
  %10697 = vst [vmem:[%s21 + $0x60] sm:$0xff] %v10681
  %10698 = vst [vmem:[%s21 + $0x68] sm:$0xff] %v10682
  %10699 = vst [vmem:[%s21 + $0x70] sm:$0xff] %v10683
  %10700 = vst [vmem:[%s21 + $0x78] sm:$0xff] %v10684
  // Predicated region
  $region86: #{_lambda_.3} parent=0 // pred_check
    _
  $region87: #{_lambda_.3} parent=0 // pred_check_branch
    %10702 = sbr.rel (0) target = $region89
  $region88: #{_lambda_.3} parent=0 // pred_region
    _
  $region89: #{_lambda_.3} parent=0 // pred_fallthru
    _
  // Predicated region
  $region90: #{_lambda_.3} parent=0 // pred_check
    _
  $region91: #{_lambda_.3} parent=0 // pred_check_branch
    %10704 = sbr.rel (0) target = $region93
  $region92: #{_lambda_.3} parent=0 // pred_region
    _
  $region93: #{_lambda_.3} parent=0 // pred_fallthru
    _

</llo_original>
